<compile_context>
chip_gen: v7x
topology: tpu7x:2x2x1
jax: 0.10.0
libtpu: 0.0.40
codegen_flags: <defaults>
</compile_context>

<pallas_src>
import numpy as np

import jax
import jax.numpy as jnp
from jax.experimental import pallas as pl
from jax.experimental.pallas import tpu as pltpu

H = 32
W = 32
HW = H * W                            # 1024 spatial positions on the lane axis
C0, C1, C2, C3 = 3, 11, 64, 11        # true channel counts
C0P, C1P, C2P, C3P = 8, 16, 72, 16    # padded channel counts (sublane axis)
# Index of the always-one "bias" channel inside each padded activation.
ONE0, ONE1, ONE2, ONE3 = 3, 11, 64, 11
NCLS = 10
JCOLS = 128                           # linear selector width: 110 real + 10 bias + pad


# ---------------------------------------------------------------------------
# Fused Pallas kernel: conv1 + conv2 + conv3 + linear, activations in VMEM
# ---------------------------------------------------------------------------
def _fused_cifar_kernel(x_ref, w1_ref, w2_ref, w3_ref, wl_ref, msk_ref, sel_ref,
                        o_ref):
    # Lane-coordinate helpers: lane index r = h*W + w of the flattened image.
    r = jax.lax.broadcasted_iota(jnp.int32, (1, HW), 1)
    rw = r & (W - 1)                                   # w = r mod W  (W = 32)

    # Precompute the 24 non-trivial out-of-image masks ONCE (conv2/conv3 reuse
    # the 3x3 subset of the 5x5 set).  f32 {0,1} rows, broadcast over channels.
    masks = {}
    for oy in range(-2, 3):
        for ox in range(-2, 3):
            conds = []
            if oy < 0:
                conds.append(r >= (-oy) * W)           # h + oy >= 0
            if oy > 0:
                conds.append(r < (H - oy) * W)         # h + oy <= H - 1
            if ox < 0:
                conds.append(rw >= -ox)                # w + ox >= 0
            if ox > 0:
                conds.append(rw < W - ox)              # w + ox <= W - 1
            if conds:
                m = conds[0]
                for c in conds[1:]:
                    m = m & c
                masks[(oy, ox)] = m.astype(jnp.float32)
            else:
                masks[(oy, ox)] = None                 # center tap: always valid

    def conv_layer(act, w_ref, ksize):
        """act: (Cin_pad, HW) f32 -> ReLU(W_layer @ stacked): (Cout_pad, HW) f32."""
        pad = ksize // 2
        pieces = []
        for dy in range(ksize):
            for dx in range(ksize):
                oy, ox = dy - pad, dx - pad
                s = oy * W + ox                        # flat lane shift of this tap
                # piece[c, i] = act[c, (i + s) mod HW]; every wrapped lane is an
                # out-of-image position, so the mask below zeroes it.
                piece = act if s == 0 else pltpu.roll(act, (-s) % HW, axis=1)
                m = masks[(oy, ox)]
                if m is not None:
                    piece = piece * m
                pieces.append(piece)
        # Stack taps along K (sublane concat of 8-aligned pieces) -> ONE matmul.
        stacked = jnp.concatenate(pieces, axis=0)      # (taps*Cin_pad, HW) f32
        out = jnp.dot(w_ref[...], stacked.astype(jnp.bfloat16),
                      preferred_element_type=jnp.float32)
        return jnp.maximum(out, 0.0)                   # bias already folded into W

    a1 = conv_layer(x_ref[...], w1_ref, 5)   # (16, 1024): rows 0..10 real, row 11 == 1
    a2 = conv_layer(a1, w2_ref, 3)           # (72, 1024): rows 0..63 real, row 64 == 1
    a3 = conv_layer(a2, w3_ref, 3)           # (16, 1024): rows 0..10 real, row 11 == 1

    # Linear (NCHW flatten order + bias absorbed into wl/msk/sel):
    #   P[c, c*10 + n]  = sum_r a3[c, r] * lin_w[n, c*1024 + r]   for c < 11
    #   P[11, 110 + n]  = lin_b[n]                                (all-ones row)
    p = jnp.dot(a3.astype(jnp.bfloat16), wl_ref[...],
                preferred_element_type=jnp.float32)              # (16, 128)
    colsum = jnp.sum(p * msk_ref[...], axis=0, keepdims=True)    # (1, 128)
    o_ref[...] = jnp.dot(colsum, sel_ref[...],
                         preferred_element_type=jnp.float32)     # (1, 10)


# ---------------------------------------------------------------------------
# One-time parameter re-layout (outside the jitted hot path)
# ---------------------------------------------------------------------------
def prepare_params(params):
    def conv_weight(w, b, cin_pad, cout_pad, one_in, one_out):
        """Torch (Cout,Cin,KH,KW) -> (Cout_pad, KH*KW*Cin_pad) bf16, K-stacked.

        The layer bias is written into the center-tap column of the always-one
        input channel `one_in`; output row `one_out` gets a pseudo-bias of 1.0
        so the next layer's always-one channel is ReLU(0 + 1) = 1.
        """
        cout, cin, kh, kw = w.shape
        wt = jnp.transpose(w, (0, 2, 3, 1))                        # (Cout,KH,KW,Cin)
        wt = jnp.pad(wt, ((0, cout_pad - cout), (0, 0), (0, 0), (0, cin_pad - cin)))
        wt = wt.reshape(cout_pad, kh * kw * cin_pad)               # tap-major, Cin-minor
        center_col = ((kh // 2) * kw + (kw // 2)) * cin_pad + one_in
        col = jnp.zeros((cout_pad,), jnp.float32).at[:cout].set(b)
        col = col.at[one_out].set(1.0)
        wt = wt.at[:, center_col].set(col)
        return wt.astype(jnp.bfloat16)

    # Linear weight: lin_w[n, c*1024 + r] -> wlt[r, c*10 + n]; columns 110..119
    # carry lin_b[n]/1024 so the all-ones a3 row 11 reproduces the bias.
    wl = params["lin_w"].reshape(NCLS, C3, HW).transpose(2, 1, 0).reshape(HW, C3 * NCLS)
    wlt = jnp.zeros((HW, JCOLS), jnp.float32)
    wlt = wlt.at[:, :C3 * NCLS].set(wl)
    wlt = wlt.at[:, C3 * NCLS:(C3 + 1) * NCLS].set(
        jnp.broadcast_to(params["lin_b"][None, :] / HW, (HW, NCLS)))

    used_hi = (C3 + 1) * NCLS                                      # 120
    c_col = jnp.arange(C3P)[:, None]                               # (16, 1)
    j_row = jnp.arange(JCOLS)[None, :]                             # (1, 128)
    msk = ((j_row // NCLS == c_col) & (j_row < used_hi)).astype(jnp.float32)  # (16,128)
    j_col = jnp.arange(JCOLS)[:, None]                             # (128, 1)
    n_row = jnp.arange(NCLS)[None, :]                              # (1, 10)
    sel = ((j_col % NCLS == n_row) & (j_col < used_hi)).astype(jnp.float32)   # (128,10)

    return {
        "w1": conv_weight(params["conv1_w"], params["conv1_b"], C0P, C1P, ONE0, ONE1),  # (16, 200)
        "w2": conv_weight(params["conv2_w"], params["conv2_b"], C1P, C2P, ONE1, ONE2),  # (72, 144)
        "w3": conv_weight(params["conv3_w"], params["conv3_b"], C2P, C3P, ONE2, ONE3),  # (16, 648)
        "wl": wlt.astype(jnp.bfloat16),   # (1024, 128)
        "msk": msk,                       # (16, 128) f32
        "sel": sel,                       # (128, 10) f32
    }


# ---------------------------------------------------------------------------
# Forward pass (single pallas_call, no grid -- whole problem fits in VMEM)
# ---------------------------------------------------------------------------
@jax.jit
def cifar_classifier_forward(x, prep):
    # Mirrors x.view(-1, 3, 32, 32).float(); the module's later x.view((1, -1))
    # only makes sense for batch 1, so reject anything else loudly.
    x = x.reshape(-1, C0, H, W).astype(jnp.float32)
    if x.shape[0] != 1:
        raise ValueError(
            f"CifarClassifier flattens to a single row; batch must be 1, got {x.shape[0]}")
    xk = jnp.concatenate([
        x[0].reshape(C0, HW),                        # NCHW is already (C, H*W)
        jnp.ones((1, HW), jnp.float32),              # always-one bias channel (row 3)
        jnp.zeros((C0P - C0 - 1, HW), jnp.float32),  # rows 4..7
    ], axis=0)                                       # (8, 1024)

    return pl.pallas_call(
        _fused_cifar_kernel,
        out_shape=jax.ShapeDtypeStruct((1, NCLS), jnp.float32),
        in_specs=[
            pl.BlockSpec(xk.shape, lambda: (0, 0)),
            pl.BlockSpec(prep["w1"].shape, lambda: (0, 0)),
            pl.BlockSpec(prep["w2"].shape, lambda: (0, 0)),
            pl.BlockSpec(prep["w3"].shape, lambda: (0, 0)),
            pl.BlockSpec(prep["wl"].shape, lambda: (0, 0)),
            pl.BlockSpec(prep["msk"].shape, lambda: (0, 0)),
            pl.BlockSpec(prep["sel"].shape, lambda: (0, 0)),
        ],
        out_specs=pl.BlockSpec((1, NCLS), lambda: (0, 0)),
        # Peak in-kernel working set (conv3 K-stack) is well under 16 MiB, but
        # ask for 32 MiB scoped VMEM for headroom; safe on v5e/v6e/v7x.
        compiler_params=pltpu.CompilerParams(vmem_limit_bytes=32 * 1024 * 1024),
    )(xk, prep["w1"], prep["w2"], prep["w3"], prep["wl"], prep["msk"], prep["sel"])


# ---------------------------------------------------------------------------
# Pure-JAX reference (for correctness verification)
# ---------------------------------------------------------------------------
def reference_forward(x, params):
    x = x.reshape(-1, C0, H, W).astype(jnp.float32)

    def conv_relu(x, w, b, pad):
        y = jax.lax.conv_general_dilated(
            x, w, window_strides=(1, 1), padding=[(pad, pad), (pad, pad)],
            dimension_numbers=("NCHW", "OIHW", "NCHW"))
        return jax.nn.relu(y + b.reshape(1, -1, 1, 1))

    x = conv_relu(x, params["conv1_w"], params["conv1_b"], 2)
    x = conv_relu(x, params["conv2_w"], params["conv2_b"], 1)
    x = conv_relu(x, params["conv3_w"], params["conv3_b"], 1)
    x = x.reshape(1, -1)
    return x @ params["lin_w"].T + params["lin_b"][None, :]


# ---------------------------------------------------------------------------
# Deterministic parameter init (PyTorch-style U(-1/sqrt(fan_in), 1/sqrt(fan_in)))
# ---------------------------------------------------------------------------
def init_params(key):
    def uniform(key, shape, fan_in):
        bound = 1.0 / jnp.sqrt(jnp.float32(fan_in))
        return jax.random.uniform(key, shape, jnp.float32, -bound, bound)

    ks = jax.random.split(key, 8)
    return {
        "conv1_w": uniform(ks[0], (C1, C0, 5, 5), C0 * 5 * 5),
        "conv1_b": uniform(ks[1], (C1,), C0 * 5 * 5),
        "conv2_w": uniform(ks[2], (C2, C1, 3, 3), C1 * 3 * 3),
        "conv2_b": uniform(ks[3], (C2,), C1 * 3 * 3),
        "conv3_w": uniform(ks[4], (C3, C2, 3, 3), C2 * 3 * 3),
        "conv3_b": uniform(ks[5], (C3,), C2 * 3 * 3),
        "lin_w": uniform(ks[6], (NCLS, C3 * HW), C3 * HW),
        "lin_b": uniform(ks[7], (NCLS,), C3 * HW),
    }


if __name__ == "__main__":
    key = jax.random.PRNGKey(0)
    k_x, k_p = jax.random.split(key)

    # Module hard-codes 32x32 spatial and flattens to a single row, so the
    # input must be (1, 3, 32, 32).
    x = jax.random.normal(k_x, (1, C0, H, W), jnp.float32)
    params = init_params(k_p)
    prep = prepare_params(params)   # one-time weight re-layout, off hot path

    logits = cifar_classifier_forward(x, prep)
    jax.block_until_ready(logits)

    assert logits.shape == (1, NCLS), logits.shape
    assert logits.dtype == jnp.float32

    # Tolerance is set by the bf16 MXU inputs (f32 accumulation); the observed
    # error is O(1e-3) on the O(1e-1) logits, so this still catches any
    # shift/mask/layout bug while accepting bf16 rounding.
    ref = reference_forward(x, params)
    np.testing.assert_allclose(np.asarray(logits), np.asarray(ref),
                               rtol=5e-2, atol=2e-2)

    print("KERNEL_OK")
</pallas_src>

<mosaic_0001>
module attributes {stable_mosaic.version = 11 : i64} {
  func.func @_fused_cifar_kernel(%arg0: memref<8x1024xf32, #tpu.memory_space<vmem>>, %arg1: memref<16x200xbf16, #tpu.memory_space<vmem>>, %arg2: memref<72x144xbf16, #tpu.memory_space<vmem>>, %arg3: memref<16x648xbf16, #tpu.memory_space<vmem>>, %arg4: memref<1024x128xbf16, #tpu.memory_space<vmem>>, %arg5: memref<16x128xf32, #tpu.memory_space<vmem>>, %arg6: memref<128x10xf32, #tpu.memory_space<vmem>>, %arg7: memref<1x10xf32, #tpu.memory_space<vmem>>) attributes {dimension_semantics = [], scalar_prefetch = 0 : i64, scratch_operands = 0 : i64, tpu.core_type = #tpu.core_type<tc>} {
    %0 = tpu.iota {dimensions = array<i32: 1>} : vector<1x1024xi32>
    %c31_i32 = arith.constant 31 : i32
    %1 = vector.broadcast %c31_i32 : i32 to vector<1x1024xi32>
    %2 = arith.andi %0, %1 : vector<1x1024xi32>
    %c64_i32 = arith.constant 64 : i32
    %3 = vector.broadcast %c64_i32 : i32 to vector<1x1024xi32>
    %4 = arith.cmpi sge, %0, %3 : vector<1x1024xi32>
    %c2_i32 = arith.constant 2 : i32
    %5 = vector.broadcast %c2_i32 : i32 to vector<1x1024xi32>
    %6 = arith.cmpi sge, %2, %5 : vector<1x1024xi32>
    %7 = arith.andi %4, %6 : vector<1x1024xi1>
    %8 = arith.extui %7 : vector<1x1024xi1> to vector<1x1024xi32>
    %9 = arith.sitofp %8 : vector<1x1024xi32> to vector<1x1024xf32>
    %c64_i32_0 = arith.constant 64 : i32
    %10 = vector.broadcast %c64_i32_0 : i32 to vector<1x1024xi32>
    %11 = arith.cmpi sge, %0, %10 : vector<1x1024xi32>
    %c1_i32 = arith.constant 1 : i32
    %12 = vector.broadcast %c1_i32 : i32 to vector<1x1024xi32>
    %13 = arith.cmpi sge, %2, %12 : vector<1x1024xi32>
    %14 = arith.andi %11, %13 : vector<1x1024xi1>
    %15 = arith.extui %14 : vector<1x1024xi1> to vector<1x1024xi32>
    %16 = arith.sitofp %15 : vector<1x1024xi32> to vector<1x1024xf32>
    %c64_i32_1 = arith.constant 64 : i32
    %17 = vector.broadcast %c64_i32_1 : i32 to vector<1x1024xi32>
    %18 = arith.cmpi sge, %0, %17 : vector<1x1024xi32>
    %19 = arith.extui %18 : vector<1x1024xi1> to vector<1x1024xi32>
    %20 = arith.sitofp %19 : vector<1x1024xi32> to vector<1x1024xf32>
    %c64_i32_2 = arith.constant 64 : i32
    %21 = vector.broadcast %c64_i32_2 : i32 to vector<1x1024xi32>
    %22 = arith.cmpi sge, %0, %21 : vector<1x1024xi32>
    %c31_i32_3 = arith.constant 31 : i32
    %23 = vector.broadcast %c31_i32_3 : i32 to vector<1x1024xi32>
    %24 = arith.cmpi slt, %2, %23 : vector<1x1024xi32>
    %25 = arith.andi %22, %24 : vector<1x1024xi1>
    %26 = arith.extui %25 : vector<1x1024xi1> to vector<1x1024xi32>
    %27 = arith.sitofp %26 : vector<1x1024xi32> to vector<1x1024xf32>
    %c64_i32_4 = arith.constant 64 : i32
    %28 = vector.broadcast %c64_i32_4 : i32 to vector<1x1024xi32>
    %29 = arith.cmpi sge, %0, %28 : vector<1x1024xi32>
    %c30_i32 = arith.constant 30 : i32
    %30 = vector.broadcast %c30_i32 : i32 to vector<1x1024xi32>
    %31 = arith.cmpi slt, %2, %30 : vector<1x1024xi32>
    %32 = arith.andi %29, %31 : vector<1x1024xi1>
    %33 = arith.extui %32 : vector<1x1024xi1> to vector<1x1024xi32>
    %34 = arith.sitofp %33 : vector<1x1024xi32> to vector<1x1024xf32>
    %c32_i32 = arith.constant 32 : i32
    %35 = vector.broadcast %c32_i32 : i32 to vector<1x1024xi32>
    %36 = arith.cmpi sge, %0, %35 : vector<1x1024xi32>
    %c2_i32_5 = arith.constant 2 : i32
    %37 = vector.broadcast %c2_i32_5 : i32 to vector<1x1024xi32>
    %38 = arith.cmpi sge, %2, %37 : vector<1x1024xi32>
    %39 = arith.andi %36, %38 : vector<1x1024xi1>
    %40 = arith.extui %39 : vector<1x1024xi1> to vector<1x1024xi32>
    %41 = arith.sitofp %40 : vector<1x1024xi32> to vector<1x1024xf32>
    %c32_i32_6 = arith.constant 32 : i32
    %42 = vector.broadcast %c32_i32_6 : i32 to vector<1x1024xi32>
    %43 = arith.cmpi sge, %0, %42 : vector<1x1024xi32>
    %c1_i32_7 = arith.constant 1 : i32
    %44 = vector.broadcast %c1_i32_7 : i32 to vector<1x1024xi32>
    %45 = arith.cmpi sge, %2, %44 : vector<1x1024xi32>
    %46 = arith.andi %43, %45 : vector<1x1024xi1>
    %47 = arith.extui %46 : vector<1x1024xi1> to vector<1x1024xi32>
    %48 = arith.sitofp %47 : vector<1x1024xi32> to vector<1x1024xf32>
    %c32_i32_8 = arith.constant 32 : i32
    %49 = vector.broadcast %c32_i32_8 : i32 to vector<1x1024xi32>
    %50 = arith.cmpi sge, %0, %49 : vector<1x1024xi32>
    %51 = arith.extui %50 : vector<1x1024xi1> to vector<1x1024xi32>
    %52 = arith.sitofp %51 : vector<1x1024xi32> to vector<1x1024xf32>
    %c32_i32_9 = arith.constant 32 : i32
    %53 = vector.broadcast %c32_i32_9 : i32 to vector<1x1024xi32>
    %54 = arith.cmpi sge, %0, %53 : vector<1x1024xi32>
    %c31_i32_10 = arith.constant 31 : i32
    %55 = vector.broadcast %c31_i32_10 : i32 to vector<1x1024xi32>
    %56 = arith.cmpi slt, %2, %55 : vector<1x1024xi32>
    %57 = arith.andi %54, %56 : vector<1x1024xi1>
    %58 = arith.extui %57 : vector<1x1024xi1> to vector<1x1024xi32>
    %59 = arith.sitofp %58 : vector<1x1024xi32> to vector<1x1024xf32>
    %c32_i32_11 = arith.constant 32 : i32
    %60 = vector.broadcast %c32_i32_11 : i32 to vector<1x1024xi32>
    %61 = arith.cmpi sge, %0, %60 : vector<1x1024xi32>
    %c30_i32_12 = arith.constant 30 : i32
    %62 = vector.broadcast %c30_i32_12 : i32 to vector<1x1024xi32>
    %63 = arith.cmpi slt, %2, %62 : vector<1x1024xi32>
    %64 = arith.andi %61, %63 : vector<1x1024xi1>
    %65 = arith.extui %64 : vector<1x1024xi1> to vector<1x1024xi32>
    %66 = arith.sitofp %65 : vector<1x1024xi32> to vector<1x1024xf32>
    %c2_i32_13 = arith.constant 2 : i32
    %67 = vector.broadcast %c2_i32_13 : i32 to vector<1x1024xi32>
    %68 = arith.cmpi sge, %2, %67 : vector<1x1024xi32>
    %69 = arith.extui %68 : vector<1x1024xi1> to vector<1x1024xi32>
    %70 = arith.sitofp %69 : vector<1x1024xi32> to vector<1x1024xf32>
    %c1_i32_14 = arith.constant 1 : i32
    %71 = vector.broadcast %c1_i32_14 : i32 to vector<1x1024xi32>
    %72 = arith.cmpi sge, %2, %71 : vector<1x1024xi32>
    %73 = arith.extui %72 : vector<1x1024xi1> to vector<1x1024xi32>
    %74 = arith.sitofp %73 : vector<1x1024xi32> to vector<1x1024xf32>
    %c31_i32_15 = arith.constant 31 : i32
    %75 = vector.broadcast %c31_i32_15 : i32 to vector<1x1024xi32>
    %76 = arith.cmpi slt, %2, %75 : vector<1x1024xi32>
    %77 = arith.extui %76 : vector<1x1024xi1> to vector<1x1024xi32>
    %78 = arith.sitofp %77 : vector<1x1024xi32> to vector<1x1024xf32>
    %c30_i32_16 = arith.constant 30 : i32
    %79 = vector.broadcast %c30_i32_16 : i32 to vector<1x1024xi32>
    %80 = arith.cmpi slt, %2, %79 : vector<1x1024xi32>
    %81 = arith.extui %80 : vector<1x1024xi1> to vector<1x1024xi32>
    %82 = arith.sitofp %81 : vector<1x1024xi32> to vector<1x1024xf32>
    %c992_i32 = arith.constant 992 : i32
    %83 = vector.broadcast %c992_i32 : i32 to vector<1x1024xi32>
    %84 = arith.cmpi slt, %0, %83 : vector<1x1024xi32>
    %c2_i32_17 = arith.constant 2 : i32
    %85 = vector.broadcast %c2_i32_17 : i32 to vector<1x1024xi32>
    %86 = arith.cmpi sge, %2, %85 : vector<1x1024xi32>
    %87 = arith.andi %84, %86 : vector<1x1024xi1>
    %88 = arith.extui %87 : vector<1x1024xi1> to vector<1x1024xi32>
    %89 = arith.sitofp %88 : vector<1x1024xi32> to vector<1x1024xf32>
    %c992_i32_18 = arith.constant 992 : i32
    %90 = vector.broadcast %c992_i32_18 : i32 to vector<1x1024xi32>
    %91 = arith.cmpi slt, %0, %90 : vector<1x1024xi32>
    %c1_i32_19 = arith.constant 1 : i32
    %92 = vector.broadcast %c1_i32_19 : i32 to vector<1x1024xi32>
    %93 = arith.cmpi sge, %2, %92 : vector<1x1024xi32>
    %94 = arith.andi %91, %93 : vector<1x1024xi1>
    %95 = arith.extui %94 : vector<1x1024xi1> to vector<1x1024xi32>
    %96 = arith.sitofp %95 : vector<1x1024xi32> to vector<1x1024xf32>
    %c992_i32_20 = arith.constant 992 : i32
    %97 = vector.broadcast %c992_i32_20 : i32 to vector<1x1024xi32>
    %98 = arith.cmpi slt, %0, %97 : vector<1x1024xi32>
    %99 = arith.extui %98 : vector<1x1024xi1> to vector<1x1024xi32>
    %100 = arith.sitofp %99 : vector<1x1024xi32> to vector<1x1024xf32>
    %c992_i32_21 = arith.constant 992 : i32
    %101 = vector.broadcast %c992_i32_21 : i32 to vector<1x1024xi32>
    %102 = arith.cmpi slt, %0, %101 : vector<1x1024xi32>
    %c31_i32_22 = arith.constant 31 : i32
    %103 = vector.broadcast %c31_i32_22 : i32 to vector<1x1024xi32>
    %104 = arith.cmpi slt, %2, %103 : vector<1x1024xi32>
    %105 = arith.andi %102, %104 : vector<1x1024xi1>
    %106 = arith.extui %105 : vector<1x1024xi1> to vector<1x1024xi32>
    %107 = arith.sitofp %106 : vector<1x1024xi32> to vector<1x1024xf32>
    %c992_i32_23 = arith.constant 992 : i32
    %108 = vector.broadcast %c992_i32_23 : i32 to vector<1x1024xi32>
    %109 = arith.cmpi slt, %0, %108 : vector<1x1024xi32>
    %c30_i32_24 = arith.constant 30 : i32
    %110 = vector.broadcast %c30_i32_24 : i32 to vector<1x1024xi32>
    %111 = arith.cmpi slt, %2, %110 : vector<1x1024xi32>
    %112 = arith.andi %109, %111 : vector<1x1024xi1>
    %113 = arith.extui %112 : vector<1x1024xi1> to vector<1x1024xi32>
    %114 = arith.sitofp %113 : vector<1x1024xi32> to vector<1x1024xf32>
    %c960_i32 = arith.constant 960 : i32
    %115 = vector.broadcast %c960_i32 : i32 to vector<1x1024xi32>
    %116 = arith.cmpi slt, %0, %115 : vector<1x1024xi32>
    %c2_i32_25 = arith.constant 2 : i32
    %117 = vector.broadcast %c2_i32_25 : i32 to vector<1x1024xi32>
    %118 = arith.cmpi sge, %2, %117 : vector<1x1024xi32>
    %119 = arith.andi %116, %118 : vector<1x1024xi1>
    %120 = arith.extui %119 : vector<1x1024xi1> to vector<1x1024xi32>
    %121 = arith.sitofp %120 : vector<1x1024xi32> to vector<1x1024xf32>
    %c960_i32_26 = arith.constant 960 : i32
    %122 = vector.broadcast %c960_i32_26 : i32 to vector<1x1024xi32>
    %123 = arith.cmpi slt, %0, %122 : vector<1x1024xi32>
    %c1_i32_27 = arith.constant 1 : i32
    %124 = vector.broadcast %c1_i32_27 : i32 to vector<1x1024xi32>
    %125 = arith.cmpi sge, %2, %124 : vector<1x1024xi32>
    %126 = arith.andi %123, %125 : vector<1x1024xi1>
    %127 = arith.extui %126 : vector<1x1024xi1> to vector<1x1024xi32>
    %128 = arith.sitofp %127 : vector<1x1024xi32> to vector<1x1024xf32>
    %c960_i32_28 = arith.constant 960 : i32
    %129 = vector.broadcast %c960_i32_28 : i32 to vector<1x1024xi32>
    %130 = arith.cmpi slt, %0, %129 : vector<1x1024xi32>
    %131 = arith.extui %130 : vector<1x1024xi1> to vector<1x1024xi32>
    %132 = arith.sitofp %131 : vector<1x1024xi32> to vector<1x1024xf32>
    %c960_i32_29 = arith.constant 960 : i32
    %133 = vector.broadcast %c960_i32_29 : i32 to vector<1x1024xi32>
    %134 = arith.cmpi slt, %0, %133 : vector<1x1024xi32>
    %c31_i32_30 = arith.constant 31 : i32
    %135 = vector.broadcast %c31_i32_30 : i32 to vector<1x1024xi32>
    %136 = arith.cmpi slt, %2, %135 : vector<1x1024xi32>
    %137 = arith.andi %134, %136 : vector<1x1024xi1>
    %138 = arith.extui %137 : vector<1x1024xi1> to vector<1x1024xi32>
    %139 = arith.sitofp %138 : vector<1x1024xi32> to vector<1x1024xf32>
    %c960_i32_31 = arith.constant 960 : i32
    %140 = vector.broadcast %c960_i32_31 : i32 to vector<1x1024xi32>
    %141 = arith.cmpi slt, %0, %140 : vector<1x1024xi32>
    %c30_i32_32 = arith.constant 30 : i32
    %142 = vector.broadcast %c30_i32_32 : i32 to vector<1x1024xi32>
    %143 = arith.cmpi slt, %2, %142 : vector<1x1024xi32>
    %144 = arith.andi %141, %143 : vector<1x1024xi1>
    %145 = arith.extui %144 : vector<1x1024xi1> to vector<1x1024xi32>
    %146 = arith.sitofp %145 : vector<1x1024xi32> to vector<1x1024xf32>
    %c0 = arith.constant 0 : index
    %c0_33 = arith.constant 0 : index
    %147 = vector.load %arg0[%c0, %c0_33] : memref<8x1024xf32, #tpu.memory_space<vmem>>, vector<8x1024xf32>
    %c66_i32 = arith.constant 66 : i32
    %148 = tpu.dynamic_rotate %147 by %c66_i32 dim 1 : vector<8x1024xf32>, i32 -> vector<8x1024xf32>
    %149 = vector.broadcast %9 : vector<1x1024xf32> to vector<8x1024xf32>
    %150 = arith.mulf %148, %149 : vector<8x1024xf32>
    %c65_i32 = arith.constant 65 : i32
    %151 = tpu.dynamic_rotate %147 by %c65_i32 dim 1 : vector<8x1024xf32>, i32 -> vector<8x1024xf32>
    %152 = vector.broadcast %16 : vector<1x1024xf32> to vector<8x1024xf32>
    %153 = arith.mulf %151, %152 : vector<8x1024xf32>
    %c64_i32_34 = arith.constant 64 : i32
    %154 = tpu.dynamic_rotate %147 by %c64_i32_34 dim 1 : vector<8x1024xf32>, i32 -> vector<8x1024xf32>
    %155 = vector.broadcast %20 : vector<1x1024xf32> to vector<8x1024xf32>
    %156 = arith.mulf %154, %155 : vector<8x1024xf32>
    %c63_i32 = arith.constant 63 : i32
    %157 = tpu.dynamic_rotate %147 by %c63_i32 dim 1 : vector<8x1024xf32>, i32 -> vector<8x1024xf32>
    %158 = vector.broadcast %27 : vector<1x1024xf32> to vector<8x1024xf32>
    %159 = arith.mulf %157, %158 : vector<8x1024xf32>
    %c62_i32 = arith.constant 62 : i32
    %160 = tpu.dynamic_rotate %147 by %c62_i32 dim 1 : vector<8x1024xf32>, i32 -> vector<8x1024xf32>
    %161 = vector.broadcast %34 : vector<1x1024xf32> to vector<8x1024xf32>
    %162 = arith.mulf %160, %161 : vector<8x1024xf32>
    %c34_i32 = arith.constant 34 : i32
    %163 = tpu.dynamic_rotate %147 by %c34_i32 dim 1 : vector<8x1024xf32>, i32 -> vector<8x1024xf32>
    %164 = vector.broadcast %41 : vector<1x1024xf32> to vector<8x1024xf32>
    %165 = arith.mulf %163, %164 : vector<8x1024xf32>
    %c33_i32 = arith.constant 33 : i32
    %166 = tpu.dynamic_rotate %147 by %c33_i32 dim 1 : vector<8x1024xf32>, i32 -> vector<8x1024xf32>
    %167 = vector.broadcast %48 : vector<1x1024xf32> to vector<8x1024xf32>
    %168 = arith.mulf %166, %167 : vector<8x1024xf32>
    %c32_i32_35 = arith.constant 32 : i32
    %169 = tpu.dynamic_rotate %147 by %c32_i32_35 dim 1 : vector<8x1024xf32>, i32 -> vector<8x1024xf32>
    %170 = vector.broadcast %52 : vector<1x1024xf32> to vector<8x1024xf32>
    %171 = arith.mulf %169, %170 : vector<8x1024xf32>
    %c31_i32_36 = arith.constant 31 : i32
    %172 = tpu.dynamic_rotate %147 by %c31_i32_36 dim 1 : vector<8x1024xf32>, i32 -> vector<8x1024xf32>
    %173 = vector.broadcast %59 : vector<1x1024xf32> to vector<8x1024xf32>
    %174 = arith.mulf %172, %173 : vector<8x1024xf32>
    %c30_i32_37 = arith.constant 30 : i32
    %175 = tpu.dynamic_rotate %147 by %c30_i32_37 dim 1 : vector<8x1024xf32>, i32 -> vector<8x1024xf32>
    %176 = vector.broadcast %66 : vector<1x1024xf32> to vector<8x1024xf32>
    %177 = arith.mulf %175, %176 : vector<8x1024xf32>
    %c2_i32_38 = arith.constant 2 : i32
    %178 = tpu.dynamic_rotate %147 by %c2_i32_38 dim 1 : vector<8x1024xf32>, i32 -> vector<8x1024xf32>
    %179 = vector.broadcast %70 : vector<1x1024xf32> to vector<8x1024xf32>
    %180 = arith.mulf %178, %179 : vector<8x1024xf32>
    %c1_i32_39 = arith.constant 1 : i32
    %181 = tpu.dynamic_rotate %147 by %c1_i32_39 dim 1 : vector<8x1024xf32>, i32 -> vector<8x1024xf32>
    %182 = vector.broadcast %74 : vector<1x1024xf32> to vector<8x1024xf32>
    %183 = arith.mulf %181, %182 : vector<8x1024xf32>
    %c1023_i32 = arith.constant 1023 : i32
    %184 = tpu.dynamic_rotate %147 by %c1023_i32 dim 1 : vector<8x1024xf32>, i32 -> vector<8x1024xf32>
    %185 = vector.broadcast %78 : vector<1x1024xf32> to vector<8x1024xf32>
    %186 = arith.mulf %184, %185 : vector<8x1024xf32>
    %c1022_i32 = arith.constant 1022 : i32
    %187 = tpu.dynamic_rotate %147 by %c1022_i32 dim 1 : vector<8x1024xf32>, i32 -> vector<8x1024xf32>
    %188 = vector.broadcast %82 : vector<1x1024xf32> to vector<8x1024xf32>
    %189 = arith.mulf %187, %188 : vector<8x1024xf32>
    %c994_i32 = arith.constant 994 : i32
    %190 = tpu.dynamic_rotate %147 by %c994_i32 dim 1 : vector<8x1024xf32>, i32 -> vector<8x1024xf32>
    %191 = vector.broadcast %89 : vector<1x1024xf32> to vector<8x1024xf32>
    %192 = arith.mulf %190, %191 : vector<8x1024xf32>
    %c993_i32 = arith.constant 993 : i32
    %193 = tpu.dynamic_rotate %147 by %c993_i32 dim 1 : vector<8x1024xf32>, i32 -> vector<8x1024xf32>
    %194 = vector.broadcast %96 : vector<1x1024xf32> to vector<8x1024xf32>
    %195 = arith.mulf %193, %194 : vector<8x1024xf32>
    %c992_i32_40 = arith.constant 992 : i32
    %196 = tpu.dynamic_rotate %147 by %c992_i32_40 dim 1 : vector<8x1024xf32>, i32 -> vector<8x1024xf32>
    %197 = vector.broadcast %100 : vector<1x1024xf32> to vector<8x1024xf32>
    %198 = arith.mulf %196, %197 : vector<8x1024xf32>
    %c991_i32 = arith.constant 991 : i32
    %199 = tpu.dynamic_rotate %147 by %c991_i32 dim 1 : vector<8x1024xf32>, i32 -> vector<8x1024xf32>
    %200 = vector.broadcast %107 : vector<1x1024xf32> to vector<8x1024xf32>
    %201 = arith.mulf %199, %200 : vector<8x1024xf32>
    %c990_i32 = arith.constant 990 : i32
    %202 = tpu.dynamic_rotate %147 by %c990_i32 dim 1 : vector<8x1024xf32>, i32 -> vector<8x1024xf32>
    %203 = vector.broadcast %114 : vector<1x1024xf32> to vector<8x1024xf32>
    %204 = arith.mulf %202, %203 : vector<8x1024xf32>
    %c962_i32 = arith.constant 962 : i32
    %205 = tpu.dynamic_rotate %147 by %c962_i32 dim 1 : vector<8x1024xf32>, i32 -> vector<8x1024xf32>
    %206 = vector.broadcast %121 : vector<1x1024xf32> to vector<8x1024xf32>
    %207 = arith.mulf %205, %206 : vector<8x1024xf32>
    %c961_i32 = arith.constant 961 : i32
    %208 = tpu.dynamic_rotate %147 by %c961_i32 dim 1 : vector<8x1024xf32>, i32 -> vector<8x1024xf32>
    %209 = vector.broadcast %128 : vector<1x1024xf32> to vector<8x1024xf32>
    %210 = arith.mulf %208, %209 : vector<8x1024xf32>
    %c960_i32_41 = arith.constant 960 : i32
    %211 = tpu.dynamic_rotate %147 by %c960_i32_41 dim 1 : vector<8x1024xf32>, i32 -> vector<8x1024xf32>
    %212 = vector.broadcast %132 : vector<1x1024xf32> to vector<8x1024xf32>
    %213 = arith.mulf %211, %212 : vector<8x1024xf32>
    %c959_i32 = arith.constant 959 : i32
    %214 = tpu.dynamic_rotate %147 by %c959_i32 dim 1 : vector<8x1024xf32>, i32 -> vector<8x1024xf32>
    %215 = vector.broadcast %139 : vector<1x1024xf32> to vector<8x1024xf32>
    %216 = arith.mulf %214, %215 : vector<8x1024xf32>
    %c958_i32 = arith.constant 958 : i32
    %217 = tpu.dynamic_rotate %147 by %c958_i32 dim 1 : vector<8x1024xf32>, i32 -> vector<8x1024xf32>
    %218 = vector.broadcast %146 : vector<1x1024xf32> to vector<8x1024xf32>
    %219 = arith.mulf %217, %218 : vector<8x1024xf32>
    %220 = tpu.concatenate %150, %153, %156, %159, %162, %165, %168, %171, %174, %177, %180, %183, %147, %186, %189, %192 in 0 : vector<8x1024xf32>, vector<8x1024xf32>, vector<8x1024xf32>, vector<8x1024xf32>, vector<8x1024xf32>, vector<8x1024xf32>, vector<8x1024xf32>, vector<8x1024xf32>, vector<8x1024xf32>, vector<8x1024xf32>, vector<8x1024xf32>, vector<8x1024xf32>, vector<8x1024xf32>, vector<8x1024xf32>, vector<8x1024xf32>, vector<8x1024xf32> -> vector<128x1024xf32>
    %221 = tpu.concatenate %195, %198, %201, %204, %207, %210, %213, %216, %219 in 0 : vector<8x1024xf32>, vector<8x1024xf32>, vector<8x1024xf32>, vector<8x1024xf32>, vector<8x1024xf32>, vector<8x1024xf32>, vector<8x1024xf32>, vector<8x1024xf32>, vector<8x1024xf32> -> vector<72x1024xf32>
    %222 = tpu.concatenate %220, %221 in 0 : vector<128x1024xf32>, vector<72x1024xf32> -> vector<200x1024xf32>
    %c0_42 = arith.constant 0 : index
    %c0_43 = arith.constant 0 : index
    %223 = vector.load %arg1[%c0_42, %c0_43] : memref<16x200xbf16, #tpu.memory_space<vmem>>, vector<16x200xbf16>
    %224 = arith.truncf %222 : vector<200x1024xf32> to vector<200x1024xbf16>
    %cst = arith.constant dense<0.000000e+00> : vector<16x1024xf32>
    %225 = tpu.matmul %223, %224, %cst {dimension_numbers = #tpu.dot_dimension_numbers<[1], [0], [0], [1], [0, 0, 1, 1], [], []>} : vector<16x200xbf16>, vector<200x1024xbf16>, vector<16x1024xf32> -> vector<16x1024xf32>
    %cst_44 = arith.constant 0.000000e+00 : f32
    %226 = vector.broadcast %cst_44 : f32 to vector<16x1024xf32>
    %227 = arith.maximumf %225, %226 : vector<16x1024xf32>
    %c33_i32_45 = arith.constant 33 : i32
    %228 = tpu.dynamic_rotate %227 by %c33_i32_45 dim 1 : vector<16x1024xf32>, i32 -> vector<16x1024xf32>
    %229 = vector.broadcast %48 : vector<1x1024xf32> to vector<16x1024xf32>
    %230 = arith.mulf %228, %229 : vector<16x1024xf32>
    %c32_i32_46 = arith.constant 32 : i32
    %231 = tpu.dynamic_rotate %227 by %c32_i32_46 dim 1 : vector<16x1024xf32>, i32 -> vector<16x1024xf32>
    %232 = vector.broadcast %52 : vector<1x1024xf32> to vector<16x1024xf32>
    %233 = arith.mulf %231, %232 : vector<16x1024xf32>
    %c31_i32_47 = arith.constant 31 : i32
    %234 = tpu.dynamic_rotate %227 by %c31_i32_47 dim 1 : vector<16x1024xf32>, i32 -> vector<16x1024xf32>
    %235 = vector.broadcast %59 : vector<1x1024xf32> to vector<16x1024xf32>
    %236 = arith.mulf %234, %235 : vector<16x1024xf32>
    %c1_i32_48 = arith.constant 1 : i32
    %237 = tpu.dynamic_rotate %227 by %c1_i32_48 dim 1 : vector<16x1024xf32>, i32 -> vector<16x1024xf32>
    %238 = vector.broadcast %74 : vector<1x1024xf32> to vector<16x1024xf32>
    %239 = arith.mulf %237, %238 : vector<16x1024xf32>
    %c1023_i32_49 = arith.constant 1023 : i32
    %240 = tpu.dynamic_rotate %227 by %c1023_i32_49 dim 1 : vector<16x1024xf32>, i32 -> vector<16x1024xf32>
    %241 = vector.broadcast %78 : vector<1x1024xf32> to vector<16x1024xf32>
    %242 = arith.mulf %240, %241 : vector<16x1024xf32>
    %c993_i32_50 = arith.constant 993 : i32
    %243 = tpu.dynamic_rotate %227 by %c993_i32_50 dim 1 : vector<16x1024xf32>, i32 -> vector<16x1024xf32>
    %244 = vector.broadcast %96 : vector<1x1024xf32> to vector<16x1024xf32>
    %245 = arith.mulf %243, %244 : vector<16x1024xf32>
    %c992_i32_51 = arith.constant 992 : i32
    %246 = tpu.dynamic_rotate %227 by %c992_i32_51 dim 1 : vector<16x1024xf32>, i32 -> vector<16x1024xf32>
    %247 = vector.broadcast %100 : vector<1x1024xf32> to vector<16x1024xf32>
    %248 = arith.mulf %246, %247 : vector<16x1024xf32>
    %c991_i32_52 = arith.constant 991 : i32
    %249 = tpu.dynamic_rotate %227 by %c991_i32_52 dim 1 : vector<16x1024xf32>, i32 -> vector<16x1024xf32>
    %250 = vector.broadcast %107 : vector<1x1024xf32> to vector<16x1024xf32>
    %251 = arith.mulf %249, %250 : vector<16x1024xf32>
    %252 = tpu.concatenate %230, %233, %236, %239, %227, %242, %245, %248, %251 in 0 : vector<16x1024xf32>, vector<16x1024xf32>, vector<16x1024xf32>, vector<16x1024xf32>, vector<16x1024xf32>, vector<16x1024xf32>, vector<16x1024xf32>, vector<16x1024xf32>, vector<16x1024xf32> -> vector<144x1024xf32>
    %c0_53 = arith.constant 0 : index
    %c0_54 = arith.constant 0 : index
    %253 = vector.load %arg2[%c0_53, %c0_54] : memref<72x144xbf16, #tpu.memory_space<vmem>>, vector<72x144xbf16>
    %254 = arith.truncf %252 : vector<144x1024xf32> to vector<144x1024xbf16>
    %cst_55 = arith.constant dense<0.000000e+00> : vector<72x1024xf32>
    %255 = tpu.matmul %253, %254, %cst_55 {dimension_numbers = #tpu.dot_dimension_numbers<[1], [0], [0], [1], [0, 0, 1, 1], [], []>} : vector<72x144xbf16>, vector<144x1024xbf16>, vector<72x1024xf32> -> vector<72x1024xf32>
    %cst_56 = arith.constant 0.000000e+00 : f32
    %256 = vector.broadcast %cst_56 : f32 to vector<72x1024xf32>
    %257 = arith.maximumf %255, %256 : vector<72x1024xf32>
    %c33_i32_57 = arith.constant 33 : i32
    %258 = tpu.dynamic_rotate %257 by %c33_i32_57 dim 1 : vector<72x1024xf32>, i32 -> vector<72x1024xf32>
    %259 = vector.broadcast %48 : vector<1x1024xf32> to vector<72x1024xf32>
    %260 = arith.mulf %258, %259 : vector<72x1024xf32>
    %c32_i32_58 = arith.constant 32 : i32
    %261 = tpu.dynamic_rotate %257 by %c32_i32_58 dim 1 : vector<72x1024xf32>, i32 -> vector<72x1024xf32>
    %262 = vector.broadcast %52 : vector<1x1024xf32> to vector<72x1024xf32>
    %263 = arith.mulf %261, %262 : vector<72x1024xf32>
    %c31_i32_59 = arith.constant 31 : i32
    %264 = tpu.dynamic_rotate %257 by %c31_i32_59 dim 1 : vector<72x1024xf32>, i32 -> vector<72x1024xf32>
    %265 = vector.broadcast %59 : vector<1x1024xf32> to vector<72x1024xf32>
    %266 = arith.mulf %264, %265 : vector<72x1024xf32>
    %c1_i32_60 = arith.constant 1 : i32
    %267 = tpu.dynamic_rotate %257 by %c1_i32_60 dim 1 : vector<72x1024xf32>, i32 -> vector<72x1024xf32>
    %268 = vector.broadcast %74 : vector<1x1024xf32> to vector<72x1024xf32>
    %269 = arith.mulf %267, %268 : vector<72x1024xf32>
    %c1023_i32_61 = arith.constant 1023 : i32
    %270 = tpu.dynamic_rotate %257 by %c1023_i32_61 dim 1 : vector<72x1024xf32>, i32 -> vector<72x1024xf32>
    %271 = vector.broadcast %78 : vector<1x1024xf32> to vector<72x1024xf32>
    %272 = arith.mulf %270, %271 : vector<72x1024xf32>
    %c993_i32_62 = arith.constant 993 : i32
    %273 = tpu.dynamic_rotate %257 by %c993_i32_62 dim 1 : vector<72x1024xf32>, i32 -> vector<72x1024xf32>
    %274 = vector.broadcast %96 : vector<1x1024xf32> to vector<72x1024xf32>
    %275 = arith.mulf %273, %274 : vector<72x1024xf32>
    %c992_i32_63 = arith.constant 992 : i32
    %276 = tpu.dynamic_rotate %257 by %c992_i32_63 dim 1 : vector<72x1024xf32>, i32 -> vector<72x1024xf32>
    %277 = vector.broadcast %100 : vector<1x1024xf32> to vector<72x1024xf32>
    %278 = arith.mulf %276, %277 : vector<72x1024xf32>
    %c991_i32_64 = arith.constant 991 : i32
    %279 = tpu.dynamic_rotate %257 by %c991_i32_64 dim 1 : vector<72x1024xf32>, i32 -> vector<72x1024xf32>
    %280 = vector.broadcast %107 : vector<1x1024xf32> to vector<72x1024xf32>
    %281 = arith.mulf %279, %280 : vector<72x1024xf32>
    %282 = tpu.concatenate %260, %263, %266, %269, %257, %272, %275, %278, %281 in 0 : vector<72x1024xf32>, vector<72x1024xf32>, vector<72x1024xf32>, vector<72x1024xf32>, vector<72x1024xf32>, vector<72x1024xf32>, vector<72x1024xf32>, vector<72x1024xf32>, vector<72x1024xf32> -> vector<648x1024xf32>
    %c0_65 = arith.constant 0 : index
    %c0_66 = arith.constant 0 : index
    %283 = vector.load %arg3[%c0_65, %c0_66] : memref<16x648xbf16, #tpu.memory_space<vmem>>, vector<16x648xbf16>
    %284 = arith.truncf %282 : vector<648x1024xf32> to vector<648x1024xbf16>
    %cst_67 = arith.constant dense<0.000000e+00> : vector<16x1024xf32>
    %285 = tpu.matmul %283, %284, %cst_67 {dimension_numbers = #tpu.dot_dimension_numbers<[1], [0], [0], [1], [0, 0, 1, 1], [], []>} : vector<16x648xbf16>, vector<648x1024xbf16>, vector<16x1024xf32> -> vector<16x1024xf32>
    %cst_68 = arith.constant 0.000000e+00 : f32
    %286 = vector.broadcast %cst_68 : f32 to vector<16x1024xf32>
    %287 = arith.maximumf %285, %286 : vector<16x1024xf32>
    %288 = arith.truncf %287 : vector<16x1024xf32> to vector<16x1024xbf16>
    %c0_69 = arith.constant 0 : index
    %c0_70 = arith.constant 0 : index
    %289 = vector.load %arg4[%c0_69, %c0_70] : memref<1024x128xbf16, #tpu.memory_space<vmem>>, vector<1024x128xbf16>
    %cst_71 = arith.constant dense<0.000000e+00> : vector<16x128xf32>
    %290 = tpu.matmul %288, %289, %cst_71 {dimension_numbers = #tpu.dot_dimension_numbers<[1], [0], [0], [1], [0, 0, 1, 1], [], []>} : vector<16x1024xbf16>, vector<1024x128xbf16>, vector<16x128xf32> -> vector<16x128xf32>
    %c0_72 = arith.constant 0 : index
    %c0_73 = arith.constant 0 : index
    %291 = vector.load %arg5[%c0_72, %c0_73] : memref<16x128xf32, #tpu.memory_space<vmem>>, vector<16x128xf32>
    %292 = arith.mulf %290, %291 : vector<16x128xf32>
    %cst_74 = arith.constant dense<0.000000e+00> : vector<128xf32>
    %293 = vector.multi_reduction <add>, %292, %cst_74 [0] : vector<16x128xf32> to vector<128xf32>
    %294 = vector.shape_cast %293 : vector<128xf32> to vector<1x128xf32>
    %c0_75 = arith.constant 0 : index
    %c0_76 = arith.constant 0 : index
    %295 = vector.load %arg6[%c0_75, %c0_76] : memref<128x10xf32, #tpu.memory_space<vmem>>, vector<128x10xf32>
    %cst_77 = arith.constant dense<0.000000e+00> : vector<1x10xf32>
    %296 = tpu.matmul %294, %295, %cst_77 {dimension_numbers = #tpu.dot_dimension_numbers<[1], [0], [0], [1], [0, 0, 1, 1], [], []>} : vector<1x128xf32>, vector<128x10xf32>, vector<1x10xf32> -> vector<1x10xf32>
    %c0_78 = arith.constant 0 : index
    %c0_79 = arith.constant 0 : index
    %297 = vector.load %arg7[%c0_78, %c0_79] : memref<1x10xf32, #tpu.memory_space<vmem>>, vector<1x10xf32>
    tpu.vector_store %arg7[%c0_78, %c0_79], %296 {strides = array<i32>} : memref<1x10xf32, #tpu.memory_space<vmem>>, vector<1x10xf32>,
    return
  }
}

</mosaic_0001>

<llo_original>
// kernel: squeeze.1
$region0: #{squeeze.1}
  %s0 = inlined_call_operand.hbm [shape: f32[1,3,32,32], index: 0, kind: input, shape index: {}]
  %s1 = inlined_call_operand.vmem [shape: f32[3,1024], index: 1, kind: output, shape index: {}]
  $region1: #{squeeze.1} parent=0
    #allocation0 [shape = 'u8[49152]{0}', space=vmem, size = 0xc000, scoped, tag = 'operand span for operand 0']
    #allocation1 [shape = 's32[1]{0}', space=sflag, size = 0x4, scoped, tag = 'scoped memory for squeeze.1']
    #allocation2 [shape = 'u8[32768]{0}', space=vmem, size = 0x8000, scoped, tag = 'scoped mem for output reshape']
    %2 = vsyncpa [#allocation1], 0
    %s4 = ssub.s32 1536, 1536
    %5 = vsyncadd [#allocation1], %s4
    %s7 = sshll.u32 [#allocation0], 4
    %s8 = int_to_ptr.vmem [resolvable:$true] %s7
    %10 = dma.hbm_to_vmem [thread:$0]  %s0, 1536, %s8, [#allocation1]
    %11 = dma.done [#allocation1], 1536
    %v12 = vld [vmem:[#allocation0] ss:$4 sm:$0xff]
    %vm13 = vcmask 261120
    %14 = vst.msk [vmem:[#allocation2] ss:$8 sm:$0xf] %vm13, %v12
    %15 = vst.msk [vmem:[#allocation2] ss:$8 sm:$0xf0] %vm13, %v12
    %s16 = scalar_lea.vmem [#allocation0], 32
    %v17 = vld [vmem:[%s16] ss:$4 sm:$0xff]
    %vm18 = vcmask 261120
    %s19 = scalar_lea.vmem [#allocation2], 1
    %20 = vst.msk [vmem:[%s19] ss:$8 sm:$0xf] %vm18, %v17
    %s21 = scalar_lea.vmem [#allocation2], 1
    %22 = vst.msk [vmem:[%s21] ss:$8 sm:$0xf0] %vm18, %v17
    %s23 = scalar_lea.vmem [#allocation0], 64
    %v24 = vld [vmem:[%s23] ss:$4 sm:$0xff]
    %vm25 = vcmask 261120
    %s26 = scalar_lea.vmem [#allocation2], 2
    %27 = vst.msk [vmem:[%s26] ss:$8 sm:$0xf] %vm25, %v24
    %s28 = scalar_lea.vmem [#allocation2], 2
    %29 = vst.msk [vmem:[%s28] ss:$8 sm:$0xf0] %vm25, %v24
    %s30 = scalar_lea.vmem [#allocation0], 3
    %v31 = vld [vmem:[%s30] sm:$0x1]
    %s32 = scalar_lea.vmem [#allocation0], 34
    %v33 = vld [vmem:[%s32] sm:$0x2]
    %vm34 = vcmask 1041409
    %v35 = vsel %vm34, %v33, %v31
    %s36 = scalar_lea.vmem [#allocation0], 187
    %s37 = smov 12
    %v38 = vld [vmem:[%s36] ss:$-60 sm:%s37]
    %vm39 = vcmask 1043458
    %v40 = vsel %vm39, %v38, %v35
    %s41 = scalar_lea.vmem [#allocation0], 35
    %v42 = vld [vmem:[%s41] sm:$0x10]
    %vm43 = vcmask 1044484
    %v44 = vsel %vm43, %v42, %v40
    %s45 = scalar_lea.vmem [#allocation0], 371
    %s46 = smov 96
    %v47 = vld [vmem:[%s45] ss:$-60 sm:%s46]
    %vm48 = vcmask 1046533
    %v49 = vsel %vm48, %v47, %v44
    %s50 = scalar_lea.vmem [#allocation0], 36
    %v51 = vld [vmem:[%s50] sm:$0x80]
    %vm52 = vcmask 1047559
    %v53 = vsel %vm52, %v51, %v49
    %54 = vrot.lane.b32.xlu0 %v53, 96
    %v55 = vpop.permute.xlu0 %54
    %vm56 = vcmask 1048320
    %57 = vst.msk [vmem:[#allocation2] sm:$0x7] %vm56, %v55
    %s58 = scalar_lea.vmem [#allocation2], 5
    %59 = vst.msk [vmem:[%s58] sm:$0x38] %vm56, %v55
    %s60 = scalar_lea.vmem [#allocation2], 10
    %61 = vst.msk [vmem:[%s60] sm:$0xc0] %vm56, %v55
    %s62 = scalar_lea.vmem [#allocation0], 19
    %v63 = vld [vmem:[%s62] sm:$0x1]
    %s64 = scalar_lea.vmem [#allocation0], 50
    %v65 = vld [vmem:[%s64] sm:$0x2]
    %vm66 = vcmask 1041409
    %v67 = vsel %vm66, %v65, %v63
    %s68 = scalar_lea.vmem [#allocation0], 203
    %s69 = smov 12
    %v70 = vld [vmem:[%s68] ss:$-60 sm:%s69]
    %vm71 = vcmask 1043458
    %v72 = vsel %vm71, %v70, %v67
    %s73 = scalar_lea.vmem [#allocation0], 51
    %v74 = vld [vmem:[%s73] sm:$0x10]
    %vm75 = vcmask 1044484
    %v76 = vsel %vm75, %v74, %v72
    %s77 = scalar_lea.vmem [#allocation0], 387
    %s78 = smov 96
    %v79 = vld [vmem:[%s77] ss:$-60 sm:%s78]
    %vm80 = vcmask 1046533
    %v81 = vsel %vm80, %v79, %v76
    %s82 = scalar_lea.vmem [#allocation0], 52
    %v83 = vld [vmem:[%s82] sm:$0x80]
    %vm84 = vcmask 1047559
    %v85 = vsel %vm84, %v83, %v81
    %86 = vrot.lane.b32.xlu0 %v85, 96
    %v87 = vpop.permute.xlu0 %86
    %vm88 = vcmask 1048320
    %s89 = scalar_lea.vmem [#allocation2], 32
    %90 = vst.msk [vmem:[%s89] sm:$0x7] %vm88, %v87
    %s91 = scalar_lea.vmem [#allocation2], 37
    %92 = vst.msk [vmem:[%s91] sm:$0x38] %vm88, %v87
    %s93 = scalar_lea.vmem [#allocation2], 42
    %94 = vst.msk [vmem:[%s93] sm:$0xc0] %vm88, %v87
    %s95 = scalar_lea.vmem [#allocation0], 75
    %s96 = smov 3
    %v97 = vld [vmem:[%s95] ss:$-60 sm:%s96]
    %s98 = scalar_lea.vmem [#allocation0], 45
    %v99 = vld [vmem:[%s98] sm:$0x4]
    %vm100 = vcmask 1042434
    %v101 = vsel %vm100, %v99, %v97
    %s102 = scalar_lea.vmem [#allocation0], 43
    %s103 = smov 24
    %v104 = vld [vmem:[%s102] ss:$12 sm:%s103]
    %vm105 = vcmask 1044483
    %v106 = vsel %vm105, %v104, %v101
    %s107 = scalar_lea.vmem [#allocation0], 26
    %v108 = vld [vmem:[%s107] sm:$0x20]
    %vm109 = vcmask 1045509
    %v110 = vsel %vm109, %v108, %v106
    %s111 = scalar_lea.vmem [#allocation0], 57
    %v112 = vld [vmem:[%s111] sm:$0x40]
    %vm113 = vcmask 1046534
    %v114 = vsel %vm113, %v112, %v110
    %s115 = scalar_lea.vmem [#allocation0], 88
    %v116 = vld [vmem:[%s115] sm:$0x80]
    %vm117 = vcmask 1047559
    %v118 = vsel %vm117, %v116, %v114
    %119 = vrot.lane.b32.xlu0 %v118, 96
    %v120 = vpop.permute.xlu0 %119
    %vm121 = vcmask 1048320
    %s122 = scalar_lea.vmem [#allocation2], 18
    %123 = vst.msk [vmem:[%s122] ss:$6 sm:$0x3] %vm121, %v120
    %s124 = scalar_lea.vmem [#allocation2], 23
    %125 = vst.msk [vmem:[%s124] sm:$0xc] %vm121, %v120
    %s126 = scalar_lea.vmem [#allocation2], 26
    %127 = vst.msk [vmem:[%s126] ss:$6 sm:$0x30] %vm121, %v120
    %s128 = scalar_lea.vmem [#allocation2], 51
    %129 = vst.msk [vmem:[%s128] sm:$0xc0] %vm121, %v120
    %s130 = scalar_lea.vmem [#allocation0], 2
    %v131 = vld [vmem:[%s130] sm:$0x1]
    %s132 = scalar_lea.vmem [#allocation0], 33
    %v133 = vld [vmem:[%s132] sm:$0x2]
    %vm134 = vcmask 1041409
    %v135 = vsel %vm134, %v133, %v131
    %s136 = scalar_lea.vmem [#allocation0], 186
    %s137 = smov 12
    %v138 = vld [vmem:[%s136] ss:$-60 sm:%s137]
    %vm139 = vcmask 1043458
    %v140 = vsel %vm139, %v138, %v135
    %s141 = scalar_lea.vmem [#allocation0], 34
    %v142 = vld [vmem:[%s141] sm:$0x10]
    %vm143 = vcmask 1044484
    %v144 = vsel %vm143, %v142, %v140
    %s145 = scalar_lea.vmem [#allocation0], 370
    %s146 = smov 96
    %v147 = vld [vmem:[%s145] ss:$-60 sm:%s146]
    %vm148 = vcmask 1046533
    %v149 = vsel %vm148, %v147, %v144
    %s150 = scalar_lea.vmem [#allocation0], 35
    %v151 = vld [vmem:[%s150] sm:$0x80]
    %vm152 = vcmask 1047559
    %v153 = vsel %vm152, %v151, %v149
    %154 = vrot.lane.b32.xlu0 %v153, 64
    %v155 = vpop.permute.xlu0 %154
    %vm156 = vcmask 785920
    %157 = vst.msk [vmem:[#allocation2] sm:$0x7] %vm156, %v155
    %s158 = scalar_lea.vmem [#allocation2], 5
    %159 = vst.msk [vmem:[%s158] sm:$0x38] %vm156, %v155
    %s160 = scalar_lea.vmem [#allocation2], 10
    %161 = vst.msk [vmem:[%s160] sm:$0xc0] %vm156, %v155
    %s162 = scalar_lea.vmem [#allocation0], 18
    %v163 = vld [vmem:[%s162] sm:$0x1]
    %s164 = scalar_lea.vmem [#allocation0], 49
    %v165 = vld [vmem:[%s164] sm:$0x2]
    %vm166 = vcmask 1041409
    %v167 = vsel %vm166, %v165, %v163
    %s168 = scalar_lea.vmem [#allocation0], 202
    %s169 = smov 12
    %v170 = vld [vmem:[%s168] ss:$-60 sm:%s169]
    %vm171 = vcmask 1043458
    %v172 = vsel %vm171, %v170, %v167
    %s173 = scalar_lea.vmem [#allocation0], 50
    %v174 = vld [vmem:[%s173] sm:$0x10]
    %vm175 = vcmask 1044484
    %v176 = vsel %vm175, %v174, %v172
    %s177 = scalar_lea.vmem [#allocation0], 386
    %s178 = smov 96
    %v179 = vld [vmem:[%s177] ss:$-60 sm:%s178]
    %vm180 = vcmask 1046533
    %v181 = vsel %vm180, %v179, %v176
    %s182 = scalar_lea.vmem [#allocation0], 51
    %v183 = vld [vmem:[%s182] sm:$0x80]
    %vm184 = vcmask 1047559
    %v185 = vsel %vm184, %v183, %v181
    %186 = vrot.lane.b32.xlu0 %v185, 64
    %v187 = vpop.permute.xlu0 %186
    %vm188 = vcmask 785920
    %s189 = scalar_lea.vmem [#allocation2], 32
    %190 = vst.msk [vmem:[%s189] sm:$0x7] %vm188, %v187
    %s191 = scalar_lea.vmem [#allocation2], 37
    %192 = vst.msk [vmem:[%s191] sm:$0x38] %vm188, %v187
    %s193 = scalar_lea.vmem [#allocation2], 42
    %194 = vst.msk [vmem:[%s193] sm:$0xc0] %vm188, %v187
    %s195 = scalar_lea.vmem [#allocation0], 74
    %s196 = smov 3
    %v197 = vld [vmem:[%s195] ss:$-60 sm:%s196]
    %s198 = scalar_lea.vmem [#allocation0], 44
    %v199 = vld [vmem:[%s198] sm:$0x4]
    %vm200 = vcmask 1042434
    %v201 = vsel %vm200, %v199, %v197
    %s202 = scalar_lea.vmem [#allocation0], 42
    %s203 = smov 24
    %v204 = vld [vmem:[%s202] ss:$12 sm:%s203]
    %vm205 = vcmask 1044483
    %v206 = vsel %vm205, %v204, %v201
    %s207 = scalar_lea.vmem [#allocation0], 25
    %v208 = vld [vmem:[%s207] sm:$0x20]
    %vm209 = vcmask 1045509
    %v210 = vsel %vm209, %v208, %v206
    %s211 = scalar_lea.vmem [#allocation0], 56
    %v212 = vld [vmem:[%s211] sm:$0x40]
    %vm213 = vcmask 1046534
    %v214 = vsel %vm213, %v212, %v210
    %s215 = scalar_lea.vmem [#allocation0], 87
    %v216 = vld [vmem:[%s215] sm:$0x80]
    %vm217 = vcmask 1047559
    %v218 = vsel %vm217, %v216, %v214
    %219 = vrot.lane.b32.xlu0 %v218, 64
    %v220 = vpop.permute.xlu0 %219
    %vm221 = vcmask 785920
    %s222 = scalar_lea.vmem [#allocation2], 18
    %223 = vst.msk [vmem:[%s222] ss:$6 sm:$0x3] %vm221, %v220
    %s224 = scalar_lea.vmem [#allocation2], 23
    %225 = vst.msk [vmem:[%s224] sm:$0xc] %vm221, %v220
    %s226 = scalar_lea.vmem [#allocation2], 26
    %227 = vst.msk [vmem:[%s226] ss:$6 sm:$0x30] %vm221, %v220
    %s228 = scalar_lea.vmem [#allocation2], 51
    %229 = vst.msk [vmem:[%s228] sm:$0xc0] %vm221, %v220
    %s230 = scalar_lea.vmem [#allocation0], 1
    %v231 = vld [vmem:[%s230] sm:$0x1]
    %s232 = scalar_lea.vmem [#allocation0], 32
    %v233 = vld [vmem:[%s232] sm:$0x2]
    %vm234 = vcmask 1041409
    %v235 = vsel %vm234, %v233, %v231
    %s236 = scalar_lea.vmem [#allocation0], 185
    %s237 = smov 12
    %v238 = vld [vmem:[%s236] ss:$-60 sm:%s237]
    %vm239 = vcmask 1043458
    %v240 = vsel %vm239, %v238, %v235
    %s241 = scalar_lea.vmem [#allocation0], 33
    %v242 = vld [vmem:[%s241] sm:$0x10]
    %vm243 = vcmask 1044484
    %v244 = vsel %vm243, %v242, %v240
    %s245 = scalar_lea.vmem [#allocation0], 369
    %s246 = smov 96
    %v247 = vld [vmem:[%s245] ss:$-60 sm:%s246]
    %vm248 = vcmask 1046533
    %v249 = vsel %vm248, %v247, %v244
    %s250 = scalar_lea.vmem [#allocation0], 34
    %v251 = vld [vmem:[%s250] sm:$0x80]
    %vm252 = vcmask 1047559
    %v253 = vsel %vm252, %v251, %v249
    %254 = vrot.lane.b32.xlu0 %v253, 32
    %v255 = vpop.permute.xlu0 %254
    %vm256 = vcmask 523520
    %257 = vst.msk [vmem:[#allocation2] sm:$0x7] %vm256, %v255
    %s258 = scalar_lea.vmem [#allocation2], 5
    %259 = vst.msk [vmem:[%s258] sm:$0x38] %vm256, %v255
    %s260 = scalar_lea.vmem [#allocation2], 10
    %261 = vst.msk [vmem:[%s260] sm:$0xc0] %vm256, %v255
    %s262 = scalar_lea.vmem [#allocation0], 17
    %v263 = vld [vmem:[%s262] sm:$0x1]
    %s264 = scalar_lea.vmem [#allocation0], 48
    %v265 = vld [vmem:[%s264] sm:$0x2]
    %vm266 = vcmask 1041409
    %v267 = vsel %vm266, %v265, %v263
    %s268 = scalar_lea.vmem [#allocation0], 201
    %s269 = smov 12
    %v270 = vld [vmem:[%s268] ss:$-60 sm:%s269]
    %vm271 = vcmask 1043458
    %v272 = vsel %vm271, %v270, %v267
    %s273 = scalar_lea.vmem [#allocation0], 49
    %v274 = vld [vmem:[%s273] sm:$0x10]
    %vm275 = vcmask 1044484
    %v276 = vsel %vm275, %v274, %v272
    %s277 = scalar_lea.vmem [#allocation0], 385
    %s278 = smov 96
    %v279 = vld [vmem:[%s277] ss:$-60 sm:%s278]
    %vm280 = vcmask 1046533
    %v281 = vsel %vm280, %v279, %v276
    %s282 = scalar_lea.vmem [#allocation0], 50
    %v283 = vld [vmem:[%s282] sm:$0x80]
    %vm284 = vcmask 1047559
    %v285 = vsel %vm284, %v283, %v281
    %286 = vrot.lane.b32.xlu0 %v285, 32
    %v287 = vpop.permute.xlu0 %286
    %vm288 = vcmask 523520
    %s289 = scalar_lea.vmem [#allocation2], 32
    %290 = vst.msk [vmem:[%s289] sm:$0x7] %vm288, %v287
    %s291 = scalar_lea.vmem [#allocation2], 37
    %292 = vst.msk [vmem:[%s291] sm:$0x38] %vm288, %v287
    %s293 = scalar_lea.vmem [#allocation2], 42
    %294 = vst.msk [vmem:[%s293] sm:$0xc0] %vm288, %v287
    %s295 = scalar_lea.vmem [#allocation0], 73
    %s296 = smov 3
    %v297 = vld [vmem:[%s295] ss:$-60 sm:%s296]
    %s298 = scalar_lea.vmem [#allocation0], 43
    %v299 = vld [vmem:[%s298] sm:$0x4]
    %vm300 = vcmask 1042434
    %v301 = vsel %vm300, %v299, %v297
    %s302 = scalar_lea.vmem [#allocation0], 41
    %s303 = smov 24
    %v304 = vld [vmem:[%s302] ss:$12 sm:%s303]
    %vm305 = vcmask 1044483
    %v306 = vsel %vm305, %v304, %v301
    %s307 = scalar_lea.vmem [#allocation0], 24
    %v308 = vld [vmem:[%s307] sm:$0x20]
    %vm309 = vcmask 1045509
    %v310 = vsel %vm309, %v308, %v306
    %s311 = scalar_lea.vmem [#allocation0], 55
    %v312 = vld [vmem:[%s311] sm:$0x40]
    %vm313 = vcmask 1046534
    %v314 = vsel %vm313, %v312, %v310
    %s315 = scalar_lea.vmem [#allocation0], 86
    %v316 = vld [vmem:[%s315] sm:$0x80]
    %vm317 = vcmask 1047559
    %v318 = vsel %vm317, %v316, %v314
    %319 = vrot.lane.b32.xlu0 %v318, 32
    %v320 = vpop.permute.xlu0 %319
    %vm321 = vcmask 523520
    %s322 = scalar_lea.vmem [#allocation2], 18
    %323 = vst.msk [vmem:[%s322] ss:$6 sm:$0x3] %vm321, %v320
    %s324 = scalar_lea.vmem [#allocation2], 23
    %325 = vst.msk [vmem:[%s324] sm:$0xc] %vm321, %v320
    %s326 = scalar_lea.vmem [#allocation2], 26
    %327 = vst.msk [vmem:[%s326] ss:$6 sm:$0x30] %vm321, %v320
    %s328 = scalar_lea.vmem [#allocation2], 51
    %329 = vst.msk [vmem:[%s328] sm:$0xc0] %vm321, %v320
    %s331 = sshllo.u32 0, 4
    %v333 = vld [vmem:[#allocation2] sm:%s331]
    %s334 = sshllo.u32 0, 4
    %335 = vst [vmem:[%s1] sm:%s334] %v333
    %s336 = scalar_lea.vmem [#allocation2], 8
    %v337 = vld [vmem:[%s336] sm:%s331]
    %s338 = sshllo.u32 0, 4
    %s339 = scalar_lea.vmem %s1, 4
    %340 = vst [vmem:[%s339] sm:%s338] %v337
    %s341 = scalar_lea.vmem [#allocation2], 16
    %v342 = vld [vmem:[%s341] sm:%s331]
    %s343 = sshllo.u32 0, 4
    %s344 = smul.addr 4, 2
    %s345 = scalar_lea.vmem %s1, %s344
    %346 = vst [vmem:[%s345] sm:%s343] %v342
    %s347 = scalar_lea.vmem [#allocation2], 24
    %v348 = vld [vmem:[%s347] sm:%s331]
    %s349 = sshllo.u32 0, 4
    %s350 = smul.addr 4, 3
    %s351 = scalar_lea.vmem %s1, %s350
    %352 = vst [vmem:[%s351] sm:%s349] %v348
    %s353 = scalar_lea.vmem [#allocation2], 32
    %v354 = vld [vmem:[%s353] sm:%s331]
    %s355 = sshllo.u32 0, 4
    %s356 = smul.addr 4, 4
    %s357 = scalar_lea.vmem %s1, %s356
    %358 = vst [vmem:[%s357] sm:%s355] %v354
    %s359 = scalar_lea.vmem [#allocation2], 40
    %v360 = vld [vmem:[%s359] sm:%s331]
    %s361 = sshllo.u32 0, 4
    %s362 = smul.addr 4, 5
    %s363 = scalar_lea.vmem %s1, %s362
    %364 = vst [vmem:[%s363] sm:%s361] %v360
    %s365 = scalar_lea.vmem [#allocation2], 48
    %v366 = vld [vmem:[%s365] sm:%s331]
    %s367 = sshllo.u32 0, 4
    %s368 = smul.addr 4, 6
    %s369 = scalar_lea.vmem %s1, %s368
    %370 = vst [vmem:[%s369] sm:%s367] %v366
    %s371 = scalar_lea.vmem [#allocation2], 56
    %v372 = vld [vmem:[%s371] sm:%s331]
    %s373 = sshllo.u32 0, 4
    %s374 = smul.addr 4, 7
    %s375 = scalar_lea.vmem %s1, %s374
    %376 = vst [vmem:[%s375] sm:%s373] %v372
    %377 = vsyncpa [#allocation1], 1

// kernel: cifar_classifier_forward.1
$region0: #{cifar_classifier_forward.1}
  #allocation0 [shape = 'u32[]', space=smem, size = 0x4, offset = 0x4, fixed_abs, tag = 'smem constant byte address 0x4 - core index']
  #allocation1 [shape = 'u32[144,128]{1,0:T(1,128)}', space=vmem, size = 0x12000, scoped, tag = 'internal scratch']
  %s0 = inlined_call_operand.vmem [shape: f32[8,1024], index: 0, kind: input, shape index: {}]
  %s1 = inlined_call_operand.vmem [shape: bf16[16,200], index: 1, kind: input, shape index: {}]
  %s2 = inlined_call_operand.vmem [shape: bf16[72,144], index: 2, kind: input, shape index: {}]
  %s3 = inlined_call_operand.vmem [shape: bf16[16,648], index: 3, kind: input, shape index: {}]
  %s4 = inlined_call_operand.hbm [shape: bf16[1024,128], index: 4, kind: input, shape index: {}]
  %s5 = inlined_call_operand.vmem [shape: f32[16,128], index: 5, kind: input, shape index: {}]
  %s6 = inlined_call_operand.vmem [shape: f32[128,10], index: 6, kind: input, shape index: {}]
  %s7 = inlined_call_operand.hbm [shape: f32[1,10], index: 7, kind: output, shape index: {}]
  %s8 = sld [smem:[#allocation0]]
  $region42: #{cifar_classifier_forward.1} parent=0
    _
  %s10 = ssub.s32 1, %s8
  %s11 = scalar_select 0, %s10, %s8
  $region1: #{cifar_classifier_forward.1} parent=0
    #allocation2 [shape = 'u8[262144]{0}', space=vmem, size = 0x40000, scoped, tag = 'input window, operand 4, single buffered']
    #allocation3 [shape = 's32[1]{0}', space=sflag, size = 0x4, scoped, tag = 'scoped memory for cifar_classifier_forward.1']
    #allocation4 [shape = 's32[1]{0}', space=sflag, size = 0x4, scoped, tag = 'scoped memory for cifar_classifier_forward.1']
    #allocation5 [shape = 'u8[512]{0}', space=vmem, size = 0x400, scoped, tag = 'output window, operand 0, single buffered']
    %12 = vsyncpa [#allocation3], 0
    %13 = vsyncpa [#allocation4], 0
    // Predicated region
    $region2: #{cifar_classifier_forward.1} parent=1 // pred_check
      _
    $region3: #{cifar_classifier_forward.1} parent=1 // pred_check_branch
      %15 = sbr.rel (0) target = $region5
    $region4: #{cifar_classifier_forward.1} parent=1 // pred_region
      _
    $region5: #{cifar_classifier_forward.1} parent=1 // pred_fallthru
      _
    // Predicated region
    $region6: #{cifar_classifier_forward.1} parent=1 // pred_check
      _
    $region7: #{cifar_classifier_forward.1} parent=1 // pred_check_branch
      %17 = sbr.rel (0) target = $region9
    $region8: #{cifar_classifier_forward.1} parent=1 // pred_region
      _
    $region9: #{cifar_classifier_forward.1} parent=1 // pred_fallthru
      _
    // Predicated region
    $region10: #{cifar_classifier_forward.1} parent=1 // pred_check
      _
    $region11: #{cifar_classifier_forward.1} parent=1 // pred_check_branch
      %19 = sbr.rel (0) target = $region13
    $region12: #{cifar_classifier_forward.1} parent=1 // pred_region
      _
    $region13: #{cifar_classifier_forward.1} parent=1 // pred_fallthru
      _
    // Predicated region
    $region14: #{cifar_classifier_forward.1} parent=1 // pred_check
      _
    $region15: #{cifar_classifier_forward.1} parent=1 // pred_check_branch
      %21 = sbr.rel (0) target = $region17
    $region16: #{cifar_classifier_forward.1} parent=1 // pred_region
      _
    $region17: #{cifar_classifier_forward.1} parent=1 // pred_fallthru
      _
    // Predicated region
    $region18: #{cifar_classifier_forward.1} parent=1 // pred_check
      _
    $region19: #{cifar_classifier_forward.1} parent=1 // pred_check_branch
      %23 = sbr.rel (0) target = $region21
    $region20: #{cifar_classifier_forward.1} parent=1 // pred_region
      %s25 = ssub.s32 8192, 8192
      %26 = vsyncadd [#allocation3], %s25
      %s27 = sshll.u32 [#allocation2], 4
      %s28 = int_to_ptr.vmem [resolvable:$true] %s27
      %33 = dma.hbm_to_vmem [thread:$0]  %s4, 8192, %s28, [#allocation3], 64, 64, 4
    $region21: #{cifar_classifier_forward.1} parent=1 // pred_fallthru
      _
    // Predicated region
    $region22: #{cifar_classifier_forward.1} parent=1 // pred_check
      _
    $region23: #{cifar_classifier_forward.1} parent=1 // pred_check_branch
      %35 = sbr.rel (0) target = $region25
    $region24: #{cifar_classifier_forward.1} parent=1 // pred_region
      _
    $region25: #{cifar_classifier_forward.1} parent=1 // pred_fallthru
      _
    // Predicated region
    $region26: #{cifar_classifier_forward.1} parent=1 // pred_check
      _
    $region27: #{cifar_classifier_forward.1} parent=1 // pred_check_branch
      %37 = sbr.rel (0) target = $region29
    $region28: #{cifar_classifier_forward.1} parent=1 // pred_region
      _
    $region29: #{cifar_classifier_forward.1} parent=1 // pred_fallthru
      _
    // Predicated region
    $region30: #{cifar_classifier_forward.1} parent=1 // pred_check
      _
    $region31: #{cifar_classifier_forward.1} parent=1 // pred_check_branch
      %39 = sbr.rel (0) target = $region33
    $region32: #{cifar_classifier_forward.1} parent=1 // pred_region
      %40 = dma.done [#allocation3], 8192
    $region33: #{cifar_classifier_forward.1} parent=1 // pred_fallthru
      _
    %v42 = vlaneseq
    %v43 = vand.u32 %v42, 127
    %v44 = vadd.s32 %v43, 128
    %v45 = vadd.s32 %v43, 256
    %v46 = vadd.s32 %v43, 384
    %v47 = vadd.s32 %v43, 512
    %v48 = vadd.s32 %v43, 640
    %v49 = vadd.s32 %v43, 768
    %v50 = vadd.s32 %v43, 896
    %v51 = vand.u32 %v43, 31
    %v52 = vand.u32 %v44, 31
    %v53 = vand.u32 %v45, 31
    %v54 = vand.u32 %v46, 31
    %v55 = vand.u32 %v47, 31
    %v56 = vand.u32 %v48, 31
    %v57 = vand.u32 %v49, 31
    %v58 = vand.u32 %v50, 31
    %vm59 = vcmp.ge.s32.totalorder %v43, 64
    %vm60 = vcmp.ge.s32.totalorder %v44, 64
    %vm61 = vcmp.ge.s32.totalorder %v45, 64
    %vm62 = vcmp.ge.s32.totalorder %v46, 64
    %vm63 = vcmp.ge.s32.totalorder %v47, 64
    %vm64 = vcmp.ge.s32.totalorder %v48, 64
    %vm65 = vcmp.ge.s32.totalorder %v49, 64
    %vm66 = vcmp.ge.s32.totalorder %v50, 64
    %vm67 = vcmp.ge.s32.totalorder %v51, 2
    %vm68 = vcmp.ge.s32.totalorder %v52, 2
    %vm69 = vcmp.ge.s32.totalorder %v53, 2
    %vm70 = vcmp.ge.s32.totalorder %v54, 2
    %vm71 = vcmp.ge.s32.totalorder %v55, 2
    %vm72 = vcmp.ge.s32.totalorder %v56, 2
    %vm73 = vcmp.ge.s32.totalorder %v57, 2
    %vm74 = vcmp.ge.s32.totalorder %v58, 2
    %vm75 = vmand %vm59, %vm67
    %vm76 = vmand %vm60, %vm68
    %vm77 = vmand %vm61, %vm69
    %vm78 = vmand %vm62, %vm70
    %vm79 = vmand %vm63, %vm71
    %vm80 = vmand %vm64, %vm72
    %vm81 = vmand %vm65, %vm73
    %vm82 = vmand %vm66, %vm74
    %v83 = vsel %vm75, 1, 0
    %v84 = vsel %vm76, 1, 0
    %v85 = vsel %vm77, 1, 0
    %v86 = vsel %vm78, 1, 0
    %v87 = vsel %vm79, 1, 0
    %v88 = vsel %vm80, 1, 0
    %v89 = vsel %vm81, 1, 0
    %v90 = vsel %vm82, 1, 0
    %v91 = vcvt.s32.f32 %v83
    %v92 = vcvt.s32.f32 %v84
    %v93 = vcvt.s32.f32 %v85
    %v94 = vcvt.s32.f32 %v86
    %v95 = vcvt.s32.f32 %v87
    %v96 = vcvt.s32.f32 %v88
    %v97 = vcvt.s32.f32 %v89
    %v98 = vcvt.s32.f32 %v90
    %vm99 = vcmp.ge.s32.totalorder %v51, 1
    %vm100 = vcmp.ge.s32.totalorder %v52, 1
    %vm101 = vcmp.ge.s32.totalorder %v53, 1
    %vm102 = vcmp.ge.s32.totalorder %v54, 1
    %vm103 = vcmp.ge.s32.totalorder %v55, 1
    %vm104 = vcmp.ge.s32.totalorder %v56, 1
    %vm105 = vcmp.ge.s32.totalorder %v57, 1
    %vm106 = vcmp.ge.s32.totalorder %v58, 1
    %vm107 = vmand %vm59, %vm99
    %vm108 = vmand %vm60, %vm100
    %vm109 = vmand %vm61, %vm101
    %vm110 = vmand %vm62, %vm102
    %vm111 = vmand %vm63, %vm103
    %vm112 = vmand %vm64, %vm104
    %vm113 = vmand %vm65, %vm105
    %vm114 = vmand %vm66, %vm106
    %v115 = vsel %vm107, 1, 0
    %v116 = vsel %vm108, 1, 0
    %v117 = vsel %vm109, 1, 0
    %v118 = vsel %vm110, 1, 0
    %v119 = vsel %vm111, 1, 0
    %v120 = vsel %vm112, 1, 0
    %v121 = vsel %vm113, 1, 0
    %v122 = vsel %vm114, 1, 0
    %v123 = vcvt.s32.f32 %v115
    %v124 = vcvt.s32.f32 %v116
    %v125 = vcvt.s32.f32 %v117
    %v126 = vcvt.s32.f32 %v118
    %v127 = vcvt.s32.f32 %v119
    %v128 = vcvt.s32.f32 %v120
    %v129 = vcvt.s32.f32 %v121
    %v130 = vcvt.s32.f32 %v122
    %v131 = vsel %vm59, 1, 0
    %v132 = vsel %vm60, 1, 0
    %v133 = vsel %vm61, 1, 0
    %v134 = vsel %vm62, 1, 0
    %v135 = vsel %vm63, 1, 0
    %v136 = vsel %vm64, 1, 0
    %v137 = vsel %vm65, 1, 0
    %v138 = vsel %vm66, 1, 0
    %v139 = vcvt.s32.f32 %v131
    %v140 = vcvt.s32.f32 %v132
    %v141 = vcvt.s32.f32 %v133
    %v142 = vcvt.s32.f32 %v134
    %v143 = vcvt.s32.f32 %v135
    %v144 = vcvt.s32.f32 %v136
    %v145 = vcvt.s32.f32 %v137
    %v146 = vcvt.s32.f32 %v138
    %vm147 = vcmp.lt.s32.totalorder %v51, 31
    %vm148 = vcmp.lt.s32.totalorder %v52, 31
    %vm149 = vcmp.lt.s32.totalorder %v53, 31
    %vm150 = vcmp.lt.s32.totalorder %v54, 31
    %vm151 = vcmp.lt.s32.totalorder %v55, 31
    %vm152 = vcmp.lt.s32.totalorder %v56, 31
    %vm153 = vcmp.lt.s32.totalorder %v57, 31
    %vm154 = vcmp.lt.s32.totalorder %v58, 31
    %vm155 = vmand %vm59, %vm147
    %vm156 = vmand %vm60, %vm148
    %vm157 = vmand %vm61, %vm149
    %vm158 = vmand %vm62, %vm150
    %vm159 = vmand %vm63, %vm151
    %vm160 = vmand %vm64, %vm152
    %vm161 = vmand %vm65, %vm153
    %vm162 = vmand %vm66, %vm154
    %v163 = vsel %vm155, 1, 0
    %v164 = vsel %vm156, 1, 0
    %v165 = vsel %vm157, 1, 0
    %v166 = vsel %vm158, 1, 0
    %v167 = vsel %vm159, 1, 0
    %v168 = vsel %vm160, 1, 0
    %v169 = vsel %vm161, 1, 0
    %v170 = vsel %vm162, 1, 0
    %v171 = vcvt.s32.f32 %v163
    %v172 = vcvt.s32.f32 %v164
    %v173 = vcvt.s32.f32 %v165
    %v174 = vcvt.s32.f32 %v166
    %v175 = vcvt.s32.f32 %v167
    %v176 = vcvt.s32.f32 %v168
    %v177 = vcvt.s32.f32 %v169
    %v178 = vcvt.s32.f32 %v170
    %vm179 = vcmp.lt.s32.totalorder %v51, 30
    %vm180 = vcmp.lt.s32.totalorder %v52, 30
    %vm181 = vcmp.lt.s32.totalorder %v53, 30
    %vm182 = vcmp.lt.s32.totalorder %v54, 30
    %vm183 = vcmp.lt.s32.totalorder %v55, 30
    %vm184 = vcmp.lt.s32.totalorder %v56, 30
    %vm185 = vcmp.lt.s32.totalorder %v57, 30
    %vm186 = vcmp.lt.s32.totalorder %v58, 30
    %vm187 = vmand %vm59, %vm179
    %vm188 = vmand %vm60, %vm180
    %vm189 = vmand %vm61, %vm181
    %vm190 = vmand %vm62, %vm182
    %vm191 = vmand %vm63, %vm183
    %vm192 = vmand %vm64, %vm184
    %vm193 = vmand %vm65, %vm185
    %vm194 = vmand %vm66, %vm186
    %v195 = vsel %vm187, 1, 0
    %v196 = vsel %vm188, 1, 0
    %v197 = vsel %vm189, 1, 0
    %v198 = vsel %vm190, 1, 0
    %v199 = vsel %vm191, 1, 0
    %v200 = vsel %vm192, 1, 0
    %v201 = vsel %vm193, 1, 0
    %v202 = vsel %vm194, 1, 0
    %v203 = vcvt.s32.f32 %v195
    %v204 = vcvt.s32.f32 %v196
    %v205 = vcvt.s32.f32 %v197
    %v206 = vcvt.s32.f32 %v198
    %v207 = vcvt.s32.f32 %v199
    %v208 = vcvt.s32.f32 %v200
    %v209 = vcvt.s32.f32 %v201
    %v210 = vcvt.s32.f32 %v202
    %vm211 = vcmp.ge.s32.totalorder %v43, 32
    %vm212 = vcmp.ge.s32.totalorder %v44, 32
    %vm213 = vcmp.ge.s32.totalorder %v45, 32
    %vm214 = vcmp.ge.s32.totalorder %v46, 32
    %vm215 = vcmp.ge.s32.totalorder %v47, 32
    %vm216 = vcmp.ge.s32.totalorder %v48, 32
    %vm217 = vcmp.ge.s32.totalorder %v49, 32
    %vm218 = vcmp.ge.s32.totalorder %v50, 32
    %vm219 = vmand %vm211, %vm67
    %vm220 = vmand %vm212, %vm68
    %vm221 = vmand %vm213, %vm69
    %vm222 = vmand %vm214, %vm70
    %vm223 = vmand %vm215, %vm71
    %vm224 = vmand %vm216, %vm72
    %vm225 = vmand %vm217, %vm73
    %vm226 = vmand %vm218, %vm74
    %v227 = vsel %vm219, 1, 0
    %v228 = vsel %vm220, 1, 0
    %v229 = vsel %vm221, 1, 0
    %v230 = vsel %vm222, 1, 0
    %v231 = vsel %vm223, 1, 0
    %v232 = vsel %vm224, 1, 0
    %v233 = vsel %vm225, 1, 0
    %v234 = vsel %vm226, 1, 0
    %v235 = vcvt.s32.f32 %v227
    %v236 = vcvt.s32.f32 %v228
    %v237 = vcvt.s32.f32 %v229
    %v238 = vcvt.s32.f32 %v230
    %v239 = vcvt.s32.f32 %v231
    %v240 = vcvt.s32.f32 %v232
    %v241 = vcvt.s32.f32 %v233
    %v242 = vcvt.s32.f32 %v234
    %vm243 = vmand %vm211, %vm99
    %vm244 = vmand %vm212, %vm100
    %vm245 = vmand %vm213, %vm101
    %vm246 = vmand %vm214, %vm102
    %vm247 = vmand %vm215, %vm103
    %vm248 = vmand %vm216, %vm104
    %vm249 = vmand %vm217, %vm105
    %vm250 = vmand %vm218, %vm106
    %v251 = vsel %vm243, 1, 0
    %v252 = vsel %vm244, 1, 0
    %v253 = vsel %vm245, 1, 0
    %v254 = vsel %vm246, 1, 0
    %v255 = vsel %vm247, 1, 0
    %v256 = vsel %vm248, 1, 0
    %v257 = vsel %vm249, 1, 0
    %v258 = vsel %vm250, 1, 0
    %v259 = vcvt.s32.f32 %v251
    %v260 = vcvt.s32.f32 %v252
    %v261 = vcvt.s32.f32 %v253
    %v262 = vcvt.s32.f32 %v254
    %v263 = vcvt.s32.f32 %v255
    %v264 = vcvt.s32.f32 %v256
    %v265 = vcvt.s32.f32 %v257
    %v266 = vcvt.s32.f32 %v258
    %v267 = vsel %vm211, 1, 0
    %v268 = vsel %vm212, 1, 0
    %v269 = vsel %vm213, 1, 0
    %v270 = vsel %vm214, 1, 0
    %v271 = vsel %vm215, 1, 0
    %v272 = vsel %vm216, 1, 0
    %v273 = vsel %vm217, 1, 0
    %v274 = vsel %vm218, 1, 0
    %v275 = vcvt.s32.f32 %v267
    %v276 = vcvt.s32.f32 %v268
    %v277 = vcvt.s32.f32 %v269
    %v278 = vcvt.s32.f32 %v270
    %v279 = vcvt.s32.f32 %v271
    %v280 = vcvt.s32.f32 %v272
    %v281 = vcvt.s32.f32 %v273
    %v282 = vcvt.s32.f32 %v274
    %vm283 = vmand %vm211, %vm147
    %vm284 = vmand %vm212, %vm148
    %vm285 = vmand %vm213, %vm149
    %vm286 = vmand %vm214, %vm150
    %vm287 = vmand %vm215, %vm151
    %vm288 = vmand %vm216, %vm152
    %vm289 = vmand %vm217, %vm153
    %vm290 = vmand %vm218, %vm154
    %v291 = vsel %vm283, 1, 0
    %v292 = vsel %vm284, 1, 0
    %v293 = vsel %vm285, 1, 0
    %v294 = vsel %vm286, 1, 0
    %v295 = vsel %vm287, 1, 0
    %v296 = vsel %vm288, 1, 0
    %v297 = vsel %vm289, 1, 0
    %v298 = vsel %vm290, 1, 0
    %v299 = vcvt.s32.f32 %v291
    %v300 = vcvt.s32.f32 %v292
    %v301 = vcvt.s32.f32 %v293
    %v302 = vcvt.s32.f32 %v294
    %v303 = vcvt.s32.f32 %v295
    %v304 = vcvt.s32.f32 %v296
    %v305 = vcvt.s32.f32 %v297
    %v306 = vcvt.s32.f32 %v298
    %vm307 = vmand %vm211, %vm179
    %vm308 = vmand %vm212, %vm180
    %vm309 = vmand %vm213, %vm181
    %vm310 = vmand %vm214, %vm182
    %vm311 = vmand %vm215, %vm183
    %vm312 = vmand %vm216, %vm184
    %vm313 = vmand %vm217, %vm185
    %vm314 = vmand %vm218, %vm186
    %v315 = vsel %vm307, 1, 0
    %v316 = vsel %vm308, 1, 0
    %v317 = vsel %vm309, 1, 0
    %v318 = vsel %vm310, 1, 0
    %v319 = vsel %vm311, 1, 0
    %v320 = vsel %vm312, 1, 0
    %v321 = vsel %vm313, 1, 0
    %v322 = vsel %vm314, 1, 0
    %v323 = vcvt.s32.f32 %v315
    %v324 = vcvt.s32.f32 %v316
    %v325 = vcvt.s32.f32 %v317
    %v326 = vcvt.s32.f32 %v318
    %v327 = vcvt.s32.f32 %v319
    %v328 = vcvt.s32.f32 %v320
    %v329 = vcvt.s32.f32 %v321
    %v330 = vcvt.s32.f32 %v322
    %v331 = vsel %vm67, 1, 0
    %v332 = vsel %vm68, 1, 0
    %v333 = vsel %vm69, 1, 0
    %v334 = vsel %vm70, 1, 0
    %v335 = vsel %vm71, 1, 0
    %v336 = vsel %vm72, 1, 0
    %v337 = vsel %vm73, 1, 0
    %v338 = vsel %vm74, 1, 0
    %v339 = vcvt.s32.f32 %v331
    %v340 = vcvt.s32.f32 %v332
    %v341 = vcvt.s32.f32 %v333
    %v342 = vcvt.s32.f32 %v334
    %v343 = vcvt.s32.f32 %v335
    %v344 = vcvt.s32.f32 %v336
    %v345 = vcvt.s32.f32 %v337
    %v346 = vcvt.s32.f32 %v338
    %v347 = vsel %vm99, 1, 0
    %v348 = vsel %vm100, 1, 0
    %v349 = vsel %vm101, 1, 0
    %v350 = vsel %vm102, 1, 0
    %v351 = vsel %vm103, 1, 0
    %v352 = vsel %vm104, 1, 0
    %v353 = vsel %vm105, 1, 0
    %v354 = vsel %vm106, 1, 0
    %v355 = vcvt.s32.f32 %v347
    %v356 = vcvt.s32.f32 %v348
    %v357 = vcvt.s32.f32 %v349
    %v358 = vcvt.s32.f32 %v350
    %v359 = vcvt.s32.f32 %v351
    %v360 = vcvt.s32.f32 %v352
    %v361 = vcvt.s32.f32 %v353
    %v362 = vcvt.s32.f32 %v354
    %v363 = vsel %vm147, 1, 0
    %v364 = vsel %vm148, 1, 0
    %v365 = vsel %vm149, 1, 0
    %v366 = vsel %vm150, 1, 0
    %v367 = vsel %vm151, 1, 0
    %v368 = vsel %vm152, 1, 0
    %v369 = vsel %vm153, 1, 0
    %v370 = vsel %vm154, 1, 0
    %v371 = vcvt.s32.f32 %v363
    %v372 = vcvt.s32.f32 %v364
    %v373 = vcvt.s32.f32 %v365
    %v374 = vcvt.s32.f32 %v366
    %v375 = vcvt.s32.f32 %v367
    %v376 = vcvt.s32.f32 %v368
    %v377 = vcvt.s32.f32 %v369
    %v378 = vcvt.s32.f32 %v370
    %v379 = vsel %vm179, 1, 0
    %v380 = vsel %vm180, 1, 0
    %v381 = vsel %vm181, 1, 0
    %v382 = vsel %vm182, 1, 0
    %v383 = vsel %vm183, 1, 0
    %v384 = vsel %vm184, 1, 0
    %v385 = vsel %vm185, 1, 0
    %v386 = vsel %vm186, 1, 0
    %v387 = vcvt.s32.f32 %v379
    %v388 = vcvt.s32.f32 %v380
    %v389 = vcvt.s32.f32 %v381
    %v390 = vcvt.s32.f32 %v382
    %v391 = vcvt.s32.f32 %v383
    %v392 = vcvt.s32.f32 %v384
    %v393 = vcvt.s32.f32 %v385
    %v394 = vcvt.s32.f32 %v386
    %vm395 = vcmp.lt.s32.totalorder %v43, 992
    %vm396 = vcmp.lt.s32.totalorder %v44, 992
    %vm397 = vcmp.lt.s32.totalorder %v45, 992
    %vm398 = vcmp.lt.s32.totalorder %v46, 992
    %vm399 = vcmp.lt.s32.totalorder %v47, 992
    %vm400 = vcmp.lt.s32.totalorder %v48, 992
    %vm401 = vcmp.lt.s32.totalorder %v49, 992
    %vm402 = vcmp.lt.s32.totalorder %v50, 992
    %vm403 = vmand %vm395, %vm67
    %vm404 = vmand %vm396, %vm68
    %vm405 = vmand %vm397, %vm69
    %vm406 = vmand %vm398, %vm70
    %vm407 = vmand %vm399, %vm71
    %vm408 = vmand %vm400, %vm72
    %vm409 = vmand %vm401, %vm73
    %vm410 = vmand %vm402, %vm74
    %v411 = vsel %vm403, 1, 0
    %v412 = vsel %vm404, 1, 0
    %v413 = vsel %vm405, 1, 0
    %v414 = vsel %vm406, 1, 0
    %v415 = vsel %vm407, 1, 0
    %v416 = vsel %vm408, 1, 0
    %v417 = vsel %vm409, 1, 0
    %v418 = vsel %vm410, 1, 0
    %v419 = vcvt.s32.f32 %v411
    %v420 = vcvt.s32.f32 %v412
    %v421 = vcvt.s32.f32 %v413
    %v422 = vcvt.s32.f32 %v414
    %v423 = vcvt.s32.f32 %v415
    %v424 = vcvt.s32.f32 %v416
    %v425 = vcvt.s32.f32 %v417
    %v426 = vcvt.s32.f32 %v418
    %vm427 = vmand %vm395, %vm99
    %vm428 = vmand %vm396, %vm100
    %vm429 = vmand %vm397, %vm101
    %vm430 = vmand %vm398, %vm102
    %vm431 = vmand %vm399, %vm103
    %vm432 = vmand %vm400, %vm104
    %vm433 = vmand %vm401, %vm105
    %vm434 = vmand %vm402, %vm106
    %v435 = vsel %vm427, 1, 0
    %v436 = vsel %vm428, 1, 0
    %v437 = vsel %vm429, 1, 0
    %v438 = vsel %vm430, 1, 0
    %v439 = vsel %vm431, 1, 0
    %v440 = vsel %vm432, 1, 0
    %v441 = vsel %vm433, 1, 0
    %v442 = vsel %vm434, 1, 0
    %v443 = vcvt.s32.f32 %v435
    %v444 = vcvt.s32.f32 %v436
    %v445 = vcvt.s32.f32 %v437
    %v446 = vcvt.s32.f32 %v438
    %v447 = vcvt.s32.f32 %v439
    %v448 = vcvt.s32.f32 %v440
    %v449 = vcvt.s32.f32 %v441
    %v450 = vcvt.s32.f32 %v442
    %v451 = vsel %vm395, 1, 0
    %v452 = vsel %vm396, 1, 0
    %v453 = vsel %vm397, 1, 0
    %v454 = vsel %vm398, 1, 0
    %v455 = vsel %vm399, 1, 0
    %v456 = vsel %vm400, 1, 0
    %v457 = vsel %vm401, 1, 0
    %v458 = vsel %vm402, 1, 0
    %v459 = vcvt.s32.f32 %v451
    %v460 = vcvt.s32.f32 %v452
    %v461 = vcvt.s32.f32 %v453
    %v462 = vcvt.s32.f32 %v454
    %v463 = vcvt.s32.f32 %v455
    %v464 = vcvt.s32.f32 %v456
    %v465 = vcvt.s32.f32 %v457
    %v466 = vcvt.s32.f32 %v458
    %vm467 = vmand %vm395, %vm147
    %vm468 = vmand %vm396, %vm148
    %vm469 = vmand %vm397, %vm149
    %vm470 = vmand %vm398, %vm150
    %vm471 = vmand %vm399, %vm151
    %vm472 = vmand %vm400, %vm152
    %vm473 = vmand %vm401, %vm153
    %vm474 = vmand %vm402, %vm154
    %v475 = vsel %vm467, 1, 0
    %v476 = vsel %vm468, 1, 0
    %v477 = vsel %vm469, 1, 0
    %v478 = vsel %vm470, 1, 0
    %v479 = vsel %vm471, 1, 0
    %v480 = vsel %vm472, 1, 0
    %v481 = vsel %vm473, 1, 0
    %v482 = vsel %vm474, 1, 0
    %v483 = vcvt.s32.f32 %v475
    %v484 = vcvt.s32.f32 %v476
    %v485 = vcvt.s32.f32 %v477
    %v486 = vcvt.s32.f32 %v478
    %v487 = vcvt.s32.f32 %v479
    %v488 = vcvt.s32.f32 %v480
    %v489 = vcvt.s32.f32 %v481
    %v490 = vcvt.s32.f32 %v482
    %vm491 = vmand %vm395, %vm179
    %vm492 = vmand %vm396, %vm180
    %vm493 = vmand %vm397, %vm181
    %vm494 = vmand %vm398, %vm182
    %vm495 = vmand %vm399, %vm183
    %vm496 = vmand %vm400, %vm184
    %vm497 = vmand %vm401, %vm185
    %vm498 = vmand %vm402, %vm186
    %v499 = vsel %vm491, 1, 0
    %v500 = vsel %vm492, 1, 0
    %v501 = vsel %vm493, 1, 0
    %v502 = vsel %vm494, 1, 0
    %v503 = vsel %vm495, 1, 0
    %v504 = vsel %vm496, 1, 0
    %v505 = vsel %vm497, 1, 0
    %v506 = vsel %vm498, 1, 0
    %v507 = vcvt.s32.f32 %v499
    %v508 = vcvt.s32.f32 %v500
    %v509 = vcvt.s32.f32 %v501
    %v510 = vcvt.s32.f32 %v502
    %v511 = vcvt.s32.f32 %v503
    %v512 = vcvt.s32.f32 %v504
    %v513 = vcvt.s32.f32 %v505
    %v514 = vcvt.s32.f32 %v506
    %vm515 = vcmp.lt.s32.totalorder %v43, 960
    %vm516 = vcmp.lt.s32.totalorder %v44, 960
    %vm517 = vcmp.lt.s32.totalorder %v45, 960
    %vm518 = vcmp.lt.s32.totalorder %v46, 960
    %vm519 = vcmp.lt.s32.totalorder %v47, 960
    %vm520 = vcmp.lt.s32.totalorder %v48, 960
    %vm521 = vcmp.lt.s32.totalorder %v49, 960
    %vm522 = vcmp.lt.s32.totalorder %v50, 960
    %vm523 = vmand %vm515, %vm67
    %vm524 = vmand %vm516, %vm68
    %vm525 = vmand %vm517, %vm69
    %vm526 = vmand %vm518, %vm70
    %vm527 = vmand %vm519, %vm71
    %vm528 = vmand %vm520, %vm72
    %vm529 = vmand %vm521, %vm73
    %vm530 = vmand %vm522, %vm74
    %v531 = vsel %vm523, 1, 0
    %v532 = vsel %vm524, 1, 0
    %v533 = vsel %vm525, 1, 0
    %v534 = vsel %vm526, 1, 0
    %v535 = vsel %vm527, 1, 0
    %v536 = vsel %vm528, 1, 0
    %v537 = vsel %vm529, 1, 0
    %v538 = vsel %vm530, 1, 0
    %v539 = vcvt.s32.f32 %v531
    %v540 = vcvt.s32.f32 %v532
    %v541 = vcvt.s32.f32 %v533
    %v542 = vcvt.s32.f32 %v534
    %v543 = vcvt.s32.f32 %v535
    %v544 = vcvt.s32.f32 %v536
    %v545 = vcvt.s32.f32 %v537
    %v546 = vcvt.s32.f32 %v538
    %vm547 = vmand %vm515, %vm99
    %vm548 = vmand %vm516, %vm100
    %vm549 = vmand %vm517, %vm101
    %vm550 = vmand %vm518, %vm102
    %vm551 = vmand %vm519, %vm103
    %vm552 = vmand %vm520, %vm104
    %vm553 = vmand %vm521, %vm105
    %vm554 = vmand %vm522, %vm106
    %v555 = vsel %vm547, 1, 0
    %v556 = vsel %vm548, 1, 0
    %v557 = vsel %vm549, 1, 0
    %v558 = vsel %vm550, 1, 0
    %v559 = vsel %vm551, 1, 0
    %v560 = vsel %vm552, 1, 0
    %v561 = vsel %vm553, 1, 0
    %v562 = vsel %vm554, 1, 0
    %v563 = vcvt.s32.f32 %v555
    %v564 = vcvt.s32.f32 %v556
    %v565 = vcvt.s32.f32 %v557
    %v566 = vcvt.s32.f32 %v558
    %v567 = vcvt.s32.f32 %v559
    %v568 = vcvt.s32.f32 %v560
    %v569 = vcvt.s32.f32 %v561
    %v570 = vcvt.s32.f32 %v562
    %v571 = vsel %vm515, 1, 0
    %v572 = vsel %vm516, 1, 0
    %v573 = vsel %vm517, 1, 0
    %v574 = vsel %vm518, 1, 0
    %v575 = vsel %vm519, 1, 0
    %v576 = vsel %vm520, 1, 0
    %v577 = vsel %vm521, 1, 0
    %v578 = vsel %vm522, 1, 0
    %v579 = vcvt.s32.f32 %v571
    %v580 = vcvt.s32.f32 %v572
    %v581 = vcvt.s32.f32 %v573
    %v582 = vcvt.s32.f32 %v574
    %v583 = vcvt.s32.f32 %v575
    %v584 = vcvt.s32.f32 %v576
    %v585 = vcvt.s32.f32 %v577
    %v586 = vcvt.s32.f32 %v578
    %vm587 = vmand %vm515, %vm147
    %vm588 = vmand %vm516, %vm148
    %vm589 = vmand %vm517, %vm149
    %vm590 = vmand %vm518, %vm150
    %vm591 = vmand %vm519, %vm151
    %vm592 = vmand %vm520, %vm152
    %vm593 = vmand %vm521, %vm153
    %vm594 = vmand %vm522, %vm154
    %v595 = vsel %vm587, 1, 0
    %v596 = vsel %vm588, 1, 0
    %v597 = vsel %vm589, 1, 0
    %v598 = vsel %vm590, 1, 0
    %v599 = vsel %vm591, 1, 0
    %v600 = vsel %vm592, 1, 0
    %v601 = vsel %vm593, 1, 0
    %v602 = vsel %vm594, 1, 0
    %v603 = vcvt.s32.f32 %v595
    %v604 = vcvt.s32.f32 %v596
    %v605 = vcvt.s32.f32 %v597
    %v606 = vcvt.s32.f32 %v598
    %v607 = vcvt.s32.f32 %v599
    %v608 = vcvt.s32.f32 %v600
    %v609 = vcvt.s32.f32 %v601
    %v610 = vcvt.s32.f32 %v602
    %vm611 = vmand %vm515, %vm179
    %vm612 = vmand %vm516, %vm180
    %vm613 = vmand %vm517, %vm181
    %vm614 = vmand %vm518, %vm182
    %vm615 = vmand %vm519, %vm183
    %vm616 = vmand %vm520, %vm184
    %vm617 = vmand %vm521, %vm185
    %vm618 = vmand %vm522, %vm186
    %v619 = vsel %vm611, 1, 0
    %v620 = vsel %vm612, 1, 0
    %v621 = vsel %vm613, 1, 0
    %v622 = vsel %vm614, 1, 0
    %v623 = vsel %vm615, 1, 0
    %v624 = vsel %vm616, 1, 0
    %v625 = vsel %vm617, 1, 0
    %v626 = vsel %vm618, 1, 0
    %v627 = vcvt.s32.f32 %v619
    %v628 = vcvt.s32.f32 %v620
    %v629 = vcvt.s32.f32 %v621
    %v630 = vcvt.s32.f32 %v622
    %v631 = vcvt.s32.f32 %v623
    %v632 = vcvt.s32.f32 %v624
    %v633 = vcvt.s32.f32 %v625
    %v634 = vcvt.s32.f32 %v626
    %v635 = vld [vmem:[%s0] sm:$0xff]
    %v636 = vld [vmem:[%s0 + $0x8] sm:$0xff]
    %v637 = vld [vmem:[%s0 + $0x10] sm:$0xff]
    %v638 = vld [vmem:[%s0 + $0x18] sm:$0xff]
    %v639 = vld [vmem:[%s0 + $0x20] sm:$0xff]
    %v640 = vld [vmem:[%s0 + $0x28] sm:$0xff]
    %v641 = vld [vmem:[%s0 + $0x30] sm:$0xff]
    %v642 = vld [vmem:[%s0 + $0x38] sm:$0xff]
    %643 = vrot.lane.b32.xlu0 %v635, 66
    %v644 = vpop.permute.xlu0 %643
    %645 = vrot.lane.b32.xlu0 %v636, 66
    %v646 = vpop.permute.xlu0 %645
    %647 = vrot.lane.b32.xlu0 %v637, 66
    %v648 = vpop.permute.xlu0 %647
    %649 = vrot.lane.b32.xlu0 %v638, 66
    %v650 = vpop.permute.xlu0 %649
    %651 = vrot.lane.b32.xlu0 %v639, 66
    %v652 = vpop.permute.xlu0 %651
    %653 = vrot.lane.b32.xlu0 %v640, 66
    %v654 = vpop.permute.xlu0 %653
    %655 = vrot.lane.b32.xlu0 %v641, 66
    %v656 = vpop.permute.xlu0 %655
    %657 = vrot.lane.b32.xlu0 %v642, 66
    %v658 = vpop.permute.xlu0 %657
    %vm659 = vcmp.lt.s32.totalorder %v43, 66
    %v660 = vsel %vm659, %v656, %v658
    %v661 = vsel %vm659, %v654, %v656
    %v662 = vsel %vm659, %v652, %v654
    %v663 = vsel %vm659, %v650, %v652
    %v664 = vsel %vm659, %v648, %v650
    %v665 = vsel %vm659, %v646, %v648
    %v666 = vsel %vm659, %v644, %v646
    %v667 = vsel %vm659, %v658, %v644
    %v668 = vmul.f32 %v667, %v91
    %v669 = vmul.f32 %v666, %v92
    %v670 = vmul.f32 %v665, %v93
    %v671 = vmul.f32 %v664, %v94
    %v672 = vmul.f32 %v663, %v95
    %v673 = vmul.f32 %v662, %v96
    %v674 = vmul.f32 %v661, %v97
    %v675 = vmul.f32 %v660, %v98
    %676 = vrot.lane.b32.xlu0 %v635, 65
    %v677 = vpop.permute.xlu0 %676
    %678 = vrot.lane.b32.xlu0 %v636, 65
    %v679 = vpop.permute.xlu0 %678
    %680 = vrot.lane.b32.xlu0 %v637, 65
    %v681 = vpop.permute.xlu0 %680
    %682 = vrot.lane.b32.xlu0 %v638, 65
    %v683 = vpop.permute.xlu0 %682
    %684 = vrot.lane.b32.xlu0 %v639, 65
    %v685 = vpop.permute.xlu0 %684
    %686 = vrot.lane.b32.xlu0 %v640, 65
    %v687 = vpop.permute.xlu0 %686
    %688 = vrot.lane.b32.xlu0 %v641, 65
    %v689 = vpop.permute.xlu0 %688
    %690 = vrot.lane.b32.xlu0 %v642, 65
    %v691 = vpop.permute.xlu0 %690
    %vm692 = vcmp.lt.s32.totalorder %v43, 65
    %v693 = vsel %vm692, %v689, %v691
    %v694 = vsel %vm692, %v687, %v689
    %v695 = vsel %vm692, %v685, %v687
    %v696 = vsel %vm692, %v683, %v685
    %v697 = vsel %vm692, %v681, %v683
    %v698 = vsel %vm692, %v679, %v681
    %v699 = vsel %vm692, %v677, %v679
    %v700 = vsel %vm692, %v691, %v677
    %v701 = vmul.f32 %v700, %v123
    %v702 = vmul.f32 %v699, %v124
    %v703 = vmul.f32 %v698, %v125
    %v704 = vmul.f32 %v697, %v126
    %v705 = vmul.f32 %v696, %v127
    %v706 = vmul.f32 %v695, %v128
    %v707 = vmul.f32 %v694, %v129
    %v708 = vmul.f32 %v693, %v130
    %709 = vrot.lane.b32.xlu0 %v635, 64
    %v710 = vpop.permute.xlu0 %709
    %711 = vrot.lane.b32.xlu0 %v636, 64
    %v712 = vpop.permute.xlu0 %711
    %713 = vrot.lane.b32.xlu0 %v637, 64
    %v714 = vpop.permute.xlu0 %713
    %715 = vrot.lane.b32.xlu0 %v638, 64
    %v716 = vpop.permute.xlu0 %715
    %717 = vrot.lane.b32.xlu0 %v639, 64
    %v718 = vpop.permute.xlu0 %717
    %719 = vrot.lane.b32.xlu0 %v640, 64
    %v720 = vpop.permute.xlu0 %719
    %721 = vrot.lane.b32.xlu0 %v641, 64
    %v722 = vpop.permute.xlu0 %721
    %723 = vrot.lane.b32.xlu0 %v642, 64
    %v724 = vpop.permute.xlu0 %723
    %vm725 = vcmp.lt.s32.totalorder %v43, 64
    %v726 = vsel %vm725, %v722, %v724
    %v727 = vsel %vm725, %v720, %v722
    %v728 = vsel %vm725, %v718, %v720
    %v729 = vsel %vm725, %v716, %v718
    %v730 = vsel %vm725, %v714, %v716
    %v731 = vsel %vm725, %v712, %v714
    %v732 = vsel %vm725, %v710, %v712
    %v733 = vsel %vm725, %v724, %v710
    %v734 = vmul.f32 %v733, %v139
    %v735 = vmul.f32 %v732, %v140
    %v736 = vmul.f32 %v731, %v141
    %v737 = vmul.f32 %v730, %v142
    %v738 = vmul.f32 %v729, %v143
    %v739 = vmul.f32 %v728, %v144
    %v740 = vmul.f32 %v727, %v145
    %v741 = vmul.f32 %v726, %v146
    %742 = vrot.lane.b32.xlu0 %v635, 63
    %v743 = vpop.permute.xlu0 %742
    %744 = vrot.lane.b32.xlu0 %v636, 63
    %v745 = vpop.permute.xlu0 %744
    %746 = vrot.lane.b32.xlu0 %v637, 63
    %v747 = vpop.permute.xlu0 %746
    %748 = vrot.lane.b32.xlu0 %v638, 63
    %v749 = vpop.permute.xlu0 %748
    %750 = vrot.lane.b32.xlu0 %v639, 63
    %v751 = vpop.permute.xlu0 %750
    %752 = vrot.lane.b32.xlu0 %v640, 63
    %v753 = vpop.permute.xlu0 %752
    %754 = vrot.lane.b32.xlu0 %v641, 63
    %v755 = vpop.permute.xlu0 %754
    %756 = vrot.lane.b32.xlu0 %v642, 63
    %v757 = vpop.permute.xlu0 %756
    %vm758 = vcmp.lt.s32.totalorder %v43, 63
    %v759 = vsel %vm758, %v755, %v757
    %v760 = vsel %vm758, %v753, %v755
    %v761 = vsel %vm758, %v751, %v753
    %v762 = vsel %vm758, %v749, %v751
    %v763 = vsel %vm758, %v747, %v749
    %v764 = vsel %vm758, %v745, %v747
    %v765 = vsel %vm758, %v743, %v745
    %v766 = vsel %vm758, %v757, %v743
    %v767 = vmul.f32 %v766, %v171
    %v768 = vmul.f32 %v765, %v172
    %v769 = vmul.f32 %v764, %v173
    %v770 = vmul.f32 %v763, %v174
    %v771 = vmul.f32 %v762, %v175
    %v772 = vmul.f32 %v761, %v176
    %v773 = vmul.f32 %v760, %v177
    %v774 = vmul.f32 %v759, %v178
    %775 = vrot.lane.b32.xlu0 %v635, 62
    %v776 = vpop.permute.xlu0 %775
    %777 = vrot.lane.b32.xlu0 %v636, 62
    %v778 = vpop.permute.xlu0 %777
    %779 = vrot.lane.b32.xlu0 %v637, 62
    %v780 = vpop.permute.xlu0 %779
    %781 = vrot.lane.b32.xlu0 %v638, 62
    %v782 = vpop.permute.xlu0 %781
    %783 = vrot.lane.b32.xlu0 %v639, 62
    %v784 = vpop.permute.xlu0 %783
    %785 = vrot.lane.b32.xlu0 %v640, 62
    %v786 = vpop.permute.xlu0 %785
    %787 = vrot.lane.b32.xlu0 %v641, 62
    %v788 = vpop.permute.xlu0 %787
    %789 = vrot.lane.b32.xlu0 %v642, 62
    %v790 = vpop.permute.xlu0 %789
    %vm791 = vcmp.lt.s32.totalorder %v43, 62
    %v792 = vsel %vm791, %v788, %v790
    %v793 = vsel %vm791, %v786, %v788
    %v794 = vsel %vm791, %v784, %v786
    %v795 = vsel %vm791, %v782, %v784
    %v796 = vsel %vm791, %v780, %v782
    %v797 = vsel %vm791, %v778, %v780
    %v798 = vsel %vm791, %v776, %v778
    %v799 = vsel %vm791, %v790, %v776
    %v800 = vmul.f32 %v799, %v203
    %v801 = vmul.f32 %v798, %v204
    %v802 = vmul.f32 %v797, %v205
    %v803 = vmul.f32 %v796, %v206
    %v804 = vmul.f32 %v795, %v207
    %v805 = vmul.f32 %v794, %v208
    %v806 = vmul.f32 %v793, %v209
    %v807 = vmul.f32 %v792, %v210
    %808 = vrot.lane.b32.xlu0 %v635, 34
    %v809 = vpop.permute.xlu0 %808
    %810 = vrot.lane.b32.xlu0 %v636, 34
    %v811 = vpop.permute.xlu0 %810
    %812 = vrot.lane.b32.xlu0 %v637, 34
    %v813 = vpop.permute.xlu0 %812
    %814 = vrot.lane.b32.xlu0 %v638, 34
    %v815 = vpop.permute.xlu0 %814
    %816 = vrot.lane.b32.xlu0 %v639, 34
    %v817 = vpop.permute.xlu0 %816
    %818 = vrot.lane.b32.xlu0 %v640, 34
    %v819 = vpop.permute.xlu0 %818
    %820 = vrot.lane.b32.xlu0 %v641, 34
    %v821 = vpop.permute.xlu0 %820
    %822 = vrot.lane.b32.xlu0 %v642, 34
    %v823 = vpop.permute.xlu0 %822
    %vm824 = vcmp.lt.s32.totalorder %v43, 34
    %v825 = vsel %vm824, %v821, %v823
    %v826 = vsel %vm824, %v819, %v821
    %v827 = vsel %vm824, %v817, %v819
    %v828 = vsel %vm824, %v815, %v817
    %v829 = vsel %vm824, %v813, %v815
    %v830 = vsel %vm824, %v811, %v813
    %v831 = vsel %vm824, %v809, %v811
    %v832 = vsel %vm824, %v823, %v809
    %v833 = vmul.f32 %v832, %v235
    %v834 = vmul.f32 %v831, %v236
    %v835 = vmul.f32 %v830, %v237
    %v836 = vmul.f32 %v829, %v238
    %v837 = vmul.f32 %v828, %v239
    %v838 = vmul.f32 %v827, %v240
    %v839 = vmul.f32 %v826, %v241
    %v840 = vmul.f32 %v825, %v242
    %841 = vrot.lane.b32.xlu0 %v635, 33
    %v842 = vpop.permute.xlu0 %841
    %843 = vrot.lane.b32.xlu0 %v636, 33
    %v844 = vpop.permute.xlu0 %843
    %845 = vrot.lane.b32.xlu0 %v637, 33
    %v846 = vpop.permute.xlu0 %845
    %847 = vrot.lane.b32.xlu0 %v638, 33
    %v848 = vpop.permute.xlu0 %847
    %849 = vrot.lane.b32.xlu0 %v639, 33
    %v850 = vpop.permute.xlu0 %849
    %851 = vrot.lane.b32.xlu0 %v640, 33
    %v852 = vpop.permute.xlu0 %851
    %853 = vrot.lane.b32.xlu0 %v641, 33
    %v854 = vpop.permute.xlu0 %853
    %855 = vrot.lane.b32.xlu0 %v642, 33
    %v856 = vpop.permute.xlu0 %855
    %vm857 = vcmp.lt.s32.totalorder %v43, 33
    %v858 = vsel %vm857, %v854, %v856
    %v859 = vsel %vm857, %v852, %v854
    %v860 = vsel %vm857, %v850, %v852
    %v861 = vsel %vm857, %v848, %v850
    %v862 = vsel %vm857, %v846, %v848
    %v863 = vsel %vm857, %v844, %v846
    %v864 = vsel %vm857, %v842, %v844
    %v865 = vsel %vm857, %v856, %v842
    %v866 = vmul.f32 %v865, %v259
    %v867 = vmul.f32 %v864, %v260
    %v868 = vmul.f32 %v863, %v261
    %v869 = vmul.f32 %v862, %v262
    %v870 = vmul.f32 %v861, %v263
    %v871 = vmul.f32 %v860, %v264
    %v872 = vmul.f32 %v859, %v265
    %v873 = vmul.f32 %v858, %v266
    %874 = vrot.lane.b32.xlu0 %v635, 32
    %v875 = vpop.permute.xlu0 %874
    %876 = vrot.lane.b32.xlu0 %v636, 32
    %v877 = vpop.permute.xlu0 %876
    %878 = vrot.lane.b32.xlu0 %v637, 32
    %v879 = vpop.permute.xlu0 %878
    %880 = vrot.lane.b32.xlu0 %v638, 32
    %v881 = vpop.permute.xlu0 %880
    %882 = vrot.lane.b32.xlu0 %v639, 32
    %v883 = vpop.permute.xlu0 %882
    %884 = vrot.lane.b32.xlu0 %v640, 32
    %v885 = vpop.permute.xlu0 %884
    %886 = vrot.lane.b32.xlu0 %v641, 32
    %v887 = vpop.permute.xlu0 %886
    %888 = vrot.lane.b32.xlu0 %v642, 32
    %v889 = vpop.permute.xlu0 %888
    %vm890 = vcmp.lt.s32.totalorder %v43, 32
    %v891 = vsel %vm890, %v887, %v889
    %v892 = vsel %vm890, %v885, %v887
    %v893 = vsel %vm890, %v883, %v885
    %v894 = vsel %vm890, %v881, %v883
    %v895 = vsel %vm890, %v879, %v881
    %v896 = vsel %vm890, %v877, %v879
    %v897 = vsel %vm890, %v875, %v877
    %v898 = vsel %vm890, %v889, %v875
    %v899 = vmul.f32 %v898, %v275
    %v900 = vmul.f32 %v897, %v276
    %v901 = vmul.f32 %v896, %v277
    %v902 = vmul.f32 %v895, %v278
    %v903 = vmul.f32 %v894, %v279
    %v904 = vmul.f32 %v893, %v280
    %v905 = vmul.f32 %v892, %v281
    %v906 = vmul.f32 %v891, %v282
    %907 = vrot.lane.b32.xlu0 %v635, 31
    %v908 = vpop.permute.xlu0 %907
    %909 = vrot.lane.b32.xlu0 %v636, 31
    %v910 = vpop.permute.xlu0 %909
    %911 = vrot.lane.b32.xlu0 %v637, 31
    %v912 = vpop.permute.xlu0 %911
    %913 = vrot.lane.b32.xlu0 %v638, 31
    %v914 = vpop.permute.xlu0 %913
    %915 = vrot.lane.b32.xlu0 %v639, 31
    %v916 = vpop.permute.xlu0 %915
    %917 = vrot.lane.b32.xlu0 %v640, 31
    %v918 = vpop.permute.xlu0 %917
    %919 = vrot.lane.b32.xlu0 %v641, 31
    %v920 = vpop.permute.xlu0 %919
    %921 = vrot.lane.b32.xlu0 %v642, 31
    %v922 = vpop.permute.xlu0 %921
    %vm923 = vcmp.lt.s32.totalorder %v43, 31
    %v924 = vsel %vm923, %v920, %v922
    %v925 = vsel %vm923, %v918, %v920
    %v926 = vsel %vm923, %v916, %v918
    %v927 = vsel %vm923, %v914, %v916
    %v928 = vsel %vm923, %v912, %v914
    %v929 = vsel %vm923, %v910, %v912
    %v930 = vsel %vm923, %v908, %v910
    %v931 = vsel %vm923, %v922, %v908
    %v932 = vmul.f32 %v931, %v299
    %v933 = vmul.f32 %v930, %v300
    %v934 = vmul.f32 %v929, %v301
    %v935 = vmul.f32 %v928, %v302
    %v936 = vmul.f32 %v927, %v303
    %v937 = vmul.f32 %v926, %v304
    %v938 = vmul.f32 %v925, %v305
    %v939 = vmul.f32 %v924, %v306
    %940 = vrot.lane.b32.xlu0 %v635, 30
    %v941 = vpop.permute.xlu0 %940
    %942 = vrot.lane.b32.xlu0 %v636, 30
    %v943 = vpop.permute.xlu0 %942
    %944 = vrot.lane.b32.xlu0 %v637, 30
    %v945 = vpop.permute.xlu0 %944
    %946 = vrot.lane.b32.xlu0 %v638, 30
    %v947 = vpop.permute.xlu0 %946
    %948 = vrot.lane.b32.xlu0 %v639, 30
    %v949 = vpop.permute.xlu0 %948
    %950 = vrot.lane.b32.xlu0 %v640, 30
    %v951 = vpop.permute.xlu0 %950
    %952 = vrot.lane.b32.xlu0 %v641, 30
    %v953 = vpop.permute.xlu0 %952
    %954 = vrot.lane.b32.xlu0 %v642, 30
    %v955 = vpop.permute.xlu0 %954
    %vm956 = vcmp.lt.s32.totalorder %v43, 30
    %v957 = vsel %vm956, %v953, %v955
    %v958 = vsel %vm956, %v951, %v953
    %v959 = vsel %vm956, %v949, %v951
    %v960 = vsel %vm956, %v947, %v949
    %v961 = vsel %vm956, %v945, %v947
    %v962 = vsel %vm956, %v943, %v945
    %v963 = vsel %vm956, %v941, %v943
    %v964 = vsel %vm956, %v955, %v941
    %v965 = vmul.f32 %v964, %v323
    %v966 = vmul.f32 %v963, %v324
    %v967 = vmul.f32 %v962, %v325
    %v968 = vmul.f32 %v961, %v326
    %v969 = vmul.f32 %v960, %v327
    %v970 = vmul.f32 %v959, %v328
    %v971 = vmul.f32 %v958, %v329
    %v972 = vmul.f32 %v957, %v330
    %973 = vrot.lane.b32.xlu0 %v635, 2
    %v974 = vpop.permute.xlu0 %973
    %975 = vrot.lane.b32.xlu0 %v636, 2
    %v976 = vpop.permute.xlu0 %975
    %977 = vrot.lane.b32.xlu0 %v637, 2
    %v978 = vpop.permute.xlu0 %977
    %979 = vrot.lane.b32.xlu0 %v638, 2
    %v980 = vpop.permute.xlu0 %979
    %981 = vrot.lane.b32.xlu0 %v639, 2
    %v982 = vpop.permute.xlu0 %981
    %983 = vrot.lane.b32.xlu0 %v640, 2
    %v984 = vpop.permute.xlu0 %983
    %985 = vrot.lane.b32.xlu0 %v641, 2
    %v986 = vpop.permute.xlu0 %985
    %987 = vrot.lane.b32.xlu0 %v642, 2
    %v988 = vpop.permute.xlu0 %987
    %vm989 = vcmp.lt.s32.totalorder %v43, 2
    %v990 = vsel %vm989, %v986, %v988
    %v991 = vsel %vm989, %v984, %v986
    %v992 = vsel %vm989, %v982, %v984
    %v993 = vsel %vm989, %v980, %v982
    %v994 = vsel %vm989, %v978, %v980
    %v995 = vsel %vm989, %v976, %v978
    %v996 = vsel %vm989, %v974, %v976
    %v997 = vsel %vm989, %v988, %v974
    %v998 = vmul.f32 %v997, %v339
    %v999 = vmul.f32 %v996, %v340
    %v1000 = vmul.f32 %v995, %v341
    %v1001 = vmul.f32 %v994, %v342
    %v1002 = vmul.f32 %v993, %v343
    %v1003 = vmul.f32 %v992, %v344
    %v1004 = vmul.f32 %v991, %v345
    %v1005 = vmul.f32 %v990, %v346
    %1006 = vrot.lane.b32.xlu0 %v635, 1
    %v1007 = vpop.permute.xlu0 %1006
    %1008 = vrot.lane.b32.xlu0 %v636, 1
    %v1009 = vpop.permute.xlu0 %1008
    %1010 = vrot.lane.b32.xlu0 %v637, 1
    %v1011 = vpop.permute.xlu0 %1010
    %1012 = vrot.lane.b32.xlu0 %v638, 1
    %v1013 = vpop.permute.xlu0 %1012
    %1014 = vrot.lane.b32.xlu0 %v639, 1
    %v1015 = vpop.permute.xlu0 %1014
    %1016 = vrot.lane.b32.xlu0 %v640, 1
    %v1017 = vpop.permute.xlu0 %1016
    %1018 = vrot.lane.b32.xlu0 %v641, 1
    %v1019 = vpop.permute.xlu0 %1018
    %1020 = vrot.lane.b32.xlu0 %v642, 1
    %v1021 = vpop.permute.xlu0 %1020
    %vm1022 = vcmp.lt.s32.totalorder %v43, 1
    %v1023 = vsel %vm1022, %v1019, %v1021
    %v1024 = vsel %vm1022, %v1017, %v1019
    %v1025 = vsel %vm1022, %v1015, %v1017
    %v1026 = vsel %vm1022, %v1013, %v1015
    %v1027 = vsel %vm1022, %v1011, %v1013
    %v1028 = vsel %vm1022, %v1009, %v1011
    %v1029 = vsel %vm1022, %v1007, %v1009
    %v1030 = vsel %vm1022, %v1021, %v1007
    %v1031 = vmul.f32 %v1030, %v355
    %v1032 = vmul.f32 %v1029, %v356
    %v1033 = vmul.f32 %v1028, %v357
    %v1034 = vmul.f32 %v1027, %v358
    %v1035 = vmul.f32 %v1026, %v359
    %v1036 = vmul.f32 %v1025, %v360
    %v1037 = vmul.f32 %v1024, %v361
    %v1038 = vmul.f32 %v1023, %v362
    %1039 = vrot.lane.b32.xlu0 %v635, 127
    %v1040 = vpop.permute.xlu0 %1039
    %1041 = vrot.lane.b32.xlu0 %v636, 127
    %v1042 = vpop.permute.xlu0 %1041
    %1043 = vrot.lane.b32.xlu0 %v637, 127
    %v1044 = vpop.permute.xlu0 %1043
    %1045 = vrot.lane.b32.xlu0 %v638, 127
    %v1046 = vpop.permute.xlu0 %1045
    %1047 = vrot.lane.b32.xlu0 %v639, 127
    %v1048 = vpop.permute.xlu0 %1047
    %1049 = vrot.lane.b32.xlu0 %v640, 127
    %v1050 = vpop.permute.xlu0 %1049
    %1051 = vrot.lane.b32.xlu0 %v641, 127
    %v1052 = vpop.permute.xlu0 %1051
    %1053 = vrot.lane.b32.xlu0 %v642, 127
    %v1054 = vpop.permute.xlu0 %1053
    %vm1055 = vcmp.lt.s32.totalorder %v43, 127
    %v1056 = vsel %vm1055, %v1052, %v1054
    %v1057 = vsel %vm1055, %v1050, %v1052
    %v1058 = vsel %vm1055, %v1048, %v1050
    %v1059 = vsel %vm1055, %v1046, %v1048
    %v1060 = vsel %vm1055, %v1044, %v1046
    %v1061 = vsel %vm1055, %v1042, %v1044
    %v1062 = vsel %vm1055, %v1040, %v1042
    %v1063 = vsel %vm1055, %v1054, %v1040
    %v1064 = vmul.f32 %v1062, %v371
    %v1065 = vmul.f32 %v1061, %v372
    %v1066 = vmul.f32 %v1060, %v373
    %v1067 = vmul.f32 %v1059, %v374
    %v1068 = vmul.f32 %v1058, %v375
    %v1069 = vmul.f32 %v1057, %v376
    %v1070 = vmul.f32 %v1056, %v377
    %v1071 = vmul.f32 %v1063, %v378
    %1072 = vrot.lane.b32.xlu0 %v635, 126
    %v1073 = vpop.permute.xlu0 %1072
    %1074 = vrot.lane.b32.xlu0 %v636, 126
    %v1075 = vpop.permute.xlu0 %1074
    %1076 = vrot.lane.b32.xlu0 %v637, 126
    %v1077 = vpop.permute.xlu0 %1076
    %1078 = vrot.lane.b32.xlu0 %v638, 126
    %v1079 = vpop.permute.xlu0 %1078
    %1080 = vrot.lane.b32.xlu0 %v639, 126
    %v1081 = vpop.permute.xlu0 %1080
    %1082 = vrot.lane.b32.xlu0 %v640, 126
    %v1083 = vpop.permute.xlu0 %1082
    %1084 = vrot.lane.b32.xlu0 %v641, 126
    %v1085 = vpop.permute.xlu0 %1084
    %1086 = vrot.lane.b32.xlu0 %v642, 126
    %v1087 = vpop.permute.xlu0 %1086
    %vm1088 = vcmp.lt.s32.totalorder %v43, 126
    %v1089 = vsel %vm1088, %v1085, %v1087
    %v1090 = vsel %vm1088, %v1083, %v1085
    %v1091 = vsel %vm1088, %v1081, %v1083
    %v1092 = vsel %vm1088, %v1079, %v1081
    %v1093 = vsel %vm1088, %v1077, %v1079
    %v1094 = vsel %vm1088, %v1075, %v1077
    %v1095 = vsel %vm1088, %v1073, %v1075
    %v1096 = vsel %vm1088, %v1087, %v1073
    %v1097 = vmul.f32 %v1095, %v387
    %v1098 = vmul.f32 %v1094, %v388
    %v1099 = vmul.f32 %v1093, %v389
    %v1100 = vmul.f32 %v1092, %v390
    %v1101 = vmul.f32 %v1091, %v391
    %v1102 = vmul.f32 %v1090, %v392
    %v1103 = vmul.f32 %v1089, %v393
    %v1104 = vmul.f32 %v1096, %v394
    %1105 = vrot.lane.b32.xlu0 %v635, 98
    %v1106 = vpop.permute.xlu0 %1105
    %1107 = vrot.lane.b32.xlu0 %v636, 98
    %v1108 = vpop.permute.xlu0 %1107
    %1109 = vrot.lane.b32.xlu0 %v637, 98
    %v1110 = vpop.permute.xlu0 %1109
    %1111 = vrot.lane.b32.xlu0 %v638, 98
    %v1112 = vpop.permute.xlu0 %1111
    %1113 = vrot.lane.b32.xlu0 %v639, 98
    %v1114 = vpop.permute.xlu0 %1113
    %1115 = vrot.lane.b32.xlu0 %v640, 98
    %v1116 = vpop.permute.xlu0 %1115
    %1117 = vrot.lane.b32.xlu0 %v641, 98
    %v1118 = vpop.permute.xlu0 %1117
    %1119 = vrot.lane.b32.xlu0 %v642, 98
    %v1120 = vpop.permute.xlu0 %1119
    %vm1121 = vcmp.lt.s32.totalorder %v43, 98
    %v1122 = vsel %vm1121, %v1118, %v1120
    %v1123 = vsel %vm1121, %v1116, %v1118
    %v1124 = vsel %vm1121, %v1114, %v1116
    %v1125 = vsel %vm1121, %v1112, %v1114
    %v1126 = vsel %vm1121, %v1110, %v1112
    %v1127 = vsel %vm1121, %v1108, %v1110
    %v1128 = vsel %vm1121, %v1106, %v1108
    %v1129 = vsel %vm1121, %v1120, %v1106
    %v1130 = vmul.f32 %v1128, %v419
    %v1131 = vmul.f32 %v1127, %v420
    %v1132 = vmul.f32 %v1126, %v421
    %v1133 = vmul.f32 %v1125, %v422
    %v1134 = vmul.f32 %v1124, %v423
    %v1135 = vmul.f32 %v1123, %v424
    %v1136 = vmul.f32 %v1122, %v425
    %v1137 = vmul.f32 %v1129, %v426
    %1138 = vrot.lane.b32.xlu0 %v635, 97
    %v1139 = vpop.permute.xlu0 %1138
    %1140 = vrot.lane.b32.xlu0 %v636, 97
    %v1141 = vpop.permute.xlu0 %1140
    %1142 = vrot.lane.b32.xlu0 %v637, 97
    %v1143 = vpop.permute.xlu0 %1142
    %1144 = vrot.lane.b32.xlu0 %v638, 97
    %v1145 = vpop.permute.xlu0 %1144
    %1146 = vrot.lane.b32.xlu0 %v639, 97
    %v1147 = vpop.permute.xlu0 %1146
    %1148 = vrot.lane.b32.xlu0 %v640, 97
    %v1149 = vpop.permute.xlu0 %1148
    %1150 = vrot.lane.b32.xlu0 %v641, 97
    %v1151 = vpop.permute.xlu0 %1150
    %1152 = vrot.lane.b32.xlu0 %v642, 97
    %v1153 = vpop.permute.xlu0 %1152
    %vm1154 = vcmp.lt.s32.totalorder %v43, 97
    %v1155 = vsel %vm1154, %v1151, %v1153
    %v1156 = vsel %vm1154, %v1149, %v1151
    %v1157 = vsel %vm1154, %v1147, %v1149
    %v1158 = vsel %vm1154, %v1145, %v1147
    %v1159 = vsel %vm1154, %v1143, %v1145
    %v1160 = vsel %vm1154, %v1141, %v1143
    %v1161 = vsel %vm1154, %v1139, %v1141
    %v1162 = vsel %vm1154, %v1153, %v1139
    %v1163 = vmul.f32 %v1161, %v443
    %v1164 = vmul.f32 %v1160, %v444
    %v1165 = vmul.f32 %v1159, %v445
    %v1166 = vmul.f32 %v1158, %v446
    %v1167 = vmul.f32 %v1157, %v447
    %v1168 = vmul.f32 %v1156, %v448
    %v1169 = vmul.f32 %v1155, %v449
    %v1170 = vmul.f32 %v1162, %v450
    %1171 = vrot.lane.b32.xlu0 %v635, 96
    %v1172 = vpop.permute.xlu0 %1171
    %1173 = vrot.lane.b32.xlu0 %v636, 96
    %v1174 = vpop.permute.xlu0 %1173
    %1175 = vrot.lane.b32.xlu0 %v637, 96
    %v1176 = vpop.permute.xlu0 %1175
    %1177 = vrot.lane.b32.xlu0 %v638, 96
    %v1178 = vpop.permute.xlu0 %1177
    %1179 = vrot.lane.b32.xlu0 %v639, 96
    %v1180 = vpop.permute.xlu0 %1179
    %1181 = vrot.lane.b32.xlu0 %v640, 96
    %v1182 = vpop.permute.xlu0 %1181
    %1183 = vrot.lane.b32.xlu0 %v641, 96
    %v1184 = vpop.permute.xlu0 %1183
    %1185 = vrot.lane.b32.xlu0 %v642, 96
    %v1186 = vpop.permute.xlu0 %1185
    %vm1187 = vcmp.lt.s32.totalorder %v43, 96
    %v1188 = vsel %vm1187, %v1184, %v1186
    %v1189 = vsel %vm1187, %v1182, %v1184
    %v1190 = vsel %vm1187, %v1180, %v1182
    %v1191 = vsel %vm1187, %v1178, %v1180
    %v1192 = vsel %vm1187, %v1176, %v1178
    %v1193 = vsel %vm1187, %v1174, %v1176
    %v1194 = vsel %vm1187, %v1172, %v1174
    %v1195 = vsel %vm1187, %v1186, %v1172
    %v1196 = vmul.f32 %v1194, %v459
    %v1197 = vmul.f32 %v1193, %v460
    %v1198 = vmul.f32 %v1192, %v461
    %v1199 = vmul.f32 %v1191, %v462
    %v1200 = vmul.f32 %v1190, %v463
    %v1201 = vmul.f32 %v1189, %v464
    %v1202 = vmul.f32 %v1188, %v465
    %v1203 = vmul.f32 %v1195, %v466
    %1204 = vrot.lane.b32.xlu0 %v635, 95
    %v1205 = vpop.permute.xlu0 %1204
    %1206 = vrot.lane.b32.xlu0 %v636, 95
    %v1207 = vpop.permute.xlu0 %1206
    %1208 = vrot.lane.b32.xlu0 %v637, 95
    %v1209 = vpop.permute.xlu0 %1208
    %1210 = vrot.lane.b32.xlu0 %v638, 95
    %v1211 = vpop.permute.xlu0 %1210
    %1212 = vrot.lane.b32.xlu0 %v639, 95
    %v1213 = vpop.permute.xlu0 %1212
    %1214 = vrot.lane.b32.xlu0 %v640, 95
    %v1215 = vpop.permute.xlu0 %1214
    %1216 = vrot.lane.b32.xlu0 %v641, 95
    %v1217 = vpop.permute.xlu0 %1216
    %1218 = vrot.lane.b32.xlu0 %v642, 95
    %v1219 = vpop.permute.xlu0 %1218
    %vm1220 = vcmp.lt.s32.totalorder %v43, 95
    %v1221 = vsel %vm1220, %v1217, %v1219
    %v1222 = vsel %vm1220, %v1215, %v1217
    %v1223 = vsel %vm1220, %v1213, %v1215
    %v1224 = vsel %vm1220, %v1211, %v1213
    %v1225 = vsel %vm1220, %v1209, %v1211
    %v1226 = vsel %vm1220, %v1207, %v1209
    %v1227 = vsel %vm1220, %v1205, %v1207
    %v1228 = vsel %vm1220, %v1219, %v1205
    %v1229 = vmul.f32 %v1227, %v483
    %v1230 = vmul.f32 %v1226, %v484
    %v1231 = vmul.f32 %v1225, %v485
    %v1232 = vmul.f32 %v1224, %v486
    %v1233 = vmul.f32 %v1223, %v487
    %v1234 = vmul.f32 %v1222, %v488
    %v1235 = vmul.f32 %v1221, %v489
    %v1236 = vmul.f32 %v1228, %v490
    %1237 = vrot.lane.b32.xlu0 %v635, 94
    %v1238 = vpop.permute.xlu0 %1237
    %1239 = vrot.lane.b32.xlu0 %v636, 94
    %v1240 = vpop.permute.xlu0 %1239
    %1241 = vrot.lane.b32.xlu0 %v637, 94
    %v1242 = vpop.permute.xlu0 %1241
    %1243 = vrot.lane.b32.xlu0 %v638, 94
    %v1244 = vpop.permute.xlu0 %1243
    %1245 = vrot.lane.b32.xlu0 %v639, 94
    %v1246 = vpop.permute.xlu0 %1245
    %1247 = vrot.lane.b32.xlu0 %v640, 94
    %v1248 = vpop.permute.xlu0 %1247
    %1249 = vrot.lane.b32.xlu0 %v641, 94
    %v1250 = vpop.permute.xlu0 %1249
    %1251 = vrot.lane.b32.xlu0 %v642, 94
    %v1252 = vpop.permute.xlu0 %1251
    %vm1253 = vcmp.lt.s32.totalorder %v43, 94
    %v1254 = vsel %vm1253, %v1250, %v1252
    %v1255 = vsel %vm1253, %v1248, %v1250
    %v1256 = vsel %vm1253, %v1246, %v1248
    %v1257 = vsel %vm1253, %v1244, %v1246
    %v1258 = vsel %vm1253, %v1242, %v1244
    %v1259 = vsel %vm1253, %v1240, %v1242
    %v1260 = vsel %vm1253, %v1238, %v1240
    %v1261 = vsel %vm1253, %v1252, %v1238
    %v1262 = vmul.f32 %v1260, %v507
    %v1263 = vmul.f32 %v1259, %v508
    %v1264 = vmul.f32 %v1258, %v509
    %v1265 = vmul.f32 %v1257, %v510
    %v1266 = vmul.f32 %v1256, %v511
    %v1267 = vmul.f32 %v1255, %v512
    %v1268 = vmul.f32 %v1254, %v513
    %v1269 = vmul.f32 %v1261, %v514
    %v1270 = vmul.f32 %v666, %v539
    %v1271 = vmul.f32 %v665, %v540
    %v1272 = vmul.f32 %v664, %v541
    %v1273 = vmul.f32 %v663, %v542
    %v1274 = vmul.f32 %v662, %v543
    %v1275 = vmul.f32 %v661, %v544
    %v1276 = vmul.f32 %v660, %v545
    %v1277 = vmul.f32 %v667, %v546
    %v1278 = vmul.f32 %v699, %v563
    %v1279 = vmul.f32 %v698, %v564
    %v1280 = vmul.f32 %v697, %v565
    %v1281 = vmul.f32 %v696, %v566
    %v1282 = vmul.f32 %v695, %v567
    %v1283 = vmul.f32 %v694, %v568
    %v1284 = vmul.f32 %v693, %v569
    %v1285 = vmul.f32 %v700, %v570
    %v1286 = vmul.f32 %v732, %v579
    %v1287 = vmul.f32 %v731, %v580
    %v1288 = vmul.f32 %v730, %v581
    %v1289 = vmul.f32 %v729, %v582
    %v1290 = vmul.f32 %v728, %v583
    %v1291 = vmul.f32 %v727, %v584
    %v1292 = vmul.f32 %v726, %v585
    %v1293 = vmul.f32 %v733, %v586
    %v1294 = vmul.f32 %v765, %v603
    %v1295 = vmul.f32 %v764, %v604
    %v1296 = vmul.f32 %v763, %v605
    %v1297 = vmul.f32 %v762, %v606
    %v1298 = vmul.f32 %v761, %v607
    %v1299 = vmul.f32 %v760, %v608
    %v1300 = vmul.f32 %v759, %v609
    %v1301 = vmul.f32 %v766, %v610
    %v1302 = vmul.f32 %v798, %v627
    %v1303 = vmul.f32 %v797, %v628
    %v1304 = vmul.f32 %v796, %v629
    %v1305 = vmul.f32 %v795, %v630
    %v1306 = vmul.f32 %v794, %v631
    %v1307 = vmul.f32 %v793, %v632
    %v1308 = vmul.f32 %v792, %v633
    %v1309 = vmul.f32 %v799, %v634
    %v1310 = vld [vmem:[%s1] sm:$0xff]
    %v1311 = vld [vmem:[%s1 + $0x8] sm:$0xff]
    %v1312 = vpack.c.bf16 %v701, %v668
    %v1313 = vpack.c.bf16 %v702, %v669
    %v1314 = vpack.c.bf16 %v703, %v670
    %v1315 = vpack.c.bf16 %v704, %v671
    %v1316 = vpack.c.bf16 %v705, %v672
    %v1317 = vpack.c.bf16 %v706, %v673
    %v1318 = vpack.c.bf16 %v707, %v674
    %v1319 = vpack.c.bf16 %v708, %v675
    %v1320 = vpack.c.bf16 %v767, %v734
    %v1321 = vpack.c.bf16 %v768, %v735
    %v1322 = vpack.c.bf16 %v769, %v736
    %v1323 = vpack.c.bf16 %v770, %v737
    %v1324 = vpack.c.bf16 %v771, %v738
    %v1325 = vpack.c.bf16 %v772, %v739
    %v1326 = vpack.c.bf16 %v773, %v740
    %v1327 = vpack.c.bf16 %v774, %v741
    %v1328 = vpack.c.bf16 %v833, %v800
    %v1329 = vpack.c.bf16 %v834, %v801
    %v1330 = vpack.c.bf16 %v835, %v802
    %v1331 = vpack.c.bf16 %v836, %v803
    %v1332 = vpack.c.bf16 %v837, %v804
    %v1333 = vpack.c.bf16 %v838, %v805
    %v1334 = vpack.c.bf16 %v839, %v806
    %v1335 = vpack.c.bf16 %v840, %v807
    %v1336 = vpack.c.bf16 %v899, %v866
    %v1337 = vpack.c.bf16 %v900, %v867
    %v1338 = vpack.c.bf16 %v901, %v868
    %v1339 = vpack.c.bf16 %v902, %v869
    %v1340 = vpack.c.bf16 %v903, %v870
    %v1341 = vpack.c.bf16 %v904, %v871
    %v1342 = vpack.c.bf16 %v905, %v872
    %v1343 = vpack.c.bf16 %v906, %v873
    %v1344 = vpack.c.bf16 %v965, %v932
    %v1345 = vpack.c.bf16 %v966, %v933
    %v1346 = vpack.c.bf16 %v967, %v934
    %v1347 = vpack.c.bf16 %v968, %v935
    %v1348 = vpack.c.bf16 %v969, %v936
    %v1349 = vpack.c.bf16 %v970, %v937
    %v1350 = vpack.c.bf16 %v971, %v938
    %v1351 = vpack.c.bf16 %v972, %v939
    %v1352 = vpack.c.bf16 %v1031, %v998
    %v1353 = vpack.c.bf16 %v1032, %v999
    %v1354 = vpack.c.bf16 %v1033, %v1000
    %v1355 = vpack.c.bf16 %v1034, %v1001
    %v1356 = vpack.c.bf16 %v1035, %v1002
    %v1357 = vpack.c.bf16 %v1036, %v1003
    %v1358 = vpack.c.bf16 %v1037, %v1004
    %v1359 = vpack.c.bf16 %v1038, %v1005
    %v1360 = vpack.c.bf16 %v1064, %v635
    %v1361 = vpack.c.bf16 %v1065, %v636
    %v1362 = vpack.c.bf16 %v1066, %v637
    %v1363 = vpack.c.bf16 %v1067, %v638
    %v1364 = vpack.c.bf16 %v1068, %v639
    %v1365 = vpack.c.bf16 %v1069, %v640
    %v1366 = vpack.c.bf16 %v1070, %v641
    %v1367 = vpack.c.bf16 %v1071, %v642
    %v1368 = vpack.c.bf16 %v1130, %v1097
    %v1369 = vpack.c.bf16 %v1131, %v1098
    %v1370 = vpack.c.bf16 %v1132, %v1099
    %v1371 = vpack.c.bf16 %v1133, %v1100
    %v1372 = vpack.c.bf16 %v1134, %v1101
    %v1373 = vpack.c.bf16 %v1135, %v1102
    %v1374 = vpack.c.bf16 %v1136, %v1103
    %v1375 = vpack.c.bf16 %v1137, %v1104
    %v1376 = vpack.c.bf16 %v1196, %v1163
    %v1377 = vpack.c.bf16 %v1197, %v1164
    %v1378 = vpack.c.bf16 %v1198, %v1165
    %v1379 = vpack.c.bf16 %v1199, %v1166
    %v1380 = vpack.c.bf16 %v1200, %v1167
    %v1381 = vpack.c.bf16 %v1201, %v1168
    %v1382 = vpack.c.bf16 %v1202, %v1169
    %v1383 = vpack.c.bf16 %v1203, %v1170
    %v1384 = vpack.c.bf16 %v1262, %v1229
    %v1385 = vpack.c.bf16 %v1263, %v1230
    %v1386 = vpack.c.bf16 %v1264, %v1231
    %v1387 = vpack.c.bf16 %v1265, %v1232
    %v1388 = vpack.c.bf16 %v1266, %v1233
    %v1389 = vpack.c.bf16 %v1267, %v1234
    %v1390 = vpack.c.bf16 %v1268, %v1235
    %v1391 = vpack.c.bf16 %v1269, %v1236
    %v1392 = vpack.c.bf16 %v1278, %v1270
    %v1393 = vpack.c.bf16 %v1279, %v1271
    %v1394 = vpack.c.bf16 %v1280, %v1272
    %v1395 = vpack.c.bf16 %v1281, %v1273
    %v1396 = vpack.c.bf16 %v1282, %v1274
    %v1397 = vpack.c.bf16 %v1283, %v1275
    %v1398 = vpack.c.bf16 %v1284, %v1276
    %v1399 = vpack.c.bf16 %v1285, %v1277
    %v1400 = vpack.c.bf16 %v1294, %v1286
    %v1401 = vpack.c.bf16 %v1295, %v1287
    %v1402 = vpack.c.bf16 %v1296, %v1288
    %v1403 = vpack.c.bf16 %v1297, %v1289
    %v1404 = vpack.c.bf16 %v1298, %v1290
    %v1405 = vpack.c.bf16 %v1299, %v1291
    %v1406 = vpack.c.bf16 %v1300, %v1292
    %v1407 = vpack.c.bf16 %v1301, %v1293
    %v1408 = vpack.c.bf16 %v1302, %v1302
    %v1409 = vpack.c.bf16 %v1303, %v1303
    %v1410 = vpack.c.bf16 %v1304, %v1304
    %v1411 = vpack.c.bf16 %v1305, %v1305
    %v1412 = vpack.c.bf16 %v1306, %v1306
    %v1413 = vpack.c.bf16 %v1307, %v1307
    %v1414 = vpack.c.bf16 %v1308, %v1308
    %v1415 = vpack.c.bf16 %v1309, %v1309
    %v1418 = vunpack.c.l.b16 %v1310
    %v1419 = vunpack.c.h.b16 %v1310
    %v1420 = vunpack.c.l.b16 %v1311
    %v1421 = vunpack.c.h.b16 %v1311
    %v1422 = vpack.c.b16 %v1420, %v1418
    %v1423 = vpack.c.b16 %v1421, %v1419
    %vm1425 = vcmask 588800
    %v1427 = vsel %vm1425, %v1423, 0
    %vm1429 = vcmask 1043456
    %v1431 = vsel %vm1429, %v1408, 0
    %v1434 = vsel %vm1429, %v1409, 0
    %v1437 = vsel %vm1429, %v1410, 0
    %v1440 = vsel %vm1429, %v1411, 0
    %v1443 = vsel %vm1429, %v1412, 0
    %v1446 = vsel %vm1429, %v1413, 0
    %v1449 = vsel %vm1429, %v1414, 0
    %v1452 = vsel %vm1429, %v1415, 0
    %1454 = vmatprep.subr.bf16.mxu0 %v1313
    %1455 = vmatpush1.bf16.msra.mxu0 %v1312
    %1456 = vmatprep.subr.bf16.mxu0 %v1321
    %1457 = vmatpush1.bf16.msra.mxu0 %v1320
    %1458 = vmatprep.subr.bf16.mxu0 %v1329
    %1459 = vmatpush1.bf16.msra.mxu0 %v1328
    %1460 = vmatprep.subr.bf16.mxu0 %v1337
    %1461 = vmatpush1.bf16.msra.mxu0 %v1336
    %1462 = vmatprep.subr.bf16.mxu0 %v1345
    %1463 = vmatpush1.bf16.msra.mxu0 %v1344
    %1464 = vmatprep.subr.bf16.mxu0 %v1353
    %1465 = vmatpush1.bf16.msra.mxu0 %v1352
    %1466 = vmatprep.subr.bf16.mxu0 %v1361
    %1467 = vmatpush1.bf16.msra.mxu0 %v1360
    %1468 = vmatprep.subr.bf16.mxu0 %v1369
    %1469 = vmatpush1.bf16.msra.mxu0 %v1368
    %1470 = vmatprep.subr.bf16.mxu0 %v1377
    %1471 = vmatpush1.bf16.msra.mxu0 %v1376
    %1472 = vmatprep.subr.bf16.mxu0 %v1385
    %1473 = vmatpush1.bf16.msra.mxu0 %v1384
    %1474 = vmatprep.subr.bf16.mxu0 %v1393
    %1475 = vmatpush1.bf16.msra.mxu0 %v1392
    %1476 = vmatprep.subr.bf16.mxu0 %v1401
    %1477 = vmatpush1.bf16.msra.mxu0 %v1400
    %1478 = vmatprep.subr.bf16.mxu0 %v1434
    %1479 = vmatpush1.bf16.msra.mxu0 %v1431
    %1480 = vmatprep.subr.bf16.mxu0 0
    %1481 = vmatpush1.bf16.msra.mxu0 0
    %1482 = vmatprep.subr.bf16.mxu0 0
    %1483 = vmatpush1.bf16.msra.mxu0 0
    %1484 = vmatprep.subr.bf16.mxu0 0
    %1485 = vmatpush1.bf16.msra.mxu0 0
    %1486 = vmatprep.mubr.bf16.mxu0 %v1427
    %1487 = vmatmul.mubr.bf16.gmra.mrb[0].mxu0 %v1422
    %v1488 = vpop.f32.mrb[0].mxu0
    %v1489 = vadd.f32 0.0, %v1488
    %v1490 = vpop.f32.mrb[0].mxu0
    %v1491 = vadd.f32 0.0, %v1490
    %v1492 = vpop.f32.mrb[0].mxu0
    %v1493 = vadd.f32 0.0, %v1492
    %v1494 = vpop.f32.mrb[0].mxu0
    %v1495 = vadd.f32 0.0, %v1494
    %1496 = vdwg.mxu0
    %1497 = vmatprep.subr.bf16.mxu0 %v1315
    %1498 = vmatpush1.bf16.msra.mxu0 %v1314
    %1499 = vmatprep.subr.bf16.mxu0 %v1323
    %1500 = vmatpush1.bf16.msra.mxu0 %v1322
    %1501 = vmatprep.subr.bf16.mxu0 %v1331
    %1502 = vmatpush1.bf16.msra.mxu0 %v1330
    %1503 = vmatprep.subr.bf16.mxu0 %v1339
    %1504 = vmatpush1.bf16.msra.mxu0 %v1338
    %1505 = vmatprep.subr.bf16.mxu0 %v1347
    %1506 = vmatpush1.bf16.msra.mxu0 %v1346
    %1507 = vmatprep.subr.bf16.mxu0 %v1355
    %1508 = vmatpush1.bf16.msra.mxu0 %v1354
    %1509 = vmatprep.subr.bf16.mxu0 %v1363
    %1510 = vmatpush1.bf16.msra.mxu0 %v1362
    %1511 = vmatprep.subr.bf16.mxu0 %v1371
    %1512 = vmatpush1.bf16.msra.mxu0 %v1370
    %1513 = vmatprep.subr.bf16.mxu0 %v1379
    %1514 = vmatpush1.bf16.msra.mxu0 %v1378
    %1515 = vmatprep.subr.bf16.mxu0 %v1387
    %1516 = vmatpush1.bf16.msra.mxu0 %v1386
    %1517 = vmatprep.subr.bf16.mxu0 %v1395
    %1518 = vmatpush1.bf16.msra.mxu0 %v1394
    %1519 = vmatprep.subr.bf16.mxu0 %v1403
    %1520 = vmatpush1.bf16.msra.mxu0 %v1402
    %1521 = vmatprep.subr.bf16.mxu0 %v1440
    %1522 = vmatpush1.bf16.msra.mxu0 %v1437
    %1523 = vmatprep.subr.bf16.mxu0 0
    %1524 = vmatpush1.bf16.msra.mxu0 0
    %1525 = vmatprep.subr.bf16.mxu0 0
    %1526 = vmatpush1.bf16.msra.mxu0 0
    %1527 = vmatprep.subr.bf16.mxu0 0
    %1528 = vmatpush1.bf16.msra.mxu0 0
    %1529 = vmatprep.mubr.bf16.mxu0 %v1427
    %1530 = vmatmul.mubr.bf16.gmra.mrb[0].mxu0 %v1422
    %v1531 = vpop.f32.mrb[0].mxu0
    %v1532 = vadd.f32 0.0, %v1531
    %v1533 = vpop.f32.mrb[0].mxu0
    %v1534 = vadd.f32 0.0, %v1533
    %v1535 = vpop.f32.mrb[0].mxu0
    %v1536 = vadd.f32 0.0, %v1535
    %v1537 = vpop.f32.mrb[0].mxu0
    %v1538 = vadd.f32 0.0, %v1537
    %1539 = vdwg.mxu0
    %1540 = vmatprep.subr.bf16.mxu0 %v1317
    %1541 = vmatpush1.bf16.msra.mxu0 %v1316
    %1542 = vmatprep.subr.bf16.mxu0 %v1325
    %1543 = vmatpush1.bf16.msra.mxu0 %v1324
    %1544 = vmatprep.subr.bf16.mxu0 %v1333
    %1545 = vmatpush1.bf16.msra.mxu0 %v1332
    %1546 = vmatprep.subr.bf16.mxu0 %v1341
    %1547 = vmatpush1.bf16.msra.mxu0 %v1340
    %1548 = vmatprep.subr.bf16.mxu0 %v1349
    %1549 = vmatpush1.bf16.msra.mxu0 %v1348
    %1550 = vmatprep.subr.bf16.mxu0 %v1357
    %1551 = vmatpush1.bf16.msra.mxu0 %v1356
    %1552 = vmatprep.subr.bf16.mxu0 %v1365
    %1553 = vmatpush1.bf16.msra.mxu0 %v1364
    %1554 = vmatprep.subr.bf16.mxu0 %v1373
    %1555 = vmatpush1.bf16.msra.mxu0 %v1372
    %1556 = vmatprep.subr.bf16.mxu0 %v1381
    %1557 = vmatpush1.bf16.msra.mxu0 %v1380
    %1558 = vmatprep.subr.bf16.mxu0 %v1389
    %1559 = vmatpush1.bf16.msra.mxu0 %v1388
    %1560 = vmatprep.subr.bf16.mxu0 %v1397
    %1561 = vmatpush1.bf16.msra.mxu0 %v1396
    %1562 = vmatprep.subr.bf16.mxu0 %v1405
    %1563 = vmatpush1.bf16.msra.mxu0 %v1404
    %1564 = vmatprep.subr.bf16.mxu0 %v1446
    %1565 = vmatpush1.bf16.msra.mxu0 %v1443
    %1566 = vmatprep.subr.bf16.mxu0 0
    %1567 = vmatpush1.bf16.msra.mxu0 0
    %1568 = vmatprep.subr.bf16.mxu0 0
    %1569 = vmatpush1.bf16.msra.mxu0 0
    %1570 = vmatprep.subr.bf16.mxu0 0
    %1571 = vmatpush1.bf16.msra.mxu0 0
    %1572 = vmatprep.mubr.bf16.mxu0 %v1427
    %1573 = vmatmul.mubr.bf16.gmra.mrb[0].mxu0 %v1422
    %v1574 = vpop.f32.mrb[0].mxu0
    %v1575 = vadd.f32 0.0, %v1574
    %v1576 = vpop.f32.mrb[0].mxu0
    %v1577 = vadd.f32 0.0, %v1576
    %v1578 = vpop.f32.mrb[0].mxu0
    %v1579 = vadd.f32 0.0, %v1578
    %v1580 = vpop.f32.mrb[0].mxu0
    %v1581 = vadd.f32 0.0, %v1580
    %1582 = vdwg.mxu0
    %1583 = vmatprep.subr.bf16.mxu0 %v1319
    %1584 = vmatpush1.bf16.msra.mxu0 %v1318
    %1585 = vmatprep.subr.bf16.mxu0 %v1327
    %1586 = vmatpush1.bf16.msra.mxu0 %v1326
    %1587 = vmatprep.subr.bf16.mxu0 %v1335
    %1588 = vmatpush1.bf16.msra.mxu0 %v1334
    %1589 = vmatprep.subr.bf16.mxu0 %v1343
    %1590 = vmatpush1.bf16.msra.mxu0 %v1342
    %1591 = vmatprep.subr.bf16.mxu0 %v1351
    %1592 = vmatpush1.bf16.msra.mxu0 %v1350
    %1593 = vmatprep.subr.bf16.mxu0 %v1359
    %1594 = vmatpush1.bf16.msra.mxu0 %v1358
    %1595 = vmatprep.subr.bf16.mxu0 %v1367
    %1596 = vmatpush1.bf16.msra.mxu0 %v1366
    %1597 = vmatprep.subr.bf16.mxu0 %v1375
    %1598 = vmatpush1.bf16.msra.mxu0 %v1374
    %1599 = vmatprep.subr.bf16.mxu0 %v1383
    %1600 = vmatpush1.bf16.msra.mxu0 %v1382
    %1601 = vmatprep.subr.bf16.mxu0 %v1391
    %1602 = vmatpush1.bf16.msra.mxu0 %v1390
    %1603 = vmatprep.subr.bf16.mxu0 %v1399
    %1604 = vmatpush1.bf16.msra.mxu0 %v1398
    %1605 = vmatprep.subr.bf16.mxu0 %v1407
    %1606 = vmatpush1.bf16.msra.mxu0 %v1406
    %1607 = vmatprep.subr.bf16.mxu0 %v1452
    %1608 = vmatpush1.bf16.msra.mxu0 %v1449
    %1609 = vmatprep.subr.bf16.mxu0 0
    %1610 = vmatpush1.bf16.msra.mxu0 0
    %1611 = vmatprep.subr.bf16.mxu0 0
    %1612 = vmatpush1.bf16.msra.mxu0 0
    %1613 = vmatprep.subr.bf16.mxu0 0
    %1614 = vmatpush1.bf16.msra.mxu0 0
    %1615 = vmatprep.mubr.bf16.mxu0 %v1427
    %1616 = vmatmul.mubr.bf16.gmra.mrb[0].mxu0 %v1422
    %v1617 = vpop.f32.mrb[0].mxu0
    %v1618 = vadd.f32 0.0, %v1617
    %v1619 = vpop.f32.mrb[0].mxu0
    %v1620 = vadd.f32 0.0, %v1619
    %v1621 = vpop.f32.mrb[0].mxu0
    %v1622 = vadd.f32 0.0, %v1621
    %v1623 = vpop.f32.mrb[0].mxu0
    %v1624 = vadd.f32 0.0, %v1623
    %1625 = vdwg.mxu0
    %v1626 = vmax.f32 %v1489, 0.0
    %v1627 = vmax.f32 %v1491, 0.0
    %v1628 = vmax.f32 %v1532, 0.0
    %v1629 = vmax.f32 %v1534, 0.0
    %v1630 = vmax.f32 %v1575, 0.0
    %v1631 = vmax.f32 %v1577, 0.0
    %v1632 = vmax.f32 %v1618, 0.0
    %v1633 = vmax.f32 %v1620, 0.0
    %v1634 = vmax.f32 %v1493, 0.0
    %v1635 = vmax.f32 %v1495, 0.0
    %v1636 = vmax.f32 %v1536, 0.0
    %v1637 = vmax.f32 %v1538, 0.0
    %v1638 = vmax.f32 %v1579, 0.0
    %v1639 = vmax.f32 %v1581, 0.0
    %v1640 = vmax.f32 %v1622, 0.0
    %v1641 = vmax.f32 %v1624, 0.0
    %1642 = vrot.lane.b32.xlu0 %v1626, 33
    %v1643 = vpop.permute.xlu0 %1642
    %1644 = vrot.lane.b32.xlu0 %v1634, 33
    %v1645 = vpop.permute.xlu0 %1644
    %1646 = vrot.lane.b32.xlu0 %v1627, 33
    %v1647 = vpop.permute.xlu0 %1646
    %1648 = vrot.lane.b32.xlu0 %v1635, 33
    %v1649 = vpop.permute.xlu0 %1648
    %1650 = vrot.lane.b32.xlu0 %v1628, 33
    %v1651 = vpop.permute.xlu0 %1650
    %1652 = vrot.lane.b32.xlu0 %v1636, 33
    %v1653 = vpop.permute.xlu0 %1652
    %1654 = vrot.lane.b32.xlu0 %v1629, 33
    %v1655 = vpop.permute.xlu0 %1654
    %1656 = vrot.lane.b32.xlu0 %v1637, 33
    %v1657 = vpop.permute.xlu0 %1656
    %1658 = vrot.lane.b32.xlu0 %v1630, 33
    %v1659 = vpop.permute.xlu0 %1658
    %1660 = vrot.lane.b32.xlu0 %v1638, 33
    %v1661 = vpop.permute.xlu0 %1660
    %1662 = vrot.lane.b32.xlu0 %v1631, 33
    %v1663 = vpop.permute.xlu0 %1662
    %1664 = vrot.lane.b32.xlu0 %v1639, 33
    %v1665 = vpop.permute.xlu0 %1664
    %1666 = vrot.lane.b32.xlu0 %v1632, 33
    %v1667 = vpop.permute.xlu0 %1666
    %1668 = vrot.lane.b32.xlu0 %v1640, 33
    %v1669 = vpop.permute.xlu0 %1668
    %1670 = vrot.lane.b32.xlu0 %v1633, 33
    %v1671 = vpop.permute.xlu0 %1670
    %1672 = vrot.lane.b32.xlu0 %v1641, 33
    %v1673 = vpop.permute.xlu0 %1672
    %v1674 = vsel %vm857, %v1667, %v1671
    %v1675 = vsel %vm857, %v1669, %v1673
    %v1676 = vsel %vm857, %v1663, %v1667
    %v1677 = vsel %vm857, %v1665, %v1669
    %v1678 = vsel %vm857, %v1659, %v1663
    %v1679 = vsel %vm857, %v1661, %v1665
    %v1680 = vsel %vm857, %v1655, %v1659
    %v1681 = vsel %vm857, %v1657, %v1661
    %v1682 = vsel %vm857, %v1651, %v1655
    %v1683 = vsel %vm857, %v1653, %v1657
    %v1684 = vsel %vm857, %v1647, %v1651
    %v1685 = vsel %vm857, %v1649, %v1653
    %v1686 = vsel %vm857, %v1643, %v1647
    %v1687 = vsel %vm857, %v1645, %v1649
    %v1688 = vsel %vm857, %v1671, %v1643
    %v1689 = vsel %vm857, %v1673, %v1645
    %v1690 = vmul.f32 %v1688, %v259
    %v1691 = vmul.f32 %v1686, %v260
    %v1692 = vmul.f32 %v1684, %v261
    %v1693 = vmul.f32 %v1682, %v262
    %v1694 = vmul.f32 %v1680, %v263
    %v1695 = vmul.f32 %v1678, %v264
    %v1696 = vmul.f32 %v1676, %v265
    %v1697 = vmul.f32 %v1674, %v266
    %v1698 = vmul.f32 %v1689, %v259
    %v1699 = vmul.f32 %v1687, %v260
    %v1700 = vmul.f32 %v1685, %v261
    %v1701 = vmul.f32 %v1683, %v262
    %v1702 = vmul.f32 %v1681, %v263
    %v1703 = vmul.f32 %v1679, %v264
    %v1704 = vmul.f32 %v1677, %v265
    %v1705 = vmul.f32 %v1675, %v266
    %1706 = vrot.lane.b32.xlu0 %v1626, 32
    %v1707 = vpop.permute.xlu0 %1706
    %1708 = vrot.lane.b32.xlu0 %v1634, 32
    %v1709 = vpop.permute.xlu0 %1708
    %1710 = vrot.lane.b32.xlu0 %v1627, 32
    %v1711 = vpop.permute.xlu0 %1710
    %1712 = vrot.lane.b32.xlu0 %v1635, 32
    %v1713 = vpop.permute.xlu0 %1712
    %1714 = vrot.lane.b32.xlu0 %v1628, 32
    %v1715 = vpop.permute.xlu0 %1714
    %1716 = vrot.lane.b32.xlu0 %v1636, 32
    %v1717 = vpop.permute.xlu0 %1716
    %1718 = vrot.lane.b32.xlu0 %v1629, 32
    %v1719 = vpop.permute.xlu0 %1718
    %1720 = vrot.lane.b32.xlu0 %v1637, 32
    %v1721 = vpop.permute.xlu0 %1720
    %1722 = vrot.lane.b32.xlu0 %v1630, 32
    %v1723 = vpop.permute.xlu0 %1722
    %1724 = vrot.lane.b32.xlu0 %v1638, 32
    %v1725 = vpop.permute.xlu0 %1724
    %1726 = vrot.lane.b32.xlu0 %v1631, 32
    %v1727 = vpop.permute.xlu0 %1726
    %1728 = vrot.lane.b32.xlu0 %v1639, 32
    %v1729 = vpop.permute.xlu0 %1728
    %1730 = vrot.lane.b32.xlu0 %v1632, 32
    %v1731 = vpop.permute.xlu0 %1730
    %1732 = vrot.lane.b32.xlu0 %v1640, 32
    %v1733 = vpop.permute.xlu0 %1732
    %1734 = vrot.lane.b32.xlu0 %v1633, 32
    %v1735 = vpop.permute.xlu0 %1734
    %1736 = vrot.lane.b32.xlu0 %v1641, 32
    %v1737 = vpop.permute.xlu0 %1736
    %v1738 = vsel %vm890, %v1731, %v1735
    %v1739 = vsel %vm890, %v1733, %v1737
    %v1740 = vsel %vm890, %v1727, %v1731
    %v1741 = vsel %vm890, %v1729, %v1733
    %v1742 = vsel %vm890, %v1723, %v1727
    %v1743 = vsel %vm890, %v1725, %v1729
    %v1744 = vsel %vm890, %v1719, %v1723
    %v1745 = vsel %vm890, %v1721, %v1725
    %v1746 = vsel %vm890, %v1715, %v1719
    %v1747 = vsel %vm890, %v1717, %v1721
    %v1748 = vsel %vm890, %v1711, %v1715
    %v1749 = vsel %vm890, %v1713, %v1717
    %v1750 = vsel %vm890, %v1707, %v1711
    %v1751 = vsel %vm890, %v1709, %v1713
    %v1752 = vsel %vm890, %v1735, %v1707
    %v1753 = vsel %vm890, %v1737, %v1709
    %v1754 = vmul.f32 %v1752, %v275
    %v1755 = vmul.f32 %v1750, %v276
    %v1756 = vmul.f32 %v1748, %v277
    %v1757 = vmul.f32 %v1746, %v278
    %v1758 = vmul.f32 %v1744, %v279
    %v1759 = vmul.f32 %v1742, %v280
    %v1760 = vmul.f32 %v1740, %v281
    %v1761 = vmul.f32 %v1738, %v282
    %v1762 = vmul.f32 %v1753, %v275
    %v1763 = vmul.f32 %v1751, %v276
    %v1764 = vmul.f32 %v1749, %v277
    %v1765 = vmul.f32 %v1747, %v278
    %v1766 = vmul.f32 %v1745, %v279
    %v1767 = vmul.f32 %v1743, %v280
    %v1768 = vmul.f32 %v1741, %v281
    %v1769 = vmul.f32 %v1739, %v282
    %1770 = vrot.lane.b32.xlu0 %v1626, 31
    %v1771 = vpop.permute.xlu0 %1770
    %1772 = vrot.lane.b32.xlu0 %v1634, 31
    %v1773 = vpop.permute.xlu0 %1772
    %1774 = vrot.lane.b32.xlu0 %v1627, 31
    %v1775 = vpop.permute.xlu0 %1774
    %1776 = vrot.lane.b32.xlu0 %v1635, 31
    %v1777 = vpop.permute.xlu0 %1776
    %1778 = vrot.lane.b32.xlu0 %v1628, 31
    %v1779 = vpop.permute.xlu0 %1778
    %1780 = vrot.lane.b32.xlu0 %v1636, 31
    %v1781 = vpop.permute.xlu0 %1780
    %1782 = vrot.lane.b32.xlu0 %v1629, 31
    %v1783 = vpop.permute.xlu0 %1782
    %1784 = vrot.lane.b32.xlu0 %v1637, 31
    %v1785 = vpop.permute.xlu0 %1784
    %1786 = vrot.lane.b32.xlu0 %v1630, 31
    %v1787 = vpop.permute.xlu0 %1786
    %1788 = vrot.lane.b32.xlu0 %v1638, 31
    %v1789 = vpop.permute.xlu0 %1788
    %1790 = vrot.lane.b32.xlu0 %v1631, 31
    %v1791 = vpop.permute.xlu0 %1790
    %1792 = vrot.lane.b32.xlu0 %v1639, 31
    %v1793 = vpop.permute.xlu0 %1792
    %1794 = vrot.lane.b32.xlu0 %v1632, 31
    %v1795 = vpop.permute.xlu0 %1794
    %1796 = vrot.lane.b32.xlu0 %v1640, 31
    %v1797 = vpop.permute.xlu0 %1796
    %1798 = vrot.lane.b32.xlu0 %v1633, 31
    %v1799 = vpop.permute.xlu0 %1798
    %1800 = vrot.lane.b32.xlu0 %v1641, 31
    %v1801 = vpop.permute.xlu0 %1800
    %v1802 = vsel %vm923, %v1795, %v1799
    %v1803 = vsel %vm923, %v1797, %v1801
    %v1804 = vsel %vm923, %v1791, %v1795
    %v1805 = vsel %vm923, %v1793, %v1797
    %v1806 = vsel %vm923, %v1787, %v1791
    %v1807 = vsel %vm923, %v1789, %v1793
    %v1808 = vsel %vm923, %v1783, %v1787
    %v1809 = vsel %vm923, %v1785, %v1789
    %v1810 = vsel %vm923, %v1779, %v1783
    %v1811 = vsel %vm923, %v1781, %v1785
    %v1812 = vsel %vm923, %v1775, %v1779
    %v1813 = vsel %vm923, %v1777, %v1781
    %v1814 = vsel %vm923, %v1771, %v1775
    %v1815 = vsel %vm923, %v1773, %v1777
    %v1816 = vsel %vm923, %v1799, %v1771
    %v1817 = vsel %vm923, %v1801, %v1773
    %v1818 = vmul.f32 %v1816, %v299
    %v1819 = vmul.f32 %v1814, %v300
    %v1820 = vmul.f32 %v1812, %v301
    %v1821 = vmul.f32 %v1810, %v302
    %v1822 = vmul.f32 %v1808, %v303
    %v1823 = vmul.f32 %v1806, %v304
    %v1824 = vmul.f32 %v1804, %v305
    %v1825 = vmul.f32 %v1802, %v306
    %v1826 = vmul.f32 %v1817, %v299
    %v1827 = vmul.f32 %v1815, %v300
    %v1828 = vmul.f32 %v1813, %v301
    %v1829 = vmul.f32 %v1811, %v302
    %v1830 = vmul.f32 %v1809, %v303
    %v1831 = vmul.f32 %v1807, %v304
    %v1832 = vmul.f32 %v1805, %v305
    %v1833 = vmul.f32 %v1803, %v306
    %1834 = vrot.lane.b32.xlu0 %v1626, 1
    %v1835 = vpop.permute.xlu0 %1834
    %1836 = vrot.lane.b32.xlu0 %v1634, 1
    %v1837 = vpop.permute.xlu0 %1836
    %1838 = vrot.lane.b32.xlu0 %v1627, 1
    %v1839 = vpop.permute.xlu0 %1838
    %1840 = vrot.lane.b32.xlu0 %v1635, 1
    %v1841 = vpop.permute.xlu0 %1840
    %1842 = vrot.lane.b32.xlu0 %v1628, 1
    %v1843 = vpop.permute.xlu0 %1842
    %1844 = vrot.lane.b32.xlu0 %v1636, 1
    %v1845 = vpop.permute.xlu0 %1844
    %1846 = vrot.lane.b32.xlu0 %v1629, 1
    %v1847 = vpop.permute.xlu0 %1846
    %1848 = vrot.lane.b32.xlu0 %v1637, 1
    %v1849 = vpop.permute.xlu0 %1848
    %1850 = vrot.lane.b32.xlu0 %v1630, 1
    %v1851 = vpop.permute.xlu0 %1850
    %1852 = vrot.lane.b32.xlu0 %v1638, 1
    %v1853 = vpop.permute.xlu0 %1852
    %1854 = vrot.lane.b32.xlu0 %v1631, 1
    %v1855 = vpop.permute.xlu0 %1854
    %1856 = vrot.lane.b32.xlu0 %v1639, 1
    %v1857 = vpop.permute.xlu0 %1856
    %1858 = vrot.lane.b32.xlu0 %v1632, 1
    %v1859 = vpop.permute.xlu0 %1858
    %1860 = vrot.lane.b32.xlu0 %v1640, 1
    %v1861 = vpop.permute.xlu0 %1860
    %1862 = vrot.lane.b32.xlu0 %v1633, 1
    %v1863 = vpop.permute.xlu0 %1862
    %1864 = vrot.lane.b32.xlu0 %v1641, 1
    %v1865 = vpop.permute.xlu0 %1864
    %v1866 = vsel %vm1022, %v1859, %v1863
    %v1867 = vsel %vm1022, %v1861, %v1865
    %v1868 = vsel %vm1022, %v1855, %v1859
    %v1869 = vsel %vm1022, %v1857, %v1861
    %v1870 = vsel %vm1022, %v1851, %v1855
    %v1871 = vsel %vm1022, %v1853, %v1857
    %v1872 = vsel %vm1022, %v1847, %v1851
    %v1873 = vsel %vm1022, %v1849, %v1853
    %v1874 = vsel %vm1022, %v1843, %v1847
    %v1875 = vsel %vm1022, %v1845, %v1849
    %v1876 = vsel %vm1022, %v1839, %v1843
    %v1877 = vsel %vm1022, %v1841, %v1845
    %v1878 = vsel %vm1022, %v1835, %v1839
    %v1879 = vsel %vm1022, %v1837, %v1841
    %v1880 = vsel %vm1022, %v1863, %v1835
    %v1881 = vsel %vm1022, %v1865, %v1837
    %v1882 = vmul.f32 %v1880, %v355
    %v1883 = vmul.f32 %v1878, %v356
    %v1884 = vmul.f32 %v1876, %v357
    %v1885 = vmul.f32 %v1874, %v358
    %v1886 = vmul.f32 %v1872, %v359
    %v1887 = vmul.f32 %v1870, %v360
    %v1888 = vmul.f32 %v1868, %v361
    %v1889 = vmul.f32 %v1866, %v362
    %v1890 = vmul.f32 %v1881, %v355
    %v1891 = vmul.f32 %v1879, %v356
    %v1892 = vmul.f32 %v1877, %v357
    %v1893 = vmul.f32 %v1875, %v358
    %v1894 = vmul.f32 %v1873, %v359
    %v1895 = vmul.f32 %v1871, %v360
    %v1896 = vmul.f32 %v1869, %v361
    %v1897 = vmul.f32 %v1867, %v362
    %1898 = vrot.lane.b32.xlu0 %v1626, 127
    %v1899 = vpop.permute.xlu0 %1898
    %1900 = vrot.lane.b32.xlu0 %v1634, 127
    %v1901 = vpop.permute.xlu0 %1900
    %1902 = vrot.lane.b32.xlu0 %v1627, 127
    %v1903 = vpop.permute.xlu0 %1902
    %1904 = vrot.lane.b32.xlu0 %v1635, 127
    %v1905 = vpop.permute.xlu0 %1904
    %1906 = vrot.lane.b32.xlu0 %v1628, 127
    %v1907 = vpop.permute.xlu0 %1906
    %1908 = vrot.lane.b32.xlu0 %v1636, 127
    %v1909 = vpop.permute.xlu0 %1908
    %1910 = vrot.lane.b32.xlu0 %v1629, 127
    %v1911 = vpop.permute.xlu0 %1910
    %1912 = vrot.lane.b32.xlu0 %v1637, 127
    %v1913 = vpop.permute.xlu0 %1912
    %1914 = vrot.lane.b32.xlu0 %v1630, 127
    %v1915 = vpop.permute.xlu0 %1914
    %1916 = vrot.lane.b32.xlu0 %v1638, 127
    %v1917 = vpop.permute.xlu0 %1916
    %1918 = vrot.lane.b32.xlu0 %v1631, 127
    %v1919 = vpop.permute.xlu0 %1918
    %1920 = vrot.lane.b32.xlu0 %v1639, 127
    %v1921 = vpop.permute.xlu0 %1920
    %1922 = vrot.lane.b32.xlu0 %v1632, 127
    %v1923 = vpop.permute.xlu0 %1922
    %1924 = vrot.lane.b32.xlu0 %v1640, 127
    %v1925 = vpop.permute.xlu0 %1924
    %1926 = vrot.lane.b32.xlu0 %v1633, 127
    %v1927 = vpop.permute.xlu0 %1926
    %1928 = vrot.lane.b32.xlu0 %v1641, 127
    %v1929 = vpop.permute.xlu0 %1928
    %v1930 = vsel %vm1055, %v1923, %v1927
    %v1931 = vsel %vm1055, %v1925, %v1929
    %v1932 = vsel %vm1055, %v1919, %v1923
    %v1933 = vsel %vm1055, %v1921, %v1925
    %v1934 = vsel %vm1055, %v1915, %v1919
    %v1935 = vsel %vm1055, %v1917, %v1921
    %v1936 = vsel %vm1055, %v1911, %v1915
    %v1937 = vsel %vm1055, %v1913, %v1917
    %v1938 = vsel %vm1055, %v1907, %v1911
    %v1939 = vsel %vm1055, %v1909, %v1913
    %v1940 = vsel %vm1055, %v1903, %v1907
    %v1941 = vsel %vm1055, %v1905, %v1909
    %v1942 = vsel %vm1055, %v1899, %v1903
    %v1943 = vsel %vm1055, %v1901, %v1905
    %v1944 = vsel %vm1055, %v1927, %v1899
    %v1945 = vsel %vm1055, %v1929, %v1901
    %v1946 = vmul.f32 %v1942, %v371
    %v1947 = vmul.f32 %v1940, %v372
    %v1948 = vmul.f32 %v1938, %v373
    %v1949 = vmul.f32 %v1936, %v374
    %v1950 = vmul.f32 %v1934, %v375
    %v1951 = vmul.f32 %v1932, %v376
    %v1952 = vmul.f32 %v1930, %v377
    %v1953 = vmul.f32 %v1944, %v378
    %v1954 = vmul.f32 %v1943, %v371
    %v1955 = vmul.f32 %v1941, %v372
    %v1956 = vmul.f32 %v1939, %v373
    %v1957 = vmul.f32 %v1937, %v374
    %v1958 = vmul.f32 %v1935, %v375
    %v1959 = vmul.f32 %v1933, %v376
    %v1960 = vmul.f32 %v1931, %v377
    %v1961 = vmul.f32 %v1945, %v378
    %1962 = vrot.lane.b32.xlu0 %v1626, 97
    %v1963 = vpop.permute.xlu0 %1962
    %1964 = vrot.lane.b32.xlu0 %v1634, 97
    %v1965 = vpop.permute.xlu0 %1964
    %1966 = vrot.lane.b32.xlu0 %v1627, 97
    %v1967 = vpop.permute.xlu0 %1966
    %1968 = vrot.lane.b32.xlu0 %v1635, 97
    %v1969 = vpop.permute.xlu0 %1968
    %1970 = vrot.lane.b32.xlu0 %v1628, 97
    %v1971 = vpop.permute.xlu0 %1970
    %1972 = vrot.lane.b32.xlu0 %v1636, 97
    %v1973 = vpop.permute.xlu0 %1972
    %1974 = vrot.lane.b32.xlu0 %v1629, 97
    %v1975 = vpop.permute.xlu0 %1974
    %1976 = vrot.lane.b32.xlu0 %v1637, 97
    %v1977 = vpop.permute.xlu0 %1976
    %1978 = vrot.lane.b32.xlu0 %v1630, 97
    %v1979 = vpop.permute.xlu0 %1978
    %1980 = vrot.lane.b32.xlu0 %v1638, 97
    %v1981 = vpop.permute.xlu0 %1980
    %1982 = vrot.lane.b32.xlu0 %v1631, 97
    %v1983 = vpop.permute.xlu0 %1982
    %1984 = vrot.lane.b32.xlu0 %v1639, 97
    %v1985 = vpop.permute.xlu0 %1984
    %1986 = vrot.lane.b32.xlu0 %v1632, 97
    %v1987 = vpop.permute.xlu0 %1986
    %1988 = vrot.lane.b32.xlu0 %v1640, 97
    %v1989 = vpop.permute.xlu0 %1988
    %1990 = vrot.lane.b32.xlu0 %v1633, 97
    %v1991 = vpop.permute.xlu0 %1990
    %1992 = vrot.lane.b32.xlu0 %v1641, 97
    %v1993 = vpop.permute.xlu0 %1992
    %v1994 = vsel %vm1154, %v1987, %v1991
    %v1995 = vsel %vm1154, %v1989, %v1993
    %v1996 = vsel %vm1154, %v1983, %v1987
    %v1997 = vsel %vm1154, %v1985, %v1989
    %v1998 = vsel %vm1154, %v1979, %v1983
    %v1999 = vsel %vm1154, %v1981, %v1985
    %v2000 = vsel %vm1154, %v1975, %v1979
    %v2001 = vsel %vm1154, %v1977, %v1981
    %v2002 = vsel %vm1154, %v1971, %v1975
    %v2003 = vsel %vm1154, %v1973, %v1977
    %v2004 = vsel %vm1154, %v1967, %v1971
    %v2005 = vsel %vm1154, %v1969, %v1973
    %v2006 = vsel %vm1154, %v1963, %v1967
    %v2007 = vsel %vm1154, %v1965, %v1969
    %v2008 = vsel %vm1154, %v1991, %v1963
    %v2009 = vsel %vm1154, %v1993, %v1965
    %v2010 = vmul.f32 %v2006, %v443
    %v2011 = vmul.f32 %v2004, %v444
    %v2012 = vmul.f32 %v2002, %v445
    %v2013 = vmul.f32 %v2000, %v446
    %v2014 = vmul.f32 %v1998, %v447
    %v2015 = vmul.f32 %v1996, %v448
    %v2016 = vmul.f32 %v1994, %v449
    %v2017 = vmul.f32 %v2008, %v450
    %v2018 = vmul.f32 %v2007, %v443
    %v2019 = vmul.f32 %v2005, %v444
    %v2020 = vmul.f32 %v2003, %v445
    %v2021 = vmul.f32 %v2001, %v446
    %v2022 = vmul.f32 %v1999, %v447
    %v2023 = vmul.f32 %v1997, %v448
    %v2024 = vmul.f32 %v1995, %v449
    %v2025 = vmul.f32 %v2009, %v450
    %2026 = vrot.lane.b32.xlu0 %v1626, 96
    %v2027 = vpop.permute.xlu0 %2026
    %2028 = vrot.lane.b32.xlu0 %v1634, 96
    %v2029 = vpop.permute.xlu0 %2028
    %2030 = vrot.lane.b32.xlu0 %v1627, 96
    %v2031 = vpop.permute.xlu0 %2030
    %2032 = vrot.lane.b32.xlu0 %v1635, 96
    %v2033 = vpop.permute.xlu0 %2032
    %2034 = vrot.lane.b32.xlu0 %v1628, 96
    %v2035 = vpop.permute.xlu0 %2034
    %2036 = vrot.lane.b32.xlu0 %v1636, 96
    %v2037 = vpop.permute.xlu0 %2036
    %2038 = vrot.lane.b32.xlu0 %v1629, 96
    %v2039 = vpop.permute.xlu0 %2038
    %2040 = vrot.lane.b32.xlu0 %v1637, 96
    %v2041 = vpop.permute.xlu0 %2040
    %2042 = vrot.lane.b32.xlu0 %v1630, 96
    %v2043 = vpop.permute.xlu0 %2042
    %2044 = vrot.lane.b32.xlu0 %v1638, 96
    %v2045 = vpop.permute.xlu0 %2044
    %2046 = vrot.lane.b32.xlu0 %v1631, 96
    %v2047 = vpop.permute.xlu0 %2046
    %2048 = vrot.lane.b32.xlu0 %v1639, 96
    %v2049 = vpop.permute.xlu0 %2048
    %2050 = vrot.lane.b32.xlu0 %v1632, 96
    %v2051 = vpop.permute.xlu0 %2050
    %2052 = vrot.lane.b32.xlu0 %v1640, 96
    %v2053 = vpop.permute.xlu0 %2052
    %2054 = vrot.lane.b32.xlu0 %v1633, 96
    %v2055 = vpop.permute.xlu0 %2054
    %2056 = vrot.lane.b32.xlu0 %v1641, 96
    %v2057 = vpop.permute.xlu0 %2056
    %v2058 = vsel %vm1187, %v2051, %v2055
    %v2059 = vsel %vm1187, %v2053, %v2057
    %v2060 = vsel %vm1187, %v2047, %v2051
    %v2061 = vsel %vm1187, %v2049, %v2053
    %v2062 = vsel %vm1187, %v2043, %v2047
    %v2063 = vsel %vm1187, %v2045, %v2049
    %v2064 = vsel %vm1187, %v2039, %v2043
    %v2065 = vsel %vm1187, %v2041, %v2045
    %v2066 = vsel %vm1187, %v2035, %v2039
    %v2067 = vsel %vm1187, %v2037, %v2041
    %v2068 = vsel %vm1187, %v2031, %v2035
    %v2069 = vsel %vm1187, %v2033, %v2037
    %v2070 = vsel %vm1187, %v2027, %v2031
    %v2071 = vsel %vm1187, %v2029, %v2033
    %v2072 = vsel %vm1187, %v2055, %v2027
    %v2073 = vsel %vm1187, %v2057, %v2029
    %v2074 = vmul.f32 %v2070, %v459
    %v2075 = vmul.f32 %v2068, %v460
    %v2076 = vmul.f32 %v2066, %v461
    %v2077 = vmul.f32 %v2064, %v462
    %v2078 = vmul.f32 %v2062, %v463
    %v2079 = vmul.f32 %v2060, %v464
    %v2080 = vmul.f32 %v2058, %v465
    %v2081 = vmul.f32 %v2072, %v466
    %v2082 = vmul.f32 %v2071, %v459
    %v2083 = vmul.f32 %v2069, %v460
    %v2084 = vmul.f32 %v2067, %v461
    %v2085 = vmul.f32 %v2065, %v462
    %v2086 = vmul.f32 %v2063, %v463
    %v2087 = vmul.f32 %v2061, %v464
    %v2088 = vmul.f32 %v2059, %v465
    %v2089 = vmul.f32 %v2073, %v466
    %2090 = vrot.lane.b32.xlu0 %v1626, 95
    %v2091 = vpop.permute.xlu0 %2090
    %2092 = vrot.lane.b32.xlu0 %v1634, 95
    %v2093 = vpop.permute.xlu0 %2092
    %2094 = vrot.lane.b32.xlu0 %v1627, 95
    %v2095 = vpop.permute.xlu0 %2094
    %2096 = vrot.lane.b32.xlu0 %v1635, 95
    %v2097 = vpop.permute.xlu0 %2096
    %2098 = vrot.lane.b32.xlu0 %v1628, 95
    %v2099 = vpop.permute.xlu0 %2098
    %2100 = vrot.lane.b32.xlu0 %v1636, 95
    %v2101 = vpop.permute.xlu0 %2100
    %2102 = vrot.lane.b32.xlu0 %v1629, 95
    %v2103 = vpop.permute.xlu0 %2102
    %2104 = vrot.lane.b32.xlu0 %v1637, 95
    %v2105 = vpop.permute.xlu0 %2104
    %2106 = vrot.lane.b32.xlu0 %v1630, 95
    %v2107 = vpop.permute.xlu0 %2106
    %2108 = vrot.lane.b32.xlu0 %v1638, 95
    %v2109 = vpop.permute.xlu0 %2108
    %2110 = vrot.lane.b32.xlu0 %v1631, 95
    %v2111 = vpop.permute.xlu0 %2110
    %2112 = vrot.lane.b32.xlu0 %v1639, 95
    %v2113 = vpop.permute.xlu0 %2112
    %2114 = vrot.lane.b32.xlu0 %v1632, 95
    %v2115 = vpop.permute.xlu0 %2114
    %2116 = vrot.lane.b32.xlu0 %v1640, 95
    %v2117 = vpop.permute.xlu0 %2116
    %2118 = vrot.lane.b32.xlu0 %v1633, 95
    %v2119 = vpop.permute.xlu0 %2118
    %2120 = vrot.lane.b32.xlu0 %v1641, 95
    %v2121 = vpop.permute.xlu0 %2120
    %v2122 = vsel %vm1220, %v2115, %v2119
    %v2123 = vsel %vm1220, %v2117, %v2121
    %v2124 = vsel %vm1220, %v2111, %v2115
    %v2125 = vsel %vm1220, %v2113, %v2117
    %v2126 = vsel %vm1220, %v2107, %v2111
    %v2127 = vsel %vm1220, %v2109, %v2113
    %v2128 = vsel %vm1220, %v2103, %v2107
    %v2129 = vsel %vm1220, %v2105, %v2109
    %v2130 = vsel %vm1220, %v2099, %v2103
    %v2131 = vsel %vm1220, %v2101, %v2105
    %v2132 = vsel %vm1220, %v2095, %v2099
    %v2133 = vsel %vm1220, %v2097, %v2101
    %v2134 = vsel %vm1220, %v2091, %v2095
    %v2135 = vsel %vm1220, %v2093, %v2097
    %v2136 = vsel %vm1220, %v2119, %v2091
    %v2137 = vsel %vm1220, %v2121, %v2093
    %v2138 = vmul.f32 %v2134, %v483
    %v2139 = vmul.f32 %v2132, %v484
    %v2140 = vmul.f32 %v2130, %v485
    %v2141 = vmul.f32 %v2128, %v486
    %v2142 = vmul.f32 %v2126, %v487
    %v2143 = vmul.f32 %v2124, %v488
    %v2144 = vmul.f32 %v2122, %v489
    %v2145 = vmul.f32 %v2136, %v490
    %v2146 = vmul.f32 %v2135, %v483
    %v2147 = vmul.f32 %v2133, %v484
    %v2148 = vmul.f32 %v2131, %v485
    %v2149 = vmul.f32 %v2129, %v486
    %v2150 = vmul.f32 %v2127, %v487
    %v2151 = vmul.f32 %v2125, %v488
    %v2152 = vmul.f32 %v2123, %v489
    %v2153 = vmul.f32 %v2137, %v490
    %v2154 = vld [vmem:[%s2] sm:$0xff]
    %v2155 = vld [vmem:[%s2 + $0x8] sm:$0xff]
    %v2156 = vld [vmem:[%s2 + $0x10] sm:$0xff]
    %v2157 = vld [vmem:[%s2 + $0x18] sm:$0xff]
    %v2158 = vld [vmem:[%s2 + $0x20] sm:$0xff]
    %v2159 = vld [vmem:[%s2 + $0x28] sm:$0xff]
    %v2160 = vld [vmem:[%s2 + $0x30] sm:$0xff]
    %v2161 = vld [vmem:[%s2 + $0x38] sm:$0xff]
    %v2162 = vld [vmem:[%s2 + $0x40] sm:$0xff]
    %v2163 = vpack.c.bf16 %v1698, %v1690
    %v2164 = vpack.c.bf16 %v1699, %v1691
    %v2165 = vpack.c.bf16 %v1700, %v1692
    %v2166 = vpack.c.bf16 %v1701, %v1693
    %v2167 = vpack.c.bf16 %v1702, %v1694
    %v2168 = vpack.c.bf16 %v1703, %v1695
    %v2169 = vpack.c.bf16 %v1704, %v1696
    %v2170 = vpack.c.bf16 %v1705, %v1697
    %v2171 = vpack.c.bf16 %v1762, %v1754
    %v2172 = vpack.c.bf16 %v1763, %v1755
    %v2173 = vpack.c.bf16 %v1764, %v1756
    %v2174 = vpack.c.bf16 %v1765, %v1757
    %v2175 = vpack.c.bf16 %v1766, %v1758
    %v2176 = vpack.c.bf16 %v1767, %v1759
    %v2177 = vpack.c.bf16 %v1768, %v1760
    %v2178 = vpack.c.bf16 %v1769, %v1761
    %v2179 = vpack.c.bf16 %v1826, %v1818
    %v2180 = vpack.c.bf16 %v1827, %v1819
    %v2181 = vpack.c.bf16 %v1828, %v1820
    %v2182 = vpack.c.bf16 %v1829, %v1821
    %v2183 = vpack.c.bf16 %v1830, %v1822
    %v2184 = vpack.c.bf16 %v1831, %v1823
    %v2185 = vpack.c.bf16 %v1832, %v1824
    %v2186 = vpack.c.bf16 %v1833, %v1825
    %v2187 = vpack.c.bf16 %v1890, %v1882
    %v2188 = vpack.c.bf16 %v1891, %v1883
    %v2189 = vpack.c.bf16 %v1892, %v1884
    %v2190 = vpack.c.bf16 %v1893, %v1885
    %v2191 = vpack.c.bf16 %v1894, %v1886
    %v2192 = vpack.c.bf16 %v1895, %v1887
    %v2193 = vpack.c.bf16 %v1896, %v1888
    %v2194 = vpack.c.bf16 %v1897, %v1889
    %v2195 = vpack.c.bf16 %v1634, %v1626
    %v2196 = vpack.c.bf16 %v1635, %v1627
    %v2197 = vpack.c.bf16 %v1636, %v1628
    %v2198 = vpack.c.bf16 %v1637, %v1629
    %v2199 = vpack.c.bf16 %v1638, %v1630
    %v2200 = vpack.c.bf16 %v1639, %v1631
    %v2201 = vpack.c.bf16 %v1640, %v1632
    %v2202 = vpack.c.bf16 %v1641, %v1633
    %v2203 = vpack.c.bf16 %v1954, %v1946
    %v2204 = vpack.c.bf16 %v1955, %v1947
    %v2205 = vpack.c.bf16 %v1956, %v1948
    %v2206 = vpack.c.bf16 %v1957, %v1949
    %v2207 = vpack.c.bf16 %v1958, %v1950
    %v2208 = vpack.c.bf16 %v1959, %v1951
    %v2209 = vpack.c.bf16 %v1960, %v1952
    %v2210 = vpack.c.bf16 %v1961, %v1953
    %v2211 = vpack.c.bf16 %v2018, %v2010
    %v2212 = vpack.c.bf16 %v2019, %v2011
    %v2213 = vpack.c.bf16 %v2020, %v2012
    %v2214 = vpack.c.bf16 %v2021, %v2013
    %v2215 = vpack.c.bf16 %v2022, %v2014
    %v2216 = vpack.c.bf16 %v2023, %v2015
    %v2217 = vpack.c.bf16 %v2024, %v2016
    %v2218 = vpack.c.bf16 %v2025, %v2017
    %v2219 = vpack.c.bf16 %v2082, %v2074
    %v2220 = vpack.c.bf16 %v2083, %v2075
    %v2221 = vpack.c.bf16 %v2084, %v2076
    %v2222 = vpack.c.bf16 %v2085, %v2077
    %v2223 = vpack.c.bf16 %v2086, %v2078
    %v2224 = vpack.c.bf16 %v2087, %v2079
    %v2225 = vpack.c.bf16 %v2088, %v2080
    %v2226 = vpack.c.bf16 %v2089, %v2081
    %v2227 = vpack.c.bf16 %v2146, %v2138
    %v2228 = vpack.c.bf16 %v2147, %v2139
    %v2229 = vpack.c.bf16 %v2148, %v2140
    %v2230 = vpack.c.bf16 %v2149, %v2141
    %v2231 = vpack.c.bf16 %v2150, %v2142
    %v2232 = vpack.c.bf16 %v2151, %v2143
    %v2233 = vpack.c.bf16 %v2152, %v2144
    %v2234 = vpack.c.bf16 %v2153, %v2145
    %v2244 = vunpack.c.l.b16 %v2154
    %v2245 = vunpack.c.h.b16 %v2154
    %v2246 = vunpack.c.l.b16 %v2155
    %v2247 = vunpack.c.h.b16 %v2155
    %v2248 = vunpack.c.l.b16 %v2156
    %v2249 = vunpack.c.h.b16 %v2156
    %v2250 = vunpack.c.l.b16 %v2157
    %v2251 = vunpack.c.h.b16 %v2157
    %v2252 = vunpack.c.l.b16 %v2158
    %v2253 = vunpack.c.h.b16 %v2158
    %v2254 = vunpack.c.l.b16 %v2159
    %v2255 = vunpack.c.h.b16 %v2159
    %v2256 = vunpack.c.l.b16 %v2160
    %v2257 = vunpack.c.h.b16 %v2160
    %v2258 = vunpack.c.l.b16 %v2161
    %v2259 = vunpack.c.h.b16 %v2161
    %v2260 = vunpack.c.l.b16 %v2162
    %v2261 = vunpack.c.h.b16 %v2162
    %v2262 = vpack.c.b16 %v2246, %v2244
    %v2263 = vpack.c.b16 %v2247, %v2245
    %v2264 = vpack.c.b16 %v2250, %v2248
    %v2265 = vpack.c.b16 %v2251, %v2249
    %v2266 = vpack.c.b16 %v2254, %v2252
    %v2267 = vpack.c.b16 %v2255, %v2253
    %v2268 = vpack.c.b16 %v2258, %v2256
    %v2269 = vpack.c.b16 %v2259, %v2257
    %v2270 = vpack.c.b16 %v2260, %v2260
    %v2271 = vpack.c.b16 %v2261, %v2261
    %vm2277 = vcmask 130048
    %v2279 = vsel %vm2277, %v2263, 0
    %v2282 = vsel %vm2277, %v2265, 0
    %v2285 = vsel %vm2277, %v2267, 0
    %v2288 = vsel %vm2277, %v2269, 0
    %v2291 = vsel %vm2277, %v2271, 0
    %2293 = vmatprep.subr.bf16.mxu0 %v2164
    %2294 = vmatpush1.bf16.msra.mxu0 %v2163
    %2295 = vmatprep.subr.bf16.mxu0 %v2172
    %2296 = vmatpush1.bf16.msra.mxu0 %v2171
    %2297 = vmatprep.subr.bf16.mxu0 %v2180
    %2298 = vmatpush1.bf16.msra.mxu0 %v2179
    %2299 = vmatprep.subr.bf16.mxu0 %v2188
    %2300 = vmatpush1.bf16.msra.mxu0 %v2187
    %2301 = vmatprep.subr.bf16.mxu0 %v2196
    %2302 = vmatpush1.bf16.msra.mxu0 %v2195
    %2303 = vmatprep.subr.bf16.mxu0 %v2204
    %2304 = vmatpush1.bf16.msra.mxu0 %v2203
    %2305 = vmatprep.subr.bf16.mxu0 %v2212
    %2306 = vmatpush1.bf16.msra.mxu0 %v2211
    %2307 = vmatprep.subr.bf16.mxu0 %v2220
    %2308 = vmatpush1.bf16.msra.mxu0 %v2219
    %2309 = vmatprep.subr.bf16.mxu0 %v2228
    %2310 = vmatpush1.bf16.msra.mxu0 %v2227
    %2311 = vmatprep.subr.bf16.mxu0 0
    %2312 = vmatpush1.bf16.msra.mxu0 0
    %2313 = vmatprep.subr.bf16.mxu0 0
    %2314 = vmatpush1.bf16.msra.mxu0 0
    %2315 = vmatprep.subr.bf16.mxu0 0
    %2316 = vmatpush1.bf16.msra.mxu0 0
    %2317 = vmatprep.subr.bf16.mxu0 0
    %2318 = vmatpush1.bf16.msra.mxu0 0
    %2319 = vmatprep.subr.bf16.mxu0 0
    %2320 = vmatpush1.bf16.msra.mxu0 0
    %2321 = vmatprep.subr.bf16.mxu0 0
    %2322 = vmatpush1.bf16.msra.mxu0 0
    %2323 = vmatprep.subr.bf16.mxu0 0
    %2324 = vmatpush1.bf16.msra.mxu0 0
    %2325 = vmatprep.mubr.bf16.mxu0 %v2279
    %2326 = vmatmul.mubr.bf16.gmra.mrb[0].mxu0 %v2262
    %v2327 = vpop.f32.mrb[0].mxu0
    %v2328 = vadd.f32 0.0, %v2327
    %v2329 = vpop.f32.mrb[0].mxu0
    %v2330 = vadd.f32 0.0, %v2329
    %v2331 = vpop.f32.mrb[0].mxu0
    %v2332 = vadd.f32 0.0, %v2331
    %v2333 = vpop.f32.mrb[0].mxu0
    %v2334 = vadd.f32 0.0, %v2333
    %2335 = vmatprep.mubr.bf16.mxu0 %v2282
    %2336 = vmatmul.mubr.bf16.gmra.mrb[0].mxu0 %v2264
    %v2337 = vpop.f32.mrb[0].mxu0
    %v2338 = vadd.f32 0.0, %v2337
    %v2339 = vpop.f32.mrb[0].mxu0
    %v2340 = vadd.f32 0.0, %v2339
    %v2341 = vpop.f32.mrb[0].mxu0
    %v2342 = vadd.f32 0.0, %v2341
    %v2343 = vpop.f32.mrb[0].mxu0
    %v2344 = vadd.f32 0.0, %v2343
    %2345 = vmatprep.mubr.bf16.mxu0 %v2285
    %2346 = vmatmul.mubr.bf16.gmra.mrb[0].mxu0 %v2266
    %v2347 = vpop.f32.mrb[0].mxu0
    %v2348 = vadd.f32 0.0, %v2347
    %v2349 = vpop.f32.mrb[0].mxu0
    %v2350 = vadd.f32 0.0, %v2349
    %v2351 = vpop.f32.mrb[0].mxu0
    %v2352 = vadd.f32 0.0, %v2351
    %v2353 = vpop.f32.mrb[0].mxu0
    %v2354 = vadd.f32 0.0, %v2353
    %2355 = vmatprep.mubr.bf16.mxu0 %v2288
    %2356 = vmatmul.mubr.bf16.gmra.mrb[0].mxu0 %v2268
    %v2357 = vpop.f32.mrb[0].mxu0
    %v2358 = vadd.f32 0.0, %v2357
    %v2359 = vpop.f32.mrb[0].mxu0
    %v2360 = vadd.f32 0.0, %v2359
    %v2361 = vpop.f32.mrb[0].mxu0
    %v2362 = vadd.f32 0.0, %v2361
    %v2363 = vpop.f32.mrb[0].mxu0
    %v2364 = vadd.f32 0.0, %v2363
    %2365 = vmatprep.mubr.bf16.mxu0 %v2291
    %2366 = vmatmul.mubr.bf16.gmra.mrb[0].mxu0 %v2270
    %v2367 = vpop.f32.mrb[0].mxu0
    %v2368 = vadd.f32 0.0, %v2367
    %v2369 = vpop.f32.mrb[0].mxu0
    %v2370 = vadd.f32 0.0, %v2369
    %v2371 = vpop.f32.mrb[0].mxu0
    %v2372 = vpop.f32.mrb[0].mxu0
    %2373 = vdwg.mxu0
    %2374 = vmatprep.subr.bf16.mxu0 %v2166
    %2375 = vmatpush1.bf16.msra.mxu0 %v2165
    %2376 = vmatprep.subr.bf16.mxu0 %v2174
    %2377 = vmatpush1.bf16.msra.mxu0 %v2173
    %2378 = vmatprep.subr.bf16.mxu0 %v2182
    %2379 = vmatpush1.bf16.msra.mxu0 %v2181
    %2380 = vmatprep.subr.bf16.mxu0 %v2190
    %2381 = vmatpush1.bf16.msra.mxu0 %v2189
    %2382 = vmatprep.subr.bf16.mxu0 %v2198
    %2383 = vmatpush1.bf16.msra.mxu0 %v2197
    %2384 = vmatprep.subr.bf16.mxu0 %v2206
    %2385 = vmatpush1.bf16.msra.mxu0 %v2205
    %2386 = vmatprep.subr.bf16.mxu0 %v2214
    %2387 = vmatpush1.bf16.msra.mxu0 %v2213
    %2388 = vmatprep.subr.bf16.mxu0 %v2222
    %2389 = vmatpush1.bf16.msra.mxu0 %v2221
    %2390 = vmatprep.subr.bf16.mxu0 %v2230
    %2391 = vmatpush1.bf16.msra.mxu0 %v2229
    %2392 = vmatprep.subr.bf16.mxu0 0
    %2393 = vmatpush1.bf16.msra.mxu0 0
    %2394 = vmatprep.subr.bf16.mxu0 0
    %2395 = vmatpush1.bf16.msra.mxu0 0
    %2396 = vmatprep.subr.bf16.mxu0 0
    %2397 = vmatpush1.bf16.msra.mxu0 0
    %2398 = vmatprep.subr.bf16.mxu0 0
    %2399 = vmatpush1.bf16.msra.mxu0 0
    %2400 = vmatprep.subr.bf16.mxu0 0
    %2401 = vmatpush1.bf16.msra.mxu0 0
    %2402 = vmatprep.subr.bf16.mxu0 0
    %2403 = vmatpush1.bf16.msra.mxu0 0
    %2404 = vmatprep.subr.bf16.mxu0 0
    %2405 = vmatpush1.bf16.msra.mxu0 0
    %2406 = vmatprep.mubr.bf16.mxu0 %v2279
    %2407 = vmatmul.mubr.bf16.gmra.mrb[0].mxu0 %v2262
    %v2408 = vpop.f32.mrb[0].mxu0
    %v2409 = vadd.f32 0.0, %v2408
    %v2410 = vpop.f32.mrb[0].mxu0
    %v2411 = vadd.f32 0.0, %v2410
    %v2412 = vpop.f32.mrb[0].mxu0
    %v2413 = vadd.f32 0.0, %v2412
    %v2414 = vpop.f32.mrb[0].mxu0
    %v2415 = vadd.f32 0.0, %v2414
    %2416 = vmatprep.mubr.bf16.mxu0 %v2282
    %2417 = vmatmul.mubr.bf16.gmra.mrb[0].mxu0 %v2264
    %v2418 = vpop.f32.mrb[0].mxu0
    %v2419 = vadd.f32 0.0, %v2418
    %v2420 = vpop.f32.mrb[0].mxu0
    %v2421 = vadd.f32 0.0, %v2420
    %v2422 = vpop.f32.mrb[0].mxu0
    %v2423 = vadd.f32 0.0, %v2422
    %v2424 = vpop.f32.mrb[0].mxu0
    %v2425 = vadd.f32 0.0, %v2424
    %2426 = vmatprep.mubr.bf16.mxu0 %v2285
    %2427 = vmatmul.mubr.bf16.gmra.mrb[0].mxu0 %v2266
    %v2428 = vpop.f32.mrb[0].mxu0
    %v2429 = vadd.f32 0.0, %v2428
    %v2430 = vpop.f32.mrb[0].mxu0
    %v2431 = vadd.f32 0.0, %v2430
    %v2432 = vpop.f32.mrb[0].mxu0
    %v2433 = vadd.f32 0.0, %v2432
    %v2434 = vpop.f32.mrb[0].mxu0
    %v2435 = vadd.f32 0.0, %v2434
    %2436 = vmatprep.mubr.bf16.mxu0 %v2288
    %2437 = vmatmul.mubr.bf16.gmra.mrb[0].mxu0 %v2268
    %v2438 = vpop.f32.mrb[0].mxu0
    %v2439 = vadd.f32 0.0, %v2438
    %v2440 = vpop.f32.mrb[0].mxu0
    %v2441 = vadd.f32 0.0, %v2440
    %v2442 = vpop.f32.mrb[0].mxu0
    %v2443 = vadd.f32 0.0, %v2442
    %v2444 = vpop.f32.mrb[0].mxu0
    %v2445 = vadd.f32 0.0, %v2444
    %2446 = vmatprep.mubr.bf16.mxu0 %v2291
    %2447 = vmatmul.mubr.bf16.gmra.mrb[0].mxu0 %v2270
    %v2448 = vpop.f32.mrb[0].mxu0
    %v2449 = vadd.f32 0.0, %v2448
    %v2450 = vpop.f32.mrb[0].mxu0
    %v2451 = vadd.f32 0.0, %v2450
    %v2452 = vpop.f32.mrb[0].mxu0
    %v2453 = vpop.f32.mrb[0].mxu0
    %2454 = vdwg.mxu0
    %2455 = vmatprep.subr.bf16.mxu0 %v2168
    %2456 = vmatpush1.bf16.msra.mxu0 %v2167
    %2457 = vmatprep.subr.bf16.mxu0 %v2176
    %2458 = vmatpush1.bf16.msra.mxu0 %v2175
    %2459 = vmatprep.subr.bf16.mxu0 %v2184
    %2460 = vmatpush1.bf16.msra.mxu0 %v2183
    %2461 = vmatprep.subr.bf16.mxu0 %v2192
    %2462 = vmatpush1.bf16.msra.mxu0 %v2191
    %2463 = vmatprep.subr.bf16.mxu0 %v2200
    %2464 = vmatpush1.bf16.msra.mxu0 %v2199
    %2465 = vmatprep.subr.bf16.mxu0 %v2208
    %2466 = vmatpush1.bf16.msra.mxu0 %v2207
    %2467 = vmatprep.subr.bf16.mxu0 %v2216
    %2468 = vmatpush1.bf16.msra.mxu0 %v2215
    %2469 = vmatprep.subr.bf16.mxu0 %v2224
    %2470 = vmatpush1.bf16.msra.mxu0 %v2223
    %2471 = vmatprep.subr.bf16.mxu0 %v2232
    %2472 = vmatpush1.bf16.msra.mxu0 %v2231
    %2473 = vmatprep.subr.bf16.mxu0 0
    %2474 = vmatpush1.bf16.msra.mxu0 0
    %2475 = vmatprep.subr.bf16.mxu0 0
    %2476 = vmatpush1.bf16.msra.mxu0 0
    %2477 = vmatprep.subr.bf16.mxu0 0
    %2478 = vmatpush1.bf16.msra.mxu0 0
    %2479 = vmatprep.subr.bf16.mxu0 0
    %2480 = vmatpush1.bf16.msra.mxu0 0
    %2481 = vmatprep.subr.bf16.mxu0 0
    %2482 = vmatpush1.bf16.msra.mxu0 0
    %2483 = vmatprep.subr.bf16.mxu0 0
    %2484 = vmatpush1.bf16.msra.mxu0 0
    %2485 = vmatprep.subr.bf16.mxu0 0
    %2486 = vmatpush1.bf16.msra.mxu0 0
    %2487 = vmatprep.mubr.bf16.mxu0 %v2279
    %2488 = vmatmul.mubr.bf16.gmra.mrb[0].mxu0 %v2262
    %v2489 = vpop.f32.mrb[0].mxu0
    %v2490 = vadd.f32 0.0, %v2489
    %v2491 = vpop.f32.mrb[0].mxu0
    %v2492 = vadd.f32 0.0, %v2491
    %v2493 = vpop.f32.mrb[0].mxu0
    %v2494 = vadd.f32 0.0, %v2493
    %v2495 = vpop.f32.mrb[0].mxu0
    %v2496 = vadd.f32 0.0, %v2495
    %2497 = vmatprep.mubr.bf16.mxu0 %v2282
    %2498 = vmatmul.mubr.bf16.gmra.mrb[0].mxu0 %v2264
    %v2499 = vpop.f32.mrb[0].mxu0
    %v2500 = vadd.f32 0.0, %v2499
    %v2501 = vpop.f32.mrb[0].mxu0
    %v2502 = vadd.f32 0.0, %v2501
    %v2503 = vpop.f32.mrb[0].mxu0
    %v2504 = vadd.f32 0.0, %v2503
    %v2505 = vpop.f32.mrb[0].mxu0
    %v2506 = vadd.f32 0.0, %v2505
    %2507 = vmatprep.mubr.bf16.mxu0 %v2285
    %2508 = vmatmul.mubr.bf16.gmra.mrb[0].mxu0 %v2266
    %v2509 = vpop.f32.mrb[0].mxu0
    %v2510 = vadd.f32 0.0, %v2509
    %v2511 = vpop.f32.mrb[0].mxu0
    %v2512 = vadd.f32 0.0, %v2511
    %v2513 = vpop.f32.mrb[0].mxu0
    %v2514 = vadd.f32 0.0, %v2513
    %v2515 = vpop.f32.mrb[0].mxu0
    %v2516 = vadd.f32 0.0, %v2515
    %2517 = vmatprep.mubr.bf16.mxu0 %v2288
    %2518 = vmatmul.mubr.bf16.gmra.mrb[0].mxu0 %v2268
    %v2519 = vpop.f32.mrb[0].mxu0
    %v2520 = vadd.f32 0.0, %v2519
    %v2521 = vpop.f32.mrb[0].mxu0
    %v2522 = vadd.f32 0.0, %v2521
    %v2523 = vpop.f32.mrb[0].mxu0
    %v2524 = vadd.f32 0.0, %v2523
    %v2525 = vpop.f32.mrb[0].mxu0
    %v2526 = vadd.f32 0.0, %v2525
    %2527 = vmatprep.mubr.bf16.mxu0 %v2291
    %2528 = vmatmul.mubr.bf16.gmra.mrb[0].mxu0 %v2270
    %v2529 = vpop.f32.mrb[0].mxu0
    %v2530 = vadd.f32 0.0, %v2529
    %v2531 = vpop.f32.mrb[0].mxu0
    %v2532 = vadd.f32 0.0, %v2531
    %v2533 = vpop.f32.mrb[0].mxu0
    %v2534 = vpop.f32.mrb[0].mxu0
    %2535 = vdwg.mxu0
    %2536 = vmatprep.subr.bf16.mxu0 %v2170
    %2537 = vmatpush1.bf16.msra.mxu0 %v2169
    %2538 = vmatprep.subr.bf16.mxu0 %v2178
    %2539 = vmatpush1.bf16.msra.mxu0 %v2177
    %2540 = vmatprep.subr.bf16.mxu0 %v2186
    %2541 = vmatpush1.bf16.msra.mxu0 %v2185
    %2542 = vmatprep.subr.bf16.mxu0 %v2194
    %2543 = vmatpush1.bf16.msra.mxu0 %v2193
    %2544 = vmatprep.subr.bf16.mxu0 %v2202
    %2545 = vmatpush1.bf16.msra.mxu0 %v2201
    %2546 = vmatprep.subr.bf16.mxu0 %v2210
    %2547 = vmatpush1.bf16.msra.mxu0 %v2209
    %2548 = vmatprep.subr.bf16.mxu0 %v2218
    %2549 = vmatpush1.bf16.msra.mxu0 %v2217
    %2550 = vmatprep.subr.bf16.mxu0 %v2226
    %2551 = vmatpush1.bf16.msra.mxu0 %v2225
    %2552 = vmatprep.subr.bf16.mxu0 %v2234
    %2553 = vmatpush1.bf16.msra.mxu0 %v2233
    %2554 = vmatprep.subr.bf16.mxu0 0
    %2555 = vmatpush1.bf16.msra.mxu0 0
    %2556 = vmatprep.subr.bf16.mxu0 0
    %2557 = vmatpush1.bf16.msra.mxu0 0
    %2558 = vmatprep.subr.bf16.mxu0 0
    %2559 = vmatpush1.bf16.msra.mxu0 0
    %2560 = vmatprep.subr.bf16.mxu0 0
    %2561 = vmatpush1.bf16.msra.mxu0 0
    %2562 = vmatprep.subr.bf16.mxu0 0
    %2563 = vmatpush1.bf16.msra.mxu0 0
    %2564 = vmatprep.subr.bf16.mxu0 0
    %2565 = vmatpush1.bf16.msra.mxu0 0
    %2566 = vmatprep.subr.bf16.mxu0 0
    %2567 = vmatpush1.bf16.msra.mxu0 0
    %2568 = vmatprep.mubr.bf16.mxu0 %v2279
    %2569 = vmatmul.mubr.bf16.gmra.mrb[0].mxu0 %v2262
    %v2570 = vpop.f32.mrb[0].mxu0
    %v2571 = vadd.f32 0.0, %v2570
    %v2572 = vpop.f32.mrb[0].mxu0
    %v2573 = vadd.f32 0.0, %v2572
    %v2574 = vpop.f32.mrb[0].mxu0
    %v2575 = vadd.f32 0.0, %v2574
    %v2576 = vpop.f32.mrb[0].mxu0
    %v2577 = vadd.f32 0.0, %v2576
    %2578 = vmatprep.mubr.bf16.mxu0 %v2282
    %2579 = vmatmul.mubr.bf16.gmra.mrb[0].mxu0 %v2264
    %v2580 = vpop.f32.mrb[0].mxu0
    %v2581 = vadd.f32 0.0, %v2580
    %v2582 = vpop.f32.mrb[0].mxu0
    %v2583 = vadd.f32 0.0, %v2582
    %v2584 = vpop.f32.mrb[0].mxu0
    %v2585 = vadd.f32 0.0, %v2584
    %v2586 = vpop.f32.mrb[0].mxu0
    %v2587 = vadd.f32 0.0, %v2586
    %2588 = vmatprep.mubr.bf16.mxu0 %v2285
    %2589 = vmatmul.mubr.bf16.gmra.mrb[0].mxu0 %v2266
    %v2590 = vpop.f32.mrb[0].mxu0
    %v2591 = vadd.f32 0.0, %v2590
    %v2592 = vpop.f32.mrb[0].mxu0
    %v2593 = vadd.f32 0.0, %v2592
    %v2594 = vpop.f32.mrb[0].mxu0
    %v2595 = vadd.f32 0.0, %v2594
    %v2596 = vpop.f32.mrb[0].mxu0
    %v2597 = vadd.f32 0.0, %v2596
    %2598 = vmatprep.mubr.bf16.mxu0 %v2288
    %2599 = vmatmul.mubr.bf16.gmra.mrb[0].mxu0 %v2268
    %v2600 = vpop.f32.mrb[0].mxu0
    %v2601 = vadd.f32 0.0, %v2600
    %v2602 = vpop.f32.mrb[0].mxu0
    %v2603 = vadd.f32 0.0, %v2602
    %v2604 = vpop.f32.mrb[0].mxu0
    %v2605 = vadd.f32 0.0, %v2604
    %v2606 = vpop.f32.mrb[0].mxu0
    %v2607 = vadd.f32 0.0, %v2606
    %2608 = vmatprep.mubr.bf16.mxu0 %v2291
    %2609 = vmatmul.mubr.bf16.gmra.mrb[0].mxu0 %v2270
    %v2610 = vpop.f32.mrb[0].mxu0
    %v2611 = vadd.f32 0.0, %v2610
    %v2612 = vpop.f32.mrb[0].mxu0
    %v2613 = vadd.f32 0.0, %v2612
    %v2614 = vpop.f32.mrb[0].mxu0
    %v2615 = vpop.f32.mrb[0].mxu0
    %2616 = vdwg.mxu0
    %v2617 = vmax.f32 %v2328, 0.0
    %v2618 = vmax.f32 %v2330, 0.0
    %v2619 = vmax.f32 %v2409, 0.0
    %v2620 = vmax.f32 %v2411, 0.0
    %v2621 = vmax.f32 %v2490, 0.0
    %v2622 = vmax.f32 %v2492, 0.0
    %v2623 = vmax.f32 %v2571, 0.0
    %v2624 = vmax.f32 %v2573, 0.0
    %v2625 = vmax.f32 %v2332, 0.0
    %v2626 = vmax.f32 %v2334, 0.0
    %v2627 = vmax.f32 %v2413, 0.0
    %v2628 = vmax.f32 %v2415, 0.0
    %v2629 = vmax.f32 %v2494, 0.0
    %v2630 = vmax.f32 %v2496, 0.0
    %v2631 = vmax.f32 %v2575, 0.0
    %v2632 = vmax.f32 %v2577, 0.0
    %v2633 = vmax.f32 %v2338, 0.0
    %v2634 = vmax.f32 %v2340, 0.0
    %v2635 = vmax.f32 %v2419, 0.0
    %v2636 = vmax.f32 %v2421, 0.0
    %v2637 = vmax.f32 %v2500, 0.0
    %v2638 = vmax.f32 %v2502, 0.0
    %v2639 = vmax.f32 %v2581, 0.0
    %v2640 = vmax.f32 %v2583, 0.0
    %v2641 = vmax.f32 %v2342, 0.0
    %v2642 = vmax.f32 %v2344, 0.0
    %v2643 = vmax.f32 %v2423, 0.0
    %v2644 = vmax.f32 %v2425, 0.0
    %v2645 = vmax.f32 %v2504, 0.0
    %v2646 = vmax.f32 %v2506, 0.0
    %v2647 = vmax.f32 %v2585, 0.0
    %v2648 = vmax.f32 %v2587, 0.0
    %v2649 = vmax.f32 %v2348, 0.0
    %v2650 = vmax.f32 %v2350, 0.0
    %v2651 = vmax.f32 %v2429, 0.0
    %v2652 = vmax.f32 %v2431, 0.0
    %v2653 = vmax.f32 %v2510, 0.0
    %v2654 = vmax.f32 %v2512, 0.0
    %v2655 = vmax.f32 %v2591, 0.0
    %v2656 = vmax.f32 %v2593, 0.0
    %v2657 = vmax.f32 %v2352, 0.0
    %v2658 = vmax.f32 %v2354, 0.0
    %v2659 = vmax.f32 %v2433, 0.0
    %v2660 = vmax.f32 %v2435, 0.0
    %v2661 = vmax.f32 %v2514, 0.0
    %v2662 = vmax.f32 %v2516, 0.0
    %v2663 = vmax.f32 %v2595, 0.0
    %v2664 = vmax.f32 %v2597, 0.0
    %v2665 = vmax.f32 %v2358, 0.0
    %v2666 = vmax.f32 %v2360, 0.0
    %v2667 = vmax.f32 %v2439, 0.0
    %v2668 = vmax.f32 %v2441, 0.0
    %v2669 = vmax.f32 %v2520, 0.0
    %v2670 = vmax.f32 %v2522, 0.0
    %v2671 = vmax.f32 %v2601, 0.0
    %v2672 = vmax.f32 %v2603, 0.0
    %v2673 = vmax.f32 %v2362, 0.0
    %v2674 = vmax.f32 %v2364, 0.0
    %v2675 = vmax.f32 %v2443, 0.0
    %v2676 = vmax.f32 %v2445, 0.0
    %v2677 = vmax.f32 %v2524, 0.0
    %v2678 = vmax.f32 %v2526, 0.0
    %v2679 = vmax.f32 %v2605, 0.0
    %v2680 = vmax.f32 %v2607, 0.0
    %v2681 = vmax.f32 %v2368, 0.0
    %v2682 = vmax.f32 %v2370, 0.0
    %v2683 = vmax.f32 %v2449, 0.0
    %v2684 = vmax.f32 %v2451, 0.0
    %v2685 = vmax.f32 %v2530, 0.0
    %v2686 = vmax.f32 %v2532, 0.0
    %v2687 = vmax.f32 %v2611, 0.0
    %v2688 = vmax.f32 %v2613, 0.0
    %2689 = vrot.lane.b32.xlu0 %v2617, 33
    %v2690 = vpop.permute.xlu0 %2689
    %2691 = vrot.lane.b32.xlu0 %v2625, 33
    %v2692 = vpop.permute.xlu0 %2691
    %2693 = vrot.lane.b32.xlu0 %v2633, 33
    %v2694 = vpop.permute.xlu0 %2693
    %2695 = vrot.lane.b32.xlu0 %v2641, 33
    %v2696 = vpop.permute.xlu0 %2695
    %2697 = vrot.lane.b32.xlu0 %v2649, 33
    %v2698 = vpop.permute.xlu0 %2697
    %2699 = vrot.lane.b32.xlu0 %v2657, 33
    %v2700 = vpop.permute.xlu0 %2699
    %2701 = vrot.lane.b32.xlu0 %v2665, 33
    %v2702 = vpop.permute.xlu0 %2701
    %2703 = vrot.lane.b32.xlu0 %v2673, 33
    %v2704 = vpop.permute.xlu0 %2703
    %2705 = vrot.lane.b32.xlu0 %v2681, 33
    %v2706 = vpop.permute.xlu0 %2705
    %2707 = vrot.lane.b32.xlu0 %v2618, 33
    %v2708 = vpop.permute.xlu0 %2707
    %2709 = vrot.lane.b32.xlu0 %v2626, 33
    %v2710 = vpop.permute.xlu0 %2709
    %2711 = vrot.lane.b32.xlu0 %v2634, 33
    %v2712 = vpop.permute.xlu0 %2711
    %2713 = vrot.lane.b32.xlu0 %v2642, 33
    %v2714 = vpop.permute.xlu0 %2713
    %2715 = vrot.lane.b32.xlu0 %v2650, 33
    %v2716 = vpop.permute.xlu0 %2715
    %2717 = vrot.lane.b32.xlu0 %v2658, 33
    %v2718 = vpop.permute.xlu0 %2717
    %2719 = vrot.lane.b32.xlu0 %v2666, 33
    %v2720 = vpop.permute.xlu0 %2719
    %2721 = vrot.lane.b32.xlu0 %v2674, 33
    %v2722 = vpop.permute.xlu0 %2721
    %2723 = vrot.lane.b32.xlu0 %v2682, 33
    %v2724 = vpop.permute.xlu0 %2723
    %2725 = vrot.lane.b32.xlu0 %v2619, 33
    %v2726 = vpop.permute.xlu0 %2725
    %2727 = vrot.lane.b32.xlu0 %v2627, 33
    %v2728 = vpop.permute.xlu0 %2727
    %2729 = vrot.lane.b32.xlu0 %v2635, 33
    %v2730 = vpop.permute.xlu0 %2729
    %2731 = vrot.lane.b32.xlu0 %v2643, 33
    %v2732 = vpop.permute.xlu0 %2731
    %2733 = vrot.lane.b32.xlu0 %v2651, 33
    %v2734 = vpop.permute.xlu0 %2733
    %2735 = vrot.lane.b32.xlu0 %v2659, 33
    %v2736 = vpop.permute.xlu0 %2735
    %2737 = vrot.lane.b32.xlu0 %v2667, 33
    %v2738 = vpop.permute.xlu0 %2737
    %2739 = vrot.lane.b32.xlu0 %v2675, 33
    %v2740 = vpop.permute.xlu0 %2739
    %2741 = vrot.lane.b32.xlu0 %v2683, 33
    %v2742 = vpop.permute.xlu0 %2741
    %2743 = vrot.lane.b32.xlu0 %v2620, 33
    %v2744 = vpop.permute.xlu0 %2743
    %2745 = vrot.lane.b32.xlu0 %v2628, 33
    %v2746 = vpop.permute.xlu0 %2745
    %2747 = vrot.lane.b32.xlu0 %v2636, 33
    %v2748 = vpop.permute.xlu0 %2747
    %2749 = vrot.lane.b32.xlu0 %v2644, 33
    %v2750 = vpop.permute.xlu0 %2749
    %2751 = vrot.lane.b32.xlu0 %v2652, 33
    %v2752 = vpop.permute.xlu0 %2751
    %2753 = vrot.lane.b32.xlu0 %v2660, 33
    %v2754 = vpop.permute.xlu0 %2753
    %2755 = vrot.lane.b32.xlu0 %v2668, 33
    %v2756 = vpop.permute.xlu0 %2755
    %2757 = vrot.lane.b32.xlu0 %v2676, 33
    %v2758 = vpop.permute.xlu0 %2757
    %2759 = vrot.lane.b32.xlu0 %v2684, 33
    %v2760 = vpop.permute.xlu0 %2759
    %2761 = vrot.lane.b32.xlu0 %v2621, 33
    %v2762 = vpop.permute.xlu0 %2761
    %2763 = vrot.lane.b32.xlu0 %v2629, 33
    %v2764 = vpop.permute.xlu0 %2763
    %2765 = vrot.lane.b32.xlu0 %v2637, 33
    %v2766 = vpop.permute.xlu0 %2765
    %2767 = vrot.lane.b32.xlu0 %v2645, 33
    %v2768 = vpop.permute.xlu0 %2767
    %2769 = vrot.lane.b32.xlu0 %v2653, 33
    %v2770 = vpop.permute.xlu0 %2769
    %2771 = vrot.lane.b32.xlu0 %v2661, 33
    %v2772 = vpop.permute.xlu0 %2771
    %2773 = vrot.lane.b32.xlu0 %v2669, 33
    %v2774 = vpop.permute.xlu0 %2773
    %2775 = vrot.lane.b32.xlu0 %v2677, 33
    %v2776 = vpop.permute.xlu0 %2775
    %2777 = vrot.lane.b32.xlu0 %v2685, 33
    %v2778 = vpop.permute.xlu0 %2777
    %2779 = vrot.lane.b32.xlu0 %v2622, 33
    %v2780 = vpop.permute.xlu0 %2779
    %2781 = vrot.lane.b32.xlu0 %v2630, 33
    %v2782 = vpop.permute.xlu0 %2781
    %2783 = vrot.lane.b32.xlu0 %v2638, 33
    %v2784 = vpop.permute.xlu0 %2783
    %2785 = vrot.lane.b32.xlu0 %v2646, 33
    %v2786 = vpop.permute.xlu0 %2785
    %2787 = vrot.lane.b32.xlu0 %v2654, 33
    %v2788 = vpop.permute.xlu0 %2787
    %2789 = vrot.lane.b32.xlu0 %v2662, 33
    %v2790 = vpop.permute.xlu0 %2789
    %2791 = vrot.lane.b32.xlu0 %v2670, 33
    %v2792 = vpop.permute.xlu0 %2791
    %2793 = vrot.lane.b32.xlu0 %v2678, 33
    %v2794 = vpop.permute.xlu0 %2793
    %2795 = vrot.lane.b32.xlu0 %v2686, 33
    %v2796 = vpop.permute.xlu0 %2795
    %2797 = vrot.lane.b32.xlu0 %v2623, 33
    %v2798 = vpop.permute.xlu0 %2797
    %2799 = vrot.lane.b32.xlu0 %v2631, 33
    %v2800 = vpop.permute.xlu0 %2799
    %2801 = vrot.lane.b32.xlu0 %v2639, 33
    %v2802 = vpop.permute.xlu0 %2801
    %2803 = vrot.lane.b32.xlu0 %v2647, 33
    %v2804 = vpop.permute.xlu0 %2803
    %2805 = vrot.lane.b32.xlu0 %v2655, 33
    %v2806 = vpop.permute.xlu0 %2805
    %2807 = vrot.lane.b32.xlu0 %v2663, 33
    %v2808 = vpop.permute.xlu0 %2807
    %2809 = vrot.lane.b32.xlu0 %v2671, 33
    %v2810 = vpop.permute.xlu0 %2809
    %2811 = vrot.lane.b32.xlu0 %v2679, 33
    %v2812 = vpop.permute.xlu0 %2811
    %2813 = vrot.lane.b32.xlu0 %v2687, 33
    %v2814 = vpop.permute.xlu0 %2813
    %2815 = vrot.lane.b32.xlu0 %v2624, 33
    %v2816 = vpop.permute.xlu0 %2815
    %2817 = vrot.lane.b32.xlu0 %v2632, 33
    %v2818 = vpop.permute.xlu0 %2817
    %2819 = vrot.lane.b32.xlu0 %v2640, 33
    %v2820 = vpop.permute.xlu0 %2819
    %2821 = vrot.lane.b32.xlu0 %v2648, 33
    %v2822 = vpop.permute.xlu0 %2821
    %2823 = vrot.lane.b32.xlu0 %v2656, 33
    %v2824 = vpop.permute.xlu0 %2823
    %2825 = vrot.lane.b32.xlu0 %v2664, 33
    %v2826 = vpop.permute.xlu0 %2825
    %2827 = vrot.lane.b32.xlu0 %v2672, 33
    %v2828 = vpop.permute.xlu0 %2827
    %2829 = vrot.lane.b32.xlu0 %v2680, 33
    %v2830 = vpop.permute.xlu0 %2829
    %2831 = vrot.lane.b32.xlu0 %v2688, 33
    %v2832 = vpop.permute.xlu0 %2831
    %v2833 = vsel %vm857, %v2798, %v2816
    %v2834 = vsel %vm857, %v2800, %v2818
    %v2835 = vsel %vm857, %v2802, %v2820
    %v2836 = vsel %vm857, %v2804, %v2822
    %v2837 = vsel %vm857, %v2806, %v2824
    %v2838 = vsel %vm857, %v2808, %v2826
    %v2839 = vsel %vm857, %v2810, %v2828
    %v2840 = vsel %vm857, %v2812, %v2830
    %v2841 = vsel %vm857, %v2814, %v2832
    %v2842 = vsel %vm857, %v2780, %v2798
    %v2843 = vsel %vm857, %v2782, %v2800
    %v2844 = vsel %vm857, %v2784, %v2802
    %v2845 = vsel %vm857, %v2786, %v2804
    %v2846 = vsel %vm857, %v2788, %v2806
    %v2847 = vsel %vm857, %v2790, %v2808
    %v2848 = vsel %vm857, %v2792, %v2810
    %v2849 = vsel %vm857, %v2794, %v2812
    %v2850 = vsel %vm857, %v2796, %v2814
    %v2851 = vsel %vm857, %v2762, %v2780
    %v2852 = vsel %vm857, %v2764, %v2782
    %v2853 = vsel %vm857, %v2766, %v2784
    %v2854 = vsel %vm857, %v2768, %v2786
    %v2855 = vsel %vm857, %v2770, %v2788
    %v2856 = vsel %vm857, %v2772, %v2790
    %v2857 = vsel %vm857, %v2774, %v2792
    %v2858 = vsel %vm857, %v2776, %v2794
    %v2859 = vsel %vm857, %v2778, %v2796
    %v2860 = vsel %vm857, %v2744, %v2762
    %v2861 = vsel %vm857, %v2746, %v2764
    %v2862 = vsel %vm857, %v2748, %v2766
    %v2863 = vsel %vm857, %v2750, %v2768
    %v2864 = vsel %vm857, %v2752, %v2770
    %v2865 = vsel %vm857, %v2754, %v2772
    %v2866 = vsel %vm857, %v2756, %v2774
    %v2867 = vsel %vm857, %v2758, %v2776
    %v2868 = vsel %vm857, %v2760, %v2778
    %v2869 = vsel %vm857, %v2726, %v2744
    %v2870 = vsel %vm857, %v2728, %v2746
    %v2871 = vsel %vm857, %v2730, %v2748
    %v2872 = vsel %vm857, %v2732, %v2750
    %v2873 = vsel %vm857, %v2734, %v2752
    %v2874 = vsel %vm857, %v2736, %v2754
    %v2875 = vsel %vm857, %v2738, %v2756
    %v2876 = vsel %vm857, %v2740, %v2758
    %v2877 = vsel %vm857, %v2742, %v2760
    %v2878 = vsel %vm857, %v2708, %v2726
    %v2879 = vsel %vm857, %v2710, %v2728
    %v2880 = vsel %vm857, %v2712, %v2730
    %v2881 = vsel %vm857, %v2714, %v2732
    %v2882 = vsel %vm857, %v2716, %v2734
    %v2883 = vsel %vm857, %v2718, %v2736
    %v2884 = vsel %vm857, %v2720, %v2738
    %v2885 = vsel %vm857, %v2722, %v2740
    %v2886 = vsel %vm857, %v2724, %v2742
    %v2887 = vsel %vm857, %v2690, %v2708
    %v2888 = vsel %vm857, %v2692, %v2710
    %v2889 = vsel %vm857, %v2694, %v2712
    %v2890 = vsel %vm857, %v2696, %v2714
    %v2891 = vsel %vm857, %v2698, %v2716
    %v2892 = vsel %vm857, %v2700, %v2718
    %v2893 = vsel %vm857, %v2702, %v2720
    %v2894 = vsel %vm857, %v2704, %v2722
    %v2895 = vsel %vm857, %v2706, %v2724
    %v2896 = vsel %vm857, %v2816, %v2690
    %v2897 = vsel %vm857, %v2818, %v2692
    %v2898 = vsel %vm857, %v2820, %v2694
    %v2899 = vsel %vm857, %v2822, %v2696
    %v2900 = vsel %vm857, %v2824, %v2698
    %v2901 = vsel %vm857, %v2826, %v2700
    %v2902 = vsel %vm857, %v2828, %v2702
    %v2903 = vsel %vm857, %v2830, %v2704
    %v2904 = vsel %vm857, %v2832, %v2706
    %v2905 = vmul.f32 %v2896, %v259
    %v2906 = vmul.f32 %v2887, %v260
    %v2907 = vmul.f32 %v2878, %v261
    %v2908 = vmul.f32 %v2869, %v262
    %v2909 = vmul.f32 %v2860, %v263
    %v2910 = vmul.f32 %v2851, %v264
    %v2911 = vmul.f32 %v2842, %v265
    %v2912 = vmul.f32 %v2833, %v266
    %v2913 = vmul.f32 %v2897, %v259
    %v2914 = vmul.f32 %v2888, %v260
    %v2915 = vmul.f32 %v2879, %v261
    %v2916 = vmul.f32 %v2870, %v262
    %v2917 = vmul.f32 %v2861, %v263
    %v2918 = vmul.f32 %v2852, %v264
    %v2919 = vmul.f32 %v2843, %v265
    %v2920 = vmul.f32 %v2834, %v266
    %v2921 = vmul.f32 %v2898, %v259
    %v2922 = vmul.f32 %v2889, %v260
    %v2923 = vmul.f32 %v2880, %v261
    %v2924 = vmul.f32 %v2871, %v262
    %v2925 = vmul.f32 %v2862, %v263
    %v2926 = vmul.f32 %v2853, %v264
    %v2927 = vmul.f32 %v2844, %v265
    %v2928 = vmul.f32 %v2835, %v266
    %v2929 = vmul.f32 %v2899, %v259
    %v2930 = vmul.f32 %v2890, %v260
    %v2931 = vmul.f32 %v2881, %v261
    %v2932 = vmul.f32 %v2872, %v262
    %v2933 = vmul.f32 %v2863, %v263
    %v2934 = vmul.f32 %v2854, %v264
    %v2935 = vmul.f32 %v2845, %v265
    %v2936 = vmul.f32 %v2836, %v266
    %v2937 = vmul.f32 %v2900, %v259
    %v2938 = vmul.f32 %v2891, %v260
    %v2939 = vmul.f32 %v2882, %v261
    %v2940 = vmul.f32 %v2873, %v262
    %v2941 = vmul.f32 %v2864, %v263
    %v2942 = vmul.f32 %v2855, %v264
    %v2943 = vmul.f32 %v2846, %v265
    %v2944 = vmul.f32 %v2837, %v266
    %v2945 = vmul.f32 %v2901, %v259
    %v2946 = vmul.f32 %v2892, %v260
    %v2947 = vmul.f32 %v2883, %v261
    %v2948 = vmul.f32 %v2874, %v262
    %v2949 = vmul.f32 %v2865, %v263
    %v2950 = vmul.f32 %v2856, %v264
    %v2951 = vmul.f32 %v2847, %v265
    %v2952 = vmul.f32 %v2838, %v266
    %v2953 = vmul.f32 %v2902, %v259
    %v2954 = vmul.f32 %v2893, %v260
    %v2955 = vmul.f32 %v2884, %v261
    %v2956 = vmul.f32 %v2875, %v262
    %v2957 = vmul.f32 %v2866, %v263
    %v2958 = vmul.f32 %v2857, %v264
    %v2959 = vmul.f32 %v2848, %v265
    %v2960 = vmul.f32 %v2839, %v266
    %v2961 = vmul.f32 %v2903, %v259
    %v2962 = vmul.f32 %v2894, %v260
    %v2963 = vmul.f32 %v2885, %v261
    %v2964 = vmul.f32 %v2876, %v262
    %v2965 = vmul.f32 %v2867, %v263
    %v2966 = vmul.f32 %v2858, %v264
    %v2967 = vmul.f32 %v2849, %v265
    %v2968 = vmul.f32 %v2840, %v266
    %v2969 = vmul.f32 %v2904, %v259
    %v2970 = vmul.f32 %v2895, %v260
    %v2971 = vmul.f32 %v2886, %v261
    %v2972 = vmul.f32 %v2877, %v262
    %v2973 = vmul.f32 %v2868, %v263
    %v2974 = vmul.f32 %v2859, %v264
    %v2975 = vmul.f32 %v2850, %v265
    %v2976 = vmul.f32 %v2841, %v266
    %2977 = vrot.lane.b32.xlu0 %v2617, 32
    %v2978 = vpop.permute.xlu0 %2977
    %2979 = vrot.lane.b32.xlu0 %v2625, 32
    %v2980 = vpop.permute.xlu0 %2979
    %2981 = vrot.lane.b32.xlu0 %v2633, 32
    %v2982 = vpop.permute.xlu0 %2981
    %2983 = vrot.lane.b32.xlu0 %v2641, 32
    %v2984 = vpop.permute.xlu0 %2983
    %2985 = vrot.lane.b32.xlu0 %v2649, 32
    %v2986 = vpop.permute.xlu0 %2985
    %2987 = vrot.lane.b32.xlu0 %v2657, 32
    %v2988 = vpop.permute.xlu0 %2987
    %2989 = vrot.lane.b32.xlu0 %v2665, 32
    %v2990 = vpop.permute.xlu0 %2989
    %2991 = vrot.lane.b32.xlu0 %v2673, 32
    %v2992 = vpop.permute.xlu0 %2991
    %2993 = vrot.lane.b32.xlu0 %v2681, 32
    %v2994 = vpop.permute.xlu0 %2993
    %2995 = vrot.lane.b32.xlu0 %v2618, 32
    %v2996 = vpop.permute.xlu0 %2995
    %2997 = vrot.lane.b32.xlu0 %v2626, 32
    %v2998 = vpop.permute.xlu0 %2997
    %2999 = vrot.lane.b32.xlu0 %v2634, 32
    %v3000 = vpop.permute.xlu0 %2999
    %3001 = vrot.lane.b32.xlu0 %v2642, 32
    %v3002 = vpop.permute.xlu0 %3001
    %3003 = vrot.lane.b32.xlu0 %v2650, 32
    %v3004 = vpop.permute.xlu0 %3003
    %3005 = vrot.lane.b32.xlu0 %v2658, 32
    %v3006 = vpop.permute.xlu0 %3005
    %3007 = vrot.lane.b32.xlu0 %v2666, 32
    %v3008 = vpop.permute.xlu0 %3007
    %3009 = vrot.lane.b32.xlu0 %v2674, 32
    %v3010 = vpop.permute.xlu0 %3009
    %3011 = vrot.lane.b32.xlu0 %v2682, 32
    %v3012 = vpop.permute.xlu0 %3011
    %3013 = vrot.lane.b32.xlu0 %v2619, 32
    %v3014 = vpop.permute.xlu0 %3013
    %3015 = vrot.lane.b32.xlu0 %v2627, 32
    %v3016 = vpop.permute.xlu0 %3015
    %3017 = vrot.lane.b32.xlu0 %v2635, 32
    %v3018 = vpop.permute.xlu0 %3017
    %3019 = vrot.lane.b32.xlu0 %v2643, 32
    %v3020 = vpop.permute.xlu0 %3019
    %3021 = vrot.lane.b32.xlu0 %v2651, 32
    %v3022 = vpop.permute.xlu0 %3021
    %3023 = vrot.lane.b32.xlu0 %v2659, 32
    %v3024 = vpop.permute.xlu0 %3023
    %3025 = vrot.lane.b32.xlu0 %v2667, 32
    %v3026 = vpop.permute.xlu0 %3025
    %3027 = vrot.lane.b32.xlu0 %v2675, 32
    %v3028 = vpop.permute.xlu0 %3027
    %3029 = vrot.lane.b32.xlu0 %v2683, 32
    %v3030 = vpop.permute.xlu0 %3029
    %3031 = vrot.lane.b32.xlu0 %v2620, 32
    %v3032 = vpop.permute.xlu0 %3031
    %3033 = vrot.lane.b32.xlu0 %v2628, 32
    %v3034 = vpop.permute.xlu0 %3033
    %3035 = vrot.lane.b32.xlu0 %v2636, 32
    %v3036 = vpop.permute.xlu0 %3035
    %3037 = vrot.lane.b32.xlu0 %v2644, 32
    %v3038 = vpop.permute.xlu0 %3037
    %3039 = vrot.lane.b32.xlu0 %v2652, 32
    %v3040 = vpop.permute.xlu0 %3039
    %3041 = vrot.lane.b32.xlu0 %v2660, 32
    %v3042 = vpop.permute.xlu0 %3041
    %3043 = vrot.lane.b32.xlu0 %v2668, 32
    %v3044 = vpop.permute.xlu0 %3043
    %3045 = vrot.lane.b32.xlu0 %v2676, 32
    %v3046 = vpop.permute.xlu0 %3045
    %3047 = vrot.lane.b32.xlu0 %v2684, 32
    %v3048 = vpop.permute.xlu0 %3047
    %3049 = vrot.lane.b32.xlu0 %v2621, 32
    %v3050 = vpop.permute.xlu0 %3049
    %3051 = vrot.lane.b32.xlu0 %v2629, 32
    %v3052 = vpop.permute.xlu0 %3051
    %3053 = vrot.lane.b32.xlu0 %v2637, 32
    %v3054 = vpop.permute.xlu0 %3053
    %3055 = vrot.lane.b32.xlu0 %v2645, 32
    %v3056 = vpop.permute.xlu0 %3055
    %3057 = vrot.lane.b32.xlu0 %v2653, 32
    %v3058 = vpop.permute.xlu0 %3057
    %3059 = vrot.lane.b32.xlu0 %v2661, 32
    %v3060 = vpop.permute.xlu0 %3059
    %3061 = vrot.lane.b32.xlu0 %v2669, 32
    %v3062 = vpop.permute.xlu0 %3061
    %3063 = vrot.lane.b32.xlu0 %v2677, 32
    %v3064 = vpop.permute.xlu0 %3063
    %3065 = vrot.lane.b32.xlu0 %v2685, 32
    %v3066 = vpop.permute.xlu0 %3065
    %3067 = vrot.lane.b32.xlu0 %v2622, 32
    %v3068 = vpop.permute.xlu0 %3067
    %3069 = vrot.lane.b32.xlu0 %v2630, 32
    %v3070 = vpop.permute.xlu0 %3069
    %3071 = vrot.lane.b32.xlu0 %v2638, 32
    %v3072 = vpop.permute.xlu0 %3071
    %3073 = vrot.lane.b32.xlu0 %v2646, 32
    %v3074 = vpop.permute.xlu0 %3073
    %3075 = vrot.lane.b32.xlu0 %v2654, 32
    %v3076 = vpop.permute.xlu0 %3075
    %3077 = vrot.lane.b32.xlu0 %v2662, 32
    %v3078 = vpop.permute.xlu0 %3077
    %3079 = vrot.lane.b32.xlu0 %v2670, 32
    %v3080 = vpop.permute.xlu0 %3079
    %3081 = vrot.lane.b32.xlu0 %v2678, 32
    %v3082 = vpop.permute.xlu0 %3081
    %3083 = vrot.lane.b32.xlu0 %v2686, 32
    %v3084 = vpop.permute.xlu0 %3083
    %3085 = vrot.lane.b32.xlu0 %v2623, 32
    %v3086 = vpop.permute.xlu0 %3085
    %3087 = vrot.lane.b32.xlu0 %v2631, 32
    %v3088 = vpop.permute.xlu0 %3087
    %3089 = vrot.lane.b32.xlu0 %v2639, 32
    %v3090 = vpop.permute.xlu0 %3089
    %3091 = vrot.lane.b32.xlu0 %v2647, 32
    %v3092 = vpop.permute.xlu0 %3091
    %3093 = vrot.lane.b32.xlu0 %v2655, 32
    %v3094 = vpop.permute.xlu0 %3093
    %3095 = vrot.lane.b32.xlu0 %v2663, 32
    %v3096 = vpop.permute.xlu0 %3095
    %3097 = vrot.lane.b32.xlu0 %v2671, 32
    %v3098 = vpop.permute.xlu0 %3097
    %3099 = vrot.lane.b32.xlu0 %v2679, 32
    %v3100 = vpop.permute.xlu0 %3099
    %3101 = vrot.lane.b32.xlu0 %v2687, 32
    %v3102 = vpop.permute.xlu0 %3101
    %3103 = vrot.lane.b32.xlu0 %v2624, 32
    %v3104 = vpop.permute.xlu0 %3103
    %3105 = vrot.lane.b32.xlu0 %v2632, 32
    %v3106 = vpop.permute.xlu0 %3105
    %3107 = vrot.lane.b32.xlu0 %v2640, 32
    %v3108 = vpop.permute.xlu0 %3107
    %3109 = vrot.lane.b32.xlu0 %v2648, 32
    %v3110 = vpop.permute.xlu0 %3109
    %3111 = vrot.lane.b32.xlu0 %v2656, 32
    %v3112 = vpop.permute.xlu0 %3111
    %3113 = vrot.lane.b32.xlu0 %v2664, 32
    %v3114 = vpop.permute.xlu0 %3113
    %3115 = vrot.lane.b32.xlu0 %v2672, 32
    %v3116 = vpop.permute.xlu0 %3115
    %3117 = vrot.lane.b32.xlu0 %v2680, 32
    %v3118 = vpop.permute.xlu0 %3117
    %3119 = vrot.lane.b32.xlu0 %v2688, 32
    %v3120 = vpop.permute.xlu0 %3119
    %v3121 = vsel %vm890, %v3086, %v3104
    %v3122 = vsel %vm890, %v3088, %v3106
    %v3123 = vsel %vm890, %v3090, %v3108
    %v3124 = vsel %vm890, %v3092, %v3110
    %v3125 = vsel %vm890, %v3094, %v3112
    %v3126 = vsel %vm890, %v3096, %v3114
    %v3127 = vsel %vm890, %v3098, %v3116
    %v3128 = vsel %vm890, %v3100, %v3118
    %v3129 = vsel %vm890, %v3102, %v3120
    %v3130 = vsel %vm890, %v3068, %v3086
    %v3131 = vsel %vm890, %v3070, %v3088
    %v3132 = vsel %vm890, %v3072, %v3090
    %v3133 = vsel %vm890, %v3074, %v3092
    %v3134 = vsel %vm890, %v3076, %v3094
    %v3135 = vsel %vm890, %v3078, %v3096
    %v3136 = vsel %vm890, %v3080, %v3098
    %v3137 = vsel %vm890, %v3082, %v3100
    %v3138 = vsel %vm890, %v3084, %v3102
    %v3139 = vsel %vm890, %v3050, %v3068
    %v3140 = vsel %vm890, %v3052, %v3070
    %v3141 = vsel %vm890, %v3054, %v3072
    %v3142 = vsel %vm890, %v3056, %v3074
    %v3143 = vsel %vm890, %v3058, %v3076
    %v3144 = vsel %vm890, %v3060, %v3078
    %v3145 = vsel %vm890, %v3062, %v3080
    %v3146 = vsel %vm890, %v3064, %v3082
    %v3147 = vsel %vm890, %v3066, %v3084
    %v3148 = vsel %vm890, %v3032, %v3050
    %v3149 = vsel %vm890, %v3034, %v3052
    %v3150 = vsel %vm890, %v3036, %v3054
    %v3151 = vsel %vm890, %v3038, %v3056
    %v3152 = vsel %vm890, %v3040, %v3058
    %v3153 = vsel %vm890, %v3042, %v3060
    %v3154 = vsel %vm890, %v3044, %v3062
    %v3155 = vsel %vm890, %v3046, %v3064
    %v3156 = vsel %vm890, %v3048, %v3066
    %v3157 = vsel %vm890, %v3014, %v3032
    %v3158 = vsel %vm890, %v3016, %v3034
    %v3159 = vsel %vm890, %v3018, %v3036
    %v3160 = vsel %vm890, %v3020, %v3038
    %v3161 = vsel %vm890, %v3022, %v3040
    %v3162 = vsel %vm890, %v3024, %v3042
    %v3163 = vsel %vm890, %v3026, %v3044
    %v3164 = vsel %vm890, %v3028, %v3046
    %v3165 = vsel %vm890, %v3030, %v3048
    %v3166 = vsel %vm890, %v2996, %v3014
    %v3167 = vsel %vm890, %v2998, %v3016
    %v3168 = vsel %vm890, %v3000, %v3018
    %v3169 = vsel %vm890, %v3002, %v3020
    %v3170 = vsel %vm890, %v3004, %v3022
    %v3171 = vsel %vm890, %v3006, %v3024
    %v3172 = vsel %vm890, %v3008, %v3026
    %v3173 = vsel %vm890, %v3010, %v3028
    %v3174 = vsel %vm890, %v3012, %v3030
    %v3175 = vsel %vm890, %v2978, %v2996
    %v3176 = vsel %vm890, %v2980, %v2998
    %v3177 = vsel %vm890, %v2982, %v3000
    %v3178 = vsel %vm890, %v2984, %v3002
    %v3179 = vsel %vm890, %v2986, %v3004
    %v3180 = vsel %vm890, %v2988, %v3006
    %v3181 = vsel %vm890, %v2990, %v3008
    %v3182 = vsel %vm890, %v2992, %v3010
    %v3183 = vsel %vm890, %v2994, %v3012
    %v3184 = vsel %vm890, %v3104, %v2978
    %v3185 = vsel %vm890, %v3106, %v2980
    %v3186 = vsel %vm890, %v3108, %v2982
    %v3187 = vsel %vm890, %v3110, %v2984
    %v3188 = vsel %vm890, %v3112, %v2986
    %v3189 = vsel %vm890, %v3114, %v2988
    %v3190 = vsel %vm890, %v3116, %v2990
    %v3191 = vsel %vm890, %v3118, %v2992
    %v3192 = vsel %vm890, %v3120, %v2994
    %v3193 = vmul.f32 %v3184, %v275
    %v3194 = vmul.f32 %v3175, %v276
    %v3195 = vmul.f32 %v3166, %v277
    %v3196 = vmul.f32 %v3157, %v278
    %v3197 = vmul.f32 %v3148, %v279
    %v3198 = vmul.f32 %v3139, %v280
    %v3199 = vmul.f32 %v3130, %v281
    %v3200 = vmul.f32 %v3121, %v282
    %v3201 = vmul.f32 %v3185, %v275
    %v3202 = vmul.f32 %v3176, %v276
    %v3203 = vmul.f32 %v3167, %v277
    %v3204 = vmul.f32 %v3158, %v278
    %v3205 = vmul.f32 %v3149, %v279
    %v3206 = vmul.f32 %v3140, %v280
    %v3207 = vmul.f32 %v3131, %v281
    %v3208 = vmul.f32 %v3122, %v282
    %v3209 = vmul.f32 %v3186, %v275
    %v3210 = vmul.f32 %v3177, %v276
    %v3211 = vmul.f32 %v3168, %v277
    %v3212 = vmul.f32 %v3159, %v278
    %v3213 = vmul.f32 %v3150, %v279
    %v3214 = vmul.f32 %v3141, %v280
    %v3215 = vmul.f32 %v3132, %v281
    %v3216 = vmul.f32 %v3123, %v282
    %v3217 = vmul.f32 %v3187, %v275
    %v3218 = vmul.f32 %v3178, %v276
    %v3219 = vmul.f32 %v3169, %v277
    %v3220 = vmul.f32 %v3160, %v278
    %v3221 = vmul.f32 %v3151, %v279
    %v3222 = vmul.f32 %v3142, %v280
    %v3223 = vmul.f32 %v3133, %v281
    %v3224 = vmul.f32 %v3124, %v282
    %v3225 = vmul.f32 %v3188, %v275
    %v3226 = vmul.f32 %v3179, %v276
    %v3227 = vmul.f32 %v3170, %v277
    %v3228 = vmul.f32 %v3161, %v278
    %v3229 = vmul.f32 %v3152, %v279
    %v3230 = vmul.f32 %v3143, %v280
    %v3231 = vmul.f32 %v3134, %v281
    %v3232 = vmul.f32 %v3125, %v282
    %v3233 = vmul.f32 %v3189, %v275
    %v3234 = vmul.f32 %v3180, %v276
    %v3235 = vmul.f32 %v3171, %v277
    %v3236 = vmul.f32 %v3162, %v278
    %v3237 = vmul.f32 %v3153, %v279
    %v3238 = vmul.f32 %v3144, %v280
    %v3239 = vmul.f32 %v3135, %v281
    %v3240 = vmul.f32 %v3126, %v282
    %v3241 = vmul.f32 %v3190, %v275
    %v3242 = vmul.f32 %v3181, %v276
    %v3243 = vmul.f32 %v3172, %v277
    %v3244 = vmul.f32 %v3163, %v278
    %v3245 = vmul.f32 %v3154, %v279
    %v3246 = vmul.f32 %v3145, %v280
    %v3247 = vmul.f32 %v3136, %v281
    %v3248 = vmul.f32 %v3127, %v282
    %v3249 = vmul.f32 %v3191, %v275
    %v3250 = vmul.f32 %v3182, %v276
    %v3251 = vmul.f32 %v3173, %v277
    %v3252 = vmul.f32 %v3164, %v278
    %v3253 = vmul.f32 %v3155, %v279
    %v3254 = vmul.f32 %v3146, %v280
    %v3255 = vmul.f32 %v3137, %v281
    %v3256 = vmul.f32 %v3128, %v282
    %v3257 = vmul.f32 %v3192, %v275
    %v3258 = vmul.f32 %v3183, %v276
    %v3259 = vmul.f32 %v3174, %v277
    %v3260 = vmul.f32 %v3165, %v278
    %v3261 = vmul.f32 %v3156, %v279
    %v3262 = vmul.f32 %v3147, %v280
    %v3263 = vmul.f32 %v3138, %v281
    %v3264 = vmul.f32 %v3129, %v282
    %3265 = vrot.lane.b32.xlu0 %v2617, 31
    %v3266 = vpop.permute.xlu0 %3265
    %3267 = vrot.lane.b32.xlu0 %v2625, 31
    %v3268 = vpop.permute.xlu0 %3267
    %3269 = vrot.lane.b32.xlu0 %v2633, 31
    %v3270 = vpop.permute.xlu0 %3269
    %3271 = vrot.lane.b32.xlu0 %v2641, 31
    %v3272 = vpop.permute.xlu0 %3271
    %3273 = vrot.lane.b32.xlu0 %v2649, 31
    %v3274 = vpop.permute.xlu0 %3273
    %3275 = vrot.lane.b32.xlu0 %v2657, 31
    %v3276 = vpop.permute.xlu0 %3275
    %3277 = vrot.lane.b32.xlu0 %v2665, 31
    %v3278 = vpop.permute.xlu0 %3277
    %3279 = vrot.lane.b32.xlu0 %v2673, 31
    %v3280 = vpop.permute.xlu0 %3279
    %3281 = vrot.lane.b32.xlu0 %v2681, 31
    %v3282 = vpop.permute.xlu0 %3281
    %3283 = vrot.lane.b32.xlu0 %v2618, 31
    %v3284 = vpop.permute.xlu0 %3283
    %3285 = vrot.lane.b32.xlu0 %v2626, 31
    %v3286 = vpop.permute.xlu0 %3285
    %3287 = vrot.lane.b32.xlu0 %v2634, 31
    %v3288 = vpop.permute.xlu0 %3287
    %3289 = vrot.lane.b32.xlu0 %v2642, 31
    %v3290 = vpop.permute.xlu0 %3289
    %3291 = vrot.lane.b32.xlu0 %v2650, 31
    %v3292 = vpop.permute.xlu0 %3291
    %3293 = vrot.lane.b32.xlu0 %v2658, 31
    %v3294 = vpop.permute.xlu0 %3293
    %3295 = vrot.lane.b32.xlu0 %v2666, 31
    %v3296 = vpop.permute.xlu0 %3295
    %3297 = vrot.lane.b32.xlu0 %v2674, 31
    %v3298 = vpop.permute.xlu0 %3297
    %3299 = vrot.lane.b32.xlu0 %v2682, 31
    %v3300 = vpop.permute.xlu0 %3299
    %3301 = vrot.lane.b32.xlu0 %v2619, 31
    %v3302 = vpop.permute.xlu0 %3301
    %3303 = vrot.lane.b32.xlu0 %v2627, 31
    %v3304 = vpop.permute.xlu0 %3303
    %3305 = vrot.lane.b32.xlu0 %v2635, 31
    %v3306 = vpop.permute.xlu0 %3305
    %3307 = vrot.lane.b32.xlu0 %v2643, 31
    %v3308 = vpop.permute.xlu0 %3307
    %3309 = vrot.lane.b32.xlu0 %v2651, 31
    %v3310 = vpop.permute.xlu0 %3309
    %3311 = vrot.lane.b32.xlu0 %v2659, 31
    %v3312 = vpop.permute.xlu0 %3311
    %3313 = vrot.lane.b32.xlu0 %v2667, 31
    %v3314 = vpop.permute.xlu0 %3313
    %3315 = vrot.lane.b32.xlu0 %v2675, 31
    %v3316 = vpop.permute.xlu0 %3315
    %3317 = vrot.lane.b32.xlu0 %v2683, 31
    %v3318 = vpop.permute.xlu0 %3317
    %3319 = vrot.lane.b32.xlu0 %v2620, 31
    %v3320 = vpop.permute.xlu0 %3319
    %3321 = vrot.lane.b32.xlu0 %v2628, 31
    %v3322 = vpop.permute.xlu0 %3321
    %3323 = vrot.lane.b32.xlu0 %v2636, 31
    %v3324 = vpop.permute.xlu0 %3323
    %3325 = vrot.lane.b32.xlu0 %v2644, 31
    %v3326 = vpop.permute.xlu0 %3325
    %3327 = vrot.lane.b32.xlu0 %v2652, 31
    %v3328 = vpop.permute.xlu0 %3327
    %3329 = vrot.lane.b32.xlu0 %v2660, 31
    %v3330 = vpop.permute.xlu0 %3329
    %3331 = vrot.lane.b32.xlu0 %v2668, 31
    %v3332 = vpop.permute.xlu0 %3331
    %3333 = vrot.lane.b32.xlu0 %v2676, 31
    %v3334 = vpop.permute.xlu0 %3333
    %3335 = vrot.lane.b32.xlu0 %v2684, 31
    %v3336 = vpop.permute.xlu0 %3335
    %3337 = vrot.lane.b32.xlu0 %v2621, 31
    %v3338 = vpop.permute.xlu0 %3337
    %3339 = vrot.lane.b32.xlu0 %v2629, 31
    %v3340 = vpop.permute.xlu0 %3339
    %3341 = vrot.lane.b32.xlu0 %v2637, 31
    %v3342 = vpop.permute.xlu0 %3341
    %3343 = vrot.lane.b32.xlu0 %v2645, 31
    %v3344 = vpop.permute.xlu0 %3343
    %3345 = vrot.lane.b32.xlu0 %v2653, 31
    %v3346 = vpop.permute.xlu0 %3345
    %3347 = vrot.lane.b32.xlu0 %v2661, 31
    %v3348 = vpop.permute.xlu0 %3347
    %3349 = vrot.lane.b32.xlu0 %v2669, 31
    %v3350 = vpop.permute.xlu0 %3349
    %3351 = vrot.lane.b32.xlu0 %v2677, 31
    %v3352 = vpop.permute.xlu0 %3351
    %3353 = vrot.lane.b32.xlu0 %v2685, 31
    %v3354 = vpop.permute.xlu0 %3353
    %3355 = vrot.lane.b32.xlu0 %v2622, 31
    %v3356 = vpop.permute.xlu0 %3355
    %3357 = vrot.lane.b32.xlu0 %v2630, 31
    %v3358 = vpop.permute.xlu0 %3357
    %3359 = vrot.lane.b32.xlu0 %v2638, 31
    %v3360 = vpop.permute.xlu0 %3359
    %3361 = vrot.lane.b32.xlu0 %v2646, 31
    %v3362 = vpop.permute.xlu0 %3361
    %3363 = vrot.lane.b32.xlu0 %v2654, 31
    %v3364 = vpop.permute.xlu0 %3363
    %3365 = vrot.lane.b32.xlu0 %v2662, 31
    %v3366 = vpop.permute.xlu0 %3365
    %3367 = vrot.lane.b32.xlu0 %v2670, 31
    %v3368 = vpop.permute.xlu0 %3367
    %3369 = vrot.lane.b32.xlu0 %v2678, 31
    %v3370 = vpop.permute.xlu0 %3369
    %3371 = vrot.lane.b32.xlu0 %v2686, 31
    %v3372 = vpop.permute.xlu0 %3371
    %3373 = vrot.lane.b32.xlu0 %v2623, 31
    %v3374 = vpop.permute.xlu0 %3373
    %3375 = vrot.lane.b32.xlu0 %v2631, 31
    %v3376 = vpop.permute.xlu0 %3375
    %3377 = vrot.lane.b32.xlu0 %v2639, 31
    %v3378 = vpop.permute.xlu0 %3377
    %3379 = vrot.lane.b32.xlu0 %v2647, 31
    %v3380 = vpop.permute.xlu0 %3379
    %3381 = vrot.lane.b32.xlu0 %v2655, 31
    %v3382 = vpop.permute.xlu0 %3381
    %3383 = vrot.lane.b32.xlu0 %v2663, 31
    %v3384 = vpop.permute.xlu0 %3383
    %3385 = vrot.lane.b32.xlu0 %v2671, 31
    %v3386 = vpop.permute.xlu0 %3385
    %3387 = vrot.lane.b32.xlu0 %v2679, 31
    %v3388 = vpop.permute.xlu0 %3387
    %3389 = vrot.lane.b32.xlu0 %v2687, 31
    %v3390 = vpop.permute.xlu0 %3389
    %3391 = vrot.lane.b32.xlu0 %v2624, 31
    %v3392 = vpop.permute.xlu0 %3391
    %3393 = vrot.lane.b32.xlu0 %v2632, 31
    %v3394 = vpop.permute.xlu0 %3393
    %3395 = vrot.lane.b32.xlu0 %v2640, 31
    %v3396 = vpop.permute.xlu0 %3395
    %3397 = vrot.lane.b32.xlu0 %v2648, 31
    %v3398 = vpop.permute.xlu0 %3397
    %3399 = vrot.lane.b32.xlu0 %v2656, 31
    %v3400 = vpop.permute.xlu0 %3399
    %3401 = vrot.lane.b32.xlu0 %v2664, 31
    %v3402 = vpop.permute.xlu0 %3401
    %3403 = vrot.lane.b32.xlu0 %v2672, 31
    %v3404 = vpop.permute.xlu0 %3403
    %3405 = vrot.lane.b32.xlu0 %v2680, 31
    %v3406 = vpop.permute.xlu0 %3405
    %3407 = vrot.lane.b32.xlu0 %v2688, 31
    %v3408 = vpop.permute.xlu0 %3407
    %v3409 = vsel %vm923, %v3374, %v3392
    %v3410 = vsel %vm923, %v3376, %v3394
    %v3411 = vsel %vm923, %v3378, %v3396
    %v3412 = vsel %vm923, %v3380, %v3398
    %v3413 = vsel %vm923, %v3382, %v3400
    %v3414 = vsel %vm923, %v3384, %v3402
    %v3415 = vsel %vm923, %v3386, %v3404
    %v3416 = vsel %vm923, %v3388, %v3406
    %v3417 = vsel %vm923, %v3390, %v3408
    %v3418 = vsel %vm923, %v3356, %v3374
    %v3419 = vsel %vm923, %v3358, %v3376
    %v3420 = vsel %vm923, %v3360, %v3378
    %v3421 = vsel %vm923, %v3362, %v3380
    %v3422 = vsel %vm923, %v3364, %v3382
    %v3423 = vsel %vm923, %v3366, %v3384
    %v3424 = vsel %vm923, %v3368, %v3386
    %v3425 = vsel %vm923, %v3370, %v3388
    %v3426 = vsel %vm923, %v3372, %v3390
    %v3427 = vsel %vm923, %v3338, %v3356
    %v3428 = vsel %vm923, %v3340, %v3358
    %v3429 = vsel %vm923, %v3342, %v3360
    %v3430 = vsel %vm923, %v3344, %v3362
    %v3431 = vsel %vm923, %v3346, %v3364
    %v3432 = vsel %vm923, %v3348, %v3366
    %v3433 = vsel %vm923, %v3350, %v3368
    %v3434 = vsel %vm923, %v3352, %v3370
    %v3435 = vsel %vm923, %v3354, %v3372
    %v3436 = vsel %vm923, %v3320, %v3338
    %v3437 = vsel %vm923, %v3322, %v3340
    %v3438 = vsel %vm923, %v3324, %v3342
    %v3439 = vsel %vm923, %v3326, %v3344
    %v3440 = vsel %vm923, %v3328, %v3346
    %v3441 = vsel %vm923, %v3330, %v3348
    %v3442 = vsel %vm923, %v3332, %v3350
    %v3443 = vsel %vm923, %v3334, %v3352
    %v3444 = vsel %vm923, %v3336, %v3354
    %v3445 = vsel %vm923, %v3302, %v3320
    %v3446 = vsel %vm923, %v3304, %v3322
    %v3447 = vsel %vm923, %v3306, %v3324
    %v3448 = vsel %vm923, %v3308, %v3326
    %v3449 = vsel %vm923, %v3310, %v3328
    %v3450 = vsel %vm923, %v3312, %v3330
    %v3451 = vsel %vm923, %v3314, %v3332
    %v3452 = vsel %vm923, %v3316, %v3334
    %v3453 = vsel %vm923, %v3318, %v3336
    %v3454 = vsel %vm923, %v3284, %v3302
    %v3455 = vsel %vm923, %v3286, %v3304
    %v3456 = vsel %vm923, %v3288, %v3306
    %v3457 = vsel %vm923, %v3290, %v3308
    %v3458 = vsel %vm923, %v3292, %v3310
    %v3459 = vsel %vm923, %v3294, %v3312
    %v3460 = vsel %vm923, %v3296, %v3314
    %v3461 = vsel %vm923, %v3298, %v3316
    %v3462 = vsel %vm923, %v3300, %v3318
    %v3463 = vsel %vm923, %v3266, %v3284
    %v3464 = vsel %vm923, %v3268, %v3286
    %v3465 = vsel %vm923, %v3270, %v3288
    %v3466 = vsel %vm923, %v3272, %v3290
    %v3467 = vsel %vm923, %v3274, %v3292
    %v3468 = vsel %vm923, %v3276, %v3294
    %v3469 = vsel %vm923, %v3278, %v3296
    %v3470 = vsel %vm923, %v3280, %v3298
    %v3471 = vsel %vm923, %v3282, %v3300
    %v3472 = vsel %vm923, %v3392, %v3266
    %v3473 = vsel %vm923, %v3394, %v3268
    %v3474 = vsel %vm923, %v3396, %v3270
    %v3475 = vsel %vm923, %v3398, %v3272
    %v3476 = vsel %vm923, %v3400, %v3274
    %v3477 = vsel %vm923, %v3402, %v3276
    %v3478 = vsel %vm923, %v3404, %v3278
    %v3479 = vsel %vm923, %v3406, %v3280
    %v3480 = vsel %vm923, %v3408, %v3282
    %v3481 = vmul.f32 %v3472, %v299
    %v3482 = vmul.f32 %v3463, %v300
    %v3483 = vmul.f32 %v3454, %v301
    %v3484 = vmul.f32 %v3445, %v302
    %v3485 = vmul.f32 %v3436, %v303
    %v3486 = vmul.f32 %v3427, %v304
    %v3487 = vmul.f32 %v3418, %v305
    %v3488 = vmul.f32 %v3409, %v306
    %v3489 = vmul.f32 %v3473, %v299
    %v3490 = vmul.f32 %v3464, %v300
    %v3491 = vmul.f32 %v3455, %v301
    %v3492 = vmul.f32 %v3446, %v302
    %v3493 = vmul.f32 %v3437, %v303
    %v3494 = vmul.f32 %v3428, %v304
    %v3495 = vmul.f32 %v3419, %v305
    %v3496 = vmul.f32 %v3410, %v306
    %v3497 = vmul.f32 %v3474, %v299
    %v3498 = vmul.f32 %v3465, %v300
    %v3499 = vmul.f32 %v3456, %v301
    %v3500 = vmul.f32 %v3447, %v302
    %v3501 = vmul.f32 %v3438, %v303
    %v3502 = vmul.f32 %v3429, %v304
    %v3503 = vmul.f32 %v3420, %v305
    %v3504 = vmul.f32 %v3411, %v306
    %v3505 = vmul.f32 %v3475, %v299
    %v3506 = vmul.f32 %v3466, %v300
    %v3507 = vmul.f32 %v3457, %v301
    %v3508 = vmul.f32 %v3448, %v302
    %v3509 = vmul.f32 %v3439, %v303
    %v3510 = vmul.f32 %v3430, %v304
    %v3511 = vmul.f32 %v3421, %v305
    %v3512 = vmul.f32 %v3412, %v306
    %v3513 = vmul.f32 %v3476, %v299
    %v3514 = vmul.f32 %v3467, %v300
    %v3515 = vmul.f32 %v3458, %v301
    %v3516 = vmul.f32 %v3449, %v302
    %v3517 = vmul.f32 %v3440, %v303
    %v3518 = vmul.f32 %v3431, %v304
    %v3519 = vmul.f32 %v3422, %v305
    %v3520 = vmul.f32 %v3413, %v306
    %v3521 = vmul.f32 %v3477, %v299
    %v3522 = vmul.f32 %v3468, %v300
    %v3523 = vmul.f32 %v3459, %v301
    %v3524 = vmul.f32 %v3450, %v302
    %v3525 = vmul.f32 %v3441, %v303
    %v3526 = vmul.f32 %v3432, %v304
    %v3527 = vmul.f32 %v3423, %v305
    %v3528 = vmul.f32 %v3414, %v306
    %v3529 = vmul.f32 %v3478, %v299
    %v3530 = vmul.f32 %v3469, %v300
    %v3531 = vmul.f32 %v3460, %v301
    %v3532 = vmul.f32 %v3451, %v302
    %v3533 = vmul.f32 %v3442, %v303
    %v3534 = vmul.f32 %v3433, %v304
    %v3535 = vmul.f32 %v3424, %v305
    %v3536 = vmul.f32 %v3415, %v306
    %v3537 = vmul.f32 %v3479, %v299
    %v3538 = vmul.f32 %v3470, %v300
    %v3539 = vmul.f32 %v3461, %v301
    %v3540 = vmul.f32 %v3452, %v302
    %v3541 = vmul.f32 %v3443, %v303
    %v3542 = vmul.f32 %v3434, %v304
    %v3543 = vmul.f32 %v3425, %v305
    %v3544 = vmul.f32 %v3416, %v306
    %v3545 = vmul.f32 %v3480, %v299
    %v3546 = vmul.f32 %v3471, %v300
    %v3547 = vmul.f32 %v3462, %v301
    %v3548 = vmul.f32 %v3453, %v302
    %v3549 = vmul.f32 %v3444, %v303
    %v3550 = vmul.f32 %v3435, %v304
    %v3551 = vmul.f32 %v3426, %v305
    %v3552 = vmul.f32 %v3417, %v306
    %3553 = vrot.lane.b32.xlu0 %v2617, 1
    %v3554 = vpop.permute.xlu0 %3553
    %3555 = vrot.lane.b32.xlu0 %v2625, 1
    %v3556 = vpop.permute.xlu0 %3555
    %3557 = vrot.lane.b32.xlu0 %v2633, 1
    %v3558 = vpop.permute.xlu0 %3557
    %3559 = vrot.lane.b32.xlu0 %v2641, 1
    %v3560 = vpop.permute.xlu0 %3559
    %3561 = vrot.lane.b32.xlu0 %v2649, 1
    %v3562 = vpop.permute.xlu0 %3561
    %3563 = vrot.lane.b32.xlu0 %v2657, 1
    %v3564 = vpop.permute.xlu0 %3563
    %3565 = vrot.lane.b32.xlu0 %v2665, 1
    %v3566 = vpop.permute.xlu0 %3565
    %3567 = vrot.lane.b32.xlu0 %v2673, 1
    %v3568 = vpop.permute.xlu0 %3567
    %3569 = vrot.lane.b32.xlu0 %v2681, 1
    %v3570 = vpop.permute.xlu0 %3569
    %3571 = vrot.lane.b32.xlu0 %v2618, 1
    %v3572 = vpop.permute.xlu0 %3571
    %3573 = vrot.lane.b32.xlu0 %v2626, 1
    %v3574 = vpop.permute.xlu0 %3573
    %3575 = vrot.lane.b32.xlu0 %v2634, 1
    %v3576 = vpop.permute.xlu0 %3575
    %3577 = vrot.lane.b32.xlu0 %v2642, 1
    %v3578 = vpop.permute.xlu0 %3577
    %3579 = vrot.lane.b32.xlu0 %v2650, 1
    %v3580 = vpop.permute.xlu0 %3579
    %3581 = vrot.lane.b32.xlu0 %v2658, 1
    %v3582 = vpop.permute.xlu0 %3581
    %3583 = vrot.lane.b32.xlu0 %v2666, 1
    %v3584 = vpop.permute.xlu0 %3583
    %3585 = vrot.lane.b32.xlu0 %v2674, 1
    %v3586 = vpop.permute.xlu0 %3585
    %3587 = vrot.lane.b32.xlu0 %v2682, 1
    %v3588 = vpop.permute.xlu0 %3587
    %3589 = vrot.lane.b32.xlu0 %v2619, 1
    %v3590 = vpop.permute.xlu0 %3589
    %3591 = vrot.lane.b32.xlu0 %v2627, 1
    %v3592 = vpop.permute.xlu0 %3591
    %3593 = vrot.lane.b32.xlu0 %v2635, 1
    %v3594 = vpop.permute.xlu0 %3593
    %3595 = vrot.lane.b32.xlu0 %v2643, 1
    %v3596 = vpop.permute.xlu0 %3595
    %3597 = vrot.lane.b32.xlu0 %v2651, 1
    %v3598 = vpop.permute.xlu0 %3597
    %3599 = vrot.lane.b32.xlu0 %v2659, 1
    %v3600 = vpop.permute.xlu0 %3599
    %3601 = vrot.lane.b32.xlu0 %v2667, 1
    %v3602 = vpop.permute.xlu0 %3601
    %3603 = vrot.lane.b32.xlu0 %v2675, 1
    %v3604 = vpop.permute.xlu0 %3603
    %3605 = vrot.lane.b32.xlu0 %v2683, 1
    %v3606 = vpop.permute.xlu0 %3605
    %3607 = vrot.lane.b32.xlu0 %v2620, 1
    %v3608 = vpop.permute.xlu0 %3607
    %3609 = vrot.lane.b32.xlu0 %v2628, 1
    %v3610 = vpop.permute.xlu0 %3609
    %3611 = vrot.lane.b32.xlu0 %v2636, 1
    %v3612 = vpop.permute.xlu0 %3611
    %3613 = vrot.lane.b32.xlu0 %v2644, 1
    %v3614 = vpop.permute.xlu0 %3613
    %3615 = vrot.lane.b32.xlu0 %v2652, 1
    %v3616 = vpop.permute.xlu0 %3615
    %3617 = vrot.lane.b32.xlu0 %v2660, 1
    %v3618 = vpop.permute.xlu0 %3617
    %3619 = vrot.lane.b32.xlu0 %v2668, 1
    %v3620 = vpop.permute.xlu0 %3619
    %3621 = vrot.lane.b32.xlu0 %v2676, 1
    %v3622 = vpop.permute.xlu0 %3621
    %3623 = vrot.lane.b32.xlu0 %v2684, 1
    %v3624 = vpop.permute.xlu0 %3623
    %3625 = vrot.lane.b32.xlu0 %v2621, 1
    %v3626 = vpop.permute.xlu0 %3625
    %3627 = vrot.lane.b32.xlu0 %v2629, 1
    %v3628 = vpop.permute.xlu0 %3627
    %3629 = vrot.lane.b32.xlu0 %v2637, 1
    %v3630 = vpop.permute.xlu0 %3629
    %3631 = vrot.lane.b32.xlu0 %v2645, 1
    %v3632 = vpop.permute.xlu0 %3631
    %3633 = vrot.lane.b32.xlu0 %v2653, 1
    %v3634 = vpop.permute.xlu0 %3633
    %3635 = vrot.lane.b32.xlu0 %v2661, 1
    %v3636 = vpop.permute.xlu0 %3635
    %3637 = vrot.lane.b32.xlu0 %v2669, 1
    %v3638 = vpop.permute.xlu0 %3637
    %3639 = vrot.lane.b32.xlu0 %v2677, 1
    %v3640 = vpop.permute.xlu0 %3639
    %3641 = vrot.lane.b32.xlu0 %v2685, 1
    %v3642 = vpop.permute.xlu0 %3641
    %3643 = vrot.lane.b32.xlu0 %v2622, 1
    %v3644 = vpop.permute.xlu0 %3643
    %3645 = vrot.lane.b32.xlu0 %v2630, 1
    %v3646 = vpop.permute.xlu0 %3645
    %3647 = vrot.lane.b32.xlu0 %v2638, 1
    %v3648 = vpop.permute.xlu0 %3647
    %3649 = vrot.lane.b32.xlu0 %v2646, 1
    %v3650 = vpop.permute.xlu0 %3649
    %3651 = vrot.lane.b32.xlu0 %v2654, 1
    %v3652 = vpop.permute.xlu0 %3651
    %3653 = vrot.lane.b32.xlu0 %v2662, 1
    %v3654 = vpop.permute.xlu0 %3653
    %3655 = vrot.lane.b32.xlu0 %v2670, 1
    %v3656 = vpop.permute.xlu0 %3655
    %3657 = vrot.lane.b32.xlu0 %v2678, 1
    %v3658 = vpop.permute.xlu0 %3657
    %3659 = vrot.lane.b32.xlu0 %v2686, 1
    %v3660 = vpop.permute.xlu0 %3659
    %3661 = vrot.lane.b32.xlu0 %v2623, 1
    %v3662 = vpop.permute.xlu0 %3661
    %3663 = vrot.lane.b32.xlu0 %v2631, 1
    %v3664 = vpop.permute.xlu0 %3663
    %3665 = vrot.lane.b32.xlu0 %v2639, 1
    %v3666 = vpop.permute.xlu0 %3665
    %3667 = vrot.lane.b32.xlu0 %v2647, 1
    %v3668 = vpop.permute.xlu0 %3667
    %3669 = vrot.lane.b32.xlu0 %v2655, 1
    %v3670 = vpop.permute.xlu0 %3669
    %3671 = vrot.lane.b32.xlu0 %v2663, 1
    %v3672 = vpop.permute.xlu0 %3671
    %3673 = vrot.lane.b32.xlu0 %v2671, 1
    %v3674 = vpop.permute.xlu0 %3673
    %3675 = vrot.lane.b32.xlu0 %v2679, 1
    %v3676 = vpop.permute.xlu0 %3675
    %3677 = vrot.lane.b32.xlu0 %v2687, 1
    %v3678 = vpop.permute.xlu0 %3677
    %3679 = vrot.lane.b32.xlu0 %v2624, 1
    %v3680 = vpop.permute.xlu0 %3679
    %3681 = vrot.lane.b32.xlu0 %v2632, 1
    %v3682 = vpop.permute.xlu0 %3681
    %3683 = vrot.lane.b32.xlu0 %v2640, 1
    %v3684 = vpop.permute.xlu0 %3683
    %3685 = vrot.lane.b32.xlu0 %v2648, 1
    %v3686 = vpop.permute.xlu0 %3685
    %3687 = vrot.lane.b32.xlu0 %v2656, 1
    %v3688 = vpop.permute.xlu0 %3687
    %3689 = vrot.lane.b32.xlu0 %v2664, 1
    %v3690 = vpop.permute.xlu0 %3689
    %3691 = vrot.lane.b32.xlu0 %v2672, 1
    %v3692 = vpop.permute.xlu0 %3691
    %3693 = vrot.lane.b32.xlu0 %v2680, 1
    %v3694 = vpop.permute.xlu0 %3693
    %3695 = vrot.lane.b32.xlu0 %v2688, 1
    %v3696 = vpop.permute.xlu0 %3695
    %v3697 = vsel %vm1022, %v3662, %v3680
    %v3698 = vsel %vm1022, %v3664, %v3682
    %v3699 = vsel %vm1022, %v3666, %v3684
    %v3700 = vsel %vm1022, %v3668, %v3686
    %v3701 = vsel %vm1022, %v3670, %v3688
    %v3702 = vsel %vm1022, %v3672, %v3690
    %v3703 = vsel %vm1022, %v3674, %v3692
    %v3704 = vsel %vm1022, %v3676, %v3694
    %v3705 = vsel %vm1022, %v3678, %v3696
    %v3706 = vsel %vm1022, %v3644, %v3662
    %v3707 = vsel %vm1022, %v3646, %v3664
    %v3708 = vsel %vm1022, %v3648, %v3666
    %v3709 = vsel %vm1022, %v3650, %v3668
    %v3710 = vsel %vm1022, %v3652, %v3670
    %v3711 = vsel %vm1022, %v3654, %v3672
    %v3712 = vsel %vm1022, %v3656, %v3674
    %v3713 = vsel %vm1022, %v3658, %v3676
    %v3714 = vsel %vm1022, %v3660, %v3678
    %v3715 = vsel %vm1022, %v3626, %v3644
    %v3716 = vsel %vm1022, %v3628, %v3646
    %v3717 = vsel %vm1022, %v3630, %v3648
    %v3718 = vsel %vm1022, %v3632, %v3650
    %v3719 = vsel %vm1022, %v3634, %v3652
    %v3720 = vsel %vm1022, %v3636, %v3654
    %v3721 = vsel %vm1022, %v3638, %v3656
    %v3722 = vsel %vm1022, %v3640, %v3658
    %v3723 = vsel %vm1022, %v3642, %v3660
    %v3724 = vsel %vm1022, %v3608, %v3626
    %v3725 = vsel %vm1022, %v3610, %v3628
    %v3726 = vsel %vm1022, %v3612, %v3630
    %v3727 = vsel %vm1022, %v3614, %v3632
    %v3728 = vsel %vm1022, %v3616, %v3634
    %v3729 = vsel %vm1022, %v3618, %v3636
    %v3730 = vsel %vm1022, %v3620, %v3638
    %v3731 = vsel %vm1022, %v3622, %v3640
    %v3732 = vsel %vm1022, %v3624, %v3642
    %v3733 = vsel %vm1022, %v3590, %v3608
    %v3734 = vsel %vm1022, %v3592, %v3610
    %v3735 = vsel %vm1022, %v3594, %v3612
    %v3736 = vsel %vm1022, %v3596, %v3614
    %v3737 = vsel %vm1022, %v3598, %v3616
    %v3738 = vsel %vm1022, %v3600, %v3618
    %v3739 = vsel %vm1022, %v3602, %v3620
    %v3740 = vsel %vm1022, %v3604, %v3622
    %v3741 = vsel %vm1022, %v3606, %v3624
    %v3742 = vsel %vm1022, %v3572, %v3590
    %v3743 = vsel %vm1022, %v3574, %v3592
    %v3744 = vsel %vm1022, %v3576, %v3594
    %v3745 = vsel %vm1022, %v3578, %v3596
    %v3746 = vsel %vm1022, %v3580, %v3598
    %v3747 = vsel %vm1022, %v3582, %v3600
    %v3748 = vsel %vm1022, %v3584, %v3602
    %v3749 = vsel %vm1022, %v3586, %v3604
    %v3750 = vsel %vm1022, %v3588, %v3606
    %v3751 = vsel %vm1022, %v3554, %v3572
    %v3752 = vsel %vm1022, %v3556, %v3574
    %v3753 = vsel %vm1022, %v3558, %v3576
    %v3754 = vsel %vm1022, %v3560, %v3578
    %v3755 = vsel %vm1022, %v3562, %v3580
    %v3756 = vsel %vm1022, %v3564, %v3582
    %v3757 = vsel %vm1022, %v3566, %v3584
    %v3758 = vsel %vm1022, %v3568, %v3586
    %v3759 = vsel %vm1022, %v3570, %v3588
    %v3760 = vsel %vm1022, %v3680, %v3554
    %v3761 = vsel %vm1022, %v3682, %v3556
    %v3762 = vsel %vm1022, %v3684, %v3558
    %v3763 = vsel %vm1022, %v3686, %v3560
    %v3764 = vsel %vm1022, %v3688, %v3562
    %v3765 = vsel %vm1022, %v3690, %v3564
    %v3766 = vsel %vm1022, %v3692, %v3566
    %v3767 = vsel %vm1022, %v3694, %v3568
    %v3768 = vsel %vm1022, %v3696, %v3570
    %v3769 = vmul.f32 %v3760, %v355
    %v3770 = vmul.f32 %v3751, %v356
    %v3771 = vmul.f32 %v3742, %v357
    %v3772 = vmul.f32 %v3733, %v358
    %v3773 = vmul.f32 %v3724, %v359
    %v3774 = vmul.f32 %v3715, %v360
    %v3775 = vmul.f32 %v3706, %v361
    %v3776 = vmul.f32 %v3697, %v362
    %v3777 = vmul.f32 %v3761, %v355
    %v3778 = vmul.f32 %v3752, %v356
    %v3779 = vmul.f32 %v3743, %v357
    %v3780 = vmul.f32 %v3734, %v358
    %v3781 = vmul.f32 %v3725, %v359
    %v3782 = vmul.f32 %v3716, %v360
    %v3783 = vmul.f32 %v3707, %v361
    %v3784 = vmul.f32 %v3698, %v362
    %v3785 = vmul.f32 %v3762, %v355
    %v3786 = vmul.f32 %v3753, %v356
    %v3787 = vmul.f32 %v3744, %v357
    %v3788 = vmul.f32 %v3735, %v358
    %v3789 = vmul.f32 %v3726, %v359
    %v3790 = vmul.f32 %v3717, %v360
    %v3791 = vmul.f32 %v3708, %v361
    %v3792 = vmul.f32 %v3699, %v362
    %v3793 = vmul.f32 %v3763, %v355
    %v3794 = vmul.f32 %v3754, %v356
    %v3795 = vmul.f32 %v3745, %v357
    %v3796 = vmul.f32 %v3736, %v358
    %v3797 = vmul.f32 %v3727, %v359
    %v3798 = vmul.f32 %v3718, %v360
    %v3799 = vmul.f32 %v3709, %v361
    %v3800 = vmul.f32 %v3700, %v362
    %v3801 = vmul.f32 %v3764, %v355
    %v3802 = vmul.f32 %v3755, %v356
    %v3803 = vmul.f32 %v3746, %v357
    %v3804 = vmul.f32 %v3737, %v358
    %v3805 = vmul.f32 %v3728, %v359
    %v3806 = vmul.f32 %v3719, %v360
    %v3807 = vmul.f32 %v3710, %v361
    %v3808 = vmul.f32 %v3701, %v362
    %v3809 = vmul.f32 %v3765, %v355
    %v3810 = vmul.f32 %v3756, %v356
    %v3811 = vmul.f32 %v3747, %v357
    %v3812 = vmul.f32 %v3738, %v358
    %v3813 = vmul.f32 %v3729, %v359
    %v3814 = vmul.f32 %v3720, %v360
    %v3815 = vmul.f32 %v3711, %v361
    %v3816 = vmul.f32 %v3702, %v362
    %v3817 = vmul.f32 %v3766, %v355
    %v3818 = vmul.f32 %v3757, %v356
    %v3819 = vmul.f32 %v3748, %v357
    %v3820 = vmul.f32 %v3739, %v358
    %v3821 = vmul.f32 %v3730, %v359
    %v3822 = vmul.f32 %v3721, %v360
    %v3823 = vmul.f32 %v3712, %v361
    %v3824 = vmul.f32 %v3703, %v362
    %v3825 = vmul.f32 %v3767, %v355
    %v3826 = vmul.f32 %v3758, %v356
    %v3827 = vmul.f32 %v3749, %v357
    %v3828 = vmul.f32 %v3740, %v358
    %v3829 = vmul.f32 %v3731, %v359
    %v3830 = vmul.f32 %v3722, %v360
    %v3831 = vmul.f32 %v3713, %v361
    %v3832 = vmul.f32 %v3704, %v362
    %v3833 = vmul.f32 %v3768, %v355
    %v3834 = vmul.f32 %v3759, %v356
    %v3835 = vmul.f32 %v3750, %v357
    %v3836 = vmul.f32 %v3741, %v358
    %v3837 = vmul.f32 %v3732, %v359
    %v3838 = vmul.f32 %v3723, %v360
    %v3839 = vmul.f32 %v3714, %v361
    %v3840 = vmul.f32 %v3705, %v362
    %3841 = vrot.lane.b32.xlu0 %v2617, 127
    %v3842 = vpop.permute.xlu0 %3841
    %3843 = vrot.lane.b32.xlu0 %v2625, 127
    %v3844 = vpop.permute.xlu0 %3843
    %3845 = vrot.lane.b32.xlu0 %v2633, 127
    %v3846 = vpop.permute.xlu0 %3845
    %3847 = vrot.lane.b32.xlu0 %v2641, 127
    %v3848 = vpop.permute.xlu0 %3847
    %3849 = vrot.lane.b32.xlu0 %v2649, 127
    %v3850 = vpop.permute.xlu0 %3849
    %3851 = vrot.lane.b32.xlu0 %v2657, 127
    %v3852 = vpop.permute.xlu0 %3851
    %3853 = vrot.lane.b32.xlu0 %v2665, 127
    %v3854 = vpop.permute.xlu0 %3853
    %3855 = vrot.lane.b32.xlu0 %v2673, 127
    %v3856 = vpop.permute.xlu0 %3855
    %3857 = vrot.lane.b32.xlu0 %v2681, 127
    %v3858 = vpop.permute.xlu0 %3857
    %3859 = vrot.lane.b32.xlu0 %v2618, 127
    %v3860 = vpop.permute.xlu0 %3859
    %3861 = vrot.lane.b32.xlu0 %v2626, 127
    %v3862 = vpop.permute.xlu0 %3861
    %3863 = vrot.lane.b32.xlu0 %v2634, 127
    %v3864 = vpop.permute.xlu0 %3863
    %3865 = vrot.lane.b32.xlu0 %v2642, 127
    %v3866 = vpop.permute.xlu0 %3865
    %3867 = vrot.lane.b32.xlu0 %v2650, 127
    %v3868 = vpop.permute.xlu0 %3867
    %3869 = vrot.lane.b32.xlu0 %v2658, 127
    %v3870 = vpop.permute.xlu0 %3869
    %3871 = vrot.lane.b32.xlu0 %v2666, 127
    %v3872 = vpop.permute.xlu0 %3871
    %3873 = vrot.lane.b32.xlu0 %v2674, 127
    %v3874 = vpop.permute.xlu0 %3873
    %3875 = vrot.lane.b32.xlu0 %v2682, 127
    %v3876 = vpop.permute.xlu0 %3875
    %3877 = vrot.lane.b32.xlu0 %v2619, 127
    %v3878 = vpop.permute.xlu0 %3877
    %3879 = vrot.lane.b32.xlu0 %v2627, 127
    %v3880 = vpop.permute.xlu0 %3879
    %3881 = vrot.lane.b32.xlu0 %v2635, 127
    %v3882 = vpop.permute.xlu0 %3881
    %3883 = vrot.lane.b32.xlu0 %v2643, 127
    %v3884 = vpop.permute.xlu0 %3883
    %3885 = vrot.lane.b32.xlu0 %v2651, 127
    %v3886 = vpop.permute.xlu0 %3885
    %3887 = vrot.lane.b32.xlu0 %v2659, 127
    %v3888 = vpop.permute.xlu0 %3887
    %3889 = vrot.lane.b32.xlu0 %v2667, 127
    %v3890 = vpop.permute.xlu0 %3889
    %3891 = vrot.lane.b32.xlu0 %v2675, 127
    %v3892 = vpop.permute.xlu0 %3891
    %3893 = vrot.lane.b32.xlu0 %v2683, 127
    %v3894 = vpop.permute.xlu0 %3893
    %3895 = vrot.lane.b32.xlu0 %v2620, 127
    %v3896 = vpop.permute.xlu0 %3895
    %3897 = vrot.lane.b32.xlu0 %v2628, 127
    %v3898 = vpop.permute.xlu0 %3897
    %3899 = vrot.lane.b32.xlu0 %v2636, 127
    %v3900 = vpop.permute.xlu0 %3899
    %3901 = vrot.lane.b32.xlu0 %v2644, 127
    %v3902 = vpop.permute.xlu0 %3901
    %3903 = vrot.lane.b32.xlu0 %v2652, 127
    %v3904 = vpop.permute.xlu0 %3903
    %3905 = vrot.lane.b32.xlu0 %v2660, 127
    %v3906 = vpop.permute.xlu0 %3905
    %3907 = vrot.lane.b32.xlu0 %v2668, 127
    %v3908 = vpop.permute.xlu0 %3907
    %3909 = vrot.lane.b32.xlu0 %v2676, 127
    %v3910 = vpop.permute.xlu0 %3909
    %3911 = vrot.lane.b32.xlu0 %v2684, 127
    %v3912 = vpop.permute.xlu0 %3911
    %3913 = vrot.lane.b32.xlu0 %v2621, 127
    %v3914 = vpop.permute.xlu0 %3913
    %3915 = vrot.lane.b32.xlu0 %v2629, 127
    %v3916 = vpop.permute.xlu0 %3915
    %3917 = vrot.lane.b32.xlu0 %v2637, 127
    %v3918 = vpop.permute.xlu0 %3917
    %3919 = vrot.lane.b32.xlu0 %v2645, 127
    %v3920 = vpop.permute.xlu0 %3919
    %3921 = vrot.lane.b32.xlu0 %v2653, 127
    %v3922 = vpop.permute.xlu0 %3921
    %3923 = vrot.lane.b32.xlu0 %v2661, 127
    %v3924 = vpop.permute.xlu0 %3923
    %3925 = vrot.lane.b32.xlu0 %v2669, 127
    %v3926 = vpop.permute.xlu0 %3925
    %3927 = vrot.lane.b32.xlu0 %v2677, 127
    %v3928 = vpop.permute.xlu0 %3927
    %3929 = vrot.lane.b32.xlu0 %v2685, 127
    %v3930 = vpop.permute.xlu0 %3929
    %3931 = vrot.lane.b32.xlu0 %v2622, 127
    %v3932 = vpop.permute.xlu0 %3931
    %3933 = vrot.lane.b32.xlu0 %v2630, 127
    %v3934 = vpop.permute.xlu0 %3933
    %3935 = vrot.lane.b32.xlu0 %v2638, 127
    %v3936 = vpop.permute.xlu0 %3935
    %3937 = vrot.lane.b32.xlu0 %v2646, 127
    %v3938 = vpop.permute.xlu0 %3937
    %3939 = vrot.lane.b32.xlu0 %v2654, 127
    %v3940 = vpop.permute.xlu0 %3939
    %3941 = vrot.lane.b32.xlu0 %v2662, 127
    %v3942 = vpop.permute.xlu0 %3941
    %3943 = vrot.lane.b32.xlu0 %v2670, 127
    %v3944 = vpop.permute.xlu0 %3943
    %3945 = vrot.lane.b32.xlu0 %v2678, 127
    %v3946 = vpop.permute.xlu0 %3945
    %3947 = vrot.lane.b32.xlu0 %v2686, 127
    %v3948 = vpop.permute.xlu0 %3947
    %3949 = vrot.lane.b32.xlu0 %v2623, 127
    %v3950 = vpop.permute.xlu0 %3949
    %3951 = vrot.lane.b32.xlu0 %v2631, 127
    %v3952 = vpop.permute.xlu0 %3951
    %3953 = vrot.lane.b32.xlu0 %v2639, 127
    %v3954 = vpop.permute.xlu0 %3953
    %3955 = vrot.lane.b32.xlu0 %v2647, 127
    %v3956 = vpop.permute.xlu0 %3955
    %3957 = vrot.lane.b32.xlu0 %v2655, 127
    %v3958 = vpop.permute.xlu0 %3957
    %3959 = vrot.lane.b32.xlu0 %v2663, 127
    %v3960 = vpop.permute.xlu0 %3959
    %3961 = vrot.lane.b32.xlu0 %v2671, 127
    %v3962 = vpop.permute.xlu0 %3961
    %3963 = vrot.lane.b32.xlu0 %v2679, 127
    %v3964 = vpop.permute.xlu0 %3963
    %3965 = vrot.lane.b32.xlu0 %v2687, 127
    %v3966 = vpop.permute.xlu0 %3965
    %3967 = vrot.lane.b32.xlu0 %v2624, 127
    %v3968 = vpop.permute.xlu0 %3967
    %3969 = vrot.lane.b32.xlu0 %v2632, 127
    %v3970 = vpop.permute.xlu0 %3969
    %3971 = vrot.lane.b32.xlu0 %v2640, 127
    %v3972 = vpop.permute.xlu0 %3971
    %3973 = vrot.lane.b32.xlu0 %v2648, 127
    %v3974 = vpop.permute.xlu0 %3973
    %3975 = vrot.lane.b32.xlu0 %v2656, 127
    %v3976 = vpop.permute.xlu0 %3975
    %3977 = vrot.lane.b32.xlu0 %v2664, 127
    %v3978 = vpop.permute.xlu0 %3977
    %3979 = vrot.lane.b32.xlu0 %v2672, 127
    %v3980 = vpop.permute.xlu0 %3979
    %3981 = vrot.lane.b32.xlu0 %v2680, 127
    %v3982 = vpop.permute.xlu0 %3981
    %3983 = vrot.lane.b32.xlu0 %v2688, 127
    %v3984 = vpop.permute.xlu0 %3983
    %v3985 = vsel %vm1055, %v3950, %v3968
    %v3986 = vsel %vm1055, %v3952, %v3970
    %v3987 = vsel %vm1055, %v3954, %v3972
    %v3988 = vsel %vm1055, %v3956, %v3974
    %v3989 = vsel %vm1055, %v3958, %v3976
    %v3990 = vsel %vm1055, %v3960, %v3978
    %v3991 = vsel %vm1055, %v3962, %v3980
    %v3992 = vsel %vm1055, %v3964, %v3982
    %v3993 = vsel %vm1055, %v3966, %v3984
    %v3994 = vsel %vm1055, %v3932, %v3950
    %v3995 = vsel %vm1055, %v3934, %v3952
    %v3996 = vsel %vm1055, %v3936, %v3954
    %v3997 = vsel %vm1055, %v3938, %v3956
    %v3998 = vsel %vm1055, %v3940, %v3958
    %v3999 = vsel %vm1055, %v3942, %v3960
    %v4000 = vsel %vm1055, %v3944, %v3962
    %v4001 = vsel %vm1055, %v3946, %v3964
    %v4002 = vsel %vm1055, %v3948, %v3966
    %v4003 = vsel %vm1055, %v3914, %v3932
    %v4004 = vsel %vm1055, %v3916, %v3934
    %v4005 = vsel %vm1055, %v3918, %v3936
    %v4006 = vsel %vm1055, %v3920, %v3938
    %v4007 = vsel %vm1055, %v3922, %v3940
    %v4008 = vsel %vm1055, %v3924, %v3942
    %v4009 = vsel %vm1055, %v3926, %v3944
    %v4010 = vsel %vm1055, %v3928, %v3946
    %v4011 = vsel %vm1055, %v3930, %v3948
    %v4012 = vsel %vm1055, %v3896, %v3914
    %v4013 = vsel %vm1055, %v3898, %v3916
    %v4014 = vsel %vm1055, %v3900, %v3918
    %v4015 = vsel %vm1055, %v3902, %v3920
    %v4016 = vsel %vm1055, %v3904, %v3922
    %v4017 = vsel %vm1055, %v3906, %v3924
    %v4018 = vsel %vm1055, %v3908, %v3926
    %v4019 = vsel %vm1055, %v3910, %v3928
    %v4020 = vsel %vm1055, %v3912, %v3930
    %v4021 = vsel %vm1055, %v3878, %v3896
    %v4022 = vsel %vm1055, %v3880, %v3898
    %v4023 = vsel %vm1055, %v3882, %v3900
    %v4024 = vsel %vm1055, %v3884, %v3902
    %v4025 = vsel %vm1055, %v3886, %v3904
    %v4026 = vsel %vm1055, %v3888, %v3906
    %v4027 = vsel %vm1055, %v3890, %v3908
    %v4028 = vsel %vm1055, %v3892, %v3910
    %v4029 = vsel %vm1055, %v3894, %v3912
    %v4030 = vsel %vm1055, %v3860, %v3878
    %v4031 = vsel %vm1055, %v3862, %v3880
    %v4032 = vsel %vm1055, %v3864, %v3882
    %v4033 = vsel %vm1055, %v3866, %v3884
    %v4034 = vsel %vm1055, %v3868, %v3886
    %v4035 = vsel %vm1055, %v3870, %v3888
    %v4036 = vsel %vm1055, %v3872, %v3890
    %v4037 = vsel %vm1055, %v3874, %v3892
    %v4038 = vsel %vm1055, %v3876, %v3894
    %v4039 = vsel %vm1055, %v3842, %v3860
    %v4040 = vsel %vm1055, %v3844, %v3862
    %v4041 = vsel %vm1055, %v3846, %v3864
    %v4042 = vsel %vm1055, %v3848, %v3866
    %v4043 = vsel %vm1055, %v3850, %v3868
    %v4044 = vsel %vm1055, %v3852, %v3870
    %v4045 = vsel %vm1055, %v3854, %v3872
    %v4046 = vsel %vm1055, %v3856, %v3874
    %v4047 = vsel %vm1055, %v3858, %v3876
    %v4048 = vsel %vm1055, %v3968, %v3842
    %v4049 = vsel %vm1055, %v3970, %v3844
    %v4050 = vsel %vm1055, %v3972, %v3846
    %v4051 = vsel %vm1055, %v3974, %v3848
    %v4052 = vsel %vm1055, %v3976, %v3850
    %v4053 = vsel %vm1055, %v3978, %v3852
    %v4054 = vsel %vm1055, %v3980, %v3854
    %v4055 = vsel %vm1055, %v3982, %v3856
    %v4056 = vsel %vm1055, %v3984, %v3858
    %v4057 = vmul.f32 %v4039, %v371
    %v4058 = vmul.f32 %v4030, %v372
    %v4059 = vmul.f32 %v4021, %v373
    %v4060 = vmul.f32 %v4012, %v374
    %v4061 = vmul.f32 %v4003, %v375
    %v4062 = vmul.f32 %v3994, %v376
    %v4063 = vmul.f32 %v3985, %v377
    %v4064 = vmul.f32 %v4048, %v378
    %v4065 = vmul.f32 %v4040, %v371
    %v4066 = vmul.f32 %v4031, %v372
    %v4067 = vmul.f32 %v4022, %v373
    %v4068 = vmul.f32 %v4013, %v374
    %v4069 = vmul.f32 %v4004, %v375
    %v4070 = vmul.f32 %v3995, %v376
    %v4071 = vmul.f32 %v3986, %v377
    %v4072 = vmul.f32 %v4049, %v378
    %v4073 = vmul.f32 %v4041, %v371
    %v4074 = vmul.f32 %v4032, %v372
    %v4075 = vmul.f32 %v4023, %v373
    %v4076 = vmul.f32 %v4014, %v374
    %v4077 = vmul.f32 %v4005, %v375
    %v4078 = vmul.f32 %v3996, %v376
    %v4079 = vmul.f32 %v3987, %v377
    %v4080 = vmul.f32 %v4050, %v378
    %v4081 = vmul.f32 %v4042, %v371
    %v4082 = vmul.f32 %v4033, %v372
    %v4083 = vmul.f32 %v4024, %v373
    %v4084 = vmul.f32 %v4015, %v374
    %v4085 = vmul.f32 %v4006, %v375
    %v4086 = vmul.f32 %v3997, %v376
    %v4087 = vmul.f32 %v3988, %v377
    %v4088 = vmul.f32 %v4051, %v378
    %v4089 = vmul.f32 %v4043, %v371
    %v4090 = vmul.f32 %v4034, %v372
    %v4091 = vmul.f32 %v4025, %v373
    %v4092 = vmul.f32 %v4016, %v374
    %v4093 = vmul.f32 %v4007, %v375
    %v4094 = vmul.f32 %v3998, %v376
    %v4095 = vmul.f32 %v3989, %v377
    %v4096 = vmul.f32 %v4052, %v378
    %v4097 = vmul.f32 %v4044, %v371
    %v4098 = vmul.f32 %v4035, %v372
    %v4099 = vmul.f32 %v4026, %v373
    %v4100 = vmul.f32 %v4017, %v374
    %v4101 = vmul.f32 %v4008, %v375
    %v4102 = vmul.f32 %v3999, %v376
    %v4103 = vmul.f32 %v3990, %v377
    %v4104 = vmul.f32 %v4053, %v378
    %v4105 = vmul.f32 %v4045, %v371
    %v4106 = vmul.f32 %v4036, %v372
    %v4107 = vmul.f32 %v4027, %v373
    %v4108 = vmul.f32 %v4018, %v374
    %v4109 = vmul.f32 %v4009, %v375
    %v4110 = vmul.f32 %v4000, %v376
    %v4111 = vmul.f32 %v3991, %v377
    %v4112 = vmul.f32 %v4054, %v378
    %v4113 = vmul.f32 %v4046, %v371
    %v4114 = vmul.f32 %v4037, %v372
    %v4115 = vmul.f32 %v4028, %v373
    %v4116 = vmul.f32 %v4019, %v374
    %v4117 = vmul.f32 %v4010, %v375
    %v4118 = vmul.f32 %v4001, %v376
    %v4119 = vmul.f32 %v3992, %v377
    %v4120 = vmul.f32 %v4055, %v378
    %v4121 = vmul.f32 %v4047, %v371
    %v4122 = vmul.f32 %v4038, %v372
    %v4123 = vmul.f32 %v4029, %v373
    %v4124 = vmul.f32 %v4020, %v374
    %v4125 = vmul.f32 %v4011, %v375
    %v4126 = vmul.f32 %v4002, %v376
    %v4127 = vmul.f32 %v3993, %v377
    %v4128 = vmul.f32 %v4056, %v378
    %4129 = vrot.lane.b32.xlu0 %v2617, 97
    %v4130 = vpop.permute.xlu0 %4129
    %4131 = vrot.lane.b32.xlu0 %v2625, 97
    %v4132 = vpop.permute.xlu0 %4131
    %4133 = vrot.lane.b32.xlu0 %v2633, 97
    %v4134 = vpop.permute.xlu0 %4133
    %4135 = vrot.lane.b32.xlu0 %v2641, 97
    %v4136 = vpop.permute.xlu0 %4135
    %4137 = vrot.lane.b32.xlu0 %v2649, 97
    %v4138 = vpop.permute.xlu0 %4137
    %4139 = vrot.lane.b32.xlu0 %v2657, 97
    %v4140 = vpop.permute.xlu0 %4139
    %4141 = vrot.lane.b32.xlu0 %v2665, 97
    %v4142 = vpop.permute.xlu0 %4141
    %4143 = vrot.lane.b32.xlu0 %v2673, 97
    %v4144 = vpop.permute.xlu0 %4143
    %4145 = vrot.lane.b32.xlu0 %v2681, 97
    %v4146 = vpop.permute.xlu0 %4145
    %4147 = vrot.lane.b32.xlu0 %v2618, 97
    %v4148 = vpop.permute.xlu0 %4147
    %4149 = vrot.lane.b32.xlu0 %v2626, 97
    %v4150 = vpop.permute.xlu0 %4149
    %4151 = vrot.lane.b32.xlu0 %v2634, 97
    %v4152 = vpop.permute.xlu0 %4151
    %4153 = vrot.lane.b32.xlu0 %v2642, 97
    %v4154 = vpop.permute.xlu0 %4153
    %4155 = vrot.lane.b32.xlu0 %v2650, 97
    %v4156 = vpop.permute.xlu0 %4155
    %4157 = vrot.lane.b32.xlu0 %v2658, 97
    %v4158 = vpop.permute.xlu0 %4157
    %4159 = vrot.lane.b32.xlu0 %v2666, 97
    %v4160 = vpop.permute.xlu0 %4159
    %4161 = vrot.lane.b32.xlu0 %v2674, 97
    %v4162 = vpop.permute.xlu0 %4161
    %4163 = vrot.lane.b32.xlu0 %v2682, 97
    %v4164 = vpop.permute.xlu0 %4163
    %4165 = vrot.lane.b32.xlu0 %v2619, 97
    %v4166 = vpop.permute.xlu0 %4165
    %4167 = vrot.lane.b32.xlu0 %v2627, 97
    %v4168 = vpop.permute.xlu0 %4167
    %4169 = vrot.lane.b32.xlu0 %v2635, 97
    %v4170 = vpop.permute.xlu0 %4169
    %4171 = vrot.lane.b32.xlu0 %v2643, 97
    %v4172 = vpop.permute.xlu0 %4171
    %4173 = vrot.lane.b32.xlu0 %v2651, 97
    %v4174 = vpop.permute.xlu0 %4173
    %4175 = vrot.lane.b32.xlu0 %v2659, 97
    %v4176 = vpop.permute.xlu0 %4175
    %4177 = vrot.lane.b32.xlu0 %v2667, 97
    %v4178 = vpop.permute.xlu0 %4177
    %4179 = vrot.lane.b32.xlu0 %v2675, 97
    %v4180 = vpop.permute.xlu0 %4179
    %4181 = vrot.lane.b32.xlu0 %v2683, 97
    %v4182 = vpop.permute.xlu0 %4181
    %4183 = vrot.lane.b32.xlu0 %v2620, 97
    %v4184 = vpop.permute.xlu0 %4183
    %4185 = vrot.lane.b32.xlu0 %v2628, 97
    %v4186 = vpop.permute.xlu0 %4185
    %4187 = vrot.lane.b32.xlu0 %v2636, 97
    %v4188 = vpop.permute.xlu0 %4187
    %4189 = vrot.lane.b32.xlu0 %v2644, 97
    %v4190 = vpop.permute.xlu0 %4189
    %4191 = vrot.lane.b32.xlu0 %v2652, 97
    %v4192 = vpop.permute.xlu0 %4191
    %4193 = vrot.lane.b32.xlu0 %v2660, 97
    %v4194 = vpop.permute.xlu0 %4193
    %4195 = vrot.lane.b32.xlu0 %v2668, 97
    %v4196 = vpop.permute.xlu0 %4195
    %4197 = vrot.lane.b32.xlu0 %v2676, 97
    %v4198 = vpop.permute.xlu0 %4197
    %4199 = vrot.lane.b32.xlu0 %v2684, 97
    %v4200 = vpop.permute.xlu0 %4199
    %4201 = vrot.lane.b32.xlu0 %v2621, 97
    %v4202 = vpop.permute.xlu0 %4201
    %4203 = vrot.lane.b32.xlu0 %v2629, 97
    %v4204 = vpop.permute.xlu0 %4203
    %4205 = vrot.lane.b32.xlu0 %v2637, 97
    %v4206 = vpop.permute.xlu0 %4205
    %4207 = vrot.lane.b32.xlu0 %v2645, 97
    %v4208 = vpop.permute.xlu0 %4207
    %4209 = vrot.lane.b32.xlu0 %v2653, 97
    %v4210 = vpop.permute.xlu0 %4209
    %4211 = vrot.lane.b32.xlu0 %v2661, 97
    %v4212 = vpop.permute.xlu0 %4211
    %4213 = vrot.lane.b32.xlu0 %v2669, 97
    %v4214 = vpop.permute.xlu0 %4213
    %4215 = vrot.lane.b32.xlu0 %v2677, 97
    %v4216 = vpop.permute.xlu0 %4215
    %4217 = vrot.lane.b32.xlu0 %v2685, 97
    %v4218 = vpop.permute.xlu0 %4217
    %4219 = vrot.lane.b32.xlu0 %v2622, 97
    %v4220 = vpop.permute.xlu0 %4219
    %4221 = vrot.lane.b32.xlu0 %v2630, 97
    %v4222 = vpop.permute.xlu0 %4221
    %4223 = vrot.lane.b32.xlu0 %v2638, 97
    %v4224 = vpop.permute.xlu0 %4223
    %4225 = vrot.lane.b32.xlu0 %v2646, 97
    %v4226 = vpop.permute.xlu0 %4225
    %4227 = vrot.lane.b32.xlu0 %v2654, 97
    %v4228 = vpop.permute.xlu0 %4227
    %4229 = vrot.lane.b32.xlu0 %v2662, 97
    %v4230 = vpop.permute.xlu0 %4229
    %4231 = vrot.lane.b32.xlu0 %v2670, 97
    %v4232 = vpop.permute.xlu0 %4231
    %4233 = vrot.lane.b32.xlu0 %v2678, 97
    %v4234 = vpop.permute.xlu0 %4233
    %4235 = vrot.lane.b32.xlu0 %v2686, 97
    %v4236 = vpop.permute.xlu0 %4235
    %4237 = vrot.lane.b32.xlu0 %v2623, 97
    %v4238 = vpop.permute.xlu0 %4237
    %4239 = vrot.lane.b32.xlu0 %v2631, 97
    %v4240 = vpop.permute.xlu0 %4239
    %4241 = vrot.lane.b32.xlu0 %v2639, 97
    %v4242 = vpop.permute.xlu0 %4241
    %4243 = vrot.lane.b32.xlu0 %v2647, 97
    %v4244 = vpop.permute.xlu0 %4243
    %4245 = vrot.lane.b32.xlu0 %v2655, 97
    %v4246 = vpop.permute.xlu0 %4245
    %4247 = vrot.lane.b32.xlu0 %v2663, 97
    %v4248 = vpop.permute.xlu0 %4247
    %4249 = vrot.lane.b32.xlu0 %v2671, 97
    %v4250 = vpop.permute.xlu0 %4249
    %4251 = vrot.lane.b32.xlu0 %v2679, 97
    %v4252 = vpop.permute.xlu0 %4251
    %4253 = vrot.lane.b32.xlu0 %v2687, 97
    %v4254 = vpop.permute.xlu0 %4253
    %4255 = vrot.lane.b32.xlu0 %v2624, 97
    %v4256 = vpop.permute.xlu0 %4255
    %4257 = vrot.lane.b32.xlu0 %v2632, 97
    %v4258 = vpop.permute.xlu0 %4257
    %4259 = vrot.lane.b32.xlu0 %v2640, 97
    %v4260 = vpop.permute.xlu0 %4259
    %4261 = vrot.lane.b32.xlu0 %v2648, 97
    %v4262 = vpop.permute.xlu0 %4261
    %4263 = vrot.lane.b32.xlu0 %v2656, 97
    %v4264 = vpop.permute.xlu0 %4263
    %4265 = vrot.lane.b32.xlu0 %v2664, 97
    %v4266 = vpop.permute.xlu0 %4265
    %4267 = vrot.lane.b32.xlu0 %v2672, 97
    %v4268 = vpop.permute.xlu0 %4267
    %4269 = vrot.lane.b32.xlu0 %v2680, 97
    %v4270 = vpop.permute.xlu0 %4269
    %4271 = vrot.lane.b32.xlu0 %v2688, 97
    %v4272 = vpop.permute.xlu0 %4271
    %v4273 = vsel %vm1154, %v4238, %v4256
    %v4274 = vsel %vm1154, %v4240, %v4258
    %v4275 = vsel %vm1154, %v4242, %v4260
    %v4276 = vsel %vm1154, %v4244, %v4262
    %v4277 = vsel %vm1154, %v4246, %v4264
    %v4278 = vsel %vm1154, %v4248, %v4266
    %v4279 = vsel %vm1154, %v4250, %v4268
    %v4280 = vsel %vm1154, %v4252, %v4270
    %v4281 = vsel %vm1154, %v4254, %v4272
    %v4282 = vsel %vm1154, %v4220, %v4238
    %v4283 = vsel %vm1154, %v4222, %v4240
    %v4284 = vsel %vm1154, %v4224, %v4242
    %v4285 = vsel %vm1154, %v4226, %v4244
    %v4286 = vsel %vm1154, %v4228, %v4246
    %v4287 = vsel %vm1154, %v4230, %v4248
    %v4288 = vsel %vm1154, %v4232, %v4250
    %v4289 = vsel %vm1154, %v4234, %v4252
    %v4290 = vsel %vm1154, %v4236, %v4254
    %v4291 = vsel %vm1154, %v4202, %v4220
    %v4292 = vsel %vm1154, %v4204, %v4222
    %v4293 = vsel %vm1154, %v4206, %v4224
    %v4294 = vsel %vm1154, %v4208, %v4226
    %v4295 = vsel %vm1154, %v4210, %v4228
    %v4296 = vsel %vm1154, %v4212, %v4230
    %v4297 = vsel %vm1154, %v4214, %v4232
    %v4298 = vsel %vm1154, %v4216, %v4234
    %v4299 = vsel %vm1154, %v4218, %v4236
    %v4300 = vsel %vm1154, %v4184, %v4202
    %v4301 = vsel %vm1154, %v4186, %v4204
    %v4302 = vsel %vm1154, %v4188, %v4206
    %v4303 = vsel %vm1154, %v4190, %v4208
    %v4304 = vsel %vm1154, %v4192, %v4210
    %v4305 = vsel %vm1154, %v4194, %v4212
    %v4306 = vsel %vm1154, %v4196, %v4214
    %v4307 = vsel %vm1154, %v4198, %v4216
    %v4308 = vsel %vm1154, %v4200, %v4218
    %v4309 = vsel %vm1154, %v4166, %v4184
    %v4310 = vsel %vm1154, %v4168, %v4186
    %v4311 = vsel %vm1154, %v4170, %v4188
    %v4312 = vsel %vm1154, %v4172, %v4190
    %v4313 = vsel %vm1154, %v4174, %v4192
    %v4314 = vsel %vm1154, %v4176, %v4194
    %v4315 = vsel %vm1154, %v4178, %v4196
    %v4316 = vsel %vm1154, %v4180, %v4198
    %v4317 = vsel %vm1154, %v4182, %v4200
    %v4318 = vsel %vm1154, %v4148, %v4166
    %v4319 = vsel %vm1154, %v4150, %v4168
    %v4320 = vsel %vm1154, %v4152, %v4170
    %v4321 = vsel %vm1154, %v4154, %v4172
    %v4322 = vsel %vm1154, %v4156, %v4174
    %v4323 = vsel %vm1154, %v4158, %v4176
    %v4324 = vsel %vm1154, %v4160, %v4178
    %v4325 = vsel %vm1154, %v4162, %v4180
    %v4326 = vsel %vm1154, %v4164, %v4182
    %v4327 = vsel %vm1154, %v4130, %v4148
    %v4328 = vsel %vm1154, %v4132, %v4150
    %v4329 = vsel %vm1154, %v4134, %v4152
    %v4330 = vsel %vm1154, %v4136, %v4154
    %v4331 = vsel %vm1154, %v4138, %v4156
    %v4332 = vsel %vm1154, %v4140, %v4158
    %v4333 = vsel %vm1154, %v4142, %v4160
    %v4334 = vsel %vm1154, %v4144, %v4162
    %v4335 = vsel %vm1154, %v4146, %v4164
    %v4336 = vsel %vm1154, %v4256, %v4130
    %v4337 = vsel %vm1154, %v4258, %v4132
    %v4338 = vsel %vm1154, %v4260, %v4134
    %v4339 = vsel %vm1154, %v4262, %v4136
    %v4340 = vsel %vm1154, %v4264, %v4138
    %v4341 = vsel %vm1154, %v4266, %v4140
    %v4342 = vsel %vm1154, %v4268, %v4142
    %v4343 = vsel %vm1154, %v4270, %v4144
    %v4344 = vsel %vm1154, %v4272, %v4146
    %v4345 = vmul.f32 %v4327, %v443
    %v4346 = vmul.f32 %v4318, %v444
    %v4347 = vmul.f32 %v4309, %v445
    %v4348 = vmul.f32 %v4300, %v446
    %v4349 = vmul.f32 %v4291, %v447
    %v4350 = vmul.f32 %v4282, %v448
    %v4351 = vmul.f32 %v4273, %v449
    %v4352 = vmul.f32 %v4336, %v450
    %v4353 = vmul.f32 %v4328, %v443
    %v4354 = vmul.f32 %v4319, %v444
    %v4355 = vmul.f32 %v4310, %v445
    %v4356 = vmul.f32 %v4301, %v446
    %v4357 = vmul.f32 %v4292, %v447
    %v4358 = vmul.f32 %v4283, %v448
    %v4359 = vmul.f32 %v4274, %v449
    %v4360 = vmul.f32 %v4337, %v450
    %v4361 = vmul.f32 %v4329, %v443
    %v4362 = vmul.f32 %v4320, %v444
    %v4363 = vmul.f32 %v4311, %v445
    %v4364 = vmul.f32 %v4302, %v446
    %v4365 = vmul.f32 %v4293, %v447
    %v4366 = vmul.f32 %v4284, %v448
    %v4367 = vmul.f32 %v4275, %v449
    %v4368 = vmul.f32 %v4338, %v450
    %v4369 = vmul.f32 %v4330, %v443
    %v4370 = vmul.f32 %v4321, %v444
    %v4371 = vmul.f32 %v4312, %v445
    %v4372 = vmul.f32 %v4303, %v446
    %v4373 = vmul.f32 %v4294, %v447
    %v4374 = vmul.f32 %v4285, %v448
    %v4375 = vmul.f32 %v4276, %v449
    %v4376 = vmul.f32 %v4339, %v450
    %v4377 = vmul.f32 %v4331, %v443
    %v4378 = vmul.f32 %v4322, %v444
    %v4379 = vmul.f32 %v4313, %v445
    %v4380 = vmul.f32 %v4304, %v446
    %v4381 = vmul.f32 %v4295, %v447
    %v4382 = vmul.f32 %v4286, %v448
    %v4383 = vmul.f32 %v4277, %v449
    %v4384 = vmul.f32 %v4340, %v450
    %v4385 = vmul.f32 %v4332, %v443
    %v4386 = vmul.f32 %v4323, %v444
    %v4387 = vmul.f32 %v4314, %v445
    %v4388 = vmul.f32 %v4305, %v446
    %v4389 = vmul.f32 %v4296, %v447
    %v4390 = vmul.f32 %v4287, %v448
    %v4391 = vmul.f32 %v4278, %v449
    %v4392 = vmul.f32 %v4341, %v450
    %v4393 = vmul.f32 %v4333, %v443
    %v4394 = vmul.f32 %v4324, %v444
    %v4395 = vmul.f32 %v4315, %v445
    %v4396 = vmul.f32 %v4306, %v446
    %v4397 = vmul.f32 %v4297, %v447
    %v4398 = vmul.f32 %v4288, %v448
    %v4399 = vmul.f32 %v4279, %v449
    %v4400 = vmul.f32 %v4342, %v450
    %v4401 = vmul.f32 %v4334, %v443
    %v4402 = vmul.f32 %v4325, %v444
    %v4403 = vmul.f32 %v4316, %v445
    %v4404 = vmul.f32 %v4307, %v446
    %v4405 = vmul.f32 %v4298, %v447
    %v4406 = vmul.f32 %v4289, %v448
    %v4407 = vmul.f32 %v4280, %v449
    %v4408 = vmul.f32 %v4343, %v450
    %v4409 = vmul.f32 %v4335, %v443
    %v4410 = vmul.f32 %v4326, %v444
    %v4411 = vmul.f32 %v4317, %v445
    %v4412 = vmul.f32 %v4308, %v446
    %v4413 = vmul.f32 %v4299, %v447
    %v4414 = vmul.f32 %v4290, %v448
    %v4415 = vmul.f32 %v4281, %v449
    %v4416 = vmul.f32 %v4344, %v450
    %4417 = vrot.lane.b32.xlu0 %v2617, 96
    %v4418 = vpop.permute.xlu0 %4417
    %4419 = vrot.lane.b32.xlu0 %v2625, 96
    %v4420 = vpop.permute.xlu0 %4419
    %4421 = vrot.lane.b32.xlu0 %v2633, 96
    %v4422 = vpop.permute.xlu0 %4421
    %4423 = vrot.lane.b32.xlu0 %v2641, 96
    %v4424 = vpop.permute.xlu0 %4423
    %4425 = vrot.lane.b32.xlu0 %v2649, 96
    %v4426 = vpop.permute.xlu0 %4425
    %4427 = vrot.lane.b32.xlu0 %v2657, 96
    %v4428 = vpop.permute.xlu0 %4427
    %4429 = vrot.lane.b32.xlu0 %v2665, 96
    %v4430 = vpop.permute.xlu0 %4429
    %4431 = vrot.lane.b32.xlu0 %v2673, 96
    %v4432 = vpop.permute.xlu0 %4431
    %4433 = vrot.lane.b32.xlu0 %v2681, 96
    %v4434 = vpop.permute.xlu0 %4433
    %4435 = vrot.lane.b32.xlu0 %v2618, 96
    %v4436 = vpop.permute.xlu0 %4435
    %4437 = vrot.lane.b32.xlu0 %v2626, 96
    %v4438 = vpop.permute.xlu0 %4437
    %4439 = vrot.lane.b32.xlu0 %v2634, 96
    %v4440 = vpop.permute.xlu0 %4439
    %4441 = vrot.lane.b32.xlu0 %v2642, 96
    %v4442 = vpop.permute.xlu0 %4441
    %4443 = vrot.lane.b32.xlu0 %v2650, 96
    %v4444 = vpop.permute.xlu0 %4443
    %4445 = vrot.lane.b32.xlu0 %v2658, 96
    %v4446 = vpop.permute.xlu0 %4445
    %4447 = vrot.lane.b32.xlu0 %v2666, 96
    %v4448 = vpop.permute.xlu0 %4447
    %4449 = vrot.lane.b32.xlu0 %v2674, 96
    %v4450 = vpop.permute.xlu0 %4449
    %4451 = vrot.lane.b32.xlu0 %v2682, 96
    %v4452 = vpop.permute.xlu0 %4451
    %4453 = vrot.lane.b32.xlu0 %v2619, 96
    %v4454 = vpop.permute.xlu0 %4453
    %4455 = vrot.lane.b32.xlu0 %v2627, 96
    %v4456 = vpop.permute.xlu0 %4455
    %4457 = vrot.lane.b32.xlu0 %v2635, 96
    %v4458 = vpop.permute.xlu0 %4457
    %4459 = vrot.lane.b32.xlu0 %v2643, 96
    %v4460 = vpop.permute.xlu0 %4459
    %4461 = vrot.lane.b32.xlu0 %v2651, 96
    %v4462 = vpop.permute.xlu0 %4461
    %4463 = vrot.lane.b32.xlu0 %v2659, 96
    %v4464 = vpop.permute.xlu0 %4463
    %4465 = vrot.lane.b32.xlu0 %v2667, 96
    %v4466 = vpop.permute.xlu0 %4465
    %4467 = vrot.lane.b32.xlu0 %v2675, 96
    %v4468 = vpop.permute.xlu0 %4467
    %4469 = vrot.lane.b32.xlu0 %v2683, 96
    %v4470 = vpop.permute.xlu0 %4469
    %4471 = vrot.lane.b32.xlu0 %v2620, 96
    %v4472 = vpop.permute.xlu0 %4471
    %4473 = vrot.lane.b32.xlu0 %v2628, 96
    %v4474 = vpop.permute.xlu0 %4473
    %4475 = vrot.lane.b32.xlu0 %v2636, 96
    %v4476 = vpop.permute.xlu0 %4475
    %4477 = vrot.lane.b32.xlu0 %v2644, 96
    %v4478 = vpop.permute.xlu0 %4477
    %4479 = vrot.lane.b32.xlu0 %v2652, 96
    %v4480 = vpop.permute.xlu0 %4479
    %4481 = vrot.lane.b32.xlu0 %v2660, 96
    %v4482 = vpop.permute.xlu0 %4481
    %4483 = vrot.lane.b32.xlu0 %v2668, 96
    %v4484 = vpop.permute.xlu0 %4483
    %4485 = vrot.lane.b32.xlu0 %v2676, 96
    %v4486 = vpop.permute.xlu0 %4485
    %4487 = vrot.lane.b32.xlu0 %v2684, 96
    %v4488 = vpop.permute.xlu0 %4487
    %4489 = vrot.lane.b32.xlu0 %v2621, 96
    %v4490 = vpop.permute.xlu0 %4489
    %4491 = vrot.lane.b32.xlu0 %v2629, 96
    %v4492 = vpop.permute.xlu0 %4491
    %4493 = vrot.lane.b32.xlu0 %v2637, 96
    %v4494 = vpop.permute.xlu0 %4493
    %4495 = vrot.lane.b32.xlu0 %v2645, 96
    %v4496 = vpop.permute.xlu0 %4495
    %4497 = vrot.lane.b32.xlu0 %v2653, 96
    %v4498 = vpop.permute.xlu0 %4497
    %4499 = vrot.lane.b32.xlu0 %v2661, 96
    %v4500 = vpop.permute.xlu0 %4499
    %4501 = vrot.lane.b32.xlu0 %v2669, 96
    %v4502 = vpop.permute.xlu0 %4501
    %4503 = vrot.lane.b32.xlu0 %v2677, 96
    %v4504 = vpop.permute.xlu0 %4503
    %4505 = vrot.lane.b32.xlu0 %v2685, 96
    %v4506 = vpop.permute.xlu0 %4505
    %4507 = vrot.lane.b32.xlu0 %v2622, 96
    %v4508 = vpop.permute.xlu0 %4507
    %4509 = vrot.lane.b32.xlu0 %v2630, 96
    %v4510 = vpop.permute.xlu0 %4509
    %4511 = vrot.lane.b32.xlu0 %v2638, 96
    %v4512 = vpop.permute.xlu0 %4511
    %4513 = vrot.lane.b32.xlu0 %v2646, 96
    %v4514 = vpop.permute.xlu0 %4513
    %4515 = vrot.lane.b32.xlu0 %v2654, 96
    %v4516 = vpop.permute.xlu0 %4515
    %4517 = vrot.lane.b32.xlu0 %v2662, 96
    %v4518 = vpop.permute.xlu0 %4517
    %4519 = vrot.lane.b32.xlu0 %v2670, 96
    %v4520 = vpop.permute.xlu0 %4519
    %4521 = vrot.lane.b32.xlu0 %v2678, 96
    %v4522 = vpop.permute.xlu0 %4521
    %4523 = vrot.lane.b32.xlu0 %v2686, 96
    %v4524 = vpop.permute.xlu0 %4523
    %4525 = vrot.lane.b32.xlu0 %v2623, 96
    %v4526 = vpop.permute.xlu0 %4525
    %4527 = vrot.lane.b32.xlu0 %v2631, 96
    %v4528 = vpop.permute.xlu0 %4527
    %4529 = vrot.lane.b32.xlu0 %v2639, 96
    %v4530 = vpop.permute.xlu0 %4529
    %4531 = vrot.lane.b32.xlu0 %v2647, 96
    %v4532 = vpop.permute.xlu0 %4531
    %4533 = vrot.lane.b32.xlu0 %v2655, 96
    %v4534 = vpop.permute.xlu0 %4533
    %4535 = vrot.lane.b32.xlu0 %v2663, 96
    %v4536 = vpop.permute.xlu0 %4535
    %4537 = vrot.lane.b32.xlu0 %v2671, 96
    %v4538 = vpop.permute.xlu0 %4537
    %4539 = vrot.lane.b32.xlu0 %v2679, 96
    %v4540 = vpop.permute.xlu0 %4539
    %4541 = vrot.lane.b32.xlu0 %v2687, 96
    %v4542 = vpop.permute.xlu0 %4541
    %4543 = vrot.lane.b32.xlu0 %v2624, 96
    %v4544 = vpop.permute.xlu0 %4543
    %4545 = vrot.lane.b32.xlu0 %v2632, 96
    %v4546 = vpop.permute.xlu0 %4545
    %4547 = vrot.lane.b32.xlu0 %v2640, 96
    %v4548 = vpop.permute.xlu0 %4547
    %4549 = vrot.lane.b32.xlu0 %v2648, 96
    %v4550 = vpop.permute.xlu0 %4549
    %4551 = vrot.lane.b32.xlu0 %v2656, 96
    %v4552 = vpop.permute.xlu0 %4551
    %4553 = vrot.lane.b32.xlu0 %v2664, 96
    %v4554 = vpop.permute.xlu0 %4553
    %4555 = vrot.lane.b32.xlu0 %v2672, 96
    %v4556 = vpop.permute.xlu0 %4555
    %4557 = vrot.lane.b32.xlu0 %v2680, 96
    %v4558 = vpop.permute.xlu0 %4557
    %4559 = vrot.lane.b32.xlu0 %v2688, 96
    %v4560 = vpop.permute.xlu0 %4559
    %v4561 = vsel %vm1187, %v4526, %v4544
    %v4562 = vsel %vm1187, %v4528, %v4546
    %v4563 = vsel %vm1187, %v4530, %v4548
    %v4564 = vsel %vm1187, %v4532, %v4550
    %v4565 = vsel %vm1187, %v4534, %v4552
    %v4566 = vsel %vm1187, %v4536, %v4554
    %v4567 = vsel %vm1187, %v4538, %v4556
    %v4568 = vsel %vm1187, %v4540, %v4558
    %v4569 = vsel %vm1187, %v4542, %v4560
    %v4570 = vsel %vm1187, %v4508, %v4526
    %v4571 = vsel %vm1187, %v4510, %v4528
    %v4572 = vsel %vm1187, %v4512, %v4530
    %v4573 = vsel %vm1187, %v4514, %v4532
    %v4574 = vsel %vm1187, %v4516, %v4534
    %v4575 = vsel %vm1187, %v4518, %v4536
    %v4576 = vsel %vm1187, %v4520, %v4538
    %v4577 = vsel %vm1187, %v4522, %v4540
    %v4578 = vsel %vm1187, %v4524, %v4542
    %v4579 = vsel %vm1187, %v4490, %v4508
    %v4580 = vsel %vm1187, %v4492, %v4510
    %v4581 = vsel %vm1187, %v4494, %v4512
    %v4582 = vsel %vm1187, %v4496, %v4514
    %v4583 = vsel %vm1187, %v4498, %v4516
    %v4584 = vsel %vm1187, %v4500, %v4518
    %v4585 = vsel %vm1187, %v4502, %v4520
    %v4586 = vsel %vm1187, %v4504, %v4522
    %v4587 = vsel %vm1187, %v4506, %v4524
    %v4588 = vsel %vm1187, %v4472, %v4490
    %v4589 = vsel %vm1187, %v4474, %v4492
    %v4590 = vsel %vm1187, %v4476, %v4494
    %v4591 = vsel %vm1187, %v4478, %v4496
    %v4592 = vsel %vm1187, %v4480, %v4498
    %v4593 = vsel %vm1187, %v4482, %v4500
    %v4594 = vsel %vm1187, %v4484, %v4502
    %v4595 = vsel %vm1187, %v4486, %v4504
    %v4596 = vsel %vm1187, %v4488, %v4506
    %v4597 = vsel %vm1187, %v4454, %v4472
    %v4598 = vsel %vm1187, %v4456, %v4474
    %v4599 = vsel %vm1187, %v4458, %v4476
    %v4600 = vsel %vm1187, %v4460, %v4478
    %v4601 = vsel %vm1187, %v4462, %v4480
    %v4602 = vsel %vm1187, %v4464, %v4482
    %v4603 = vsel %vm1187, %v4466, %v4484
    %v4604 = vsel %vm1187, %v4468, %v4486
    %v4605 = vsel %vm1187, %v4470, %v4488
    %v4606 = vsel %vm1187, %v4436, %v4454
    %v4607 = vsel %vm1187, %v4438, %v4456
    %v4608 = vsel %vm1187, %v4440, %v4458
    %v4609 = vsel %vm1187, %v4442, %v4460
    %v4610 = vsel %vm1187, %v4444, %v4462
    %v4611 = vsel %vm1187, %v4446, %v4464
    %v4612 = vsel %vm1187, %v4448, %v4466
    %v4613 = vsel %vm1187, %v4450, %v4468
    %v4614 = vsel %vm1187, %v4452, %v4470
    %v4615 = vsel %vm1187, %v4418, %v4436
    %v4616 = vsel %vm1187, %v4420, %v4438
    %v4617 = vsel %vm1187, %v4422, %v4440
    %v4618 = vsel %vm1187, %v4424, %v4442
    %v4619 = vsel %vm1187, %v4426, %v4444
    %v4620 = vsel %vm1187, %v4428, %v4446
    %v4621 = vsel %vm1187, %v4430, %v4448
    %v4622 = vsel %vm1187, %v4432, %v4450
    %v4623 = vsel %vm1187, %v4434, %v4452
    %v4624 = vsel %vm1187, %v4544, %v4418
    %v4625 = vsel %vm1187, %v4546, %v4420
    %v4626 = vsel %vm1187, %v4548, %v4422
    %v4627 = vsel %vm1187, %v4550, %v4424
    %v4628 = vsel %vm1187, %v4552, %v4426
    %v4629 = vsel %vm1187, %v4554, %v4428
    %v4630 = vsel %vm1187, %v4556, %v4430
    %v4631 = vsel %vm1187, %v4558, %v4432
    %v4632 = vsel %vm1187, %v4560, %v4434
    %v4633 = vmul.f32 %v4615, %v459
    %v4634 = vmul.f32 %v4606, %v460
    %v4635 = vmul.f32 %v4597, %v461
    %v4636 = vmul.f32 %v4588, %v462
    %v4637 = vmul.f32 %v4579, %v463
    %v4638 = vmul.f32 %v4570, %v464
    %v4639 = vmul.f32 %v4561, %v465
    %v4640 = vmul.f32 %v4624, %v466
    %v4641 = vmul.f32 %v4616, %v459
    %v4642 = vmul.f32 %v4607, %v460
    %v4643 = vmul.f32 %v4598, %v461
    %v4644 = vmul.f32 %v4589, %v462
    %v4645 = vmul.f32 %v4580, %v463
    %v4646 = vmul.f32 %v4571, %v464
    %v4647 = vmul.f32 %v4562, %v465
    %v4648 = vmul.f32 %v4625, %v466
    %v4649 = vmul.f32 %v4617, %v459
    %v4650 = vmul.f32 %v4608, %v460
    %v4651 = vmul.f32 %v4599, %v461
    %v4652 = vmul.f32 %v4590, %v462
    %v4653 = vmul.f32 %v4581, %v463
    %v4654 = vmul.f32 %v4572, %v464
    %v4655 = vmul.f32 %v4563, %v465
    %v4656 = vmul.f32 %v4626, %v466
    %v4657 = vmul.f32 %v4618, %v459
    %v4658 = vmul.f32 %v4609, %v460
    %v4659 = vmul.f32 %v4600, %v461
    %v4660 = vmul.f32 %v4591, %v462
    %v4661 = vmul.f32 %v4582, %v463
    %v4662 = vmul.f32 %v4573, %v464
    %v4663 = vmul.f32 %v4564, %v465
    %v4664 = vmul.f32 %v4627, %v466
    %v4665 = vmul.f32 %v4619, %v459
    %v4666 = vmul.f32 %v4610, %v460
    %v4667 = vmul.f32 %v4601, %v461
    %v4668 = vmul.f32 %v4592, %v462
    %v4669 = vmul.f32 %v4583, %v463
    %v4670 = vmul.f32 %v4574, %v464
    %v4671 = vmul.f32 %v4565, %v465
    %v4672 = vmul.f32 %v4628, %v466
    %v4673 = vmul.f32 %v4620, %v459
    %v4674 = vmul.f32 %v4611, %v460
    %v4675 = vmul.f32 %v4602, %v461
    %v4676 = vmul.f32 %v4593, %v462
    %v4677 = vmul.f32 %v4584, %v463
    %v4678 = vmul.f32 %v4575, %v464
    %v4679 = vmul.f32 %v4566, %v465
    %v4680 = vmul.f32 %v4629, %v466
    %v4681 = vmul.f32 %v4621, %v459
    %v4682 = vmul.f32 %v4612, %v460
    %v4683 = vmul.f32 %v4603, %v461
    %v4684 = vmul.f32 %v4594, %v462
    %v4685 = vmul.f32 %v4585, %v463
    %v4686 = vmul.f32 %v4576, %v464
    %v4687 = vmul.f32 %v4567, %v465
    %v4688 = vmul.f32 %v4630, %v466
    %v4689 = vmul.f32 %v4622, %v459
    %v4690 = vmul.f32 %v4613, %v460
    %v4691 = vmul.f32 %v4604, %v461
    %v4692 = vmul.f32 %v4595, %v462
    %v4693 = vmul.f32 %v4586, %v463
    %v4694 = vmul.f32 %v4577, %v464
    %v4695 = vmul.f32 %v4568, %v465
    %v4696 = vmul.f32 %v4631, %v466
    %v4697 = vmul.f32 %v4623, %v459
    %v4698 = vmul.f32 %v4614, %v460
    %v4699 = vmul.f32 %v4605, %v461
    %v4700 = vmul.f32 %v4596, %v462
    %v4701 = vmul.f32 %v4587, %v463
    %v4702 = vmul.f32 %v4578, %v464
    %v4703 = vmul.f32 %v4569, %v465
    %v4704 = vmul.f32 %v4632, %v466
    %4705 = vrot.lane.b32.xlu0 %v2617, 95
    %v4706 = vpop.permute.xlu0 %4705
    %4707 = vrot.lane.b32.xlu0 %v2625, 95
    %v4708 = vpop.permute.xlu0 %4707
    %4709 = vrot.lane.b32.xlu0 %v2633, 95
    %v4710 = vpop.permute.xlu0 %4709
    %4711 = vrot.lane.b32.xlu0 %v2641, 95
    %v4712 = vpop.permute.xlu0 %4711
    %4713 = vrot.lane.b32.xlu0 %v2649, 95
    %v4714 = vpop.permute.xlu0 %4713
    %4715 = vrot.lane.b32.xlu0 %v2657, 95
    %v4716 = vpop.permute.xlu0 %4715
    %4717 = vrot.lane.b32.xlu0 %v2665, 95
    %v4718 = vpop.permute.xlu0 %4717
    %4719 = vrot.lane.b32.xlu0 %v2673, 95
    %v4720 = vpop.permute.xlu0 %4719
    %4721 = vrot.lane.b32.xlu0 %v2681, 95
    %v4722 = vpop.permute.xlu0 %4721
    %4723 = vrot.lane.b32.xlu0 %v2618, 95
    %v4724 = vpop.permute.xlu0 %4723
    %4725 = vrot.lane.b32.xlu0 %v2626, 95
    %v4726 = vpop.permute.xlu0 %4725
    %4727 = vrot.lane.b32.xlu0 %v2634, 95
    %v4728 = vpop.permute.xlu0 %4727
    %4729 = vrot.lane.b32.xlu0 %v2642, 95
    %v4730 = vpop.permute.xlu0 %4729
    %4731 = vrot.lane.b32.xlu0 %v2650, 95
    %v4732 = vpop.permute.xlu0 %4731
    %4733 = vrot.lane.b32.xlu0 %v2658, 95
    %v4734 = vpop.permute.xlu0 %4733
    %4735 = vrot.lane.b32.xlu0 %v2666, 95
    %v4736 = vpop.permute.xlu0 %4735
    %4737 = vrot.lane.b32.xlu0 %v2674, 95
    %v4738 = vpop.permute.xlu0 %4737
    %4739 = vrot.lane.b32.xlu0 %v2682, 95
    %v4740 = vpop.permute.xlu0 %4739
    %4741 = vrot.lane.b32.xlu0 %v2619, 95
    %v4742 = vpop.permute.xlu0 %4741
    %4743 = vrot.lane.b32.xlu0 %v2627, 95
    %v4744 = vpop.permute.xlu0 %4743
    %4745 = vrot.lane.b32.xlu0 %v2635, 95
    %v4746 = vpop.permute.xlu0 %4745
    %4747 = vrot.lane.b32.xlu0 %v2643, 95
    %v4748 = vpop.permute.xlu0 %4747
    %4749 = vrot.lane.b32.xlu0 %v2651, 95
    %v4750 = vpop.permute.xlu0 %4749
    %4751 = vrot.lane.b32.xlu0 %v2659, 95
    %v4752 = vpop.permute.xlu0 %4751
    %4753 = vrot.lane.b32.xlu0 %v2667, 95
    %v4754 = vpop.permute.xlu0 %4753
    %4755 = vrot.lane.b32.xlu0 %v2675, 95
    %v4756 = vpop.permute.xlu0 %4755
    %4757 = vrot.lane.b32.xlu0 %v2683, 95
    %v4758 = vpop.permute.xlu0 %4757
    %4759 = vrot.lane.b32.xlu0 %v2620, 95
    %v4760 = vpop.permute.xlu0 %4759
    %4761 = vrot.lane.b32.xlu0 %v2628, 95
    %v4762 = vpop.permute.xlu0 %4761
    %4763 = vrot.lane.b32.xlu0 %v2636, 95
    %v4764 = vpop.permute.xlu0 %4763
    %4765 = vrot.lane.b32.xlu0 %v2644, 95
    %v4766 = vpop.permute.xlu0 %4765
    %4767 = vrot.lane.b32.xlu0 %v2652, 95
    %v4768 = vpop.permute.xlu0 %4767
    %4769 = vrot.lane.b32.xlu0 %v2660, 95
    %v4770 = vpop.permute.xlu0 %4769
    %4771 = vrot.lane.b32.xlu0 %v2668, 95
    %v4772 = vpop.permute.xlu0 %4771
    %4773 = vrot.lane.b32.xlu0 %v2676, 95
    %v4774 = vpop.permute.xlu0 %4773
    %4775 = vrot.lane.b32.xlu0 %v2684, 95
    %v4776 = vpop.permute.xlu0 %4775
    %4777 = vrot.lane.b32.xlu0 %v2621, 95
    %v4778 = vpop.permute.xlu0 %4777
    %4779 = vrot.lane.b32.xlu0 %v2629, 95
    %v4780 = vpop.permute.xlu0 %4779
    %4781 = vrot.lane.b32.xlu0 %v2637, 95
    %v4782 = vpop.permute.xlu0 %4781
    %4783 = vrot.lane.b32.xlu0 %v2645, 95
    %v4784 = vpop.permute.xlu0 %4783
    %4785 = vrot.lane.b32.xlu0 %v2653, 95
    %v4786 = vpop.permute.xlu0 %4785
    %4787 = vrot.lane.b32.xlu0 %v2661, 95
    %v4788 = vpop.permute.xlu0 %4787
    %4789 = vrot.lane.b32.xlu0 %v2669, 95
    %v4790 = vpop.permute.xlu0 %4789
    %4791 = vrot.lane.b32.xlu0 %v2677, 95
    %v4792 = vpop.permute.xlu0 %4791
    %4793 = vrot.lane.b32.xlu0 %v2685, 95
    %v4794 = vpop.permute.xlu0 %4793
    %4795 = vrot.lane.b32.xlu0 %v2622, 95
    %v4796 = vpop.permute.xlu0 %4795
    %4797 = vrot.lane.b32.xlu0 %v2630, 95
    %v4798 = vpop.permute.xlu0 %4797
    %4799 = vrot.lane.b32.xlu0 %v2638, 95
    %v4800 = vpop.permute.xlu0 %4799
    %4801 = vrot.lane.b32.xlu0 %v2646, 95
    %v4802 = vpop.permute.xlu0 %4801
    %4803 = vrot.lane.b32.xlu0 %v2654, 95
    %v4804 = vpop.permute.xlu0 %4803
    %4805 = vrot.lane.b32.xlu0 %v2662, 95
    %v4806 = vpop.permute.xlu0 %4805
    %4807 = vrot.lane.b32.xlu0 %v2670, 95
    %v4808 = vpop.permute.xlu0 %4807
    %4809 = vrot.lane.b32.xlu0 %v2678, 95
    %v4810 = vpop.permute.xlu0 %4809
    %4811 = vrot.lane.b32.xlu0 %v2686, 95
    %v4812 = vpop.permute.xlu0 %4811
    %4813 = vrot.lane.b32.xlu0 %v2623, 95
    %v4814 = vpop.permute.xlu0 %4813
    %4815 = vrot.lane.b32.xlu0 %v2631, 95
    %v4816 = vpop.permute.xlu0 %4815
    %4817 = vrot.lane.b32.xlu0 %v2639, 95
    %v4818 = vpop.permute.xlu0 %4817
    %4819 = vrot.lane.b32.xlu0 %v2647, 95
    %v4820 = vpop.permute.xlu0 %4819
    %4821 = vrot.lane.b32.xlu0 %v2655, 95
    %v4822 = vpop.permute.xlu0 %4821
    %4823 = vrot.lane.b32.xlu0 %v2663, 95
    %v4824 = vpop.permute.xlu0 %4823
    %4825 = vrot.lane.b32.xlu0 %v2671, 95
    %v4826 = vpop.permute.xlu0 %4825
    %4827 = vrot.lane.b32.xlu0 %v2679, 95
    %v4828 = vpop.permute.xlu0 %4827
    %4829 = vrot.lane.b32.xlu0 %v2687, 95
    %v4830 = vpop.permute.xlu0 %4829
    %4831 = vrot.lane.b32.xlu0 %v2624, 95
    %v4832 = vpop.permute.xlu0 %4831
    %4833 = vrot.lane.b32.xlu0 %v2632, 95
    %v4834 = vpop.permute.xlu0 %4833
    %4835 = vrot.lane.b32.xlu0 %v2640, 95
    %v4836 = vpop.permute.xlu0 %4835
    %4837 = vrot.lane.b32.xlu0 %v2648, 95
    %v4838 = vpop.permute.xlu0 %4837
    %4839 = vrot.lane.b32.xlu0 %v2656, 95
    %v4840 = vpop.permute.xlu0 %4839
    %4841 = vrot.lane.b32.xlu0 %v2664, 95
    %v4842 = vpop.permute.xlu0 %4841
    %4843 = vrot.lane.b32.xlu0 %v2672, 95
    %v4844 = vpop.permute.xlu0 %4843
    %4845 = vrot.lane.b32.xlu0 %v2680, 95
    %v4846 = vpop.permute.xlu0 %4845
    %4847 = vrot.lane.b32.xlu0 %v2688, 95
    %v4848 = vpop.permute.xlu0 %4847
    %v4849 = vsel %vm1220, %v4814, %v4832
    %v4850 = vsel %vm1220, %v4816, %v4834
    %v4851 = vsel %vm1220, %v4818, %v4836
    %v4852 = vsel %vm1220, %v4820, %v4838
    %v4853 = vsel %vm1220, %v4822, %v4840
    %v4854 = vsel %vm1220, %v4824, %v4842
    %v4855 = vsel %vm1220, %v4826, %v4844
    %v4856 = vsel %vm1220, %v4828, %v4846
    %v4857 = vsel %vm1220, %v4830, %v4848
    %v4858 = vsel %vm1220, %v4796, %v4814
    %v4859 = vsel %vm1220, %v4798, %v4816
    %v4860 = vsel %vm1220, %v4800, %v4818
    %v4861 = vsel %vm1220, %v4802, %v4820
    %v4862 = vsel %vm1220, %v4804, %v4822
    %v4863 = vsel %vm1220, %v4806, %v4824
    %v4864 = vsel %vm1220, %v4808, %v4826
    %v4865 = vsel %vm1220, %v4810, %v4828
    %v4866 = vsel %vm1220, %v4812, %v4830
    %v4867 = vsel %vm1220, %v4778, %v4796
    %v4868 = vsel %vm1220, %v4780, %v4798
    %v4869 = vsel %vm1220, %v4782, %v4800
    %v4870 = vsel %vm1220, %v4784, %v4802
    %v4871 = vsel %vm1220, %v4786, %v4804
    %v4872 = vsel %vm1220, %v4788, %v4806
    %v4873 = vsel %vm1220, %v4790, %v4808
    %v4874 = vsel %vm1220, %v4792, %v4810
    %v4875 = vsel %vm1220, %v4794, %v4812
    %v4876 = vsel %vm1220, %v4760, %v4778
    %v4877 = vsel %vm1220, %v4762, %v4780
    %v4878 = vsel %vm1220, %v4764, %v4782
    %v4879 = vsel %vm1220, %v4766, %v4784
    %v4880 = vsel %vm1220, %v4768, %v4786
    %v4881 = vsel %vm1220, %v4770, %v4788
    %v4882 = vsel %vm1220, %v4772, %v4790
    %v4883 = vsel %vm1220, %v4774, %v4792
    %v4884 = vsel %vm1220, %v4776, %v4794
    %v4885 = vsel %vm1220, %v4742, %v4760
    %v4886 = vsel %vm1220, %v4744, %v4762
    %v4887 = vsel %vm1220, %v4746, %v4764
    %v4888 = vsel %vm1220, %v4748, %v4766
    %v4889 = vsel %vm1220, %v4750, %v4768
    %v4890 = vsel %vm1220, %v4752, %v4770
    %v4891 = vsel %vm1220, %v4754, %v4772
    %v4892 = vsel %vm1220, %v4756, %v4774
    %v4893 = vsel %vm1220, %v4758, %v4776
    %v4894 = vsel %vm1220, %v4724, %v4742
    %v4895 = vsel %vm1220, %v4726, %v4744
    %v4896 = vsel %vm1220, %v4728, %v4746
    %v4897 = vsel %vm1220, %v4730, %v4748
    %v4898 = vsel %vm1220, %v4732, %v4750
    %v4899 = vsel %vm1220, %v4734, %v4752
    %v4900 = vsel %vm1220, %v4736, %v4754
    %v4901 = vsel %vm1220, %v4738, %v4756
    %v4902 = vsel %vm1220, %v4740, %v4758
    %v4903 = vsel %vm1220, %v4706, %v4724
    %v4904 = vsel %vm1220, %v4708, %v4726
    %v4905 = vsel %vm1220, %v4710, %v4728
    %v4906 = vsel %vm1220, %v4712, %v4730
    %v4907 = vsel %vm1220, %v4714, %v4732
    %v4908 = vsel %vm1220, %v4716, %v4734
    %v4909 = vsel %vm1220, %v4718, %v4736
    %v4910 = vsel %vm1220, %v4720, %v4738
    %v4911 = vsel %vm1220, %v4722, %v4740
    %v4912 = vsel %vm1220, %v4832, %v4706
    %v4913 = vsel %vm1220, %v4834, %v4708
    %v4914 = vsel %vm1220, %v4836, %v4710
    %v4915 = vsel %vm1220, %v4838, %v4712
    %v4916 = vsel %vm1220, %v4840, %v4714
    %v4917 = vsel %vm1220, %v4842, %v4716
    %v4918 = vsel %vm1220, %v4844, %v4718
    %v4919 = vsel %vm1220, %v4846, %v4720
    %v4920 = vsel %vm1220, %v4848, %v4722
    %v4921 = vmul.f32 %v4903, %v483
    %v4922 = vmul.f32 %v4894, %v484
    %v4923 = vmul.f32 %v4885, %v485
    %v4924 = vmul.f32 %v4876, %v486
    %v4925 = vmul.f32 %v4867, %v487
    %v4926 = vmul.f32 %v4858, %v488
    %v4927 = vmul.f32 %v4849, %v489
    %v4928 = vmul.f32 %v4912, %v490
    %v4929 = vmul.f32 %v4904, %v483
    %v4930 = vmul.f32 %v4895, %v484
    %v4931 = vmul.f32 %v4886, %v485
    %v4932 = vmul.f32 %v4877, %v486
    %v4933 = vmul.f32 %v4868, %v487
    %v4934 = vmul.f32 %v4859, %v488
    %v4935 = vmul.f32 %v4850, %v489
    %v4936 = vmul.f32 %v4913, %v490
    %v4937 = vmul.f32 %v4905, %v483
    %v4938 = vmul.f32 %v4896, %v484
    %v4939 = vmul.f32 %v4887, %v485
    %v4940 = vmul.f32 %v4878, %v486
    %v4941 = vmul.f32 %v4869, %v487
    %v4942 = vmul.f32 %v4860, %v488
    %v4943 = vmul.f32 %v4851, %v489
    %v4944 = vmul.f32 %v4914, %v490
    %v4945 = vmul.f32 %v4906, %v483
    %v4946 = vmul.f32 %v4897, %v484
    %v4947 = vmul.f32 %v4888, %v485
    %v4948 = vmul.f32 %v4879, %v486
    %v4949 = vmul.f32 %v4870, %v487
    %v4950 = vmul.f32 %v4861, %v488
    %v4951 = vmul.f32 %v4852, %v489
    %v4952 = vmul.f32 %v4915, %v490
    %v4953 = vmul.f32 %v4907, %v483
    %v4954 = vmul.f32 %v4898, %v484
    %v4955 = vmul.f32 %v4889, %v485
    %v4956 = vmul.f32 %v4880, %v486
    %v4957 = vmul.f32 %v4871, %v487
    %v4958 = vmul.f32 %v4862, %v488
    %v4959 = vmul.f32 %v4853, %v489
    %v4960 = vmul.f32 %v4916, %v490
    %v4961 = vmul.f32 %v4908, %v483
    %v4962 = vmul.f32 %v4899, %v484
    %v4963 = vmul.f32 %v4890, %v485
    %v4964 = vmul.f32 %v4881, %v486
    %v4965 = vmul.f32 %v4872, %v487
    %v4966 = vmul.f32 %v4863, %v488
    %v4967 = vmul.f32 %v4854, %v489
    %v4968 = vmul.f32 %v4917, %v490
    %v4969 = vmul.f32 %v4909, %v483
    %v4970 = vmul.f32 %v4900, %v484
    %v4971 = vmul.f32 %v4891, %v485
    %v4972 = vmul.f32 %v4882, %v486
    %v4973 = vmul.f32 %v4873, %v487
    %v4974 = vmul.f32 %v4864, %v488
    %v4975 = vmul.f32 %v4855, %v489
    %v4976 = vmul.f32 %v4918, %v490
    %v4977 = vmul.f32 %v4910, %v483
    %v4978 = vmul.f32 %v4901, %v484
    %v4979 = vmul.f32 %v4892, %v485
    %v4980 = vmul.f32 %v4883, %v486
    %v4981 = vmul.f32 %v4874, %v487
    %v4982 = vmul.f32 %v4865, %v488
    %v4983 = vmul.f32 %v4856, %v489
    %v4984 = vmul.f32 %v4919, %v490
    %v4985 = vmul.f32 %v4911, %v483
    %v4986 = vmul.f32 %v4902, %v484
    %v4987 = vmul.f32 %v4893, %v485
    %v4988 = vmul.f32 %v4884, %v486
    %v4989 = vmul.f32 %v4875, %v487
    %v4990 = vmul.f32 %v4866, %v488
    %v4991 = vmul.f32 %v4857, %v489
    %v4992 = vmul.f32 %v4920, %v490
    %v4993 = vld [vmem:[%s3] sm:$0xff]
    %v4994 = vld [vmem:[%s3 + $0x8] sm:$0xff]
    %v4995 = vld [vmem:[%s3 + $0x10] sm:$0xff]
    %v4996 = vld [vmem:[%s3 + $0x18] sm:$0xff]
    %v4997 = vld [vmem:[%s3 + $0x20] sm:$0xff]
    %v4998 = vld [vmem:[%s3 + $0x28] sm:$0xff]
    %v4999 = vpack.c.bf16 %v2913, %v2905
    %v5000 = vpack.c.bf16 %v2914, %v2906
    %v5001 = vpack.c.bf16 %v2915, %v2907
    %v5002 = vpack.c.bf16 %v2916, %v2908
    %v5003 = vpack.c.bf16 %v2917, %v2909
    %v5004 = vpack.c.bf16 %v2918, %v2910
    %v5005 = vpack.c.bf16 %v2919, %v2911
    %v5006 = vpack.c.bf16 %v2920, %v2912
    %v5007 = vpack.c.bf16 %v2929, %v2921
    %v5008 = vpack.c.bf16 %v2930, %v2922
    %v5009 = vpack.c.bf16 %v2931, %v2923
    %v5010 = vpack.c.bf16 %v2932, %v2924
    %v5011 = vpack.c.bf16 %v2933, %v2925
    %v5012 = vpack.c.bf16 %v2934, %v2926
    %v5013 = vpack.c.bf16 %v2935, %v2927
    %v5014 = vpack.c.bf16 %v2936, %v2928
    %v5015 = vpack.c.bf16 %v2945, %v2937
    %v5016 = vpack.c.bf16 %v2946, %v2938
    %v5017 = vpack.c.bf16 %v2947, %v2939
    %v5018 = vpack.c.bf16 %v2948, %v2940
    %v5019 = vpack.c.bf16 %v2949, %v2941
    %v5020 = vpack.c.bf16 %v2950, %v2942
    %v5021 = vpack.c.bf16 %v2951, %v2943
    %v5022 = vpack.c.bf16 %v2952, %v2944
    %v5023 = vpack.c.bf16 %v2961, %v2953
    %v5024 = vpack.c.bf16 %v2962, %v2954
    %v5025 = vpack.c.bf16 %v2963, %v2955
    %v5026 = vpack.c.bf16 %v2964, %v2956
    %v5027 = vpack.c.bf16 %v2965, %v2957
    %v5028 = vpack.c.bf16 %v2966, %v2958
    %v5029 = vpack.c.bf16 %v2967, %v2959
    %v5030 = vpack.c.bf16 %v2968, %v2960
    %v5031 = vpack.c.bf16 %v3193, %v2969
    %v5032 = vpack.c.bf16 %v3194, %v2970
    %v5033 = vpack.c.bf16 %v3195, %v2971
    %v5034 = vpack.c.bf16 %v3196, %v2972
    %v5035 = vpack.c.bf16 %v3197, %v2973
    %v5036 = vpack.c.bf16 %v3198, %v2974
    %v5037 = vpack.c.bf16 %v3199, %v2975
    %v5038 = vpack.c.bf16 %v3200, %v2976
    %v5039 = vpack.c.bf16 %v3209, %v3201
    %v5040 = vpack.c.bf16 %v3210, %v3202
    %v5041 = vpack.c.bf16 %v3211, %v3203
    %v5042 = vpack.c.bf16 %v3212, %v3204
    %v5043 = vpack.c.bf16 %v3213, %v3205
    %v5044 = vpack.c.bf16 %v3214, %v3206
    %v5045 = vpack.c.bf16 %v3215, %v3207
    %v5046 = vpack.c.bf16 %v3216, %v3208
    %v5047 = vpack.c.bf16 %v3225, %v3217
    %v5048 = vpack.c.bf16 %v3226, %v3218
    %v5049 = vpack.c.bf16 %v3227, %v3219
    %v5050 = vpack.c.bf16 %v3228, %v3220
    %v5051 = vpack.c.bf16 %v3229, %v3221
    %v5052 = vpack.c.bf16 %v3230, %v3222
    %v5053 = vpack.c.bf16 %v3231, %v3223
    %v5054 = vpack.c.bf16 %v3232, %v3224
    %v5055 = vpack.c.bf16 %v3241, %v3233
    %v5056 = vpack.c.bf16 %v3242, %v3234
    %v5057 = vpack.c.bf16 %v3243, %v3235
    %v5058 = vpack.c.bf16 %v3244, %v3236
    %v5059 = vpack.c.bf16 %v3245, %v3237
    %v5060 = vpack.c.bf16 %v3246, %v3238
    %v5061 = vpack.c.bf16 %v3247, %v3239
    %v5062 = vpack.c.bf16 %v3248, %v3240
    %v5063 = vpack.c.bf16 %v3257, %v3249
    %v5064 = vpack.c.bf16 %v3258, %v3250
    %v5065 = vpack.c.bf16 %v3259, %v3251
    %v5066 = vpack.c.bf16 %v3260, %v3252
    %v5067 = vpack.c.bf16 %v3261, %v3253
    %v5068 = vpack.c.bf16 %v3262, %v3254
    %v5069 = vpack.c.bf16 %v3263, %v3255
    %v5070 = vpack.c.bf16 %v3264, %v3256
    %v5071 = vpack.c.bf16 %v3489, %v3481
    %v5072 = vpack.c.bf16 %v3490, %v3482
    %v5073 = vpack.c.bf16 %v3491, %v3483
    %v5074 = vpack.c.bf16 %v3492, %v3484
    %v5075 = vpack.c.bf16 %v3493, %v3485
    %v5076 = vpack.c.bf16 %v3494, %v3486
    %v5077 = vpack.c.bf16 %v3495, %v3487
    %v5078 = vpack.c.bf16 %v3496, %v3488
    %v5079 = vpack.c.bf16 %v3505, %v3497
    %v5080 = vpack.c.bf16 %v3506, %v3498
    %v5081 = vpack.c.bf16 %v3507, %v3499
    %v5082 = vpack.c.bf16 %v3508, %v3500
    %v5083 = vpack.c.bf16 %v3509, %v3501
    %v5084 = vpack.c.bf16 %v3510, %v3502
    %v5085 = vpack.c.bf16 %v3511, %v3503
    %v5086 = vpack.c.bf16 %v3512, %v3504
    %v5087 = vpack.c.bf16 %v3521, %v3513
    %v5088 = vpack.c.bf16 %v3522, %v3514
    %v5089 = vpack.c.bf16 %v3523, %v3515
    %v5090 = vpack.c.bf16 %v3524, %v3516
    %v5091 = vpack.c.bf16 %v3525, %v3517
    %v5092 = vpack.c.bf16 %v3526, %v3518
    %v5093 = vpack.c.bf16 %v3527, %v3519
    %v5094 = vpack.c.bf16 %v3528, %v3520
    %v5095 = vpack.c.bf16 %v3537, %v3529
    %v5096 = vpack.c.bf16 %v3538, %v3530
    %v5097 = vpack.c.bf16 %v3539, %v3531
    %v5098 = vpack.c.bf16 %v3540, %v3532
    %v5099 = vpack.c.bf16 %v3541, %v3533
    %v5100 = vpack.c.bf16 %v3542, %v3534
    %v5101 = vpack.c.bf16 %v3543, %v3535
    %v5102 = vpack.c.bf16 %v3544, %v3536
    %v5103 = vpack.c.bf16 %v3769, %v3545
    %v5104 = vpack.c.bf16 %v3770, %v3546
    %v5105 = vpack.c.bf16 %v3771, %v3547
    %v5106 = vpack.c.bf16 %v3772, %v3548
    %v5107 = vpack.c.bf16 %v3773, %v3549
    %v5108 = vpack.c.bf16 %v3774, %v3550
    %v5109 = vpack.c.bf16 %v3775, %v3551
    %v5110 = vpack.c.bf16 %v3776, %v3552
    %v5111 = vpack.c.bf16 %v3785, %v3777
    %v5112 = vpack.c.bf16 %v3786, %v3778
    %v5113 = vpack.c.bf16 %v3787, %v3779
    %v5114 = vpack.c.bf16 %v3788, %v3780
    %v5115 = vpack.c.bf16 %v3789, %v3781
    %v5116 = vpack.c.bf16 %v3790, %v3782
    %v5117 = vpack.c.bf16 %v3791, %v3783
    %v5118 = vpack.c.bf16 %v3792, %v3784
    %v5119 = vpack.c.bf16 %v3801, %v3793
    %v5120 = vpack.c.bf16 %v3802, %v3794
    %v5121 = vpack.c.bf16 %v3803, %v3795
    %v5122 = vpack.c.bf16 %v3804, %v3796
    %v5123 = vpack.c.bf16 %v3805, %v3797
    %v5124 = vpack.c.bf16 %v3806, %v3798
    %v5125 = vpack.c.bf16 %v3807, %v3799
    %v5126 = vpack.c.bf16 %v3808, %v3800
    %v5127 = vpack.c.bf16 %v3817, %v3809
    %v5128 = vpack.c.bf16 %v3818, %v3810
    %v5129 = vpack.c.bf16 %v3819, %v3811
    %v5130 = vpack.c.bf16 %v3820, %v3812
    %v5131 = vpack.c.bf16 %v3821, %v3813
    %v5132 = vpack.c.bf16 %v3822, %v3814
    %v5133 = vpack.c.bf16 %v3823, %v3815
    %v5134 = vpack.c.bf16 %v3824, %v3816
    %v5135 = vpack.c.bf16 %v3833, %v3825
    %v5136 = vpack.c.bf16 %v3834, %v3826
    %v5137 = vpack.c.bf16 %v3835, %v3827
    %v5138 = vpack.c.bf16 %v3836, %v3828
    %v5139 = vpack.c.bf16 %v3837, %v3829
    %v5140 = vpack.c.bf16 %v3838, %v3830
    %v5141 = vpack.c.bf16 %v3839, %v3831
    %v5142 = vpack.c.bf16 %v3840, %v3832
    %v5143 = vpack.c.bf16 %v2625, %v2617
    %v5144 = vpack.c.bf16 %v2626, %v2618
    %v5145 = vpack.c.bf16 %v2627, %v2619
    %v5146 = vpack.c.bf16 %v2628, %v2620
    %v5147 = vpack.c.bf16 %v2629, %v2621
    %v5148 = vpack.c.bf16 %v2630, %v2622
    %v5149 = vpack.c.bf16 %v2631, %v2623
    %v5150 = vpack.c.bf16 %v2632, %v2624
    %v5151 = vpack.c.bf16 %v2641, %v2633
    %v5152 = vpack.c.bf16 %v2642, %v2634
    %v5153 = vpack.c.bf16 %v2643, %v2635
    %v5154 = vpack.c.bf16 %v2644, %v2636
    %v5155 = vpack.c.bf16 %v2645, %v2637
    %v5156 = vpack.c.bf16 %v2646, %v2638
    %v5157 = vpack.c.bf16 %v2647, %v2639
    %v5158 = vpack.c.bf16 %v2648, %v2640
    %v5159 = vpack.c.bf16 %v2657, %v2649
    %v5160 = vpack.c.bf16 %v2658, %v2650
    %v5161 = vpack.c.bf16 %v2659, %v2651
    %v5162 = vpack.c.bf16 %v2660, %v2652
    %v5163 = vpack.c.bf16 %v2661, %v2653
    %v5164 = vpack.c.bf16 %v2662, %v2654
    %v5165 = vpack.c.bf16 %v2663, %v2655
    %v5166 = vpack.c.bf16 %v2664, %v2656
    %v5167 = vpack.c.bf16 %v2673, %v2665
    %v5168 = vpack.c.bf16 %v2674, %v2666
    %v5169 = vpack.c.bf16 %v2675, %v2667
    %v5170 = vpack.c.bf16 %v2676, %v2668
    %v5171 = vpack.c.bf16 %v2677, %v2669
    %v5172 = vpack.c.bf16 %v2678, %v2670
    %v5173 = vpack.c.bf16 %v2679, %v2671
    %v5174 = vpack.c.bf16 %v2680, %v2672
    %v5175 = vpack.c.bf16 %v4057, %v2681
    %v5176 = vpack.c.bf16 %v4058, %v2682
    %v5177 = vpack.c.bf16 %v4059, %v2683
    %v5178 = vpack.c.bf16 %v4060, %v2684
    %v5179 = vpack.c.bf16 %v4061, %v2685
    %v5180 = vpack.c.bf16 %v4062, %v2686
    %v5181 = vpack.c.bf16 %v4063, %v2687
    %v5182 = vpack.c.bf16 %v4064, %v2688
    %v5183 = vpack.c.bf16 %v4073, %v4065
    %v5184 = vpack.c.bf16 %v4074, %v4066
    %v5185 = vpack.c.bf16 %v4075, %v4067
    %v5186 = vpack.c.bf16 %v4076, %v4068
    %v5187 = vpack.c.bf16 %v4077, %v4069
    %v5188 = vpack.c.bf16 %v4078, %v4070
    %v5189 = vpack.c.bf16 %v4079, %v4071
    %v5190 = vpack.c.bf16 %v4080, %v4072
    %v5191 = vpack.c.bf16 %v4089, %v4081
    %v5192 = vpack.c.bf16 %v4090, %v4082
    %v5193 = vpack.c.bf16 %v4091, %v4083
    %v5194 = vpack.c.bf16 %v4092, %v4084
    %v5195 = vpack.c.bf16 %v4093, %v4085
    %v5196 = vpack.c.bf16 %v4094, %v4086
    %v5197 = vpack.c.bf16 %v4095, %v4087
    %v5198 = vpack.c.bf16 %v4096, %v4088
    %v5199 = vpack.c.bf16 %v4105, %v4097
    %v5200 = vpack.c.bf16 %v4106, %v4098
    %v5201 = vpack.c.bf16 %v4107, %v4099
    %v5202 = vpack.c.bf16 %v4108, %v4100
    %v5203 = vpack.c.bf16 %v4109, %v4101
    %v5204 = vpack.c.bf16 %v4110, %v4102
    %v5205 = vpack.c.bf16 %v4111, %v4103
    %v5206 = vpack.c.bf16 %v4112, %v4104
    %v5207 = vpack.c.bf16 %v4121, %v4113
    %v5208 = vpack.c.bf16 %v4122, %v4114
    %v5209 = vpack.c.bf16 %v4123, %v4115
    %v5210 = vpack.c.bf16 %v4124, %v4116
    %v5211 = vpack.c.bf16 %v4125, %v4117
    %v5212 = vpack.c.bf16 %v4126, %v4118
    %v5213 = vpack.c.bf16 %v4127, %v4119
    %v5214 = vpack.c.bf16 %v4128, %v4120
    %v5215 = vpack.c.bf16 %v4353, %v4345
    %v5216 = vpack.c.bf16 %v4354, %v4346
    %v5217 = vpack.c.bf16 %v4355, %v4347
    %v5218 = vpack.c.bf16 %v4356, %v4348
    %v5219 = vpack.c.bf16 %v4357, %v4349
    %v5220 = vpack.c.bf16 %v4358, %v4350
    %v5221 = vpack.c.bf16 %v4359, %v4351
    %v5222 = vpack.c.bf16 %v4360, %v4352
    %v5223 = vpack.c.bf16 %v4369, %v4361
    %v5224 = vpack.c.bf16 %v4370, %v4362
    %v5225 = vpack.c.bf16 %v4371, %v4363
    %v5226 = vpack.c.bf16 %v4372, %v4364
    %v5227 = vpack.c.bf16 %v4373, %v4365
    %v5228 = vpack.c.bf16 %v4374, %v4366
    %v5229 = vpack.c.bf16 %v4375, %v4367
    %v5230 = vpack.c.bf16 %v4376, %v4368
    %v5231 = vpack.c.bf16 %v4385, %v4377
    %v5232 = vpack.c.bf16 %v4386, %v4378
    %v5233 = vpack.c.bf16 %v4387, %v4379
    %v5234 = vpack.c.bf16 %v4388, %v4380
    %v5235 = vpack.c.bf16 %v4389, %v4381
    %v5236 = vpack.c.bf16 %v4390, %v4382
    %v5237 = vpack.c.bf16 %v4391, %v4383
    %v5238 = vpack.c.bf16 %v4392, %v4384
    %v5239 = vpack.c.bf16 %v4401, %v4393
    %v5240 = vpack.c.bf16 %v4402, %v4394
    %v5241 = vpack.c.bf16 %v4403, %v4395
    %v5242 = vpack.c.bf16 %v4404, %v4396
    %v5243 = vpack.c.bf16 %v4405, %v4397
    %v5244 = vpack.c.bf16 %v4406, %v4398
    %v5245 = vpack.c.bf16 %v4407, %v4399
    %v5246 = vpack.c.bf16 %v4408, %v4400
    %v5247 = vpack.c.bf16 %v4633, %v4409
    %v5248 = vpack.c.bf16 %v4634, %v4410
    %v5249 = vpack.c.bf16 %v4635, %v4411
    %v5250 = vpack.c.bf16 %v4636, %v4412
    %v5251 = vpack.c.bf16 %v4637, %v4413
    %v5252 = vpack.c.bf16 %v4638, %v4414
    %v5253 = vpack.c.bf16 %v4639, %v4415
    %v5254 = vpack.c.bf16 %v4640, %v4416
    %v5255 = vpack.c.bf16 %v4649, %v4641
    %v5256 = vpack.c.bf16 %v4650, %v4642
    %v5257 = vpack.c.bf16 %v4651, %v4643
    %v5258 = vpack.c.bf16 %v4652, %v4644
    %v5259 = vpack.c.bf16 %v4653, %v4645
    %v5260 = vpack.c.bf16 %v4654, %v4646
    %v5261 = vpack.c.bf16 %v4655, %v4647
    %v5262 = vpack.c.bf16 %v4656, %v4648
    %v5263 = vpack.c.bf16 %v4665, %v4657
    %v5264 = vpack.c.bf16 %v4666, %v4658
    %v5265 = vpack.c.bf16 %v4667, %v4659
    %v5266 = vpack.c.bf16 %v4668, %v4660
    %v5267 = vpack.c.bf16 %v4669, %v4661
    %v5268 = vpack.c.bf16 %v4670, %v4662
    %v5269 = vpack.c.bf16 %v4671, %v4663
    %v5270 = vpack.c.bf16 %v4672, %v4664
    %v5271 = vpack.c.bf16 %v4681, %v4673
    %v5272 = vpack.c.bf16 %v4682, %v4674
    %v5273 = vpack.c.bf16 %v4683, %v4675
    %v5274 = vpack.c.bf16 %v4684, %v4676
    %v5275 = vpack.c.bf16 %v4685, %v4677
    %v5276 = vpack.c.bf16 %v4686, %v4678
    %v5277 = vpack.c.bf16 %v4687, %v4679
    %v5278 = vpack.c.bf16 %v4688, %v4680
    %v5279 = vpack.c.bf16 %v4697, %v4689
    %v5280 = vpack.c.bf16 %v4698, %v4690
    %v5281 = vpack.c.bf16 %v4699, %v4691
    %v5282 = vpack.c.bf16 %v4700, %v4692
    %v5283 = vpack.c.bf16 %v4701, %v4693
    %v5284 = vpack.c.bf16 %v4702, %v4694
    %v5285 = vpack.c.bf16 %v4703, %v4695
    %v5286 = vpack.c.bf16 %v4704, %v4696
    %v5287 = vpack.c.bf16 %v4929, %v4921
    %v5288 = vpack.c.bf16 %v4930, %v4922
    %v5289 = vpack.c.bf16 %v4931, %v4923
    %v5290 = vpack.c.bf16 %v4932, %v4924
    %v5291 = vpack.c.bf16 %v4933, %v4925
    %v5292 = vpack.c.bf16 %v4934, %v4926
    %v5293 = vpack.c.bf16 %v4935, %v4927
    %v5294 = vpack.c.bf16 %v4936, %v4928
    %v5295 = vpack.c.bf16 %v4945, %v4937
    %v5296 = vpack.c.bf16 %v4946, %v4938
    %v5297 = vpack.c.bf16 %v4947, %v4939
    %v5298 = vpack.c.bf16 %v4948, %v4940
    %v5299 = vpack.c.bf16 %v4949, %v4941
    %v5300 = vpack.c.bf16 %v4950, %v4942
    %v5301 = vpack.c.bf16 %v4951, %v4943
    %v5302 = vpack.c.bf16 %v4952, %v4944
    %v5303 = vpack.c.bf16 %v4961, %v4953
    %v5304 = vpack.c.bf16 %v4962, %v4954
    %v5305 = vpack.c.bf16 %v4963, %v4955
    %v5306 = vpack.c.bf16 %v4964, %v4956
    %v5307 = vpack.c.bf16 %v4965, %v4957
    %v5308 = vpack.c.bf16 %v4966, %v4958
    %v5309 = vpack.c.bf16 %v4967, %v4959
    %v5310 = vpack.c.bf16 %v4968, %v4960
    %v5311 = vpack.c.bf16 %v4977, %v4969
    %v5312 = vpack.c.bf16 %v4978, %v4970
    %v5313 = vpack.c.bf16 %v4979, %v4971
    %v5314 = vpack.c.bf16 %v4980, %v4972
    %v5315 = vpack.c.bf16 %v4981, %v4973
    %v5316 = vpack.c.bf16 %v4982, %v4974
    %v5317 = vpack.c.bf16 %v4983, %v4975
    %v5318 = vpack.c.bf16 %v4984, %v4976
    %v5319 = vpack.c.bf16 %v4985, %v4985
    %v5320 = vpack.c.bf16 %v4986, %v4986
    %v5321 = vpack.c.bf16 %v4987, %v4987
    %v5322 = vpack.c.bf16 %v4988, %v4988
    %v5323 = vpack.c.bf16 %v4989, %v4989
    %v5324 = vpack.c.bf16 %v4990, %v4990
    %v5325 = vpack.c.bf16 %v4991, %v4991
    %v5326 = vpack.c.bf16 %v4992, %v4992
    %v5333 = vunpack.c.l.b16 %v4993
    %v5334 = vunpack.c.h.b16 %v4993
    %v5335 = vunpack.c.l.b16 %v4994
    %v5336 = vunpack.c.h.b16 %v4994
    %v5337 = vunpack.c.l.b16 %v4995
    %v5338 = vunpack.c.h.b16 %v4995
    %v5339 = vunpack.c.l.b16 %v4996
    %v5340 = vunpack.c.h.b16 %v4996
    %v5341 = vunpack.c.l.b16 %v4997
    %v5342 = vunpack.c.h.b16 %v4997
    %v5343 = vunpack.c.l.b16 %v4998
    %v5344 = vunpack.c.h.b16 %v4998
    %v5345 = vpack.c.b16 %v5339, %v5333
    %v5346 = vpack.c.b16 %v5340, %v5334
    %v5347 = vpack.c.b16 %v5341, %v5335
    %v5348 = vpack.c.b16 %v5342, %v5336
    %v5349 = vpack.c.b16 %v5343, %v5337
    %v5350 = vpack.c.b16 %v5344, %v5338
    %vm5356 = vcmask 64512
    %v5358 = vsel %vm5356, %v5350, 0
    %v5361 = vsel %vm1429, %v5319, 0
    %v5364 = vsel %vm1429, %v5320, 0
    %v5367 = vsel %vm1429, %v5321, 0
    %v5370 = vsel %vm1429, %v5322, 0
    %v5373 = vsel %vm1429, %v5323, 0
    %v5376 = vsel %vm1429, %v5324, 0
    %v5379 = vsel %vm1429, %v5325, 0
    %v5382 = vsel %vm1429, %v5326, 0
    %5384 = vmatprep.subr.bf16.mxu0 %v5000
    %5385 = vmatpush1.bf16.msra.mxu0 %v4999
    %5386 = vmatprep.subr.bf16.mxu0 %v5008
    %5387 = vmatpush1.bf16.msra.mxu0 %v5007
    %5388 = vmatprep.subr.bf16.mxu0 %v5016
    %5389 = vmatpush1.bf16.msra.mxu0 %v5015
    %5390 = vmatprep.subr.bf16.mxu0 %v5024
    %5391 = vmatpush1.bf16.msra.mxu0 %v5023
    %5392 = vmatprep.subr.bf16.mxu0 %v5032
    %5393 = vmatpush1.bf16.msra.mxu0 %v5031
    %5394 = vmatprep.subr.bf16.mxu0 %v5040
    %5395 = vmatpush1.bf16.msra.mxu0 %v5039
    %5396 = vmatprep.subr.bf16.mxu0 %v5048
    %5397 = vmatpush1.bf16.msra.mxu0 %v5047
    %5398 = vmatprep.subr.bf16.mxu0 %v5056
    %5399 = vmatpush1.bf16.msra.mxu0 %v5055
    %5400 = vmatprep.subr.bf16.mxu0 %v5064
    %5401 = vmatpush1.bf16.msra.mxu0 %v5063
    %5402 = vmatprep.subr.bf16.mxu0 %v5072
    %5403 = vmatpush1.bf16.msra.mxu0 %v5071
    %5404 = vmatprep.subr.bf16.mxu0 %v5080
    %5405 = vmatpush1.bf16.msra.mxu0 %v5079
    %5406 = vmatprep.subr.bf16.mxu0 %v5088
    %5407 = vmatpush1.bf16.msra.mxu0 %v5087
    %5408 = vmatprep.subr.bf16.mxu0 %v5096
    %5409 = vmatpush1.bf16.msra.mxu0 %v5095
    %5410 = vmatprep.subr.bf16.mxu0 %v5104
    %5411 = vmatpush1.bf16.msra.mxu0 %v5103
    %5412 = vmatprep.subr.bf16.mxu0 %v5112
    %5413 = vmatpush1.bf16.msra.mxu0 %v5111
    %5414 = vmatprep.subr.bf16.mxu0 %v5120
    %5415 = vmatpush1.bf16.msra.mxu0 %v5119
    %5416 = vmatprep.mubr.bf16.mxu0 %v5346
    %5417 = vmatmul.mubr.bf16.gmra.mrb[0].mxu0 %v5345
    %v5418 = vpop.f32.mrb[0].mxu0
    %v5419 = vadd.f32 0.0, %v5418
    %v5420 = vpop.f32.mrb[0].mxu0
    %v5421 = vadd.f32 0.0, %v5420
    %v5422 = vpop.f32.mrb[0].mxu0
    %v5423 = vadd.f32 0.0, %v5422
    %v5424 = vpop.f32.mrb[0].mxu0
    %v5425 = vadd.f32 0.0, %v5424
    %5426 = vdwg.mxu0
    %5427 = vmatprep.subr.bf16.mxu0 %v5128
    %5428 = vmatpush1.bf16.msra.mxu0 %v5127
    %5429 = vmatprep.subr.bf16.mxu0 %v5136
    %5430 = vmatpush1.bf16.msra.mxu0 %v5135
    %5431 = vmatprep.subr.bf16.mxu0 %v5144
    %5432 = vmatpush1.bf16.msra.mxu0 %v5143
    %5433 = vmatprep.subr.bf16.mxu0 %v5152
    %5434 = vmatpush1.bf16.msra.mxu0 %v5151
    %5435 = vmatprep.subr.bf16.mxu0 %v5160
    %5436 = vmatpush1.bf16.msra.mxu0 %v5159
    %5437 = vmatprep.subr.bf16.mxu0 %v5168
    %5438 = vmatpush1.bf16.msra.mxu0 %v5167
    %5439 = vmatprep.subr.bf16.mxu0 %v5176
    %5440 = vmatpush1.bf16.msra.mxu0 %v5175
    %5441 = vmatprep.subr.bf16.mxu0 %v5184
    %5442 = vmatpush1.bf16.msra.mxu0 %v5183
    %5443 = vmatprep.subr.bf16.mxu0 %v5192
    %5444 = vmatpush1.bf16.msra.mxu0 %v5191
    %5445 = vmatprep.subr.bf16.mxu0 %v5200
    %5446 = vmatpush1.bf16.msra.mxu0 %v5199
    %5447 = vmatprep.subr.bf16.mxu0 %v5208
    %5448 = vmatpush1.bf16.msra.mxu0 %v5207
    %5449 = vmatprep.subr.bf16.mxu0 %v5216
    %5450 = vmatpush1.bf16.msra.mxu0 %v5215
    %5451 = vmatprep.subr.bf16.mxu0 %v5224
    %5452 = vmatpush1.bf16.msra.mxu0 %v5223
    %5453 = vmatprep.subr.bf16.mxu0 %v5232
    %5454 = vmatpush1.bf16.msra.mxu0 %v5231
    %5455 = vmatprep.subr.bf16.mxu0 %v5240
    %5456 = vmatpush1.bf16.msra.mxu0 %v5239
    %5457 = vmatprep.subr.bf16.mxu0 %v5248
    %5458 = vmatpush1.bf16.msra.mxu0 %v5247
    %5459 = vmatprep.mubr.bf16.mxu0 %v5348
    %5460 = vmatmul.mubr.bf16.gmra.mrb[0].mxu0 %v5347
    %v5461 = vpop.f32.mrb[0].mxu0
    %v5462 = vadd.f32 %v5419, %v5461
    %v5463 = vpop.f32.mrb[0].mxu0
    %v5464 = vadd.f32 %v5421, %v5463
    %v5465 = vpop.f32.mrb[0].mxu0
    %v5466 = vadd.f32 %v5423, %v5465
    %v5467 = vpop.f32.mrb[0].mxu0
    %v5468 = vadd.f32 %v5425, %v5467
    %5469 = vdwg.mxu0
    %5470 = vmatprep.subr.bf16.mxu0 %v5256
    %5471 = vmatpush1.bf16.msra.mxu0 %v5255
    %5472 = vmatprep.subr.bf16.mxu0 %v5264
    %5473 = vmatpush1.bf16.msra.mxu0 %v5263
    %5474 = vmatprep.subr.bf16.mxu0 %v5272
    %5475 = vmatpush1.bf16.msra.mxu0 %v5271
    %5476 = vmatprep.subr.bf16.mxu0 %v5280
    %5477 = vmatpush1.bf16.msra.mxu0 %v5279
    %5478 = vmatprep.subr.bf16.mxu0 %v5288
    %5479 = vmatpush1.bf16.msra.mxu0 %v5287
    %5480 = vmatprep.subr.bf16.mxu0 %v5296
    %5481 = vmatpush1.bf16.msra.mxu0 %v5295
    %5482 = vmatprep.subr.bf16.mxu0 %v5304
    %5483 = vmatpush1.bf16.msra.mxu0 %v5303
    %5484 = vmatprep.subr.bf16.mxu0 %v5312
    %5485 = vmatpush1.bf16.msra.mxu0 %v5311
    %5486 = vmatprep.subr.bf16.mxu0 %v5364
    %5487 = vmatpush1.bf16.msra.mxu0 %v5361
    %5488 = vmatprep.subr.bf16.mxu0 0
    %5489 = vmatpush1.bf16.msra.mxu0 0
    %5490 = vmatprep.subr.bf16.mxu0 0
    %5491 = vmatpush1.bf16.msra.mxu0 0
    %5492 = vmatprep.subr.bf16.mxu0 0
    %5493 = vmatpush1.bf16.msra.mxu0 0
    %5494 = vmatprep.subr.bf16.mxu0 0
    %5495 = vmatpush1.bf16.msra.mxu0 0
    %5496 = vmatprep.subr.bf16.mxu0 0
    %5497 = vmatpush1.bf16.msra.mxu0 0
    %5498 = vmatprep.subr.bf16.mxu0 0
    %5499 = vmatpush1.bf16.msra.mxu0 0
    %5500 = vmatprep.subr.bf16.mxu0 0
    %5501 = vmatpush1.bf16.msra.mxu0 0
    %5502 = vmatprep.mubr.bf16.mxu0 %v5358
    %5503 = vmatmul.mubr.bf16.gmra.mrb[0].mxu0 %v5349
    %v5504 = vpop.f32.mrb[0].mxu0
    %v5505 = vadd.f32 %v5462, %v5504
    %v5506 = vpop.f32.mrb[0].mxu0
    %v5507 = vadd.f32 %v5464, %v5506
    %v5508 = vpop.f32.mrb[0].mxu0
    %v5509 = vadd.f32 %v5466, %v5508
    %v5510 = vpop.f32.mrb[0].mxu0
    %v5511 = vadd.f32 %v5468, %v5510
    %5512 = vdwg.mxu0
    %5513 = vmatprep.subr.bf16.mxu0 %v5002
    %5514 = vmatpush1.bf16.msra.mxu0 %v5001
    %5515 = vmatprep.subr.bf16.mxu0 %v5010
    %5516 = vmatpush1.bf16.msra.mxu0 %v5009
    %5517 = vmatprep.subr.bf16.mxu0 %v5018
    %5518 = vmatpush1.bf16.msra.mxu0 %v5017
    %5519 = vmatprep.subr.bf16.mxu0 %v5026
    %5520 = vmatpush1.bf16.msra.mxu0 %v5025
    %5521 = vmatprep.subr.bf16.mxu0 %v5034
    %5522 = vmatpush1.bf16.msra.mxu0 %v5033
    %5523 = vmatprep.subr.bf16.mxu0 %v5042
    %5524 = vmatpush1.bf16.msra.mxu0 %v5041
    %5525 = vmatprep.subr.bf16.mxu0 %v5050
    %5526 = vmatpush1.bf16.msra.mxu0 %v5049
    %5527 = vmatprep.subr.bf16.mxu0 %v5058
    %5528 = vmatpush1.bf16.msra.mxu0 %v5057
    %5529 = vmatprep.subr.bf16.mxu0 %v5066
    %5530 = vmatpush1.bf16.msra.mxu0 %v5065
    %5531 = vmatprep.subr.bf16.mxu0 %v5074
    %5532 = vmatpush1.bf16.msra.mxu0 %v5073
    %5533 = vmatprep.subr.bf16.mxu0 %v5082
    %5534 = vmatpush1.bf16.msra.mxu0 %v5081
    %5535 = vmatprep.subr.bf16.mxu0 %v5090
    %5536 = vmatpush1.bf16.msra.mxu0 %v5089
    %5537 = vmatprep.subr.bf16.mxu0 %v5098
    %5538 = vmatpush1.bf16.msra.mxu0 %v5097
    %5539 = vmatprep.subr.bf16.mxu0 %v5106
    %5540 = vmatpush1.bf16.msra.mxu0 %v5105
    %5541 = vmatprep.subr.bf16.mxu0 %v5114
    %5542 = vmatpush1.bf16.msra.mxu0 %v5113
    %5543 = vmatprep.subr.bf16.mxu0 %v5122
    %5544 = vmatpush1.bf16.msra.mxu0 %v5121
    %5545 = vmatprep.mubr.bf16.mxu0 %v5346
    %5546 = vmatmul.mubr.bf16.gmra.mrb[0].mxu0 %v5345
    %v5547 = vpop.f32.mrb[0].mxu0
    %v5548 = vadd.f32 0.0, %v5547
    %v5549 = vpop.f32.mrb[0].mxu0
    %v5550 = vadd.f32 0.0, %v5549
    %v5551 = vpop.f32.mrb[0].mxu0
    %v5552 = vadd.f32 0.0, %v5551
    %v5553 = vpop.f32.mrb[0].mxu0
    %v5554 = vadd.f32 0.0, %v5553
    %5555 = vdwg.mxu0
    %5556 = vmatprep.subr.bf16.mxu0 %v5130
    %5557 = vmatpush1.bf16.msra.mxu0 %v5129
    %5558 = vmatprep.subr.bf16.mxu0 %v5138
    %5559 = vmatpush1.bf16.msra.mxu0 %v5137
    %5560 = vmatprep.subr.bf16.mxu0 %v5146
    %5561 = vmatpush1.bf16.msra.mxu0 %v5145
    %5562 = vmatprep.subr.bf16.mxu0 %v5154
    %5563 = vmatpush1.bf16.msra.mxu0 %v5153
    %5564 = vmatprep.subr.bf16.mxu0 %v5162
    %5565 = vmatpush1.bf16.msra.mxu0 %v5161
    %5566 = vmatprep.subr.bf16.mxu0 %v5170
    %5567 = vmatpush1.bf16.msra.mxu0 %v5169
    %5568 = vmatprep.subr.bf16.mxu0 %v5178
    %5569 = vmatpush1.bf16.msra.mxu0 %v5177
    %5570 = vmatprep.subr.bf16.mxu0 %v5186
    %5571 = vmatpush1.bf16.msra.mxu0 %v5185
    %5572 = vmatprep.subr.bf16.mxu0 %v5194
    %5573 = vmatpush1.bf16.msra.mxu0 %v5193
    %5574 = vmatprep.subr.bf16.mxu0 %v5202
    %5575 = vmatpush1.bf16.msra.mxu0 %v5201
    %5576 = vmatprep.subr.bf16.mxu0 %v5210
    %5577 = vmatpush1.bf16.msra.mxu0 %v5209
    %5578 = vmatprep.subr.bf16.mxu0 %v5218
    %5579 = vmatpush1.bf16.msra.mxu0 %v5217
    %5580 = vmatprep.subr.bf16.mxu0 %v5226
    %5581 = vmatpush1.bf16.msra.mxu0 %v5225
    %5582 = vmatprep.subr.bf16.mxu0 %v5234
    %5583 = vmatpush1.bf16.msra.mxu0 %v5233
    %5584 = vmatprep.subr.bf16.mxu0 %v5242
    %5585 = vmatpush1.bf16.msra.mxu0 %v5241
    %5586 = vmatprep.subr.bf16.mxu0 %v5250
    %5587 = vmatpush1.bf16.msra.mxu0 %v5249
    %5588 = vmatprep.mubr.bf16.mxu0 %v5348
    %5589 = vmatmul.mubr.bf16.gmra.mrb[0].mxu0 %v5347
    %v5590 = vpop.f32.mrb[0].mxu0
    %v5591 = vadd.f32 %v5548, %v5590
    %v5592 = vpop.f32.mrb[0].mxu0
    %v5593 = vadd.f32 %v5550, %v5592
    %v5594 = vpop.f32.mrb[0].mxu0
    %v5595 = vadd.f32 %v5552, %v5594
    %v5596 = vpop.f32.mrb[0].mxu0
    %v5597 = vadd.f32 %v5554, %v5596
    %5598 = vdwg.mxu0
    %5599 = vmatprep.subr.bf16.mxu0 %v5258
    %5600 = vmatpush1.bf16.msra.mxu0 %v5257
    %5601 = vmatprep.subr.bf16.mxu0 %v5266
    %5602 = vmatpush1.bf16.msra.mxu0 %v5265
    %5603 = vmatprep.subr.bf16.mxu0 %v5274
    %5604 = vmatpush1.bf16.msra.mxu0 %v5273
    %5605 = vmatprep.subr.bf16.mxu0 %v5282
    %5606 = vmatpush1.bf16.msra.mxu0 %v5281
    %5607 = vmatprep.subr.bf16.mxu0 %v5290
    %5608 = vmatpush1.bf16.msra.mxu0 %v5289
    %5609 = vmatprep.subr.bf16.mxu0 %v5298
    %5610 = vmatpush1.bf16.msra.mxu0 %v5297
    %5611 = vmatprep.subr.bf16.mxu0 %v5306
    %5612 = vmatpush1.bf16.msra.mxu0 %v5305
    %5613 = vmatprep.subr.bf16.mxu0 %v5314
    %5614 = vmatpush1.bf16.msra.mxu0 %v5313
    %5615 = vmatprep.subr.bf16.mxu0 %v5370
    %5616 = vmatpush1.bf16.msra.mxu0 %v5367
    %5617 = vmatprep.subr.bf16.mxu0 0
    %5618 = vmatpush1.bf16.msra.mxu0 0
    %5619 = vmatprep.subr.bf16.mxu0 0
    %5620 = vmatpush1.bf16.msra.mxu0 0
    %5621 = vmatprep.subr.bf16.mxu0 0
    %5622 = vmatpush1.bf16.msra.mxu0 0
    %5623 = vmatprep.subr.bf16.mxu0 0
    %5624 = vmatpush1.bf16.msra.mxu0 0
    %5625 = vmatprep.subr.bf16.mxu0 0
    %5626 = vmatpush1.bf16.msra.mxu0 0
    %5627 = vmatprep.subr.bf16.mxu0 0
    %5628 = vmatpush1.bf16.msra.mxu0 0
    %5629 = vmatprep.subr.bf16.mxu0 0
    %5630 = vmatpush1.bf16.msra.mxu0 0
    %5631 = vmatprep.mubr.bf16.mxu0 %v5358
    %5632 = vmatmul.mubr.bf16.gmra.mrb[0].mxu0 %v5349
    %v5633 = vpop.f32.mrb[0].mxu0
    %v5634 = vadd.f32 %v5591, %v5633
    %v5635 = vpop.f32.mrb[0].mxu0
    %v5636 = vadd.f32 %v5593, %v5635
    %v5637 = vpop.f32.mrb[0].mxu0
    %v5638 = vadd.f32 %v5595, %v5637
    %v5639 = vpop.f32.mrb[0].mxu0
    %v5640 = vadd.f32 %v5597, %v5639
    %5641 = vdwg.mxu0
    %5642 = vmatprep.subr.bf16.mxu0 %v5004
    %5643 = vmatpush1.bf16.msra.mxu0 %v5003
    %5644 = vmatprep.subr.bf16.mxu0 %v5012
    %5645 = vmatpush1.bf16.msra.mxu0 %v5011
    %5646 = vmatprep.subr.bf16.mxu0 %v5020
    %5647 = vmatpush1.bf16.msra.mxu0 %v5019
    %5648 = vmatprep.subr.bf16.mxu0 %v5028
    %5649 = vmatpush1.bf16.msra.mxu0 %v5027
    %5650 = vmatprep.subr.bf16.mxu0 %v5036
    %5651 = vmatpush1.bf16.msra.mxu0 %v5035
    %5652 = vmatprep.subr.bf16.mxu0 %v5044
    %5653 = vmatpush1.bf16.msra.mxu0 %v5043
    %5654 = vmatprep.subr.bf16.mxu0 %v5052
    %5655 = vmatpush1.bf16.msra.mxu0 %v5051
    %5656 = vmatprep.subr.bf16.mxu0 %v5060
    %5657 = vmatpush1.bf16.msra.mxu0 %v5059
    %5658 = vmatprep.subr.bf16.mxu0 %v5068
    %5659 = vmatpush1.bf16.msra.mxu0 %v5067
    %5660 = vmatprep.subr.bf16.mxu0 %v5076
    %5661 = vmatpush1.bf16.msra.mxu0 %v5075
    %5662 = vmatprep.subr.bf16.mxu0 %v5084
    %5663 = vmatpush1.bf16.msra.mxu0 %v5083
    %5664 = vmatprep.subr.bf16.mxu0 %v5092
    %5665 = vmatpush1.bf16.msra.mxu0 %v5091
    %5666 = vmatprep.subr.bf16.mxu0 %v5100
    %5667 = vmatpush1.bf16.msra.mxu0 %v5099
    %5668 = vmatprep.subr.bf16.mxu0 %v5108
    %5669 = vmatpush1.bf16.msra.mxu0 %v5107
    %5670 = vmatprep.subr.bf16.mxu0 %v5116
    %5671 = vmatpush1.bf16.msra.mxu0 %v5115
    %5672 = vmatprep.subr.bf16.mxu0 %v5124
    %5673 = vmatpush1.bf16.msra.mxu0 %v5123
    %5674 = vmatprep.mubr.bf16.mxu0 %v5346
    %5675 = vmatmul.mubr.bf16.gmra.mrb[0].mxu0 %v5345
    %v5676 = vpop.f32.mrb[0].mxu0
    %v5677 = vadd.f32 0.0, %v5676
    %v5678 = vpop.f32.mrb[0].mxu0
    %v5679 = vadd.f32 0.0, %v5678
    %v5680 = vpop.f32.mrb[0].mxu0
    %v5681 = vadd.f32 0.0, %v5680
    %v5682 = vpop.f32.mrb[0].mxu0
    %v5683 = vadd.f32 0.0, %v5682
    %5684 = vdwg.mxu0
    %5685 = vmatprep.subr.bf16.mxu0 %v5132
    %5686 = vmatpush1.bf16.msra.mxu0 %v5131
    %5687 = vmatprep.subr.bf16.mxu0 %v5140
    %5688 = vmatpush1.bf16.msra.mxu0 %v5139
    %5689 = vmatprep.subr.bf16.mxu0 %v5148
    %5690 = vmatpush1.bf16.msra.mxu0 %v5147
    %5691 = vmatprep.subr.bf16.mxu0 %v5156
    %5692 = vmatpush1.bf16.msra.mxu0 %v5155
    %5693 = vmatprep.subr.bf16.mxu0 %v5164
    %5694 = vmatpush1.bf16.msra.mxu0 %v5163
    %5695 = vmatprep.subr.bf16.mxu0 %v5172
    %5696 = vmatpush1.bf16.msra.mxu0 %v5171
    %5697 = vmatprep.subr.bf16.mxu0 %v5180
    %5698 = vmatpush1.bf16.msra.mxu0 %v5179
    %5699 = vmatprep.subr.bf16.mxu0 %v5188
    %5700 = vmatpush1.bf16.msra.mxu0 %v5187
    %5701 = vmatprep.subr.bf16.mxu0 %v5196
    %5702 = vmatpush1.bf16.msra.mxu0 %v5195
    %5703 = vmatprep.subr.bf16.mxu0 %v5204
    %5704 = vmatpush1.bf16.msra.mxu0 %v5203
    %5705 = vmatprep.subr.bf16.mxu0 %v5212
    %5706 = vmatpush1.bf16.msra.mxu0 %v5211
    %5707 = vmatprep.subr.bf16.mxu0 %v5220
    %5708 = vmatpush1.bf16.msra.mxu0 %v5219
    %5709 = vmatprep.subr.bf16.mxu0 %v5228
    %5710 = vmatpush1.bf16.msra.mxu0 %v5227
    %5711 = vmatprep.subr.bf16.mxu0 %v5236
    %5712 = vmatpush1.bf16.msra.mxu0 %v5235
    %5713 = vmatprep.subr.bf16.mxu0 %v5244
    %5714 = vmatpush1.bf16.msra.mxu0 %v5243
    %5715 = vmatprep.subr.bf16.mxu0 %v5252
    %5716 = vmatpush1.bf16.msra.mxu0 %v5251
    %5717 = vmatprep.mubr.bf16.mxu0 %v5348
    %5718 = vmatmul.mubr.bf16.gmra.mrb[0].mxu0 %v5347
    %v5719 = vpop.f32.mrb[0].mxu0
    %v5720 = vadd.f32 %v5677, %v5719
    %v5721 = vpop.f32.mrb[0].mxu0
    %v5722 = vadd.f32 %v5679, %v5721
    %v5723 = vpop.f32.mrb[0].mxu0
    %v5724 = vadd.f32 %v5681, %v5723
    %v5725 = vpop.f32.mrb[0].mxu0
    %v5726 = vadd.f32 %v5683, %v5725
    %5727 = vdwg.mxu0
    %5728 = vmatprep.subr.bf16.mxu0 %v5260
    %5729 = vmatpush1.bf16.msra.mxu0 %v5259
    %5730 = vmatprep.subr.bf16.mxu0 %v5268
    %5731 = vmatpush1.bf16.msra.mxu0 %v5267
    %5732 = vmatprep.subr.bf16.mxu0 %v5276
    %5733 = vmatpush1.bf16.msra.mxu0 %v5275
    %5734 = vmatprep.subr.bf16.mxu0 %v5284
    %5735 = vmatpush1.bf16.msra.mxu0 %v5283
    %5736 = vmatprep.subr.bf16.mxu0 %v5292
    %5737 = vmatpush1.bf16.msra.mxu0 %v5291
    %5738 = vmatprep.subr.bf16.mxu0 %v5300
    %5739 = vmatpush1.bf16.msra.mxu0 %v5299
    %5740 = vmatprep.subr.bf16.mxu0 %v5308
    %5741 = vmatpush1.bf16.msra.mxu0 %v5307
    %5742 = vmatprep.subr.bf16.mxu0 %v5316
    %5743 = vmatpush1.bf16.msra.mxu0 %v5315
    %5744 = vmatprep.subr.bf16.mxu0 %v5376
    %5745 = vmatpush1.bf16.msra.mxu0 %v5373
    %5746 = vmatprep.subr.bf16.mxu0 0
    %5747 = vmatpush1.bf16.msra.mxu0 0
    %5748 = vmatprep.subr.bf16.mxu0 0
    %5749 = vmatpush1.bf16.msra.mxu0 0
    %5750 = vmatprep.subr.bf16.mxu0 0
    %5751 = vmatpush1.bf16.msra.mxu0 0
    %5752 = vmatprep.subr.bf16.mxu0 0
    %5753 = vmatpush1.bf16.msra.mxu0 0
    %5754 = vmatprep.subr.bf16.mxu0 0
    %5755 = vmatpush1.bf16.msra.mxu0 0
    %5756 = vmatprep.subr.bf16.mxu0 0
    %5757 = vmatpush1.bf16.msra.mxu0 0
    %5758 = vmatprep.subr.bf16.mxu0 0
    %5759 = vmatpush1.bf16.msra.mxu0 0
    %5760 = vmatprep.mubr.bf16.mxu0 %v5358
    %5761 = vmatmul.mubr.bf16.gmra.mrb[0].mxu0 %v5349
    %v5762 = vpop.f32.mrb[0].mxu0
    %v5763 = vadd.f32 %v5720, %v5762
    %v5764 = vpop.f32.mrb[0].mxu0
    %v5765 = vadd.f32 %v5722, %v5764
    %v5766 = vpop.f32.mrb[0].mxu0
    %v5767 = vadd.f32 %v5724, %v5766
    %v5768 = vpop.f32.mrb[0].mxu0
    %v5769 = vadd.f32 %v5726, %v5768
    %5770 = vdwg.mxu0
    %5771 = vmatprep.subr.bf16.mxu0 %v5006
    %5772 = vmatpush1.bf16.msra.mxu0 %v5005
    %5773 = vmatprep.subr.bf16.mxu0 %v5014
    %5774 = vmatpush1.bf16.msra.mxu0 %v5013
    %5775 = vmatprep.subr.bf16.mxu0 %v5022
    %5776 = vmatpush1.bf16.msra.mxu0 %v5021
    %5777 = vmatprep.subr.bf16.mxu0 %v5030
    %5778 = vmatpush1.bf16.msra.mxu0 %v5029
    %5779 = vmatprep.subr.bf16.mxu0 %v5038
    %5780 = vmatpush1.bf16.msra.mxu0 %v5037
    %5781 = vmatprep.subr.bf16.mxu0 %v5046
    %5782 = vmatpush1.bf16.msra.mxu0 %v5045
    %5783 = vmatprep.subr.bf16.mxu0 %v5054
    %5784 = vmatpush1.bf16.msra.mxu0 %v5053
    %5785 = vmatprep.subr.bf16.mxu0 %v5062
    %5786 = vmatpush1.bf16.msra.mxu0 %v5061
    %5787 = vmatprep.subr.bf16.mxu0 %v5070
    %5788 = vmatpush1.bf16.msra.mxu0 %v5069
    %5789 = vmatprep.subr.bf16.mxu0 %v5078
    %5790 = vmatpush1.bf16.msra.mxu0 %v5077
    %5791 = vmatprep.subr.bf16.mxu0 %v5086
    %5792 = vmatpush1.bf16.msra.mxu0 %v5085
    %5793 = vmatprep.subr.bf16.mxu0 %v5094
    %5794 = vmatpush1.bf16.msra.mxu0 %v5093
    %5795 = vmatprep.subr.bf16.mxu0 %v5102
    %5796 = vmatpush1.bf16.msra.mxu0 %v5101
    %5797 = vmatprep.subr.bf16.mxu0 %v5110
    %5798 = vmatpush1.bf16.msra.mxu0 %v5109
    %5799 = vmatprep.subr.bf16.mxu0 %v5118
    %5800 = vmatpush1.bf16.msra.mxu0 %v5117
    %5801 = vmatprep.subr.bf16.mxu0 %v5126
    %5802 = vmatpush1.bf16.msra.mxu0 %v5125
    %5803 = vmatprep.mubr.bf16.mxu0 %v5346
    %5804 = vmatmul.mubr.bf16.gmra.mrb[0].mxu0 %v5345
    %v5805 = vpop.f32.mrb[0].mxu0
    %v5806 = vadd.f32 0.0, %v5805
    %v5807 = vpop.f32.mrb[0].mxu0
    %v5808 = vadd.f32 0.0, %v5807
    %v5809 = vpop.f32.mrb[0].mxu0
    %v5810 = vadd.f32 0.0, %v5809
    %v5811 = vpop.f32.mrb[0].mxu0
    %v5812 = vadd.f32 0.0, %v5811
    %5813 = vdwg.mxu0
    %5814 = vmatprep.subr.bf16.mxu0 %v5134
    %5815 = vmatpush1.bf16.msra.mxu0 %v5133
    %5816 = vmatprep.subr.bf16.mxu0 %v5142
    %5817 = vmatpush1.bf16.msra.mxu0 %v5141
    %5818 = vmatprep.subr.bf16.mxu0 %v5150
    %5819 = vmatpush1.bf16.msra.mxu0 %v5149
    %5820 = vmatprep.subr.bf16.mxu0 %v5158
    %5821 = vmatpush1.bf16.msra.mxu0 %v5157
    %5822 = vmatprep.subr.bf16.mxu0 %v5166
    %5823 = vmatpush1.bf16.msra.mxu0 %v5165
    %5824 = vmatprep.subr.bf16.mxu0 %v5174
    %5825 = vmatpush1.bf16.msra.mxu0 %v5173
    %5826 = vmatprep.subr.bf16.mxu0 %v5182
    %5827 = vmatpush1.bf16.msra.mxu0 %v5181
    %5828 = vmatprep.subr.bf16.mxu0 %v5190
    %5829 = vmatpush1.bf16.msra.mxu0 %v5189
    %5830 = vmatprep.subr.bf16.mxu0 %v5198
    %5831 = vmatpush1.bf16.msra.mxu0 %v5197
    %5832 = vmatprep.subr.bf16.mxu0 %v5206
    %5833 = vmatpush1.bf16.msra.mxu0 %v5205
    %5834 = vmatprep.subr.bf16.mxu0 %v5214
    %5835 = vmatpush1.bf16.msra.mxu0 %v5213
    %5836 = vmatprep.subr.bf16.mxu0 %v5222
    %5837 = vmatpush1.bf16.msra.mxu0 %v5221
    %5838 = vmatprep.subr.bf16.mxu0 %v5230
    %5839 = vmatpush1.bf16.msra.mxu0 %v5229
    %5840 = vmatprep.subr.bf16.mxu0 %v5238
    %5841 = vmatpush1.bf16.msra.mxu0 %v5237
    %5842 = vmatprep.subr.bf16.mxu0 %v5246
    %5843 = vmatpush1.bf16.msra.mxu0 %v5245
    %5844 = vmatprep.subr.bf16.mxu0 %v5254
    %5845 = vmatpush1.bf16.msra.mxu0 %v5253
    %5846 = vmatprep.mubr.bf16.mxu0 %v5348
    %5847 = vmatmul.mubr.bf16.gmra.mrb[0].mxu0 %v5347
    %v5848 = vpop.f32.mrb[0].mxu0
    %v5849 = vadd.f32 %v5806, %v5848
    %v5850 = vpop.f32.mrb[0].mxu0
    %v5851 = vadd.f32 %v5808, %v5850
    %v5852 = vpop.f32.mrb[0].mxu0
    %v5853 = vadd.f32 %v5810, %v5852
    %v5854 = vpop.f32.mrb[0].mxu0
    %v5855 = vadd.f32 %v5812, %v5854
    %5856 = vdwg.mxu0
    %5857 = vmatprep.subr.bf16.mxu0 %v5262
    %5858 = vmatpush1.bf16.msra.mxu0 %v5261
    %5859 = vmatprep.subr.bf16.mxu0 %v5270
    %5860 = vmatpush1.bf16.msra.mxu0 %v5269
    %5861 = vmatprep.subr.bf16.mxu0 %v5278
    %5862 = vmatpush1.bf16.msra.mxu0 %v5277
    %5863 = vmatprep.subr.bf16.mxu0 %v5286
    %5864 = vmatpush1.bf16.msra.mxu0 %v5285
    %5865 = vmatprep.subr.bf16.mxu0 %v5294
    %5866 = vmatpush1.bf16.msra.mxu0 %v5293
    %5867 = vmatprep.subr.bf16.mxu0 %v5302
    %5868 = vmatpush1.bf16.msra.mxu0 %v5301
    %5869 = vmatprep.subr.bf16.mxu0 %v5310
    %5870 = vmatpush1.bf16.msra.mxu0 %v5309
    %5871 = vmatprep.subr.bf16.mxu0 %v5318
    %5872 = vmatpush1.bf16.msra.mxu0 %v5317
    %5873 = vmatprep.subr.bf16.mxu0 %v5382
    %5874 = vmatpush1.bf16.msra.mxu0 %v5379
    %5875 = vmatprep.subr.bf16.mxu0 0
    %5876 = vmatpush1.bf16.msra.mxu0 0
    %5877 = vmatprep.subr.bf16.mxu0 0
    %5878 = vmatpush1.bf16.msra.mxu0 0
    %5879 = vmatprep.subr.bf16.mxu0 0
    %5880 = vmatpush1.bf16.msra.mxu0 0
    %5881 = vmatprep.subr.bf16.mxu0 0
    %5882 = vmatpush1.bf16.msra.mxu0 0
    %5883 = vmatprep.subr.bf16.mxu0 0
    %5884 = vmatpush1.bf16.msra.mxu0 0
    %5885 = vmatprep.subr.bf16.mxu0 0
    %5886 = vmatpush1.bf16.msra.mxu0 0
    %5887 = vmatprep.subr.bf16.mxu0 0
    %5888 = vmatpush1.bf16.msra.mxu0 0
    %5889 = vmatprep.mubr.bf16.mxu0 %v5358
    %5890 = vmatmul.mubr.bf16.gmra.mrb[0].mxu0 %v5349
    %v5891 = vpop.f32.mrb[0].mxu0
    %v5892 = vadd.f32 %v5849, %v5891
    %v5893 = vpop.f32.mrb[0].mxu0
    %v5894 = vadd.f32 %v5851, %v5893
    %v5895 = vpop.f32.mrb[0].mxu0
    %v5896 = vadd.f32 %v5853, %v5895
    %v5897 = vpop.f32.mrb[0].mxu0
    %v5898 = vadd.f32 %v5855, %v5897
    %5899 = vdwg.mxu0
    %v5900 = vmax.f32 %v5505, 0.0
    %v5901 = vmax.f32 %v5507, 0.0
    %v5902 = vmax.f32 %v5634, 0.0
    %v5903 = vmax.f32 %v5636, 0.0
    %v5904 = vmax.f32 %v5763, 0.0
    %v5905 = vmax.f32 %v5765, 0.0
    %v5906 = vmax.f32 %v5892, 0.0
    %v5907 = vmax.f32 %v5894, 0.0
    %v5908 = vmax.f32 %v5509, 0.0
    %v5909 = vmax.f32 %v5511, 0.0
    %v5910 = vmax.f32 %v5638, 0.0
    %v5911 = vmax.f32 %v5640, 0.0
    %v5912 = vmax.f32 %v5767, 0.0
    %v5913 = vmax.f32 %v5769, 0.0
    %v5914 = vmax.f32 %v5896, 0.0
    %v5915 = vmax.f32 %v5898, 0.0
    %v5916 = vpack.c.bf16 %v5908, %v5900
    %v5917 = vpack.c.bf16 %v5909, %v5901
    %v5918 = vpack.c.bf16 %v5910, %v5902
    %v5919 = vpack.c.bf16 %v5911, %v5903
    %v5920 = vpack.c.bf16 %v5912, %v5904
    %v5921 = vpack.c.bf16 %v5913, %v5905
    %v5922 = vpack.c.bf16 %v5914, %v5906
    %v5923 = vpack.c.bf16 %v5915, %v5907
    %v5924 = vld [vmem:[#allocation2] sm:$0xf]
    %v5925 = vld [vmem:[#allocation2 + $0x4] sm:$0xf]
    %v5926 = vld [vmem:[#allocation2 + $0x8] sm:$0xf]
    %v5927 = vld [vmem:[#allocation2 + $0xc] sm:$0xf]
    %v5928 = vld [vmem:[#allocation2 + $0x10] sm:$0xf]
    %v5929 = vld [vmem:[#allocation2 + $0x14] sm:$0xf]
    %v5930 = vld [vmem:[#allocation2 + $0x18] sm:$0xf]
    %v5931 = vld [vmem:[#allocation2 + $0x1c] sm:$0xf]
    %v5932 = vld [vmem:[#allocation2 + $0x20] sm:$0xf]
    %v5933 = vld [vmem:[#allocation2 + $0x24] sm:$0xf]
    %v5934 = vld [vmem:[#allocation2 + $0x28] sm:$0xf]
    %v5935 = vld [vmem:[#allocation2 + $0x2c] sm:$0xf]
    %v5936 = vld [vmem:[#allocation2 + $0x30] sm:$0xf]
    %v5937 = vld [vmem:[#allocation2 + $0x34] sm:$0xf]
    %v5938 = vld [vmem:[#allocation2 + $0x38] sm:$0xf]
    %v5939 = vld [vmem:[#allocation2 + $0x3c] sm:$0xf]
    %v5940 = vld [vmem:[#allocation2 + $0x40] sm:$0xf]
    %v5941 = vld [vmem:[#allocation2 + $0x44] sm:$0xf]
    %v5942 = vld [vmem:[#allocation2 + $0x48] sm:$0xf]
    %v5943 = vld [vmem:[#allocation2 + $0x4c] sm:$0xf]
    %v5944 = vld [vmem:[#allocation2 + $0x50] sm:$0xf]
    %v5945 = vld [vmem:[#allocation2 + $0x54] sm:$0xf]
    %v5946 = vld [vmem:[#allocation2 + $0x58] sm:$0xf]
    %v5947 = vld [vmem:[#allocation2 + $0x5c] sm:$0xf]
    %v5948 = vld [vmem:[#allocation2 + $0x60] sm:$0xf]
    %v5949 = vld [vmem:[#allocation2 + $0x64] sm:$0xf]
    %v5950 = vld [vmem:[#allocation2 + $0x68] sm:$0xf]
    %v5951 = vld [vmem:[#allocation2 + $0x6c] sm:$0xf]
    %v5952 = vld [vmem:[#allocation2 + $0x70] sm:$0xf]
    %v5953 = vld [vmem:[#allocation2 + $0x74] sm:$0xf]
    %v5954 = vld [vmem:[#allocation2 + $0x78] sm:$0xf]
    %v5955 = vld [vmem:[#allocation2 + $0x7c] sm:$0xf]
    %v5956 = vld [vmem:[#allocation2 + $0x80] sm:$0xf]
    %v5957 = vld [vmem:[#allocation2 + $0x84] sm:$0xf]
    %v5958 = vld [vmem:[#allocation2 + $0x88] sm:$0xf]
    %v5959 = vld [vmem:[#allocation2 + $0x8c] sm:$0xf]
    %v5960 = vld [vmem:[#allocation2 + $0x90] sm:$0xf]
    %v5961 = vld [vmem:[#allocation2 + $0x94] sm:$0xf]
    %v5962 = vld [vmem:[#allocation2 + $0x98] sm:$0xf]
    %v5963 = vld [vmem:[#allocation2 + $0x9c] sm:$0xf]
    %v5964 = vld [vmem:[#allocation2 + $0xa0] sm:$0xf]
    %v5965 = vld [vmem:[#allocation2 + $0xa4] sm:$0xf]
    %v5966 = vld [vmem:[#allocation2 + $0xa8] sm:$0xf]
    %v5967 = vld [vmem:[#allocation2 + $0xac] sm:$0xf]
    %v5968 = vld [vmem:[#allocation2 + $0xb0] sm:$0xf]
    %v5969 = vld [vmem:[#allocation2 + $0xb4] sm:$0xf]
    %v5970 = vld [vmem:[#allocation2 + $0xb8] sm:$0xf]
    %v5971 = vld [vmem:[#allocation2 + $0xbc] sm:$0xf]
    %v5972 = vld [vmem:[#allocation2 + $0xc0] sm:$0xf]
    %v5973 = vld [vmem:[#allocation2 + $0xc4] sm:$0xf]
    %v5974 = vld [vmem:[#allocation2 + $0xc8] sm:$0xf]
    %v5975 = vld [vmem:[#allocation2 + $0xcc] sm:$0xf]
    %v5976 = vld [vmem:[#allocation2 + $0xd0] sm:$0xf]
    %v5977 = vld [vmem:[#allocation2 + $0xd4] sm:$0xf]
    %v5978 = vld [vmem:[#allocation2 + $0xd8] sm:$0xf]
    %v5979 = vld [vmem:[#allocation2 + $0xdc] sm:$0xf]
    %v5980 = vld [vmem:[#allocation2 + $0xe0] sm:$0xf]
    %v5981 = vld [vmem:[#allocation2 + $0xe4] sm:$0xf]
    %v5982 = vld [vmem:[#allocation2 + $0xe8] sm:$0xf]
    %v5983 = vld [vmem:[#allocation2 + $0xec] sm:$0xf]
    %v5984 = vld [vmem:[#allocation2 + $0xf0] sm:$0xf]
    %v5985 = vld [vmem:[#allocation2 + $0xf4] sm:$0xf]
    %v5986 = vld [vmem:[#allocation2 + $0xf8] sm:$0xf]
    %v5987 = vld [vmem:[#allocation2 + $0xfc] sm:$0xf]
    %v5988 = vld [vmem:[#allocation2 + $0x100] sm:$0xf]
    %v5989 = vld [vmem:[#allocation2 + $0x104] sm:$0xf]
    %v5990 = vld [vmem:[#allocation2 + $0x108] sm:$0xf]
    %v5991 = vld [vmem:[#allocation2 + $0x10c] sm:$0xf]
    %v5992 = vld [vmem:[#allocation2 + $0x110] sm:$0xf]
    %v5993 = vld [vmem:[#allocation2 + $0x114] sm:$0xf]
    %v5994 = vld [vmem:[#allocation2 + $0x118] sm:$0xf]
    %v5995 = vld [vmem:[#allocation2 + $0x11c] sm:$0xf]
    %v5996 = vld [vmem:[#allocation2 + $0x120] sm:$0xf]
    %v5997 = vld [vmem:[#allocation2 + $0x124] sm:$0xf]
    %v5998 = vld [vmem:[#allocation2 + $0x128] sm:$0xf]
    %v5999 = vld [vmem:[#allocation2 + $0x12c] sm:$0xf]
    %v6000 = vld [vmem:[#allocation2 + $0x130] sm:$0xf]
    %v6001 = vld [vmem:[#allocation2 + $0x134] sm:$0xf]
    %v6002 = vld [vmem:[#allocation2 + $0x138] sm:$0xf]
    %v6003 = vld [vmem:[#allocation2 + $0x13c] sm:$0xf]
    %v6004 = vld [vmem:[#allocation2 + $0x140] sm:$0xf]
    %v6005 = vld [vmem:[#allocation2 + $0x144] sm:$0xf]
    %v6006 = vld [vmem:[#allocation2 + $0x148] sm:$0xf]
    %v6007 = vld [vmem:[#allocation2 + $0x14c] sm:$0xf]
    %v6008 = vld [vmem:[#allocation2 + $0x150] sm:$0xf]
    %v6009 = vld [vmem:[#allocation2 + $0x154] sm:$0xf]
    %v6010 = vld [vmem:[#allocation2 + $0x158] sm:$0xf]
    %v6011 = vld [vmem:[#allocation2 + $0x15c] sm:$0xf]
    %v6012 = vld [vmem:[#allocation2 + $0x160] sm:$0xf]
    %v6013 = vld [vmem:[#allocation2 + $0x164] sm:$0xf]
    %v6014 = vld [vmem:[#allocation2 + $0x168] sm:$0xf]
    %v6015 = vld [vmem:[#allocation2 + $0x16c] sm:$0xf]
    %v6016 = vld [vmem:[#allocation2 + $0x170] sm:$0xf]
    %v6017 = vld [vmem:[#allocation2 + $0x174] sm:$0xf]
    %v6018 = vld [vmem:[#allocation2 + $0x178] sm:$0xf]
    %v6019 = vld [vmem:[#allocation2 + $0x17c] sm:$0xf]
    %v6020 = vld [vmem:[#allocation2 + $0x180] sm:$0xf]
    %v6021 = vld [vmem:[#allocation2 + $0x184] sm:$0xf]
    %v6022 = vld [vmem:[#allocation2 + $0x188] sm:$0xf]
    %v6023 = vld [vmem:[#allocation2 + $0x18c] sm:$0xf]
    %v6024 = vld [vmem:[#allocation2 + $0x190] sm:$0xf]
    %v6025 = vld [vmem:[#allocation2 + $0x194] sm:$0xf]
    %v6026 = vld [vmem:[#allocation2 + $0x198] sm:$0xf]
    %v6027 = vld [vmem:[#allocation2 + $0x19c] sm:$0xf]
    %v6028 = vld [vmem:[#allocation2 + $0x1a0] sm:$0xf]
    %v6029 = vld [vmem:[#allocation2 + $0x1a4] sm:$0xf]
    %v6030 = vld [vmem:[#allocation2 + $0x1a8] sm:$0xf]
    %v6031 = vld [vmem:[#allocation2 + $0x1ac] sm:$0xf]
    %v6032 = vld [vmem:[#allocation2 + $0x1b0] sm:$0xf]
    %v6033 = vld [vmem:[#allocation2 + $0x1b4] sm:$0xf]
    %v6034 = vld [vmem:[#allocation2 + $0x1b8] sm:$0xf]
    %v6035 = vld [vmem:[#allocation2 + $0x1bc] sm:$0xf]
    %v6036 = vld [vmem:[#allocation2 + $0x1c0] sm:$0xf]
    %v6037 = vld [vmem:[#allocation2 + $0x1c4] sm:$0xf]
    %v6038 = vld [vmem:[#allocation2 + $0x1c8] sm:$0xf]
    %v6039 = vld [vmem:[#allocation2 + $0x1cc] sm:$0xf]
    %v6040 = vld [vmem:[#allocation2 + $0x1d0] sm:$0xf]
    %v6041 = vld [vmem:[#allocation2 + $0x1d4] sm:$0xf]
    %v6042 = vld [vmem:[#allocation2 + $0x1d8] sm:$0xf]
    %v6043 = vld [vmem:[#allocation2 + $0x1dc] sm:$0xf]
    %v6044 = vld [vmem:[#allocation2 + $0x1e0] sm:$0xf]
    %v6045 = vld [vmem:[#allocation2 + $0x1e4] sm:$0xf]
    %v6046 = vld [vmem:[#allocation2 + $0x1e8] sm:$0xf]
    %v6047 = vld [vmem:[#allocation2 + $0x1ec] sm:$0xf]
    %v6048 = vld [vmem:[#allocation2 + $0x1f0] sm:$0xf]
    %v6049 = vld [vmem:[#allocation2 + $0x1f4] sm:$0xf]
    %v6050 = vld [vmem:[#allocation2 + $0x1f8] sm:$0xf]
    %v6051 = vld [vmem:[#allocation2 + $0x1fc] sm:$0xf]
    %v6180 = vunpack.c.l.b16 %v5924
    %v6181 = vunpack.c.l.b16 %v5925
    %v6182 = vunpack.c.l.b16 %v5926
    %v6183 = vunpack.c.l.b16 %v5927
    %v6184 = vunpack.c.l.b16 %v5928
    %v6185 = vunpack.c.l.b16 %v5929
    %v6186 = vunpack.c.l.b16 %v5930
    %v6187 = vunpack.c.l.b16 %v5931
    %v6188 = vunpack.c.l.b16 %v5932
    %v6189 = vunpack.c.l.b16 %v5933
    %v6190 = vunpack.c.l.b16 %v5934
    %v6191 = vunpack.c.l.b16 %v5935
    %v6192 = vunpack.c.l.b16 %v5936
    %v6193 = vunpack.c.l.b16 %v5937
    %v6194 = vunpack.c.l.b16 %v5938
    %v6195 = vunpack.c.l.b16 %v5939
    %v6196 = vunpack.c.l.b16 %v5940
    %v6197 = vunpack.c.l.b16 %v5941
    %v6198 = vunpack.c.l.b16 %v5942
    %v6199 = vunpack.c.l.b16 %v5943
    %v6200 = vunpack.c.l.b16 %v5944
    %v6201 = vunpack.c.l.b16 %v5945
    %v6202 = vunpack.c.l.b16 %v5946
    %v6203 = vunpack.c.l.b16 %v5947
    %v6204 = vunpack.c.l.b16 %v5948
    %v6205 = vunpack.c.l.b16 %v5949
    %v6206 = vunpack.c.l.b16 %v5950
    %v6207 = vunpack.c.l.b16 %v5951
    %v6208 = vunpack.c.l.b16 %v5952
    %v6209 = vunpack.c.l.b16 %v5953
    %v6210 = vunpack.c.l.b16 %v5954
    %v6211 = vunpack.c.l.b16 %v5955
    %v6212 = vunpack.c.l.b16 %v5956
    %v6213 = vunpack.c.l.b16 %v5957
    %v6214 = vunpack.c.l.b16 %v5958
    %v6215 = vunpack.c.l.b16 %v5959
    %v6216 = vunpack.c.l.b16 %v5960
    %v6217 = vunpack.c.l.b16 %v5961
    %v6218 = vunpack.c.l.b16 %v5962
    %v6219 = vunpack.c.l.b16 %v5963
    %v6220 = vunpack.c.l.b16 %v5964
    %v6221 = vunpack.c.l.b16 %v5965
    %v6222 = vunpack.c.l.b16 %v5966
    %v6223 = vunpack.c.l.b16 %v5967
    %v6224 = vunpack.c.l.b16 %v5968
    %v6225 = vunpack.c.l.b16 %v5969
    %v6226 = vunpack.c.l.b16 %v5970
    %v6227 = vunpack.c.l.b16 %v5971
    %v6228 = vunpack.c.l.b16 %v5972
    %v6229 = vunpack.c.l.b16 %v5973
    %v6230 = vunpack.c.l.b16 %v5974
    %v6231 = vunpack.c.l.b16 %v5975
    %v6232 = vunpack.c.l.b16 %v5976
    %v6233 = vunpack.c.l.b16 %v5977
    %v6234 = vunpack.c.l.b16 %v5978
    %v6235 = vunpack.c.l.b16 %v5979
    %v6236 = vunpack.c.l.b16 %v5980
    %v6237 = vunpack.c.l.b16 %v5981
    %v6238 = vunpack.c.l.b16 %v5982
    %v6239 = vunpack.c.l.b16 %v5983
    %v6240 = vunpack.c.l.b16 %v5984
    %v6241 = vunpack.c.l.b16 %v5985
    %v6242 = vunpack.c.l.b16 %v5986
    %v6243 = vunpack.c.l.b16 %v5987
    %v6244 = vunpack.c.l.b16 %v5988
    %v6245 = vunpack.c.l.b16 %v5989
    %v6246 = vunpack.c.l.b16 %v5990
    %v6247 = vunpack.c.l.b16 %v5991
    %v6248 = vunpack.c.l.b16 %v5992
    %v6249 = vunpack.c.l.b16 %v5993
    %v6250 = vunpack.c.l.b16 %v5994
    %v6251 = vunpack.c.l.b16 %v5995
    %v6252 = vunpack.c.l.b16 %v5996
    %v6253 = vunpack.c.l.b16 %v5997
    %v6254 = vunpack.c.l.b16 %v5998
    %v6255 = vunpack.c.l.b16 %v5999
    %v6256 = vunpack.c.l.b16 %v6000
    %v6257 = vunpack.c.l.b16 %v6001
    %v6258 = vunpack.c.l.b16 %v6002
    %v6259 = vunpack.c.l.b16 %v6003
    %v6260 = vunpack.c.l.b16 %v6004
    %v6261 = vunpack.c.l.b16 %v6005
    %v6262 = vunpack.c.l.b16 %v6006
    %v6263 = vunpack.c.l.b16 %v6007
    %v6264 = vunpack.c.l.b16 %v6008
    %v6265 = vunpack.c.l.b16 %v6009
    %v6266 = vunpack.c.l.b16 %v6010
    %v6267 = vunpack.c.l.b16 %v6011
    %v6268 = vunpack.c.l.b16 %v6012
    %v6269 = vunpack.c.l.b16 %v6013
    %v6270 = vunpack.c.l.b16 %v6014
    %v6271 = vunpack.c.l.b16 %v6015
    %v6272 = vunpack.c.l.b16 %v6016
    %v6273 = vunpack.c.l.b16 %v6017
    %v6274 = vunpack.c.l.b16 %v6018
    %v6275 = vunpack.c.l.b16 %v6019
    %v6276 = vunpack.c.l.b16 %v6020
    %v6277 = vunpack.c.l.b16 %v6021
    %v6278 = vunpack.c.l.b16 %v6022
    %v6279 = vunpack.c.l.b16 %v6023
    %v6280 = vunpack.c.l.b16 %v6024
    %v6281 = vunpack.c.l.b16 %v6025
    %v6282 = vunpack.c.l.b16 %v6026
    %v6283 = vunpack.c.l.b16 %v6027
    %v6284 = vunpack.c.l.b16 %v6028
    %v6285 = vunpack.c.l.b16 %v6029
    %v6286 = vunpack.c.l.b16 %v6030
    %v6287 = vunpack.c.l.b16 %v6031
    %v6288 = vunpack.c.l.b16 %v6032
    %v6289 = vunpack.c.l.b16 %v6033
    %v6290 = vunpack.c.l.b16 %v6034
    %v6291 = vunpack.c.l.b16 %v6035
    %v6292 = vunpack.c.l.b16 %v6036
    %v6293 = vunpack.c.l.b16 %v6037
    %v6294 = vunpack.c.l.b16 %v6038
    %v6295 = vunpack.c.l.b16 %v6039
    %v6296 = vunpack.c.l.b16 %v6040
    %v6297 = vunpack.c.l.b16 %v6041
    %v6298 = vunpack.c.l.b16 %v6042
    %v6299 = vunpack.c.l.b16 %v6043
    %v6300 = vunpack.c.l.b16 %v6044
    %v6301 = vunpack.c.l.b16 %v6045
    %v6302 = vunpack.c.l.b16 %v6046
    %v6303 = vunpack.c.l.b16 %v6047
    %v6304 = vunpack.c.l.b16 %v6048
    %v6305 = vunpack.c.l.b16 %v6049
    %v6306 = vunpack.c.l.b16 %v6050
    %v6307 = vunpack.c.l.b16 %v6051
    %v6308 = vpack.c.b16 %v6181, %v6180
    %v6309 = vpack.c.b16 %v6183, %v6182
    %v6310 = vpack.c.b16 %v6185, %v6184
    %v6311 = vpack.c.b16 %v6187, %v6186
    %v6312 = vpack.c.b16 %v6189, %v6188
    %v6313 = vpack.c.b16 %v6191, %v6190
    %v6314 = vpack.c.b16 %v6193, %v6192
    %v6315 = vpack.c.b16 %v6195, %v6194
    %v6316 = vpack.c.b16 %v6197, %v6196
    %v6317 = vpack.c.b16 %v6199, %v6198
    %v6318 = vpack.c.b16 %v6201, %v6200
    %v6319 = vpack.c.b16 %v6203, %v6202
    %v6320 = vpack.c.b16 %v6205, %v6204
    %v6321 = vpack.c.b16 %v6207, %v6206
    %v6322 = vpack.c.b16 %v6209, %v6208
    %v6323 = vpack.c.b16 %v6211, %v6210
    %v6324 = vpack.c.b16 %v6213, %v6212
    %v6325 = vpack.c.b16 %v6215, %v6214
    %v6326 = vpack.c.b16 %v6217, %v6216
    %v6327 = vpack.c.b16 %v6219, %v6218
    %v6328 = vpack.c.b16 %v6221, %v6220
    %v6329 = vpack.c.b16 %v6223, %v6222
    %v6330 = vpack.c.b16 %v6225, %v6224
    %v6331 = vpack.c.b16 %v6227, %v6226
    %v6332 = vpack.c.b16 %v6229, %v6228
    %v6333 = vpack.c.b16 %v6231, %v6230
    %v6334 = vpack.c.b16 %v6233, %v6232
    %v6335 = vpack.c.b16 %v6235, %v6234
    %v6336 = vpack.c.b16 %v6237, %v6236
    %v6337 = vpack.c.b16 %v6239, %v6238
    %v6338 = vpack.c.b16 %v6241, %v6240
    %v6339 = vpack.c.b16 %v6243, %v6242
    %v6340 = vpack.c.b16 %v6245, %v6244
    %v6341 = vpack.c.b16 %v6247, %v6246
    %v6342 = vpack.c.b16 %v6249, %v6248
    %v6343 = vpack.c.b16 %v6251, %v6250
    %v6344 = vpack.c.b16 %v6253, %v6252
    %v6345 = vpack.c.b16 %v6255, %v6254
    %v6346 = vpack.c.b16 %v6257, %v6256
    %v6347 = vpack.c.b16 %v6259, %v6258
    %v6348 = vpack.c.b16 %v6261, %v6260
    %v6349 = vpack.c.b16 %v6263, %v6262
    %v6350 = vpack.c.b16 %v6265, %v6264
    %v6351 = vpack.c.b16 %v6267, %v6266
    %v6352 = vpack.c.b16 %v6269, %v6268
    %v6353 = vpack.c.b16 %v6271, %v6270
    %v6354 = vpack.c.b16 %v6273, %v6272
    %v6355 = vpack.c.b16 %v6275, %v6274
    %v6356 = vpack.c.b16 %v6277, %v6276
    %v6357 = vpack.c.b16 %v6279, %v6278
    %v6358 = vpack.c.b16 %v6281, %v6280
    %v6359 = vpack.c.b16 %v6283, %v6282
    %v6360 = vpack.c.b16 %v6285, %v6284
    %v6361 = vpack.c.b16 %v6287, %v6286
    %v6362 = vpack.c.b16 %v6289, %v6288
    %v6363 = vpack.c.b16 %v6291, %v6290
    %v6364 = vpack.c.b16 %v6293, %v6292
    %v6365 = vpack.c.b16 %v6295, %v6294
    %v6366 = vpack.c.b16 %v6297, %v6296
    %v6367 = vpack.c.b16 %v6299, %v6298
    %v6368 = vpack.c.b16 %v6301, %v6300
    %v6369 = vpack.c.b16 %v6303, %v6302
    %v6370 = vpack.c.b16 %v6305, %v6304
    %v6371 = vpack.c.b16 %v6307, %v6306
    %6436 = vmatprep.subr.bf16.mxu0 0
    %6437 = vmatpush1.bf16.msra.mxu0 %v6308
    %6438 = vmatprep.subr.bf16.mxu0 0
    %6439 = vmatpush1.bf16.msra.mxu0 %v6309
    %6440 = vmatprep.subr.bf16.mxu0 0
    %6441 = vmatpush1.bf16.msra.mxu0 %v6310
    %6442 = vmatprep.subr.bf16.mxu0 0
    %6443 = vmatpush1.bf16.msra.mxu0 %v6311
    %6444 = vmatprep.subr.bf16.mxu0 0
    %6445 = vmatpush1.bf16.msra.mxu0 %v6312
    %6446 = vmatprep.subr.bf16.mxu0 0
    %6447 = vmatpush1.bf16.msra.mxu0 %v6313
    %6448 = vmatprep.subr.bf16.mxu0 0
    %6449 = vmatpush1.bf16.msra.mxu0 %v6314
    %6450 = vmatprep.subr.bf16.mxu0 0
    %6451 = vmatpush1.bf16.msra.mxu0 %v6315
    %6452 = vmatprep.subr.bf16.mxu0 0
    %6453 = vmatpush1.bf16.msra.mxu0 %v6316
    %6454 = vmatprep.subr.bf16.mxu0 0
    %6455 = vmatpush1.bf16.msra.mxu0 %v6317
    %6456 = vmatprep.subr.bf16.mxu0 0
    %6457 = vmatpush1.bf16.msra.mxu0 %v6318
    %6458 = vmatprep.subr.bf16.mxu0 0
    %6459 = vmatpush1.bf16.msra.mxu0 %v6319
    %6460 = vmatprep.subr.bf16.mxu0 0
    %6461 = vmatpush1.bf16.msra.mxu0 %v6320
    %6462 = vmatprep.subr.bf16.mxu0 0
    %6463 = vmatpush1.bf16.msra.mxu0 %v6321
    %6464 = vmatprep.subr.bf16.mxu0 0
    %6465 = vmatpush1.bf16.msra.mxu0 %v6322
    %6466 = vmatprep.subr.bf16.mxu0 0
    %6467 = vmatpush1.bf16.msra.mxu0 %v6323
    %6468 = vmatprep.mubr.bf16.mxu0 %v5917
    %6469 = vmatmul.mubr.bf16.gmra.mrb[0].mxu0 %v5916
    %v6470 = vpop.f32.mrb[0].mxu0
    %v6471 = vadd.f32 0.0, %v6470
    %v6472 = vpop.f32.mrb[0].mxu0
    %v6473 = vpop.f32.mrb[0].mxu0
    %v6474 = vadd.f32 0.0, %v6473
    %v6475 = vpop.f32.mrb[0].mxu0
    %6476 = vdwg.mxu0
    %6477 = vmatprep.subr.bf16.mxu0 0
    %6478 = vmatpush1.bf16.msra.mxu0 %v6324
    %6479 = vmatprep.subr.bf16.mxu0 0
    %6480 = vmatpush1.bf16.msra.mxu0 %v6325
    %6481 = vmatprep.subr.bf16.mxu0 0
    %6482 = vmatpush1.bf16.msra.mxu0 %v6326
    %6483 = vmatprep.subr.bf16.mxu0 0
    %6484 = vmatpush1.bf16.msra.mxu0 %v6327
    %6485 = vmatprep.subr.bf16.mxu0 0
    %6486 = vmatpush1.bf16.msra.mxu0 %v6328
    %6487 = vmatprep.subr.bf16.mxu0 0
    %6488 = vmatpush1.bf16.msra.mxu0 %v6329
    %6489 = vmatprep.subr.bf16.mxu0 0
    %6490 = vmatpush1.bf16.msra.mxu0 %v6330
    %6491 = vmatprep.subr.bf16.mxu0 0
    %6492 = vmatpush1.bf16.msra.mxu0 %v6331
    %6493 = vmatprep.subr.bf16.mxu0 0
    %6494 = vmatpush1.bf16.msra.mxu0 %v6332
    %6495 = vmatprep.subr.bf16.mxu0 0
    %6496 = vmatpush1.bf16.msra.mxu0 %v6333
    %6497 = vmatprep.subr.bf16.mxu0 0
    %6498 = vmatpush1.bf16.msra.mxu0 %v6334
    %6499 = vmatprep.subr.bf16.mxu0 0
    %6500 = vmatpush1.bf16.msra.mxu0 %v6335
    %6501 = vmatprep.subr.bf16.mxu0 0
    %6502 = vmatpush1.bf16.msra.mxu0 %v6336
    %6503 = vmatprep.subr.bf16.mxu0 0
    %6504 = vmatpush1.bf16.msra.mxu0 %v6337
    %6505 = vmatprep.subr.bf16.mxu0 0
    %6506 = vmatpush1.bf16.msra.mxu0 %v6338
    %6507 = vmatprep.subr.bf16.mxu0 0
    %6508 = vmatpush1.bf16.msra.mxu0 %v6339
    %6509 = vmatprep.mubr.bf16.mxu0 %v5919
    %6510 = vmatmul.mubr.bf16.gmra.mrb[0].mxu0 %v5918
    %v6511 = vpop.f32.mrb[0].mxu0
    %v6512 = vadd.f32 %v6471, %v6511
    %v6513 = vpop.f32.mrb[0].mxu0
    %v6514 = vpop.f32.mrb[0].mxu0
    %v6515 = vadd.f32 %v6474, %v6514
    %v6516 = vpop.f32.mrb[0].mxu0
    %6517 = vdwg.mxu0
    %6518 = vmatprep.subr.bf16.mxu0 0
    %6519 = vmatpush1.bf16.msra.mxu0 %v6340
    %6520 = vmatprep.subr.bf16.mxu0 0
    %6521 = vmatpush1.bf16.msra.mxu0 %v6341
    %6522 = vmatprep.subr.bf16.mxu0 0
    %6523 = vmatpush1.bf16.msra.mxu0 %v6342
    %6524 = vmatprep.subr.bf16.mxu0 0
    %6525 = vmatpush1.bf16.msra.mxu0 %v6343
    %6526 = vmatprep.subr.bf16.mxu0 0
    %6527 = vmatpush1.bf16.msra.mxu0 %v6344
    %6528 = vmatprep.subr.bf16.mxu0 0
    %6529 = vmatpush1.bf16.msra.mxu0 %v6345
    %6530 = vmatprep.subr.bf16.mxu0 0
    %6531 = vmatpush1.bf16.msra.mxu0 %v6346
    %6532 = vmatprep.subr.bf16.mxu0 0
    %6533 = vmatpush1.bf16.msra.mxu0 %v6347
    %6534 = vmatprep.subr.bf16.mxu0 0
    %6535 = vmatpush1.bf16.msra.mxu0 %v6348
    %6536 = vmatprep.subr.bf16.mxu0 0
    %6537 = vmatpush1.bf16.msra.mxu0 %v6349
    %6538 = vmatprep.subr.bf16.mxu0 0
    %6539 = vmatpush1.bf16.msra.mxu0 %v6350
    %6540 = vmatprep.subr.bf16.mxu0 0
    %6541 = vmatpush1.bf16.msra.mxu0 %v6351
    %6542 = vmatprep.subr.bf16.mxu0 0
    %6543 = vmatpush1.bf16.msra.mxu0 %v6352
    %6544 = vmatprep.subr.bf16.mxu0 0
    %6545 = vmatpush1.bf16.msra.mxu0 %v6353
    %6546 = vmatprep.subr.bf16.mxu0 0
    %6547 = vmatpush1.bf16.msra.mxu0 %v6354
    %6548 = vmatprep.subr.bf16.mxu0 0
    %6549 = vmatpush1.bf16.msra.mxu0 %v6355
    %6550 = vmatprep.mubr.bf16.mxu0 %v5921
    %6551 = vmatmul.mubr.bf16.gmra.mrb[0].mxu0 %v5920
    %v6552 = vpop.f32.mrb[0].mxu0
    %v6553 = vadd.f32 %v6512, %v6552
    %v6554 = vpop.f32.mrb[0].mxu0
    %v6555 = vpop.f32.mrb[0].mxu0
    %v6556 = vadd.f32 %v6515, %v6555
    %v6557 = vpop.f32.mrb[0].mxu0
    %6558 = vdwg.mxu0
    %6559 = vmatprep.subr.bf16.mxu0 0
    %6560 = vmatpush1.bf16.msra.mxu0 %v6356
    %6561 = vmatprep.subr.bf16.mxu0 0
    %6562 = vmatpush1.bf16.msra.mxu0 %v6357
    %6563 = vmatprep.subr.bf16.mxu0 0
    %6564 = vmatpush1.bf16.msra.mxu0 %v6358
    %6565 = vmatprep.subr.bf16.mxu0 0
    %6566 = vmatpush1.bf16.msra.mxu0 %v6359
    %6567 = vmatprep.subr.bf16.mxu0 0
    %6568 = vmatpush1.bf16.msra.mxu0 %v6360
    %6569 = vmatprep.subr.bf16.mxu0 0
    %6570 = vmatpush1.bf16.msra.mxu0 %v6361
    %6571 = vmatprep.subr.bf16.mxu0 0
    %6572 = vmatpush1.bf16.msra.mxu0 %v6362
    %6573 = vmatprep.subr.bf16.mxu0 0
    %6574 = vmatpush1.bf16.msra.mxu0 %v6363
    %6575 = vmatprep.subr.bf16.mxu0 0
    %6576 = vmatpush1.bf16.msra.mxu0 %v6364
    %6577 = vmatprep.subr.bf16.mxu0 0
    %6578 = vmatpush1.bf16.msra.mxu0 %v6365
    %6579 = vmatprep.subr.bf16.mxu0 0
    %6580 = vmatpush1.bf16.msra.mxu0 %v6366
    %6581 = vmatprep.subr.bf16.mxu0 0
    %6582 = vmatpush1.bf16.msra.mxu0 %v6367
    %6583 = vmatprep.subr.bf16.mxu0 0
    %6584 = vmatpush1.bf16.msra.mxu0 %v6368
    %6585 = vmatprep.subr.bf16.mxu0 0
    %6586 = vmatpush1.bf16.msra.mxu0 %v6369
    %6587 = vmatprep.subr.bf16.mxu0 0
    %6588 = vmatpush1.bf16.msra.mxu0 %v6370
    %6589 = vmatprep.subr.bf16.mxu0 0
    %6590 = vmatpush1.bf16.msra.mxu0 %v6371
    %6591 = vmatprep.mubr.bf16.mxu0 %v5923
    %6592 = vmatmul.mubr.bf16.gmra.mrb[0].mxu0 %v5922
    %v6593 = vpop.f32.mrb[0].mxu0
    %v6594 = vadd.f32 %v6553, %v6593
    %v6595 = vpop.f32.mrb[0].mxu0
    %v6596 = vpop.f32.mrb[0].mxu0
    %v6597 = vadd.f32 %v6556, %v6596
    %v6598 = vpop.f32.mrb[0].mxu0
    %6599 = vdwg.mxu0
    %v6600 = vld [vmem:[%s5] sm:$0xff]
    %v6601 = vld [vmem:[%s5 + $0x8] sm:$0xff]
    %v6602 = vmul.f32 %v6594, %v6600
    %v6603 = vmul.f32 %v6597, %v6601
    %v6604 = vadd.f32 %v6602, %v6603
    %v6605 = vrot.slane %v6604, 4
    %v6606 = vadd.f32 %v6604, %v6605
    %v6607 = vrot.slane %v6606, 2
    %v6608 = vadd.f32 %v6606, %v6607
    %v6609 = vrot.slane %v6608, 1
    %v6610 = vadd.f32 %v6608, %v6609
    %v6611 = vld [vmem:[%s6] sm:$0xff]
    %v6612 = vld [vmem:[%s6 + $0x8] sm:$0xff]
    %v6613 = vld [vmem:[%s6 + $0x10] sm:$0xff]
    %v6614 = vld [vmem:[%s6 + $0x18] sm:$0xff]
    %v6615 = vld [vmem:[%s6 + $0x20] sm:$0xff]
    %v6616 = vld [vmem:[%s6 + $0x28] sm:$0xff]
    %v6617 = vld [vmem:[%s6 + $0x30] sm:$0xff]
    %v6618 = vld [vmem:[%s6 + $0x38] sm:$0xff]
    %v6619 = vld [vmem:[%s6 + $0x40] sm:$0xff]
    %v6620 = vld [vmem:[%s6 + $0x48] sm:$0xff]
    %v6621 = vld [vmem:[%s6 + $0x50] sm:$0xff]
    %v6622 = vld [vmem:[%s6 + $0x58] sm:$0xff]
    %v6623 = vld [vmem:[%s6 + $0x60] sm:$0xff]
    %v6624 = vld [vmem:[%s6 + $0x68] sm:$0xff]
    %v6625 = vld [vmem:[%s6 + $0x70] sm:$0xff]
    %v6626 = vld [vmem:[%s6 + $0x78] sm:$0xff]
    %6627 = vmatprep.subr.mxu0 0.0
    %6628 = vmatpush1.msra.mxu0 %v6611
    %6629 = vmatprep.subr.mxu0 0.0
    %6630 = vmatpush1.msra.mxu0 %v6612
    %6631 = vmatprep.subr.mxu0 0.0
    %6632 = vmatpush1.msra.mxu0 %v6613
    %6633 = vmatprep.subr.mxu0 0.0
    %6634 = vmatpush1.msra.mxu0 %v6614
    %6635 = vmatprep.subr.mxu0 0.0
    %6636 = vmatpush1.msra.mxu0 %v6615
    %6637 = vmatprep.subr.mxu0 0.0
    %6638 = vmatpush1.msra.mxu0 %v6616
    %6639 = vmatprep.subr.mxu0 0.0
    %6640 = vmatpush1.msra.mxu0 %v6617
    %6641 = vmatprep.subr.mxu0 0.0
    %6642 = vmatpush1.msra.mxu0 %v6618
    %6643 = vmatprep.subr.mxu0 0.0
    %6644 = vmatpush1.msra.mxu0 %v6619
    %6645 = vmatprep.subr.mxu0 0.0
    %6646 = vmatpush1.msra.mxu0 %v6620
    %6647 = vmatprep.subr.mxu0 0.0
    %6648 = vmatpush1.msra.mxu0 %v6621
    %6649 = vmatprep.subr.mxu0 0.0
    %6650 = vmatpush1.msra.mxu0 %v6622
    %6651 = vmatprep.subr.mxu0 0.0
    %6652 = vmatpush1.msra.mxu0 %v6623
    %6653 = vmatprep.subr.mxu0 0.0
    %6654 = vmatpush1.msra.mxu0 %v6624
    %6655 = vmatprep.subr.mxu0 0.0
    %6656 = vmatpush1.msra.mxu0 %v6625
    %6657 = vmatprep.subr.mxu0 0.0
    %6658 = vmatpush1.msra.mxu0 %v6626
    %6659 = vmatprep.subr.mxu0 0.0
    %6660 = vmatpush1.msra.mxu0 0.0
    %6661 = vmatprep.subr.mxu0 0.0
    %6662 = vmatpush1.msra.mxu0 0.0
    %6663 = vmatprep.subr.mxu0 0.0
    %6664 = vmatpush1.msra.mxu0 0.0
    %6665 = vmatprep.subr.mxu0 0.0
    %6666 = vmatpush1.msra.mxu0 0.0
    %6667 = vmatprep.subr.mxu0 0.0
    %6668 = vmatpush1.msra.mxu0 0.0
    %6669 = vmatprep.subr.mxu0 0.0
    %6670 = vmatpush1.msra.mxu0 0.0
    %6671 = vmatprep.subr.mxu0 0.0
    %6672 = vmatpush1.msra.mxu0 0.0
    %6673 = vmatprep.subr.mxu0 0.0
    %6674 = vmatpush1.msra.mxu0 0.0
    %6675 = vmatprep.subr.mxu0 0.0
    %6676 = vmatpush1.msra.mxu0 0.0
    %6677 = vmatprep.subr.mxu0 0.0
    %6678 = vmatpush1.msra.mxu0 0.0
    %6679 = vmatprep.subr.mxu0 0.0
    %6680 = vmatpush1.msra.mxu0 0.0
    %6681 = vmatprep.subr.mxu0 0.0
    %6682 = vmatpush1.msra.mxu0 0.0
    %6683 = vmatprep.subr.mxu0 0.0
    %6684 = vmatpush1.msra.mxu0 0.0
    %6685 = vmatprep.subr.mxu0 0.0
    %6686 = vmatpush1.msra.mxu0 0.0
    %6687 = vmatprep.subr.mxu0 0.0
    %6688 = vmatpush1.msra.mxu0 0.0
    %6689 = vmatprep.subr.mxu0 0.0
    %6690 = vmatpush1.msra.mxu0 0.0
    %6691 = vmatprep.mubr.f32.mxu0 0.0
    %6692 = vmatmul.mubr.f32.gmra.mrb[0].mxu0 %v6610
    %v6693 = vpop.f32.mrb[0].mxu0
    %v6694 = vadd.f32 0.0, %v6693
    %v6695 = vpop.f32.mrb[0].mxu0
    %6696 = vdwg.mxu0
    %vm6697 = vcmask 73728
    %6698 = vst.msk [vmem:[#allocation5] sm:$0x1] %vm6697, %v6694
    // Predicated region
    $region34: #{cifar_classifier_forward.1} parent=1 // pred_check
      _
    $region35: #{cifar_classifier_forward.1} parent=1 // pred_check_branch
      %6700 = sbr.rel (0) target = $region37
    $region36: #{cifar_classifier_forward.1} parent=1 // pred_region
      %s6702 = ssub.s32 16, 16
      %6703 = vsyncadd [#allocation4], %s6702
      %s6705 = sshll.u32 [#allocation5], 4
      %s6706 = int_to_ptr.vmem [resolvable:$true] %s6705
      %6708 = dma.vmem_to_hbm [thread:$0]  %s6706, 16, %s7, [#allocation4]
    $region37: #{cifar_classifier_forward.1} parent=1 // pred_fallthru
      _
    // Predicated region
    $region38: #{cifar_classifier_forward.1} parent=1 // pred_check
      _
    $region39: #{cifar_classifier_forward.1} parent=1 // pred_check_branch
      %6710 = sbr.rel (0) target = $region41
    $region40: #{cifar_classifier_forward.1} parent=1 // pred_region
      %6711 = dma.done [#allocation4], 16
    $region41: #{cifar_classifier_forward.1} parent=1 // pred_fallthru
      _
    %6712 = vsyncpa [#allocation3], 1
    %6713 = vsyncpa [#allocation4], 1

</llo_original>
